<compile_context>
chip_gen: v6e
topology: v6e:2x2x1
jax: 0.10.0
libtpu: 0.0.40
codegen_flags: <defaults>
</compile_context>

<pallas_src>
import jax
import jax.numpy as jnp
from jax.experimental import pallas as pl
from jax.experimental.pallas import tpu as pltpu

IN_DIM = 784     # input features (not padded; full-dim block is legal)
OUT_DIM = 10     # real logits
OUT_PAD = 128    # logits padded to one full 128-lane vreg (unmasked vst)


def mlp_kernel(x_ref,
               w1_ref, b1_ref,
               w2_ref, b2_ref,
               w3_ref, b3_ref,
               w4_ref, b4_ref,
               w5_ref, b5_ref,
               o_ref):
    # x arrives in its stored dtype; cast to bf16 in-kernel (free on the VPU).
    x = x_ref[...].astype(jnp.bfloat16)

    # bf16 operands on the MXU, f32 accumulation, f32 bias-add / ReLU.
    h = jnp.dot(x, w1_ref[...], preferred_element_type=jnp.float32)
    h = jnp.maximum(h + b1_ref[...], 0.0)

    h = jnp.dot(h.astype(jnp.bfloat16), w2_ref[...],
                preferred_element_type=jnp.float32)
    h = jnp.maximum(h + b2_ref[...], 0.0)

    h = jnp.dot(h.astype(jnp.bfloat16), w3_ref[...],
                preferred_element_type=jnp.float32)
    h = jnp.maximum(h + b3_ref[...], 0.0)

    h = jnp.dot(h.astype(jnp.bfloat16), w4_ref[...],
                preferred_element_type=jnp.float32)
    h = jnp.maximum(h + b4_ref[...], 0.0)

    # Output layer: logits, no activation (matches the PyTorch forward).
    o = jnp.dot(h.astype(jnp.bfloat16), w5_ref[...],
                preferred_element_type=jnp.float32)
    o_ref[...] = (o + b5_ref[...]).astype(o_ref.dtype)   # bf16 writeback


def init_params(key):
    """Deterministic init mimicking PyTorch nn.Linear default
    (U[-1/sqrt(in), 1/sqrt(in)]). Weights already transposed to (in, out)."""
    dims = [(784, 128), (128, 256), (256, 512), (512, 512), (512, 10)]
    params = []
    for fan_in, fan_out in dims:
        key, kw, kb = jax.random.split(key, 3)
        bound = 1.0 / jnp.sqrt(jnp.float32(fan_in))
        w_t = jax.random.uniform(kw, (fan_in, fan_out), jnp.float32, -bound, bound)
        b = jax.random.uniform(kb, (1, fan_out), jnp.float32, -bound, bound)
        params.append((w_t, b))
    return params


def prepare_params(params):
    """One-time (amortized) prep: lane-pad only the 10-wide output layer,
    cast weights to bf16 (MXU operands), keep biases f32 (VPU elementwise)."""
    prepared = []
    last = len(params) - 1
    for i, (w_t, b) in enumerate(params):
        w, bb = w_t, b
        if i == last:
            w = jnp.pad(w, ((0, 0), (0, OUT_PAD - w.shape[1])))
            bb = jnp.pad(bb, ((0, 0), (0, OUT_PAD - bb.shape[1])))
        prepared.append((w.astype(jnp.bfloat16), bb.astype(jnp.float32)))
    return prepared


def _choose_tile_b(batch):
    """min(1024, round_up(ceil(batch/2), 256)): large batches get 512-1024-row
    tiles; batches >= 512 yield >= 2 'parallel' grid steps (both v7x TCs)."""
    half = -(-batch // 2)
    return min(1024, ((half + 255) // 256) * 256)


def _const_spec(shape, single_buffer):
    """Constant-index_map spec: DMA'd once, VMEM-resident across grid steps.
    Optionally single-buffered (never re-fetched -> no double-buffer needed)."""
    if single_buffer:
        return pl.BlockSpec(shape, lambda i: (0, 0), pipeline_mode=pl.Buffered(1))
    return pl.BlockSpec(shape, lambda i: (0, 0))


def multiclass_forward(x, prepared):
    """x: (batch, 784), any float dtype. prepared: output of prepare_params."""
    batch, k = x.shape
    assert k == IN_DIM, k

    tile_b = _choose_tile_b(batch)
    n_tiles = pl.cdiv(batch, tile_b)
    padded_batch = n_tiles * tile_b

    # Pad the batch only when needed (no dtype cast, no K padding).
    xp = x if padded_batch == batch else jnp.pad(x, ((0, padded_batch - batch), (0, 0)))

    flat_params = []
    for w, b in prepared:
        flat_params.append(w)
        flat_params.append(b)

    def call(single_buffer_weights):
        in_specs = [pl.BlockSpec((tile_b, IN_DIM), lambda i: (i, 0))]
        for w, b in prepared:
            in_specs.append(_const_spec(w.shape, single_buffer_weights))
            in_specs.append(_const_spec(b.shape, single_buffer_weights))
        return pl.pallas_call(
            mlp_kernel,
            out_shape=jax.ShapeDtypeStruct((padded_batch, OUT_PAD), jnp.bfloat16),
            grid=(n_tiles,),
            in_specs=in_specs,
            out_specs=pl.BlockSpec((tile_b, OUT_PAD), lambda i: (i, 0)),
            compiler_params=pltpu.CompilerParams(
                dimension_semantics=("parallel",),   # shard batch tiles over TCs
                vmem_limit_bytes=32 << 20,           # footprint < ~10 MiB @ 1024
            ),
        )(xp, *flat_params)

    try:
        out = call(single_buffer_weights=True)
    except Exception:
        # pl.Buffered(1) unsupported in this jax version -> default buffering.
        out = call(single_buffer_weights=False)

    # Strip batch padding and the 118 zero logit columns; return f32 logits.
    return out[:batch, :OUT_DIM].astype(jnp.float32)


def reference_forward(x, prepared):
    """Pure-JAX reference mirroring the kernel numerics exactly
    (bf16 operands, f32 accumulate, f32 bias/ReLU, bf16 logit store)."""
    h = x.astype(jnp.bfloat16)
    last = len(prepared) - 1
    for i, (w, b) in enumerate(prepared):
        h = jnp.dot(h, w, preferred_element_type=jnp.float32) + b
        if i < last:
            h = jnp.maximum(h, 0.0).astype(jnp.bfloat16)
        else:
            h = h.astype(jnp.bfloat16)
    return h[:, :OUT_DIM].astype(jnp.float32)


if __name__ == "__main__":
    key = jax.random.PRNGKey(0)
    key, kx = jax.random.split(key)

    batch = 8
    x = jax.random.normal(kx, (batch, IN_DIM), jnp.float32)

    params = init_params(key)
    prepared = prepare_params(params)

    out = jax.block_until_ready(multiclass_forward(x, prepared))
    ref = reference_forward(x, prepared)

    assert out.shape == (batch, OUT_DIM), out.shape
    assert jnp.allclose(out, ref, atol=2e-2, rtol=2e-2), \
        float(jnp.max(jnp.abs(out - ref)))

    print("KERNEL_OK")
</pallas_src>

<mosaic_0001>
module attributes {stable_mosaic.version = 11 : i64} {
  func.func @mlp_kernel(%arg0: i32, %arg1: memref<256x784xf32, #tpu.memory_space<vmem>>, %arg2: memref<784x128xbf16, #tpu.memory_space<vmem>>, %arg3: memref<1x128xf32, #tpu.memory_space<vmem>>, %arg4: memref<128x256xbf16, #tpu.memory_space<vmem>>, %arg5: memref<1x256xf32, #tpu.memory_space<vmem>>, %arg6: memref<256x512xbf16, #tpu.memory_space<vmem>>, %arg7: memref<1x512xf32, #tpu.memory_space<vmem>>, %arg8: memref<512x512xbf16, #tpu.memory_space<vmem>>, %arg9: memref<1x512xf32, #tpu.memory_space<vmem>>, %arg10: memref<512x128xbf16, #tpu.memory_space<vmem>>, %arg11: memref<1x128xf32, #tpu.memory_space<vmem>>, %arg12: memref<256x128xbf16, #tpu.memory_space<vmem>>) attributes {dimension_semantics = [#tpu.dimension_semantics<parallel>], iteration_bounds = array<i64: 1>, scalar_prefetch = 0 : i64, scratch_operands = 0 : i64, tpu.core_type = #tpu.core_type<tc>, window_params = [{transform_indices = @transform_0, window_bounds = array<i64: 256, 784>}, {pipeline_mode = #tpu.pipeline_mode<synchronous>, transform_indices = @transform_1, window_bounds = array<i64: 784, 128>}, {pipeline_mode = #tpu.pipeline_mode<synchronous>, transform_indices = @transform_2, window_bounds = array<i64: 1, 128>}, {pipeline_mode = #tpu.pipeline_mode<synchronous>, transform_indices = @transform_3, window_bounds = array<i64: 128, 256>}, {pipeline_mode = #tpu.pipeline_mode<synchronous>, transform_indices = @transform_4, window_bounds = array<i64: 1, 256>}, {pipeline_mode = #tpu.pipeline_mode<synchronous>, transform_indices = @transform_5, window_bounds = array<i64: 256, 512>}, {pipeline_mode = #tpu.pipeline_mode<synchronous>, transform_indices = @transform_6, window_bounds = array<i64: 1, 512>}, {pipeline_mode = #tpu.pipeline_mode<synchronous>, transform_indices = @transform_7, window_bounds = array<i64: 512, 512>}, {pipeline_mode = #tpu.pipeline_mode<synchronous>, transform_indices = @transform_8, window_bounds = array<i64: 1, 512>}, {pipeline_mode = #tpu.pipeline_mode<synchronous>, transform_indices = @transform_9, window_bounds = array<i64: 512, 128>}, {pipeline_mode = #tpu.pipeline_mode<synchronous>, transform_indices = @transform_10, window_bounds = array<i64: 1, 128>}, {transform_indices = @transform_11, window_bounds = array<i64: 256, 128>}]} {
    %c0 = arith.constant 0 : index
    %c0_0 = arith.constant 0 : index
    %0 = vector.load %arg1[%c0, %c0_0] : memref<256x784xf32, #tpu.memory_space<vmem>>, vector<256x784xf32>
    %1 = arith.truncf %0 : vector<256x784xf32> to vector<256x784xbf16>
    %c0_1 = arith.constant 0 : index
    %c0_2 = arith.constant 0 : index
    %2 = vector.load %arg2[%c0_1, %c0_2] : memref<784x128xbf16, #tpu.memory_space<vmem>>, vector<784x128xbf16>
    %cst = arith.constant dense<0.000000e+00> : vector<256x128xf32>
    %3 = tpu.matmul %1, %2, %cst {dimension_numbers = #tpu.dot_dimension_numbers<[1], [0], [0], [1], [0, 0, 1, 1], [], []>} : vector<256x784xbf16>, vector<784x128xbf16>, vector<256x128xf32> -> vector<256x128xf32>
    %c0_3 = arith.constant 0 : index
    %c0_4 = arith.constant 0 : index
    %4 = vector.load %arg3[%c0_3, %c0_4] : memref<1x128xf32, #tpu.memory_space<vmem>>, vector<1x128xf32>
    %5 = vector.broadcast %4 : vector<1x128xf32> to vector<256x128xf32>
    %6 = arith.addf %3, %5 : vector<256x128xf32>
    %cst_5 = arith.constant 0.000000e+00 : f32
    %7 = vector.broadcast %cst_5 : f32 to vector<256x128xf32>
    %8 = arith.maximumf %6, %7 : vector<256x128xf32>
    %9 = arith.truncf %8 : vector<256x128xf32> to vector<256x128xbf16>
    %c0_6 = arith.constant 0 : index
    %c0_7 = arith.constant 0 : index
    %10 = vector.load %arg4[%c0_6, %c0_7] : memref<128x256xbf16, #tpu.memory_space<vmem>>, vector<128x256xbf16>
    %cst_8 = arith.constant dense<0.000000e+00> : vector<256x256xf32>
    %11 = tpu.matmul %9, %10, %cst_8 {dimension_numbers = #tpu.dot_dimension_numbers<[1], [0], [0], [1], [0, 0, 1, 1], [], []>} : vector<256x128xbf16>, vector<128x256xbf16>, vector<256x256xf32> -> vector<256x256xf32>
    %c0_9 = arith.constant 0 : index
    %c0_10 = arith.constant 0 : index
    %12 = vector.load %arg5[%c0_9, %c0_10] : memref<1x256xf32, #tpu.memory_space<vmem>>, vector<1x256xf32>
    %13 = vector.broadcast %12 : vector<1x256xf32> to vector<256x256xf32>
    %14 = arith.addf %11, %13 : vector<256x256xf32>
    %cst_11 = arith.constant 0.000000e+00 : f32
    %15 = vector.broadcast %cst_11 : f32 to vector<256x256xf32>
    %16 = arith.maximumf %14, %15 : vector<256x256xf32>
    %17 = arith.truncf %16 : vector<256x256xf32> to vector<256x256xbf16>
    %c0_12 = arith.constant 0 : index
    %c0_13 = arith.constant 0 : index
    %18 = vector.load %arg6[%c0_12, %c0_13] : memref<256x512xbf16, #tpu.memory_space<vmem>>, vector<256x512xbf16>
    %cst_14 = arith.constant dense<0.000000e+00> : vector<256x512xf32>
    %19 = tpu.matmul %17, %18, %cst_14 {dimension_numbers = #tpu.dot_dimension_numbers<[1], [0], [0], [1], [0, 0, 1, 1], [], []>} : vector<256x256xbf16>, vector<256x512xbf16>, vector<256x512xf32> -> vector<256x512xf32>
    %c0_15 = arith.constant 0 : index
    %c0_16 = arith.constant 0 : index
    %20 = vector.load %arg7[%c0_15, %c0_16] : memref<1x512xf32, #tpu.memory_space<vmem>>, vector<1x512xf32>
    %21 = vector.broadcast %20 : vector<1x512xf32> to vector<256x512xf32>
    %22 = arith.addf %19, %21 : vector<256x512xf32>
    %cst_17 = arith.constant 0.000000e+00 : f32
    %23 = vector.broadcast %cst_17 : f32 to vector<256x512xf32>
    %24 = arith.maximumf %22, %23 : vector<256x512xf32>
    %25 = arith.truncf %24 : vector<256x512xf32> to vector<256x512xbf16>
    %c0_18 = arith.constant 0 : index
    %c0_19 = arith.constant 0 : index
    %26 = vector.load %arg8[%c0_18, %c0_19] : memref<512x512xbf16, #tpu.memory_space<vmem>>, vector<512x512xbf16>
    %cst_20 = arith.constant dense<0.000000e+00> : vector<256x512xf32>
    %27 = tpu.matmul %25, %26, %cst_20 {dimension_numbers = #tpu.dot_dimension_numbers<[1], [0], [0], [1], [0, 0, 1, 1], [], []>} : vector<256x512xbf16>, vector<512x512xbf16>, vector<256x512xf32> -> vector<256x512xf32>
    %c0_21 = arith.constant 0 : index
    %c0_22 = arith.constant 0 : index
    %28 = vector.load %arg9[%c0_21, %c0_22] : memref<1x512xf32, #tpu.memory_space<vmem>>, vector<1x512xf32>
    %29 = vector.broadcast %28 : vector<1x512xf32> to vector<256x512xf32>
    %30 = arith.addf %27, %29 : vector<256x512xf32>
    %cst_23 = arith.constant 0.000000e+00 : f32
    %31 = vector.broadcast %cst_23 : f32 to vector<256x512xf32>
    %32 = arith.maximumf %30, %31 : vector<256x512xf32>
    %33 = arith.truncf %32 : vector<256x512xf32> to vector<256x512xbf16>
    %c0_24 = arith.constant 0 : index
    %c0_25 = arith.constant 0 : index
    %34 = vector.load %arg10[%c0_24, %c0_25] : memref<512x128xbf16, #tpu.memory_space<vmem>>, vector<512x128xbf16>
    %cst_26 = arith.constant dense<0.000000e+00> : vector<256x128xf32>
    %35 = tpu.matmul %33, %34, %cst_26 {dimension_numbers = #tpu.dot_dimension_numbers<[1], [0], [0], [1], [0, 0, 1, 1], [], []>} : vector<256x512xbf16>, vector<512x128xbf16>, vector<256x128xf32> -> vector<256x128xf32>
    %c0_27 = arith.constant 0 : index
    %c0_28 = arith.constant 0 : index
    %36 = vector.load %arg11[%c0_27, %c0_28] : memref<1x128xf32, #tpu.memory_space<vmem>>, vector<1x128xf32>
    %37 = vector.broadcast %36 : vector<1x128xf32> to vector<256x128xf32>
    %38 = arith.addf %35, %37 : vector<256x128xf32>
    %39 = arith.truncf %38 : vector<256x128xf32> to vector<256x128xbf16>
    %c0_29 = arith.constant 0 : index
    %c0_30 = arith.constant 0 : index
    %40 = vector.load %arg12[%c0_29, %c0_30] : memref<256x128xbf16, #tpu.memory_space<vmem>>, vector<256x128xbf16>
    tpu.vector_store %arg12[%c0_29, %c0_30], %39 {strides = array<i32>} : memref<256x128xbf16, #tpu.memory_space<vmem>>, vector<256x128xbf16>,
    return
  }
  func.func @transform_0(%arg0: i32) -> (i32, i32) {
    %c0_i32 = arith.constant 0 : i32
    %c0_i32_0 = arith.constant 0 : i32
    return %arg0, %c0_i32 : i32, i32
  }
  func.func @transform_1(%arg0: i32) -> (i32, i32) {
    %c0_i32 = arith.constant 0 : i32
    %c0_i32_0 = arith.constant 0 : i32
    %c0_i32_1 = arith.constant 0 : i32
    return %c0_i32, %c0_i32_0 : i32, i32
  }
  func.func @transform_2(%arg0: i32) -> (i32, i32) {
    %c0_i32 = arith.constant 0 : i32
    %c0_i32_0 = arith.constant 0 : i32
    %c0_i32_1 = arith.constant 0 : i32
    return %c0_i32, %c0_i32_0 : i32, i32
  }
  func.func @transform_3(%arg0: i32) -> (i32, i32) {
    %c0_i32 = arith.constant 0 : i32
    %c0_i32_0 = arith.constant 0 : i32
    %c0_i32_1 = arith.constant 0 : i32
    return %c0_i32, %c0_i32_0 : i32, i32
  }
  func.func @transform_4(%arg0: i32) -> (i32, i32) {
    %c0_i32 = arith.constant 0 : i32
    %c0_i32_0 = arith.constant 0 : i32
    %c0_i32_1 = arith.constant 0 : i32
    return %c0_i32, %c0_i32_0 : i32, i32
  }
  func.func @transform_5(%arg0: i32) -> (i32, i32) {
    %c0_i32 = arith.constant 0 : i32
    %c0_i32_0 = arith.constant 0 : i32
    %c0_i32_1 = arith.constant 0 : i32
    return %c0_i32, %c0_i32_0 : i32, i32
  }
  func.func @transform_6(%arg0: i32) -> (i32, i32) {
    %c0_i32 = arith.constant 0 : i32
    %c0_i32_0 = arith.constant 0 : i32
    %c0_i32_1 = arith.constant 0 : i32
    return %c0_i32, %c0_i32_0 : i32, i32
  }
  func.func @transform_7(%arg0: i32) -> (i32, i32) {
    %c0_i32 = arith.constant 0 : i32
    %c0_i32_0 = arith.constant 0 : i32
    %c0_i32_1 = arith.constant 0 : i32
    return %c0_i32, %c0_i32_0 : i32, i32
  }
  func.func @transform_8(%arg0: i32) -> (i32, i32) {
    %c0_i32 = arith.constant 0 : i32
    %c0_i32_0 = arith.constant 0 : i32
    %c0_i32_1 = arith.constant 0 : i32
    return %c0_i32, %c0_i32_0 : i32, i32
  }
  func.func @transform_9(%arg0: i32) -> (i32, i32) {
    %c0_i32 = arith.constant 0 : i32
    %c0_i32_0 = arith.constant 0 : i32
    %c0_i32_1 = arith.constant 0 : i32
    return %c0_i32, %c0_i32_0 : i32, i32
  }
  func.func @transform_10(%arg0: i32) -> (i32, i32) {
    %c0_i32 = arith.constant 0 : i32
    %c0_i32_0 = arith.constant 0 : i32
    %c0_i32_1 = arith.constant 0 : i32
    return %c0_i32, %c0_i32_0 : i32, i32
  }
  func.func @transform_11(%arg0: i32) -> (i32, i32) {
    %c0_i32 = arith.constant 0 : i32
    %c0_i32_0 = arith.constant 0 : i32
    return %arg0, %c0_i32 : i32, i32
  }
}

module attributes {stable_mosaic.version = 11 : i64} {
  func.func @mlp_kernel(%arg0: i32, %arg1: memref<256x784xf32, #tpu.memory_space<vmem>>, %arg2: memref<784x128xbf16, #tpu.memory_space<vmem>>, %arg3: memref<1x128xf32, #tpu.memory_space<vmem>>, %arg4: memref<128x256xbf16, #tpu.memory_space<vmem>>, %arg5: memref<1x256xf32, #tpu.memory_space<vmem>>, %arg6: memref<256x512xbf16, #tpu.memory_space<vmem>>, %arg7: memref<1x512xf32, #tpu.memory_space<vmem>>, %arg8: memref<512x512xbf16, #tpu.memory_space<vmem>>, %arg9: memref<1x512xf32, #tpu.memory_space<vmem>>, %arg10: memref<512x128xbf16, #tpu.memory_space<vmem>>, %arg11: memref<1x128xf32, #tpu.memory_space<vmem>>, %arg12: memref<256x128xbf16, #tpu.memory_space<vmem>>) attributes {dimension_semantics = [#tpu.dimension_semantics<parallel>], iteration_bounds = array<i64: 1>, scalar_prefetch = 0 : i64, scratch_operands = 0 : i64, tpu.core_type = #tpu.core_type<tc>, window_params = [{transform_indices = @transform_0, window_bounds = array<i64: 256, 784>}, {pipeline_mode = #tpu.pipeline_mode<synchronous>, transform_indices = @transform_1, window_bounds = array<i64: 784, 128>}, {pipeline_mode = #tpu.pipeline_mode<synchronous>, transform_indices = @transform_2, window_bounds = array<i64: 1, 128>}, {pipeline_mode = #tpu.pipeline_mode<synchronous>, transform_indices = @transform_3, window_bounds = array<i64: 128, 256>}, {pipeline_mode = #tpu.pipeline_mode<synchronous>, transform_indices = @transform_4, window_bounds = array<i64: 1, 256>}, {pipeline_mode = #tpu.pipeline_mode<synchronous>, transform_indices = @transform_5, window_bounds = array<i64: 256, 512>}, {pipeline_mode = #tpu.pipeline_mode<synchronous>, transform_indices = @transform_6, window_bounds = array<i64: 1, 512>}, {pipeline_mode = #tpu.pipeline_mode<synchronous>, transform_indices = @transform_7, window_bounds = array<i64: 512, 512>}, {pipeline_mode = #tpu.pipeline_mode<synchronous>, transform_indices = @transform_8, window_bounds = array<i64: 1, 512>}, {pipeline_mode = #tpu.pipeline_mode<synchronous>, transform_indices = @transform_9, window_bounds = array<i64: 512, 128>}, {pipeline_mode = #tpu.pipeline_mode<synchronous>, transform_indices = @transform_10, window_bounds = array<i64: 1, 128>}, {transform_indices = @transform_11, window_bounds = array<i64: 256, 128>}]} {
    %c0 = arith.constant 0 : index
    %c0_0 = arith.constant 0 : index
    %0 = vector.load %arg1[%c0, %c0_0] : memref<256x784xf32, #tpu.memory_space<vmem>>, vector<256x784xf32>
    %1 = arith.truncf %0 : vector<256x784xf32> to vector<256x784xbf16>
    %c0_1 = arith.constant 0 : index
    %c0_2 = arith.constant 0 : index
    %2 = vector.load %arg2[%c0_1, %c0_2] : memref<784x128xbf16, #tpu.memory_space<vmem>>, vector<784x128xbf16>
    %cst = arith.constant dense<0.000000e+00> : vector<256x128xf32>
    %3 = tpu.matmul %1, %2, %cst {dimension_numbers = #tpu.dot_dimension_numbers<[1], [0], [0], [1], [0, 0, 1, 1], [], []>} : vector<256x784xbf16>, vector<784x128xbf16>, vector<256x128xf32> -> vector<256x128xf32>
    %c0_3 = arith.constant 0 : index
    %c0_4 = arith.constant 0 : index
    %4 = vector.load %arg3[%c0_3, %c0_4] : memref<1x128xf32, #tpu.memory_space<vmem>>, vector<1x128xf32>
    %5 = vector.broadcast %4 : vector<1x128xf32> to vector<256x128xf32>
    %6 = arith.addf %3, %5 : vector<256x128xf32>
    %cst_5 = arith.constant 0.000000e+00 : f32
    %7 = vector.broadcast %cst_5 : f32 to vector<256x128xf32>
    %8 = arith.maximumf %6, %7 : vector<256x128xf32>
    %9 = arith.truncf %8 : vector<256x128xf32> to vector<256x128xbf16>
    %c0_6 = arith.constant 0 : index
    %c0_7 = arith.constant 0 : index
    %10 = vector.load %arg4[%c0_6, %c0_7] : memref<128x256xbf16, #tpu.memory_space<vmem>>, vector<128x256xbf16>
    %cst_8 = arith.constant dense<0.000000e+00> : vector<256x256xf32>
    %11 = tpu.matmul %9, %10, %cst_8 {dimension_numbers = #tpu.dot_dimension_numbers<[1], [0], [0], [1], [0, 0, 1, 1], [], []>} : vector<256x128xbf16>, vector<128x256xbf16>, vector<256x256xf32> -> vector<256x256xf32>
    %c0_9 = arith.constant 0 : index
    %c0_10 = arith.constant 0 : index
    %12 = vector.load %arg5[%c0_9, %c0_10] : memref<1x256xf32, #tpu.memory_space<vmem>>, vector<1x256xf32>
    %13 = vector.broadcast %12 : vector<1x256xf32> to vector<256x256xf32>
    %14 = arith.addf %11, %13 : vector<256x256xf32>
    %cst_11 = arith.constant 0.000000e+00 : f32
    %15 = vector.broadcast %cst_11 : f32 to vector<256x256xf32>
    %16 = arith.maximumf %14, %15 : vector<256x256xf32>
    %17 = arith.truncf %16 : vector<256x256xf32> to vector<256x256xbf16>
    %c0_12 = arith.constant 0 : index
    %c0_13 = arith.constant 0 : index
    %18 = vector.load %arg6[%c0_12, %c0_13] : memref<256x512xbf16, #tpu.memory_space<vmem>>, vector<256x512xbf16>
    %cst_14 = arith.constant dense<0.000000e+00> : vector<256x512xf32>
    %19 = tpu.matmul %17, %18, %cst_14 {dimension_numbers = #tpu.dot_dimension_numbers<[1], [0], [0], [1], [0, 0, 1, 1], [], []>} : vector<256x256xbf16>, vector<256x512xbf16>, vector<256x512xf32> -> vector<256x512xf32>
    %c0_15 = arith.constant 0 : index
    %c0_16 = arith.constant 0 : index
    %20 = vector.load %arg7[%c0_15, %c0_16] : memref<1x512xf32, #tpu.memory_space<vmem>>, vector<1x512xf32>
    %21 = vector.broadcast %20 : vector<1x512xf32> to vector<256x512xf32>
    %22 = arith.addf %19, %21 : vector<256x512xf32>
    %cst_17 = arith.constant 0.000000e+00 : f32
    %23 = vector.broadcast %cst_17 : f32 to vector<256x512xf32>
    %24 = arith.maximumf %22, %23 : vector<256x512xf32>
    %25 = arith.truncf %24 : vector<256x512xf32> to vector<256x512xbf16>
    %c0_18 = arith.constant 0 : index
    %c0_19 = arith.constant 0 : index
    %26 = vector.load %arg8[%c0_18, %c0_19] : memref<512x512xbf16, #tpu.memory_space<vmem>>, vector<512x512xbf16>
    %cst_20 = arith.constant dense<0.000000e+00> : vector<256x512xf32>
    %27 = tpu.matmul %25, %26, %cst_20 {dimension_numbers = #tpu.dot_dimension_numbers<[1], [0], [0], [1], [0, 0, 1, 1], [], []>} : vector<256x512xbf16>, vector<512x512xbf16>, vector<256x512xf32> -> vector<256x512xf32>
    %c0_21 = arith.constant 0 : index
    %c0_22 = arith.constant 0 : index
    %28 = vector.load %arg9[%c0_21, %c0_22] : memref<1x512xf32, #tpu.memory_space<vmem>>, vector<1x512xf32>
    %29 = vector.broadcast %28 : vector<1x512xf32> to vector<256x512xf32>
    %30 = arith.addf %27, %29 : vector<256x512xf32>
    %cst_23 = arith.constant 0.000000e+00 : f32
    %31 = vector.broadcast %cst_23 : f32 to vector<256x512xf32>
    %32 = arith.maximumf %30, %31 : vector<256x512xf32>
    %33 = arith.truncf %32 : vector<256x512xf32> to vector<256x512xbf16>
    %c0_24 = arith.constant 0 : index
    %c0_25 = arith.constant 0 : index
    %34 = vector.load %arg10[%c0_24, %c0_25] : memref<512x128xbf16, #tpu.memory_space<vmem>>, vector<512x128xbf16>
    %cst_26 = arith.constant dense<0.000000e+00> : vector<256x128xf32>
    %35 = tpu.matmul %33, %34, %cst_26 {dimension_numbers = #tpu.dot_dimension_numbers<[1], [0], [0], [1], [0, 0, 1, 1], [], []>} : vector<256x512xbf16>, vector<512x128xbf16>, vector<256x128xf32> -> vector<256x128xf32>
    %c0_27 = arith.constant 0 : index
    %c0_28 = arith.constant 0 : index
    %36 = vector.load %arg11[%c0_27, %c0_28] : memref<1x128xf32, #tpu.memory_space<vmem>>, vector<1x128xf32>
    %37 = vector.broadcast %36 : vector<1x128xf32> to vector<256x128xf32>
    %38 = arith.addf %35, %37 : vector<256x128xf32>
    %39 = arith.truncf %38 : vector<256x128xf32> to vector<256x128xbf16>
    %c0_29 = arith.constant 0 : index
    %c0_30 = arith.constant 0 : index
    %40 = vector.load %arg12[%c0_29, %c0_30] : memref<256x128xbf16, #tpu.memory_space<vmem>>, vector<256x128xbf16>
    tpu.vector_store %arg12[%c0_29, %c0_30], %39 {strides = array<i32>} : memref<256x128xbf16, #tpu.memory_space<vmem>>, vector<256x128xbf16>,
    return
  }
  func.func @transform_0(%arg0: i32) -> (i32, i32) {
    %c0_i32 = arith.constant 0 : i32
    %c0_i32_0 = arith.constant 0 : i32
    return %arg0, %c0_i32 : i32, i32
  }
  func.func @transform_1(%arg0: i32) -> (i32, i32) {
    %c0_i32 = arith.constant 0 : i32
    %c0_i32_0 = arith.constant 0 : i32
    %c0_i32_1 = arith.constant 0 : i32
    return %c0_i32, %c0_i32_0 : i32, i32
  }
  func.func @transform_2(%arg0: i32) -> (i32, i32) {
    %c0_i32 = arith.constant 0 : i32
    %c0_i32_0 = arith.constant 0 : i32
    %c0_i32_1 = arith.constant 0 : i32
    return %c0_i32, %c0_i32_0 : i32, i32
  }
  func.func @transform_3(%arg0: i32) -> (i32, i32) {
    %c0_i32 = arith.constant 0 : i32
    %c0_i32_0 = arith.constant 0 : i32
    %c0_i32_1 = arith.constant 0 : i32
    return %c0_i32, %c0_i32_0 : i32, i32
  }
  func.func @transform_4(%arg0: i32) -> (i32, i32) {
    %c0_i32 = arith.constant 0 : i32
    %c0_i32_0 = arith.constant 0 : i32
    %c0_i32_1 = arith.constant 0 : i32
    return %c0_i32, %c0_i32_0 : i32, i32
  }
  func.func @transform_5(%arg0: i32) -> (i32, i32) {
    %c0_i32 = arith.constant 0 : i32
    %c0_i32_0 = arith.constant 0 : i32
    %c0_i32_1 = arith.constant 0 : i32
    return %c0_i32, %c0_i32_0 : i32, i32
  }
  func.func @transform_6(%arg0: i32) -> (i32, i32) {
    %c0_i32 = arith.constant 0 : i32
    %c0_i32_0 = arith.constant 0 : i32
    %c0_i32_1 = arith.constant 0 : i32
    return %c0_i32, %c0_i32_0 : i32, i32
  }
  func.func @transform_7(%arg0: i32) -> (i32, i32) {
    %c0_i32 = arith.constant 0 : i32
    %c0_i32_0 = arith.constant 0 : i32
    %c0_i32_1 = arith.constant 0 : i32
    return %c0_i32, %c0_i32_0 : i32, i32
  }
  func.func @transform_8(%arg0: i32) -> (i32, i32) {
    %c0_i32 = arith.constant 0 : i32
    %c0_i32_0 = arith.constant 0 : i32
    %c0_i32_1 = arith.constant 0 : i32
    return %c0_i32, %c0_i32_0 : i32, i32
  }
  func.func @transform_9(%arg0: i32) -> (i32, i32) {
    %c0_i32 = arith.constant 0 : i32
    %c0_i32_0 = arith.constant 0 : i32
    %c0_i32_1 = arith.constant 0 : i32
    return %c0_i32, %c0_i32_0 : i32, i32
  }
  func.func @transform_10(%arg0: i32) -> (i32, i32) {
    %c0_i32 = arith.constant 0 : i32
    %c0_i32_0 = arith.constant 0 : i32
    %c0_i32_1 = arith.constant 0 : i32
    return %c0_i32, %c0_i32_0 : i32, i32
  }
  func.func @transform_11(%arg0: i32) -> (i32, i32) {
    %c0_i32 = arith.constant 0 : i32
    %c0_i32_0 = arith.constant 0 : i32
    return %arg0, %c0_i32 : i32, i32
  }
}

</mosaic_0001>

<llo_original>
// kernel: tpu_custom_call.1
$region0: #{tpu_custom_call.1}
  #allocation0 [shape = 'u32[]', space=smem, size = 0x4, offset = 0x4, fixed_abs, tag = 'smem constant byte address 0x4 - core index']
  #allocation1 [shape = 'u32[144,128]{1,0:T(1,128)}', space=vmem, size = 0x12000, scoped, tag = 'internal scratch']
  %s0 = inlined_call_operand.vmem [shape: f32[256,784], index: 0, kind: input, shape index: {}]
  %s1 = inlined_call_operand.vmem [shape: bf16[784,128], index: 1, kind: input, shape index: {}]
  %s2 = inlined_call_operand.vmem [shape: f32[1,128], index: 2, kind: input, shape index: {}]
  %s3 = inlined_call_operand.vmem [shape: bf16[128,256], index: 3, kind: input, shape index: {}]
  %s4 = inlined_call_operand.vmem [shape: f32[1,256], index: 4, kind: input, shape index: {}]
  %s5 = inlined_call_operand.vmem [shape: bf16[256,512], index: 5, kind: input, shape index: {}]
  %s6 = inlined_call_operand.vmem [shape: f32[1,512], index: 6, kind: input, shape index: {}]
  %s7 = inlined_call_operand.vmem [shape: bf16[512,512], index: 7, kind: input, shape index: {}]
  %s8 = inlined_call_operand.vmem [shape: f32[1,512], index: 8, kind: input, shape index: {}]
  %s9 = inlined_call_operand.vmem [shape: bf16[512,128], index: 9, kind: input, shape index: {}]
  %s10 = inlined_call_operand.vmem [shape: f32[1,128], index: 10, kind: input, shape index: {}]
  %s11 = inlined_call_operand.hbm [shape: bf16[256,128], index: 11, kind: output, shape index: {}]
  %s12 = sld [smem:[#allocation0]]
  $region54: #{tpu_custom_call.1} parent=0
    _
  %s14 = ssub.s32 1, %s12
  %s15 = scalar_select 0, %s14, %s12
  $region1: #{tpu_custom_call.1} parent=0
    #allocation2 [shape = 'u8[65536]{0}', space=vmem, size = 0x10000, scoped, tag = 'output window, operand 0, single buffered']
    #allocation3 [shape = 's32[1]{0}', space=sflag, size = 0x4, scoped, tag = 'scoped memory for tpu_custom_call.1']
    %16 = vsyncpa [#allocation3], 0
    // Predicated region
    $region2: #{tpu_custom_call.1} parent=1 // pred_check
      _
    $region3: #{tpu_custom_call.1} parent=1 // pred_check_branch
      %18 = sbr.rel (0) target = $region5
    $region4: #{tpu_custom_call.1} parent=1 // pred_region
      _
    $region5: #{tpu_custom_call.1} parent=1 // pred_fallthru
      _
    // Predicated region
    $region6: #{tpu_custom_call.1} parent=1 // pred_check
      _
    $region7: #{tpu_custom_call.1} parent=1 // pred_check_branch
      %20 = sbr.rel (0) target = $region9
    $region8: #{tpu_custom_call.1} parent=1 // pred_region
      _
    $region9: #{tpu_custom_call.1} parent=1 // pred_fallthru
      _
    // Predicated region
    $region10: #{tpu_custom_call.1} parent=1 // pred_check
      _
    $region11: #{tpu_custom_call.1} parent=1 // pred_check_branch
      %22 = sbr.rel (0) target = $region13
    $region12: #{tpu_custom_call.1} parent=1 // pred_region
      _
    $region13: #{tpu_custom_call.1} parent=1 // pred_fallthru
      _
    // Predicated region
    $region14: #{tpu_custom_call.1} parent=1 // pred_check
      _
    $region15: #{tpu_custom_call.1} parent=1 // pred_check_branch
      %24 = sbr.rel (0) target = $region17
    $region16: #{tpu_custom_call.1} parent=1 // pred_region
      _
    $region17: #{tpu_custom_call.1} parent=1 // pred_fallthru
      _
    // Predicated region
    $region18: #{tpu_custom_call.1} parent=1 // pred_check
      _
    $region19: #{tpu_custom_call.1} parent=1 // pred_check_branch
      %26 = sbr.rel (0) target = $region21
    $region20: #{tpu_custom_call.1} parent=1 // pred_region
      _
    $region21: #{tpu_custom_call.1} parent=1 // pred_fallthru
      _
    // Predicated region
    $region22: #{tpu_custom_call.1} parent=1 // pred_check
      _
    $region23: #{tpu_custom_call.1} parent=1 // pred_check_branch
      %28 = sbr.rel (0) target = $region25
    $region24: #{tpu_custom_call.1} parent=1 // pred_region
      _
    $region25: #{tpu_custom_call.1} parent=1 // pred_fallthru
      _
    // Predicated region
    $region26: #{tpu_custom_call.1} parent=1 // pred_check
      _
    $region27: #{tpu_custom_call.1} parent=1 // pred_check_branch
      %30 = sbr.rel (0) target = $region29
    $region28: #{tpu_custom_call.1} parent=1 // pred_region
      _
    $region29: #{tpu_custom_call.1} parent=1 // pred_fallthru
      _
    // Predicated region
    $region30: #{tpu_custom_call.1} parent=1 // pred_check
      _
    $region31: #{tpu_custom_call.1} parent=1 // pred_check_branch
      %32 = sbr.rel (0) target = $region33
    $region32: #{tpu_custom_call.1} parent=1 // pred_region
      _
    $region33: #{tpu_custom_call.1} parent=1 // pred_fallthru
      _
    // Predicated region
    $region34: #{tpu_custom_call.1} parent=1 // pred_check
      _
    $region35: #{tpu_custom_call.1} parent=1 // pred_check_branch
      %34 = sbr.rel (0) target = $region37
    $region36: #{tpu_custom_call.1} parent=1 // pred_region
      _
    $region37: #{tpu_custom_call.1} parent=1 // pred_fallthru
      _
    // Predicated region
    $region38: #{tpu_custom_call.1} parent=1 // pred_check
      _
    $region39: #{tpu_custom_call.1} parent=1 // pred_check_branch
      %36 = sbr.rel (0) target = $region41
    $region40: #{tpu_custom_call.1} parent=1 // pred_region
      _
    $region41: #{tpu_custom_call.1} parent=1 // pred_fallthru
      _
    // Predicated region
    $region42: #{tpu_custom_call.1} parent=1 // pred_check
      _
    $region43: #{tpu_custom_call.1} parent=1 // pred_check_branch
      %38 = sbr.rel (0) target = $region45
    $region44: #{tpu_custom_call.1} parent=1 // pred_region
      _
    $region45: #{tpu_custom_call.1} parent=1 // pred_fallthru
      _
    %v40 = vld [vmem:[%s0] sm:$0xff]
    %v41 = vld [vmem:[%s0 + $0x8] sm:$0xff]
    %v42 = vld [vmem:[%s0 + $0x10] sm:$0xff]
    %v43 = vld [vmem:[%s0 + $0x18] sm:$0xff]
    %v44 = vld [vmem:[%s0 + $0x20] sm:$0xff]
    %v45 = vld [vmem:[%s0 + $0x28] sm:$0xff]
    %v46 = vld [vmem:[%s0 + $0x30] sm:$0xff]
    %v47 = vld [vmem:[%s0 + $0x38] sm:$0xff]
    %v48 = vld [vmem:[%s0 + $0x40] sm:$0xff]
    %v49 = vld [vmem:[%s0 + $0x48] sm:$0xff]
    %v50 = vld [vmem:[%s0 + $0x50] sm:$0xff]
    %v51 = vld [vmem:[%s0 + $0x58] sm:$0xff]
    %v52 = vld [vmem:[%s0 + $0x60] sm:$0xff]
    %v53 = vld [vmem:[%s0 + $0x68] sm:$0xff]
    %v54 = vld [vmem:[%s0 + $0x70] sm:$0xff]
    %v55 = vld [vmem:[%s0 + $0x78] sm:$0xff]
    %v56 = vld [vmem:[%s0 + $0x80] sm:$0xff]
    %v57 = vld [vmem:[%s0 + $0x88] sm:$0xff]
    %v58 = vld [vmem:[%s0 + $0x90] sm:$0xff]
    %v59 = vld [vmem:[%s0 + $0x98] sm:$0xff]
    %v60 = vld [vmem:[%s0 + $0xa0] sm:$0xff]
    %v61 = vld [vmem:[%s0 + $0xa8] sm:$0xff]
    %v62 = vld [vmem:[%s0 + $0xb0] sm:$0xff]
    %v63 = vld [vmem:[%s0 + $0xb8] sm:$0xff]
    %v64 = vld [vmem:[%s0 + $0xc0] sm:$0xff]
    %v65 = vld [vmem:[%s0 + $0xc8] sm:$0xff]
    %v66 = vld [vmem:[%s0 + $0xd0] sm:$0xff]
    %v67 = vld [vmem:[%s0 + $0xd8] sm:$0xff]
    %v68 = vld [vmem:[%s0 + $0xe0] sm:$0xff]
    %v69 = vld [vmem:[%s0 + $0xe8] sm:$0xff]
    %v70 = vld [vmem:[%s0 + $0xf0] sm:$0xff]
    %v71 = vld [vmem:[%s0 + $0xf8] sm:$0xff]
    %v72 = vld [vmem:[%s0 + $0x100] sm:$0xff]
    %v73 = vld [vmem:[%s0 + $0x108] sm:$0xff]
    %v74 = vld [vmem:[%s0 + $0x110] sm:$0xff]
    %v75 = vld [vmem:[%s0 + $0x118] sm:$0xff]
    %v76 = vld [vmem:[%s0 + $0x120] sm:$0xff]
    %v77 = vld [vmem:[%s0 + $0x128] sm:$0xff]
    %v78 = vld [vmem:[%s0 + $0x130] sm:$0xff]
    %v79 = vld [vmem:[%s0 + $0x138] sm:$0xff]
    %v80 = vld [vmem:[%s0 + $0x140] sm:$0xff]
    %v81 = vld [vmem:[%s0 + $0x148] sm:$0xff]
    %v82 = vld [vmem:[%s0 + $0x150] sm:$0xff]
    %v83 = vld [vmem:[%s0 + $0x158] sm:$0xff]
    %v84 = vld [vmem:[%s0 + $0x160] sm:$0xff]
    %v85 = vld [vmem:[%s0 + $0x168] sm:$0xff]
    %v86 = vld [vmem:[%s0 + $0x170] sm:$0xff]
    %v87 = vld [vmem:[%s0 + $0x178] sm:$0xff]
    %v88 = vld [vmem:[%s0 + $0x180] sm:$0xff]
    %v89 = vld [vmem:[%s0 + $0x188] sm:$0xff]
    %v90 = vld [vmem:[%s0 + $0x190] sm:$0xff]
    %v91 = vld [vmem:[%s0 + $0x198] sm:$0xff]
    %v92 = vld [vmem:[%s0 + $0x1a0] sm:$0xff]
    %v93 = vld [vmem:[%s0 + $0x1a8] sm:$0xff]
    %v94 = vld [vmem:[%s0 + $0x1b0] sm:$0xff]
    %v95 = vld [vmem:[%s0 + $0x1b8] sm:$0xff]
    %v96 = vld [vmem:[%s0 + $0x1c0] sm:$0xff]
    %v97 = vld [vmem:[%s0 + $0x1c8] sm:$0xff]
    %v98 = vld [vmem:[%s0 + $0x1d0] sm:$0xff]
    %v99 = vld [vmem:[%s0 + $0x1d8] sm:$0xff]
    %v100 = vld [vmem:[%s0 + $0x1e0] sm:$0xff]
    %v101 = vld [vmem:[%s0 + $0x1e8] sm:$0xff]
    %v102 = vld [vmem:[%s0 + $0x1f0] sm:$0xff]
    %v103 = vld [vmem:[%s0 + $0x1f8] sm:$0xff]
    %v104 = vld [vmem:[%s0 + $0x200] sm:$0xff]
    %v105 = vld [vmem:[%s0 + $0x208] sm:$0xff]
    %v106 = vld [vmem:[%s0 + $0x210] sm:$0xff]
    %v107 = vld [vmem:[%s0 + $0x218] sm:$0xff]
    %v108 = vld [vmem:[%s0 + $0x220] sm:$0xff]
    %v109 = vld [vmem:[%s0 + $0x228] sm:$0xff]
    %v110 = vld [vmem:[%s0 + $0x230] sm:$0xff]
    %v111 = vld [vmem:[%s0 + $0x238] sm:$0xff]
    %v112 = vld [vmem:[%s0 + $0x240] sm:$0xff]
    %v113 = vld [vmem:[%s0 + $0x248] sm:$0xff]
    %v114 = vld [vmem:[%s0 + $0x250] sm:$0xff]
    %v115 = vld [vmem:[%s0 + $0x258] sm:$0xff]
    %v116 = vld [vmem:[%s0 + $0x260] sm:$0xff]
    %v117 = vld [vmem:[%s0 + $0x268] sm:$0xff]
    %v118 = vld [vmem:[%s0 + $0x270] sm:$0xff]
    %v119 = vld [vmem:[%s0 + $0x278] sm:$0xff]
    %v120 = vld [vmem:[%s0 + $0x280] sm:$0xff]
    %v121 = vld [vmem:[%s0 + $0x288] sm:$0xff]
    %v122 = vld [vmem:[%s0 + $0x290] sm:$0xff]
    %v123 = vld [vmem:[%s0 + $0x298] sm:$0xff]
    %v124 = vld [vmem:[%s0 + $0x2a0] sm:$0xff]
    %v125 = vld [vmem:[%s0 + $0x2a8] sm:$0xff]
    %v126 = vld [vmem:[%s0 + $0x2b0] sm:$0xff]
    %v127 = vld [vmem:[%s0 + $0x2b8] sm:$0xff]
    %v128 = vld [vmem:[%s0 + $0x2c0] sm:$0xff]
    %v129 = vld [vmem:[%s0 + $0x2c8] sm:$0xff]
    %v130 = vld [vmem:[%s0 + $0x2d0] sm:$0xff]
    %v131 = vld [vmem:[%s0 + $0x2d8] sm:$0xff]
    %v132 = vld [vmem:[%s0 + $0x2e0] sm:$0xff]
    %v133 = vld [vmem:[%s0 + $0x2e8] sm:$0xff]
    %v134 = vld [vmem:[%s0 + $0x2f0] sm:$0xff]
    %v135 = vld [vmem:[%s0 + $0x2f8] sm:$0xff]
    %v136 = vld [vmem:[%s0 + $0x300] sm:$0xff]
    %v137 = vld [vmem:[%s0 + $0x308] sm:$0xff]
    %v138 = vld [vmem:[%s0 + $0x310] sm:$0xff]
    %v139 = vld [vmem:[%s0 + $0x318] sm:$0xff]
    %v140 = vld [vmem:[%s0 + $0x320] sm:$0xff]
    %v141 = vld [vmem:[%s0 + $0x328] sm:$0xff]
    %v142 = vld [vmem:[%s0 + $0x330] sm:$0xff]
    %v143 = vld [vmem:[%s0 + $0x338] sm:$0xff]
    %v144 = vld [vmem:[%s0 + $0x340] sm:$0xff]
    %v145 = vld [vmem:[%s0 + $0x348] sm:$0xff]
    %v146 = vld [vmem:[%s0 + $0x350] sm:$0xff]
    %v147 = vld [vmem:[%s0 + $0x358] sm:$0xff]
    %v148 = vld [vmem:[%s0 + $0x360] sm:$0xff]
    %v149 = vld [vmem:[%s0 + $0x368] sm:$0xff]
    %v150 = vld [vmem:[%s0 + $0x370] sm:$0xff]
    %v151 = vld [vmem:[%s0 + $0x378] sm:$0xff]
    %v152 = vld [vmem:[%s0 + $0x380] sm:$0xff]
    %v153 = vld [vmem:[%s0 + $0x388] sm:$0xff]
    %v154 = vld [vmem:[%s0 + $0x390] sm:$0xff]
    %v155 = vld [vmem:[%s0 + $0x398] sm:$0xff]
    %v156 = vld [vmem:[%s0 + $0x3a0] sm:$0xff]
    %v157 = vld [vmem:[%s0 + $0x3a8] sm:$0xff]
    %v158 = vld [vmem:[%s0 + $0x3b0] sm:$0xff]
    %v159 = vld [vmem:[%s0 + $0x3b8] sm:$0xff]
    %v160 = vld [vmem:[%s0 + $0x3c0] sm:$0xff]
    %v161 = vld [vmem:[%s0 + $0x3c8] sm:$0xff]
    %v162 = vld [vmem:[%s0 + $0x3d0] sm:$0xff]
    %v163 = vld [vmem:[%s0 + $0x3d8] sm:$0xff]
    %v164 = vld [vmem:[%s0 + $0x3e0] sm:$0xff]
    %v165 = vld [vmem:[%s0 + $0x3e8] sm:$0xff]
    %v166 = vld [vmem:[%s0 + $0x3f0] sm:$0xff]
    %v167 = vld [vmem:[%s0 + $0x3f8] sm:$0xff]
    %v168 = vld [vmem:[%s0 + $0x400] sm:$0xff]
    %v169 = vld [vmem:[%s0 + $0x408] sm:$0xff]
    %v170 = vld [vmem:[%s0 + $0x410] sm:$0xff]
    %v171 = vld [vmem:[%s0 + $0x418] sm:$0xff]
    %v172 = vld [vmem:[%s0 + $0x420] sm:$0xff]
    %v173 = vld [vmem:[%s0 + $0x428] sm:$0xff]
    %v174 = vld [vmem:[%s0 + $0x430] sm:$0xff]
    %v175 = vld [vmem:[%s0 + $0x438] sm:$0xff]
    %v176 = vld [vmem:[%s0 + $0x440] sm:$0xff]
    %v177 = vld [vmem:[%s0 + $0x448] sm:$0xff]
    %v178 = vld [vmem:[%s0 + $0x450] sm:$0xff]
    %v179 = vld [vmem:[%s0 + $0x458] sm:$0xff]
    %v180 = vld [vmem:[%s0 + $0x460] sm:$0xff]
    %v181 = vld [vmem:[%s0 + $0x468] sm:$0xff]
    %v182 = vld [vmem:[%s0 + $0x470] sm:$0xff]
    %v183 = vld [vmem:[%s0 + $0x478] sm:$0xff]
    %v184 = vld [vmem:[%s0 + $0x480] sm:$0xff]
    %v185 = vld [vmem:[%s0 + $0x488] sm:$0xff]
    %v186 = vld [vmem:[%s0 + $0x490] sm:$0xff]
    %v187 = vld [vmem:[%s0 + $0x498] sm:$0xff]
    %v188 = vld [vmem:[%s0 + $0x4a0] sm:$0xff]
    %v189 = vld [vmem:[%s0 + $0x4a8] sm:$0xff]
    %v190 = vld [vmem:[%s0 + $0x4b0] sm:$0xff]
    %v191 = vld [vmem:[%s0 + $0x4b8] sm:$0xff]
    %v192 = vld [vmem:[%s0 + $0x4c0] sm:$0xff]
    %v193 = vld [vmem:[%s0 + $0x4c8] sm:$0xff]
    %v194 = vld [vmem:[%s0 + $0x4d0] sm:$0xff]
    %v195 = vld [vmem:[%s0 + $0x4d8] sm:$0xff]
    %v196 = vld [vmem:[%s0 + $0x4e0] sm:$0xff]
    %v197 = vld [vmem:[%s0 + $0x4e8] sm:$0xff]
    %v198 = vld [vmem:[%s0 + $0x4f0] sm:$0xff]
    %v199 = vld [vmem:[%s0 + $0x4f8] sm:$0xff]
    %v200 = vld [vmem:[%s0 + $0x500] sm:$0xff]
    %v201 = vld [vmem:[%s0 + $0x508] sm:$0xff]
    %v202 = vld [vmem:[%s0 + $0x510] sm:$0xff]
    %v203 = vld [vmem:[%s0 + $0x518] sm:$0xff]
    %v204 = vld [vmem:[%s0 + $0x520] sm:$0xff]
    %v205 = vld [vmem:[%s0 + $0x528] sm:$0xff]
    %v206 = vld [vmem:[%s0 + $0x530] sm:$0xff]
    %v207 = vld [vmem:[%s0 + $0x538] sm:$0xff]
    %v208 = vld [vmem:[%s0 + $0x540] sm:$0xff]
    %v209 = vld [vmem:[%s0 + $0x548] sm:$0xff]
    %v210 = vld [vmem:[%s0 + $0x550] sm:$0xff]
    %v211 = vld [vmem:[%s0 + $0x558] sm:$0xff]
    %v212 = vld [vmem:[%s0 + $0x560] sm:$0xff]
    %v213 = vld [vmem:[%s0 + $0x568] sm:$0xff]
    %v214 = vld [vmem:[%s0 + $0x570] sm:$0xff]
    %v215 = vld [vmem:[%s0 + $0x578] sm:$0xff]
    %v216 = vld [vmem:[%s0 + $0x580] sm:$0xff]
    %v217 = vld [vmem:[%s0 + $0x588] sm:$0xff]
    %v218 = vld [vmem:[%s0 + $0x590] sm:$0xff]
    %v219 = vld [vmem:[%s0 + $0x598] sm:$0xff]
    %v220 = vld [vmem:[%s0 + $0x5a0] sm:$0xff]
    %v221 = vld [vmem:[%s0 + $0x5a8] sm:$0xff]
    %v222 = vld [vmem:[%s0 + $0x5b0] sm:$0xff]
    %v223 = vld [vmem:[%s0 + $0x5b8] sm:$0xff]
    %v224 = vld [vmem:[%s0 + $0x5c0] sm:$0xff]
    %v225 = vld [vmem:[%s0 + $0x5c8] sm:$0xff]
    %v226 = vld [vmem:[%s0 + $0x5d0] sm:$0xff]
    %v227 = vld [vmem:[%s0 + $0x5d8] sm:$0xff]
    %v228 = vld [vmem:[%s0 + $0x5e0] sm:$0xff]
    %v229 = vld [vmem:[%s0 + $0x5e8] sm:$0xff]
    %v230 = vld [vmem:[%s0 + $0x5f0] sm:$0xff]
    %v231 = vld [vmem:[%s0 + $0x5f8] sm:$0xff]
    %v232 = vld [vmem:[%s0 + $0x600] sm:$0xff]
    %v233 = vld [vmem:[%s0 + $0x608] sm:$0xff]
    %v234 = vld [vmem:[%s0 + $0x610] sm:$0xff]
    %v235 = vld [vmem:[%s0 + $0x618] sm:$0xff]
    %v236 = vld [vmem:[%s0 + $0x620] sm:$0xff]
    %v237 = vld [vmem:[%s0 + $0x628] sm:$0xff]
    %v238 = vld [vmem:[%s0 + $0x630] sm:$0xff]
    %v239 = vld [vmem:[%s0 + $0x638] sm:$0xff]
    %v240 = vld [vmem:[%s0 + $0x640] sm:$0xff]
    %v241 = vld [vmem:[%s0 + $0x648] sm:$0xff]
    %v242 = vld [vmem:[%s0 + $0x650] sm:$0xff]
    %v243 = vld [vmem:[%s0 + $0x658] sm:$0xff]
    %v244 = vld [vmem:[%s0 + $0x660] sm:$0xff]
    %v245 = vld [vmem:[%s0 + $0x668] sm:$0xff]
    %v246 = vld [vmem:[%s0 + $0x670] sm:$0xff]
    %v247 = vld [vmem:[%s0 + $0x678] sm:$0xff]
    %v248 = vld [vmem:[%s0 + $0x680] sm:$0xff]
    %v249 = vld [vmem:[%s0 + $0x688] sm:$0xff]
    %v250 = vld [vmem:[%s0 + $0x690] sm:$0xff]
    %v251 = vld [vmem:[%s0 + $0x698] sm:$0xff]
    %v252 = vld [vmem:[%s0 + $0x6a0] sm:$0xff]
    %v253 = vld [vmem:[%s0 + $0x6a8] sm:$0xff]
    %v254 = vld [vmem:[%s0 + $0x6b0] sm:$0xff]
    %v255 = vld [vmem:[%s0 + $0x6b8] sm:$0xff]
    %v256 = vld [vmem:[%s0 + $0x6c0] sm:$0xff]
    %v257 = vld [vmem:[%s0 + $0x6c8] sm:$0xff]
    %v258 = vld [vmem:[%s0 + $0x6d0] sm:$0xff]
    %v259 = vld [vmem:[%s0 + $0x6d8] sm:$0xff]
    %v260 = vld [vmem:[%s0 + $0x6e0] sm:$0xff]
    %v261 = vld [vmem:[%s0 + $0x6e8] sm:$0xff]
    %v262 = vld [vmem:[%s0 + $0x6f0] sm:$0xff]
    %v263 = vld [vmem:[%s0 + $0x6f8] sm:$0xff]
    %v264 = vpack.c.bf16 %v47, %v40
    %v265 = vpack.c.bf16 %v48, %v41
    %v266 = vpack.c.bf16 %v49, %v42
    %v267 = vpack.c.bf16 %v50, %v43
    %v268 = vpack.c.bf16 %v51, %v44
    %v269 = vpack.c.bf16 %v52, %v45
    %v270 = vpack.c.bf16 %v53, %v46
    %v271 = vpack.c.bf16 %v61, %v54
    %v272 = vpack.c.bf16 %v62, %v55
    %v273 = vpack.c.bf16 %v63, %v56
    %v274 = vpack.c.bf16 %v64, %v57
    %v275 = vpack.c.bf16 %v65, %v58
    %v276 = vpack.c.bf16 %v66, %v59
    %v277 = vpack.c.bf16 %v67, %v60
    %v278 = vpack.c.bf16 %v75, %v68
    %v279 = vpack.c.bf16 %v76, %v69
    %v280 = vpack.c.bf16 %v77, %v70
    %v281 = vpack.c.bf16 %v78, %v71
    %v282 = vpack.c.bf16 %v79, %v72
    %v283 = vpack.c.bf16 %v80, %v73
    %v284 = vpack.c.bf16 %v81, %v74
    %v285 = vpack.c.bf16 %v89, %v82
    %v286 = vpack.c.bf16 %v90, %v83
    %v287 = vpack.c.bf16 %v91, %v84
    %v288 = vpack.c.bf16 %v92, %v85
    %v289 = vpack.c.bf16 %v93, %v86
    %v290 = vpack.c.bf16 %v94, %v87
    %v291 = vpack.c.bf16 %v95, %v88
    %v292 = vpack.c.bf16 %v103, %v96
    %v293 = vpack.c.bf16 %v104, %v97
    %v294 = vpack.c.bf16 %v105, %v98
    %v295 = vpack.c.bf16 %v106, %v99
    %v296 = vpack.c.bf16 %v107, %v100
    %v297 = vpack.c.bf16 %v108, %v101
    %v298 = vpack.c.bf16 %v109, %v102
    %v299 = vpack.c.bf16 %v117, %v110
    %v300 = vpack.c.bf16 %v118, %v111
    %v301 = vpack.c.bf16 %v119, %v112
    %v302 = vpack.c.bf16 %v120, %v113
    %v303 = vpack.c.bf16 %v121, %v114
    %v304 = vpack.c.bf16 %v122, %v115
    %v305 = vpack.c.bf16 %v123, %v116
    %v306 = vpack.c.bf16 %v131, %v124
    %v307 = vpack.c.bf16 %v132, %v125
    %v308 = vpack.c.bf16 %v133, %v126
    %v309 = vpack.c.bf16 %v134, %v127
    %v310 = vpack.c.bf16 %v135, %v128
    %v311 = vpack.c.bf16 %v136, %v129
    %v312 = vpack.c.bf16 %v137, %v130
    %v313 = vpack.c.bf16 %v145, %v138
    %v314 = vpack.c.bf16 %v146, %v139
    %v315 = vpack.c.bf16 %v147, %v140
    %v316 = vpack.c.bf16 %v148, %v141
    %v317 = vpack.c.bf16 %v149, %v142
    %v318 = vpack.c.bf16 %v150, %v143
    %v319 = vpack.c.bf16 %v151, %v144
    %v320 = vpack.c.bf16 %v159, %v152
    %v321 = vpack.c.bf16 %v160, %v153
    %v322 = vpack.c.bf16 %v161, %v154
    %v323 = vpack.c.bf16 %v162, %v155
    %v324 = vpack.c.bf16 %v163, %v156
    %v325 = vpack.c.bf16 %v164, %v157
    %v326 = vpack.c.bf16 %v165, %v158
    %v327 = vpack.c.bf16 %v173, %v166
    %v328 = vpack.c.bf16 %v174, %v167
    %v329 = vpack.c.bf16 %v175, %v168
    %v330 = vpack.c.bf16 %v176, %v169
    %v331 = vpack.c.bf16 %v177, %v170
    %v332 = vpack.c.bf16 %v178, %v171
    %v333 = vpack.c.bf16 %v179, %v172
    %v334 = vpack.c.bf16 %v187, %v180
    %v335 = vpack.c.bf16 %v188, %v181
    %v336 = vpack.c.bf16 %v189, %v182
    %v337 = vpack.c.bf16 %v190, %v183
    %v338 = vpack.c.bf16 %v191, %v184
    %v339 = vpack.c.bf16 %v192, %v185
    %v340 = vpack.c.bf16 %v193, %v186
    %v341 = vpack.c.bf16 %v201, %v194
    %v342 = vpack.c.bf16 %v202, %v195
    %v343 = vpack.c.bf16 %v203, %v196
    %v344 = vpack.c.bf16 %v204, %v197
    %v345 = vpack.c.bf16 %v205, %v198
    %v346 = vpack.c.bf16 %v206, %v199
    %v347 = vpack.c.bf16 %v207, %v200
    %v348 = vpack.c.bf16 %v215, %v208
    %v349 = vpack.c.bf16 %v216, %v209
    %v350 = vpack.c.bf16 %v217, %v210
    %v351 = vpack.c.bf16 %v218, %v211
    %v352 = vpack.c.bf16 %v219, %v212
    %v353 = vpack.c.bf16 %v220, %v213
    %v354 = vpack.c.bf16 %v221, %v214
    %v355 = vpack.c.bf16 %v229, %v222
    %v356 = vpack.c.bf16 %v230, %v223
    %v357 = vpack.c.bf16 %v231, %v224
    %v358 = vpack.c.bf16 %v232, %v225
    %v359 = vpack.c.bf16 %v233, %v226
    %v360 = vpack.c.bf16 %v234, %v227
    %v361 = vpack.c.bf16 %v235, %v228
    %v362 = vpack.c.bf16 %v243, %v236
    %v363 = vpack.c.bf16 %v244, %v237
    %v364 = vpack.c.bf16 %v245, %v238
    %v365 = vpack.c.bf16 %v246, %v239
    %v366 = vpack.c.bf16 %v247, %v240
    %v367 = vpack.c.bf16 %v248, %v241
    %v368 = vpack.c.bf16 %v249, %v242
    %v369 = vpack.c.bf16 %v257, %v250
    %v370 = vpack.c.bf16 %v258, %v251
    %v371 = vpack.c.bf16 %v259, %v252
    %v372 = vpack.c.bf16 %v260, %v253
    %v373 = vpack.c.bf16 %v261, %v254
    %v374 = vpack.c.bf16 %v262, %v255
    %v375 = vpack.c.bf16 %v263, %v256
    %v376 = vld [vmem:[%s1] sm:$0xf]
    %v377 = vld [vmem:[%s1 + $0x4] sm:$0xf]
    %v378 = vld [vmem:[%s1 + $0x8] sm:$0xf]
    %v379 = vld [vmem:[%s1 + $0xc] sm:$0xf]
    %v380 = vld [vmem:[%s1 + $0x10] sm:$0xf]
    %v381 = vld [vmem:[%s1 + $0x14] sm:$0xf]
    %v382 = vld [vmem:[%s1 + $0x18] sm:$0xf]
    %v383 = vld [vmem:[%s1 + $0x1c] sm:$0xf]
    %v384 = vld [vmem:[%s1 + $0x20] sm:$0xf]
    %v385 = vld [vmem:[%s1 + $0x24] sm:$0xf]
    %v386 = vld [vmem:[%s1 + $0x28] sm:$0xf]
    %v387 = vld [vmem:[%s1 + $0x2c] sm:$0xf]
    %v388 = vld [vmem:[%s1 + $0x30] sm:$0xf]
    %v389 = vld [vmem:[%s1 + $0x34] sm:$0xf]
    %v390 = vld [vmem:[%s1 + $0x38] sm:$0xf]
    %v391 = vld [vmem:[%s1 + $0x3c] sm:$0xf]
    %v392 = vld [vmem:[%s1 + $0x40] sm:$0xf]
    %v393 = vld [vmem:[%s1 + $0x44] sm:$0xf]
    %v394 = vld [vmem:[%s1 + $0x48] sm:$0xf]
    %v395 = vld [vmem:[%s1 + $0x4c] sm:$0xf]
    %v396 = vld [vmem:[%s1 + $0x50] sm:$0xf]
    %v397 = vld [vmem:[%s1 + $0x54] sm:$0xf]
    %v398 = vld [vmem:[%s1 + $0x58] sm:$0xf]
    %v399 = vld [vmem:[%s1 + $0x5c] sm:$0xf]
    %v400 = vld [vmem:[%s1 + $0x60] sm:$0xf]
    %v401 = vld [vmem:[%s1 + $0x64] sm:$0xf]
    %v402 = vld [vmem:[%s1 + $0x68] sm:$0xf]
    %v403 = vld [vmem:[%s1 + $0x6c] sm:$0xf]
    %v404 = vld [vmem:[%s1 + $0x70] sm:$0xf]
    %v405 = vld [vmem:[%s1 + $0x74] sm:$0xf]
    %v406 = vld [vmem:[%s1 + $0x78] sm:$0xf]
    %v407 = vld [vmem:[%s1 + $0x7c] sm:$0xf]
    %v408 = vld [vmem:[%s1 + $0x80] sm:$0xf]
    %v409 = vld [vmem:[%s1 + $0x84] sm:$0xf]
    %v410 = vld [vmem:[%s1 + $0x88] sm:$0xf]
    %v411 = vld [vmem:[%s1 + $0x8c] sm:$0xf]
    %v412 = vld [vmem:[%s1 + $0x90] sm:$0xf]
    %v413 = vld [vmem:[%s1 + $0x94] sm:$0xf]
    %v414 = vld [vmem:[%s1 + $0x98] sm:$0xf]
    %v415 = vld [vmem:[%s1 + $0x9c] sm:$0xf]
    %v416 = vld [vmem:[%s1 + $0xa0] sm:$0xf]
    %v417 = vld [vmem:[%s1 + $0xa4] sm:$0xf]
    %v418 = vld [vmem:[%s1 + $0xa8] sm:$0xf]
    %v419 = vld [vmem:[%s1 + $0xac] sm:$0xf]
    %v420 = vld [vmem:[%s1 + $0xb0] sm:$0xf]
    %v421 = vld [vmem:[%s1 + $0xb4] sm:$0xf]
    %v422 = vld [vmem:[%s1 + $0xb8] sm:$0xf]
    %v423 = vld [vmem:[%s1 + $0xbc] sm:$0xf]
    %v424 = vld [vmem:[%s1 + $0xc0] sm:$0xf]
    %v425 = vld [vmem:[%s1 + $0xc4] sm:$0xf]
    %v426 = vld [vmem:[%s1 + $0xc8] sm:$0xf]
    %v427 = vld [vmem:[%s1 + $0xcc] sm:$0xf]
    %v428 = vld [vmem:[%s1 + $0xd0] sm:$0xf]
    %v429 = vld [vmem:[%s1 + $0xd4] sm:$0xf]
    %v430 = vld [vmem:[%s1 + $0xd8] sm:$0xf]
    %v431 = vld [vmem:[%s1 + $0xdc] sm:$0xf]
    %v432 = vld [vmem:[%s1 + $0xe0] sm:$0xf]
    %v433 = vld [vmem:[%s1 + $0xe4] sm:$0xf]
    %v434 = vld [vmem:[%s1 + $0xe8] sm:$0xf]
    %v435 = vld [vmem:[%s1 + $0xec] sm:$0xf]
    %v436 = vld [vmem:[%s1 + $0xf0] sm:$0xf]
    %v437 = vld [vmem:[%s1 + $0xf4] sm:$0xf]
    %v438 = vld [vmem:[%s1 + $0xf8] sm:$0xf]
    %v439 = vld [vmem:[%s1 + $0xfc] sm:$0xf]
    %v440 = vld [vmem:[%s1 + $0x100] sm:$0xf]
    %v441 = vld [vmem:[%s1 + $0x104] sm:$0xf]
    %v442 = vld [vmem:[%s1 + $0x108] sm:$0xf]
    %v443 = vld [vmem:[%s1 + $0x10c] sm:$0xf]
    %v444 = vld [vmem:[%s1 + $0x110] sm:$0xf]
    %v445 = vld [vmem:[%s1 + $0x114] sm:$0xf]
    %v446 = vld [vmem:[%s1 + $0x118] sm:$0xf]
    %v447 = vld [vmem:[%s1 + $0x11c] sm:$0xf]
    %v448 = vld [vmem:[%s1 + $0x120] sm:$0xf]
    %v449 = vld [vmem:[%s1 + $0x124] sm:$0xf]
    %v450 = vld [vmem:[%s1 + $0x128] sm:$0xf]
    %v451 = vld [vmem:[%s1 + $0x12c] sm:$0xf]
    %v452 = vld [vmem:[%s1 + $0x130] sm:$0xf]
    %v453 = vld [vmem:[%s1 + $0x134] sm:$0xf]
    %v454 = vld [vmem:[%s1 + $0x138] sm:$0xf]
    %v455 = vld [vmem:[%s1 + $0x13c] sm:$0xf]
    %v456 = vld [vmem:[%s1 + $0x140] sm:$0xf]
    %v457 = vld [vmem:[%s1 + $0x144] sm:$0xf]
    %v458 = vld [vmem:[%s1 + $0x148] sm:$0xf]
    %v459 = vld [vmem:[%s1 + $0x14c] sm:$0xf]
    %v460 = vld [vmem:[%s1 + $0x150] sm:$0xf]
    %v461 = vld [vmem:[%s1 + $0x154] sm:$0xf]
    %v462 = vld [vmem:[%s1 + $0x158] sm:$0xf]
    %v463 = vld [vmem:[%s1 + $0x15c] sm:$0xf]
    %v464 = vld [vmem:[%s1 + $0x160] sm:$0xf]
    %v465 = vld [vmem:[%s1 + $0x164] sm:$0xf]
    %v466 = vld [vmem:[%s1 + $0x168] sm:$0xf]
    %v467 = vld [vmem:[%s1 + $0x16c] sm:$0xf]
    %v468 = vld [vmem:[%s1 + $0x170] sm:$0xf]
    %v469 = vld [vmem:[%s1 + $0x174] sm:$0xf]
    %v470 = vld [vmem:[%s1 + $0x178] sm:$0xf]
    %v471 = vld [vmem:[%s1 + $0x17c] sm:$0xf]
    %v472 = vld [vmem:[%s1 + $0x180] sm:$0xf]
    %v473 = vld [vmem:[%s1 + $0x184] sm:$0xf]
    %v474 = vld [vmem:[%s2] sm:$0x1]
    %v476 = vlaneseq
    %v477 = vshrl.u32 %v476, 7
    %v478 = vsub.s32 0, %v477
    %v479 = vrot.slane %v474, %v478
    %v579 = vunpack.c.l.b16 %v376
    %v580 = vunpack.c.l.b16 %v377
    %v581 = vunpack.c.l.b16 %v378
    %v582 = vunpack.c.l.b16 %v379
    %v583 = vunpack.c.l.b16 %v380
    %v584 = vunpack.c.l.b16 %v381
    %v585 = vunpack.c.l.b16 %v382
    %v586 = vunpack.c.l.b16 %v383
    %v587 = vunpack.c.l.b16 %v384
    %v588 = vunpack.c.l.b16 %v385
    %v589 = vunpack.c.l.b16 %v386
    %v590 = vunpack.c.l.b16 %v387
    %v591 = vunpack.c.l.b16 %v388
    %v592 = vunpack.c.l.b16 %v389
    %v593 = vunpack.c.l.b16 %v390
    %v594 = vunpack.c.l.b16 %v391
    %v595 = vunpack.c.l.b16 %v392
    %v596 = vunpack.c.l.b16 %v393
    %v597 = vunpack.c.l.b16 %v394
    %v598 = vunpack.c.l.b16 %v395
    %v599 = vunpack.c.l.b16 %v396
    %v600 = vunpack.c.l.b16 %v397
    %v601 = vunpack.c.l.b16 %v398
    %v602 = vunpack.c.l.b16 %v399
    %v603 = vunpack.c.l.b16 %v400
    %v604 = vunpack.c.l.b16 %v401
    %v605 = vunpack.c.l.b16 %v402
    %v606 = vunpack.c.l.b16 %v403
    %v607 = vunpack.c.l.b16 %v404
    %v608 = vunpack.c.l.b16 %v405
    %v609 = vunpack.c.l.b16 %v406
    %v610 = vunpack.c.l.b16 %v407
    %v611 = vunpack.c.l.b16 %v408
    %v612 = vunpack.c.l.b16 %v409
    %v613 = vunpack.c.l.b16 %v410
    %v614 = vunpack.c.l.b16 %v411
    %v615 = vunpack.c.l.b16 %v412
    %v616 = vunpack.c.l.b16 %v413
    %v617 = vunpack.c.l.b16 %v414
    %v618 = vunpack.c.l.b16 %v415
    %v619 = vunpack.c.l.b16 %v416
    %v620 = vunpack.c.l.b16 %v417
    %v621 = vunpack.c.l.b16 %v418
    %v622 = vunpack.c.l.b16 %v419
    %v623 = vunpack.c.l.b16 %v420
    %v624 = vunpack.c.l.b16 %v421
    %v625 = vunpack.c.l.b16 %v422
    %v626 = vunpack.c.l.b16 %v423
    %v627 = vunpack.c.l.b16 %v424
    %v628 = vunpack.c.l.b16 %v425
    %v629 = vunpack.c.l.b16 %v426
    %v630 = vunpack.c.l.b16 %v427
    %v631 = vunpack.c.l.b16 %v428
    %v632 = vunpack.c.l.b16 %v429
    %v633 = vunpack.c.l.b16 %v430
    %v634 = vunpack.c.l.b16 %v431
    %v635 = vunpack.c.l.b16 %v432
    %v636 = vunpack.c.l.b16 %v433
    %v637 = vunpack.c.l.b16 %v434
    %v638 = vunpack.c.l.b16 %v435
    %v639 = vunpack.c.l.b16 %v436
    %v640 = vunpack.c.l.b16 %v437
    %v641 = vunpack.c.l.b16 %v438
    %v642 = vunpack.c.l.b16 %v439
    %v643 = vunpack.c.l.b16 %v440
    %v644 = vunpack.c.l.b16 %v441
    %v645 = vunpack.c.l.b16 %v442
    %v646 = vunpack.c.l.b16 %v443
    %v647 = vunpack.c.l.b16 %v444
    %v648 = vunpack.c.l.b16 %v445
    %v649 = vunpack.c.l.b16 %v446
    %v650 = vunpack.c.l.b16 %v447
    %v651 = vunpack.c.l.b16 %v448
    %v652 = vunpack.c.l.b16 %v449
    %v653 = vunpack.c.l.b16 %v450
    %v654 = vunpack.c.l.b16 %v451
    %v655 = vunpack.c.l.b16 %v452
    %v656 = vunpack.c.l.b16 %v453
    %v657 = vunpack.c.l.b16 %v454
    %v658 = vunpack.c.l.b16 %v455
    %v659 = vunpack.c.l.b16 %v456
    %v660 = vunpack.c.l.b16 %v457
    %v661 = vunpack.c.l.b16 %v458
    %v662 = vunpack.c.l.b16 %v459
    %v663 = vunpack.c.l.b16 %v460
    %v664 = vunpack.c.l.b16 %v461
    %v665 = vunpack.c.l.b16 %v462
    %v666 = vunpack.c.l.b16 %v463
    %v667 = vunpack.c.l.b16 %v464
    %v668 = vunpack.c.l.b16 %v465
    %v669 = vunpack.c.l.b16 %v466
    %v670 = vunpack.c.l.b16 %v467
    %v671 = vunpack.c.l.b16 %v468
    %v672 = vunpack.c.l.b16 %v469
    %v673 = vunpack.c.l.b16 %v470
    %v674 = vunpack.c.l.b16 %v471
    %v675 = vunpack.c.l.b16 %v472
    %v676 = vunpack.c.l.b16 %v473
    %v677 = vpack.c.b16 %v580, %v579
    %v678 = vpack.c.b16 %v582, %v581
    %v679 = vpack.c.b16 %v584, %v583
    %v680 = vpack.c.b16 %v586, %v585
    %v681 = vpack.c.b16 %v588, %v587
    %v682 = vpack.c.b16 %v590, %v589
    %v683 = vpack.c.b16 %v592, %v591
    %v684 = vpack.c.b16 %v594, %v593
    %v685 = vpack.c.b16 %v596, %v595
    %v686 = vpack.c.b16 %v598, %v597
    %v687 = vpack.c.b16 %v600, %v599
    %v688 = vpack.c.b16 %v602, %v601
    %v689 = vpack.c.b16 %v604, %v603
    %v690 = vpack.c.b16 %v606, %v605
    %v691 = vpack.c.b16 %v608, %v607
    %v692 = vpack.c.b16 %v610, %v609
    %v693 = vpack.c.b16 %v612, %v611
    %v694 = vpack.c.b16 %v614, %v613
    %v695 = vpack.c.b16 %v616, %v615
    %v696 = vpack.c.b16 %v618, %v617
    %v697 = vpack.c.b16 %v620, %v619
    %v698 = vpack.c.b16 %v622, %v621
    %v699 = vpack.c.b16 %v624, %v623
    %v700 = vpack.c.b16 %v626, %v625
    %v701 = vpack.c.b16 %v628, %v627
    %v702 = vpack.c.b16 %v630, %v629
    %v703 = vpack.c.b16 %v632, %v631
    %v704 = vpack.c.b16 %v634, %v633
    %v705 = vpack.c.b16 %v636, %v635
    %v706 = vpack.c.b16 %v638, %v637
    %v707 = vpack.c.b16 %v640, %v639
    %v708 = vpack.c.b16 %v642, %v641
    %v709 = vpack.c.b16 %v644, %v643
    %v710 = vpack.c.b16 %v646, %v645
    %v711 = vpack.c.b16 %v648, %v647
    %v712 = vpack.c.b16 %v650, %v649
    %v713 = vpack.c.b16 %v652, %v651
    %v714 = vpack.c.b16 %v654, %v653
    %v715 = vpack.c.b16 %v656, %v655
    %v716 = vpack.c.b16 %v658, %v657
    %v717 = vpack.c.b16 %v660, %v659
    %v718 = vpack.c.b16 %v662, %v661
    %v719 = vpack.c.b16 %v664, %v663
    %v720 = vpack.c.b16 %v666, %v665
    %v721 = vpack.c.b16 %v668, %v667
    %v722 = vpack.c.b16 %v670, %v669
    %v723 = vpack.c.b16 %v672, %v671
    %v724 = vpack.c.b16 %v674, %v673
    %v725 = vpack.c.b16 %v676, %v675
    %vm775 = vcmask 130048
    %v777 = vsel %vm775, %v270, 0
    %v780 = vsel %vm775, %v277, 0
    %v783 = vsel %vm775, %v284, 0
    %v786 = vsel %vm775, %v291, 0
    %v789 = vsel %vm775, %v298, 0
    %v792 = vsel %vm775, %v305, 0
    %v795 = vsel %vm775, %v312, 0
    %v798 = vsel %vm775, %v319, 0
    %v801 = vsel %vm775, %v326, 0
    %v804 = vsel %vm775, %v333, 0
    %v807 = vsel %vm775, %v340, 0
    %v810 = vsel %vm775, %v347, 0
    %v813 = vsel %vm775, %v354, 0
    %v816 = vsel %vm775, %v361, 0
    %v819 = vsel %vm775, %v368, 0
    %v822 = vsel %vm775, %v375, 0
    %824 = vmatprep.subr.bf16.mxu0 0
    %825 = vmatpush1.bf16.msra.mxu0 %v684
    %826 = vmatprep.subr.bf16.mxu0 0
    %827 = vmatpush1.bf16.msra.mxu0 %v683
    %828 = vmatprep.subr.bf16.mxu0 0
    %829 = vmatpush1.bf16.msra.mxu0 %v682
    %830 = vmatprep.subr.bf16.mxu0 0
    %831 = vmatpush1.bf16.msra.mxu0 %v681
    %832 = vmatprep.subr.bf16.mxu0 0
    %833 = vmatpush1.bf16.msra.mxu0 %v680
    %834 = vmatprep.subr.bf16.mxu0 0
    %835 = vmatpush1.bf16.msra.mxu0 %v679
    %836 = vmatprep.subr.bf16.mxu0 0
    %837 = vmatpush1.bf16.msra.mxu0 %v678
    %838 = vmatprep.subr.bf16.mxu0 0
    %839 = vmatpush1.bf16.msra.mxu0 %v677
    %840 = vmatprep.subr.bf16.mxu0 0
    %841 = vmatpush2.bf16.msra.mxu0 %v692
    %842 = vmatprep.subr.bf16.mxu0 0
    %843 = vmatpush2.bf16.msra.mxu0 %v691
    %844 = vmatprep.subr.bf16.mxu0 0
    %845 = vmatpush2.bf16.msra.mxu0 %v690
    %846 = vmatprep.subr.bf16.mxu0 0
    %847 = vmatpush2.bf16.msra.mxu0 %v689
    %848 = vmatprep.subr.bf16.mxu0 0
    %849 = vmatpush2.bf16.msra.mxu0 %v688
    %850 = vmatprep.subr.bf16.mxu0 0
    %851 = vmatpush2.bf16.msra.mxu0 %v687
    %852 = vmatprep.subr.bf16.mxu0 0
    %853 = vmatpush2.bf16.msra.mxu0 %v686
    %854 = vmatprep.subr.bf16.mxu0 0
    %855 = vmatpush2.bf16.msra.mxu0 %v685
    %856 = vmatprep.mubr.bf16.mxu0 %v265
    %857 = vmatmul.mubr.bf16.gmra.mxu0 %v264
    %v858 = vpop.f32.mrf.mxu0
    %v859 = vadd.f32 %v479, %v858
    %v860 = vpop.f32.mrf.mxu0
    %v861 = vpop.f32.mrf.mxu0
    %v862 = vadd.f32 %v479, %v861
    %v863 = vpop.f32.mrf.mxu0
    %864 = vmatprep.mubr.bf16.mxu0 %v272
    %865 = vmatmul.mubr.bf16.gmra.mxu0 %v271
    %v866 = vpop.f32.mrf.mxu0
    %v867 = vadd.f32 %v479, %v866
    %v868 = vpop.f32.mrf.mxu0
    %v869 = vpop.f32.mrf.mxu0
    %v870 = vadd.f32 %v479, %v869
    %v871 = vpop.f32.mrf.mxu0
    %872 = vmatprep.mubr.bf16.mxu0 %v279
    %873 = vmatmul.mubr.bf16.gmra.mxu0 %v278
    %v874 = vpop.f32.mrf.mxu0
    %v875 = vadd.f32 %v479, %v874
    %v876 = vpop.f32.mrf.mxu0
    %v877 = vpop.f32.mrf.mxu0
    %v878 = vadd.f32 %v479, %v877
    %v879 = vpop.f32.mrf.mxu0
    %880 = vmatprep.mubr.bf16.mxu0 %v286
    %881 = vmatmul.mubr.bf16.gmra.mxu0 %v285
    %v882 = vpop.f32.mrf.mxu0
    %v883 = vadd.f32 %v479, %v882
    %v884 = vpop.f32.mrf.mxu0
    %v885 = vpop.f32.mrf.mxu0
    %v886 = vadd.f32 %v479, %v885
    %v887 = vpop.f32.mrf.mxu0
    %888 = vmatprep.mubr.bf16.mxu0 %v293
    %889 = vmatmul.mubr.bf16.gmra.mxu0 %v292
    %v890 = vpop.f32.mrf.mxu0
    %v891 = vadd.f32 %v479, %v890
    %v892 = vpop.f32.mrf.mxu0
    %v893 = vpop.f32.mrf.mxu0
    %v894 = vadd.f32 %v479, %v893
    %v895 = vpop.f32.mrf.mxu0
    %896 = vmatprep.mubr.bf16.mxu0 %v300
    %897 = vmatmul.mubr.bf16.gmra.mxu0 %v299
    %v898 = vpop.f32.mrf.mxu0
    %v899 = vadd.f32 %v479, %v898
    %v900 = vpop.f32.mrf.mxu0
    %v901 = vpop.f32.mrf.mxu0
    %v902 = vadd.f32 %v479, %v901
    %v903 = vpop.f32.mrf.mxu0
    %904 = vmatprep.mubr.bf16.mxu0 %v307
    %905 = vmatmul.mubr.bf16.gmra.mxu0 %v306
    %v906 = vpop.f32.mrf.mxu0
    %v907 = vadd.f32 %v479, %v906
    %v908 = vpop.f32.mrf.mxu0
    %v909 = vpop.f32.mrf.mxu0
    %v910 = vadd.f32 %v479, %v909
    %v911 = vpop.f32.mrf.mxu0
    %912 = vmatprep.mubr.bf16.mxu0 %v314
    %913 = vmatmul.mubr.bf16.gmra.mxu0 %v313
    %v914 = vpop.f32.mrf.mxu0
    %v915 = vadd.f32 %v479, %v914
    %v916 = vpop.f32.mrf.mxu0
    %v917 = vpop.f32.mrf.mxu0
    %v918 = vadd.f32 %v479, %v917
    %v919 = vpop.f32.mrf.mxu0
    %920 = vmatprep.mubr.bf16.mxu0 %v321
    %921 = vmatmul.mubr.bf16.gmra.mxu0 %v320
    %v922 = vpop.f32.mrf.mxu0
    %v923 = vadd.f32 %v479, %v922
    %v924 = vpop.f32.mrf.mxu0
    %v925 = vpop.f32.mrf.mxu0
    %v926 = vadd.f32 %v479, %v925
    %v927 = vpop.f32.mrf.mxu0
    %928 = vmatprep.mubr.bf16.mxu0 %v328
    %929 = vmatmul.mubr.bf16.gmra.mxu0 %v327
    %v930 = vpop.f32.mrf.mxu0
    %v931 = vadd.f32 %v479, %v930
    %v932 = vpop.f32.mrf.mxu0
    %v933 = vpop.f32.mrf.mxu0
    %v934 = vadd.f32 %v479, %v933
    %v935 = vpop.f32.mrf.mxu0
    %936 = vmatprep.mubr.bf16.mxu0 %v335
    %937 = vmatmul.mubr.bf16.gmra.mxu0 %v334
    %v938 = vpop.f32.mrf.mxu0
    %v939 = vadd.f32 %v479, %v938
    %v940 = vpop.f32.mrf.mxu0
    %v941 = vpop.f32.mrf.mxu0
    %v942 = vadd.f32 %v479, %v941
    %v943 = vpop.f32.mrf.mxu0
    %944 = vmatprep.mubr.bf16.mxu0 %v342
    %945 = vmatmul.mubr.bf16.gmra.mxu0 %v341
    %v946 = vpop.f32.mrf.mxu0
    %v947 = vadd.f32 %v479, %v946
    %v948 = vpop.f32.mrf.mxu0
    %v949 = vpop.f32.mrf.mxu0
    %v950 = vadd.f32 %v479, %v949
    %v951 = vpop.f32.mrf.mxu0
    %952 = vmatprep.mubr.bf16.mxu0 %v349
    %953 = vmatmul.mubr.bf16.gmra.mxu0 %v348
    %v954 = vpop.f32.mrf.mxu0
    %v955 = vadd.f32 %v479, %v954
    %v956 = vpop.f32.mrf.mxu0
    %v957 = vpop.f32.mrf.mxu0
    %v958 = vadd.f32 %v479, %v957
    %v959 = vpop.f32.mrf.mxu0
    %960 = vmatprep.mubr.bf16.mxu0 %v356
    %961 = vmatmul.mubr.bf16.gmra.mxu0 %v355
    %v962 = vpop.f32.mrf.mxu0
    %v963 = vadd.f32 %v479, %v962
    %v964 = vpop.f32.mrf.mxu0
    %v965 = vpop.f32.mrf.mxu0
    %v966 = vadd.f32 %v479, %v965
    %v967 = vpop.f32.mrf.mxu0
    %968 = vmatprep.mubr.bf16.mxu0 %v363
    %969 = vmatmul.mubr.bf16.gmra.mxu0 %v362
    %v970 = vpop.f32.mrf.mxu0
    %v971 = vadd.f32 %v479, %v970
    %v972 = vpop.f32.mrf.mxu0
    %v973 = vpop.f32.mrf.mxu0
    %v974 = vadd.f32 %v479, %v973
    %v975 = vpop.f32.mrf.mxu0
    %976 = vmatprep.mubr.bf16.mxu0 %v370
    %977 = vmatmul.mubr.bf16.gmra.mxu0 %v369
    %v978 = vpop.f32.mrf.mxu0
    %v979 = vadd.f32 %v479, %v978
    %v980 = vpop.f32.mrf.mxu0
    %v981 = vpop.f32.mrf.mxu0
    %v982 = vadd.f32 %v479, %v981
    %v983 = vpop.f32.mrf.mxu0
    %984 = vdwg.mxu0
    %985 = vmatprep.subr.bf16.mxu0 0
    %986 = vmatpush1.bf16.msra.mxu0 %v700
    %987 = vmatprep.subr.bf16.mxu0 0
    %988 = vmatpush1.bf16.msra.mxu0 %v699
    %989 = vmatprep.subr.bf16.mxu0 0
    %990 = vmatpush1.bf16.msra.mxu0 %v698
    %991 = vmatprep.subr.bf16.mxu0 0
    %992 = vmatpush1.bf16.msra.mxu0 %v697
    %993 = vmatprep.subr.bf16.mxu0 0
    %994 = vmatpush1.bf16.msra.mxu0 %v696
    %995 = vmatprep.subr.bf16.mxu0 0
    %996 = vmatpush1.bf16.msra.mxu0 %v695
    %997 = vmatprep.subr.bf16.mxu0 0
    %998 = vmatpush1.bf16.msra.mxu0 %v694
    %999 = vmatprep.subr.bf16.mxu0 0
    %1000 = vmatpush1.bf16.msra.mxu0 %v693
    %1001 = vmatprep.subr.bf16.mxu0 0
    %1002 = vmatpush2.bf16.msra.mxu0 %v708
    %1003 = vmatprep.subr.bf16.mxu0 0
    %1004 = vmatpush2.bf16.msra.mxu0 %v707
    %1005 = vmatprep.subr.bf16.mxu0 0
    %1006 = vmatpush2.bf16.msra.mxu0 %v706
    %1007 = vmatprep.subr.bf16.mxu0 0
    %1008 = vmatpush2.bf16.msra.mxu0 %v705
    %1009 = vmatprep.subr.bf16.mxu0 0
    %1010 = vmatpush2.bf16.msra.mxu0 %v704
    %1011 = vmatprep.subr.bf16.mxu0 0
    %1012 = vmatpush2.bf16.msra.mxu0 %v703
    %1013 = vmatprep.subr.bf16.mxu0 0
    %1014 = vmatpush2.bf16.msra.mxu0 %v702
    %1015 = vmatprep.subr.bf16.mxu0 0
    %1016 = vmatpush2.bf16.msra.mxu0 %v701
    %1017 = vmatprep.mubr.bf16.mxu0 %v267
    %1018 = vmatmul.mubr.bf16.gmra.mxu0 %v266
    %v1019 = vpop.f32.mrf.mxu0
    %v1020 = vadd.f32 %v859, %v1019
    %v1021 = vpop.f32.mrf.mxu0
    %v1022 = vpop.f32.mrf.mxu0
    %v1023 = vadd.f32 %v862, %v1022
    %v1024 = vpop.f32.mrf.mxu0
    %1025 = vmatprep.mubr.bf16.mxu0 %v274
    %1026 = vmatmul.mubr.bf16.gmra.mxu0 %v273
    %v1027 = vpop.f32.mrf.mxu0
    %v1028 = vadd.f32 %v867, %v1027
    %v1029 = vpop.f32.mrf.mxu0
    %v1030 = vpop.f32.mrf.mxu0
    %v1031 = vadd.f32 %v870, %v1030
    %v1032 = vpop.f32.mrf.mxu0
    %1033 = vmatprep.mubr.bf16.mxu0 %v281
    %1034 = vmatmul.mubr.bf16.gmra.mxu0 %v280
    %v1035 = vpop.f32.mrf.mxu0
    %v1036 = vadd.f32 %v875, %v1035
    %v1037 = vpop.f32.mrf.mxu0
    %v1038 = vpop.f32.mrf.mxu0
    %v1039 = vadd.f32 %v878, %v1038
    %v1040 = vpop.f32.mrf.mxu0
    %1041 = vmatprep.mubr.bf16.mxu0 %v288
    %1042 = vmatmul.mubr.bf16.gmra.mxu0 %v287
    %v1043 = vpop.f32.mrf.mxu0
    %v1044 = vadd.f32 %v883, %v1043
    %v1045 = vpop.f32.mrf.mxu0
    %v1046 = vpop.f32.mrf.mxu0
    %v1047 = vadd.f32 %v886, %v1046
    %v1048 = vpop.f32.mrf.mxu0
    %1049 = vmatprep.mubr.bf16.mxu0 %v295
    %1050 = vmatmul.mubr.bf16.gmra.mxu0 %v294
    %v1051 = vpop.f32.mrf.mxu0
    %v1052 = vadd.f32 %v891, %v1051
    %v1053 = vpop.f32.mrf.mxu0
    %v1054 = vpop.f32.mrf.mxu0
    %v1055 = vadd.f32 %v894, %v1054
    %v1056 = vpop.f32.mrf.mxu0
    %1057 = vmatprep.mubr.bf16.mxu0 %v302
    %1058 = vmatmul.mubr.bf16.gmra.mxu0 %v301
    %v1059 = vpop.f32.mrf.mxu0
    %v1060 = vadd.f32 %v899, %v1059
    %v1061 = vpop.f32.mrf.mxu0
    %v1062 = vpop.f32.mrf.mxu0
    %v1063 = vadd.f32 %v902, %v1062
    %v1064 = vpop.f32.mrf.mxu0
    %1065 = vmatprep.mubr.bf16.mxu0 %v309
    %1066 = vmatmul.mubr.bf16.gmra.mxu0 %v308
    %v1067 = vpop.f32.mrf.mxu0
    %v1068 = vadd.f32 %v907, %v1067
    %v1069 = vpop.f32.mrf.mxu0
    %v1070 = vpop.f32.mrf.mxu0
    %v1071 = vadd.f32 %v910, %v1070
    %v1072 = vpop.f32.mrf.mxu0
    %1073 = vmatprep.mubr.bf16.mxu0 %v316
    %1074 = vmatmul.mubr.bf16.gmra.mxu0 %v315
    %v1075 = vpop.f32.mrf.mxu0
    %v1076 = vadd.f32 %v915, %v1075
    %v1077 = vpop.f32.mrf.mxu0
    %v1078 = vpop.f32.mrf.mxu0
    %v1079 = vadd.f32 %v918, %v1078
    %v1080 = vpop.f32.mrf.mxu0
    %1081 = vmatprep.mubr.bf16.mxu0 %v323
    %1082 = vmatmul.mubr.bf16.gmra.mxu0 %v322
    %v1083 = vpop.f32.mrf.mxu0
    %v1084 = vadd.f32 %v923, %v1083
    %v1085 = vpop.f32.mrf.mxu0
    %v1086 = vpop.f32.mrf.mxu0
    %v1087 = vadd.f32 %v926, %v1086
    %v1088 = vpop.f32.mrf.mxu0
    %1089 = vmatprep.mubr.bf16.mxu0 %v330
    %1090 = vmatmul.mubr.bf16.gmra.mxu0 %v329
    %v1091 = vpop.f32.mrf.mxu0
    %v1092 = vadd.f32 %v931, %v1091
    %v1093 = vpop.f32.mrf.mxu0
    %v1094 = vpop.f32.mrf.mxu0
    %v1095 = vadd.f32 %v934, %v1094
    %v1096 = vpop.f32.mrf.mxu0
    %1097 = vmatprep.mubr.bf16.mxu0 %v337
    %1098 = vmatmul.mubr.bf16.gmra.mxu0 %v336
    %v1099 = vpop.f32.mrf.mxu0
    %v1100 = vadd.f32 %v939, %v1099
    %v1101 = vpop.f32.mrf.mxu0
    %v1102 = vpop.f32.mrf.mxu0
    %v1103 = vadd.f32 %v942, %v1102
    %v1104 = vpop.f32.mrf.mxu0
    %1105 = vmatprep.mubr.bf16.mxu0 %v344
    %1106 = vmatmul.mubr.bf16.gmra.mxu0 %v343
    %v1107 = vpop.f32.mrf.mxu0
    %v1108 = vadd.f32 %v947, %v1107
    %v1109 = vpop.f32.mrf.mxu0
    %v1110 = vpop.f32.mrf.mxu0
    %v1111 = vadd.f32 %v950, %v1110
    %v1112 = vpop.f32.mrf.mxu0
    %1113 = vmatprep.mubr.bf16.mxu0 %v351
    %1114 = vmatmul.mubr.bf16.gmra.mxu0 %v350
    %v1115 = vpop.f32.mrf.mxu0
    %v1116 = vadd.f32 %v955, %v1115
    %v1117 = vpop.f32.mrf.mxu0
    %v1118 = vpop.f32.mrf.mxu0
    %v1119 = vadd.f32 %v958, %v1118
    %v1120 = vpop.f32.mrf.mxu0
    %1121 = vmatprep.mubr.bf16.mxu0 %v358
    %1122 = vmatmul.mubr.bf16.gmra.mxu0 %v357
    %v1123 = vpop.f32.mrf.mxu0
    %v1124 = vadd.f32 %v963, %v1123
    %v1125 = vpop.f32.mrf.mxu0
    %v1126 = vpop.f32.mrf.mxu0
    %v1127 = vadd.f32 %v966, %v1126
    %v1128 = vpop.f32.mrf.mxu0
    %1129 = vmatprep.mubr.bf16.mxu0 %v365
    %1130 = vmatmul.mubr.bf16.gmra.mxu0 %v364
    %v1131 = vpop.f32.mrf.mxu0
    %v1132 = vadd.f32 %v971, %v1131
    %v1133 = vpop.f32.mrf.mxu0
    %v1134 = vpop.f32.mrf.mxu0
    %v1135 = vadd.f32 %v974, %v1134
    %v1136 = vpop.f32.mrf.mxu0
    %1137 = vmatprep.mubr.bf16.mxu0 %v372
    %1138 = vmatmul.mubr.bf16.gmra.mxu0 %v371
    %v1139 = vpop.f32.mrf.mxu0
    %v1140 = vadd.f32 %v979, %v1139
    %v1141 = vpop.f32.mrf.mxu0
    %v1142 = vpop.f32.mrf.mxu0
    %v1143 = vadd.f32 %v982, %v1142
    %v1144 = vpop.f32.mrf.mxu0
    %1145 = vdwg.mxu0
    %1146 = vmatprep.subr.bf16.mxu0 0
    %1147 = vmatpush1.bf16.msra.mxu0 %v716
    %1148 = vmatprep.subr.bf16.mxu0 0
    %1149 = vmatpush1.bf16.msra.mxu0 %v715
    %1150 = vmatprep.subr.bf16.mxu0 0
    %1151 = vmatpush1.bf16.msra.mxu0 %v714
    %1152 = vmatprep.subr.bf16.mxu0 0
    %1153 = vmatpush1.bf16.msra.mxu0 %v713
    %1154 = vmatprep.subr.bf16.mxu0 0
    %1155 = vmatpush1.bf16.msra.mxu0 %v712
    %1156 = vmatprep.subr.bf16.mxu0 0
    %1157 = vmatpush1.bf16.msra.mxu0 %v711
    %1158 = vmatprep.subr.bf16.mxu0 0
    %1159 = vmatpush1.bf16.msra.mxu0 %v710
    %1160 = vmatprep.subr.bf16.mxu0 0
    %1161 = vmatpush1.bf16.msra.mxu0 %v709
    %1162 = vmatprep.subr.bf16.mxu0 0
    %1163 = vmatpush2.bf16.msra.mxu0 %v724
    %1164 = vmatprep.subr.bf16.mxu0 0
    %1165 = vmatpush2.bf16.msra.mxu0 %v723
    %1166 = vmatprep.subr.bf16.mxu0 0
    %1167 = vmatpush2.bf16.msra.mxu0 %v722
    %1168 = vmatprep.subr.bf16.mxu0 0
    %1169 = vmatpush2.bf16.msra.mxu0 %v721
    %1170 = vmatprep.subr.bf16.mxu0 0
    %1171 = vmatpush2.bf16.msra.mxu0 %v720
    %1172 = vmatprep.subr.bf16.mxu0 0
    %1173 = vmatpush2.bf16.msra.mxu0 %v719
    %1174 = vmatprep.subr.bf16.mxu0 0
    %1175 = vmatpush2.bf16.msra.mxu0 %v718
    %1176 = vmatprep.subr.bf16.mxu0 0
    %1177 = vmatpush2.bf16.msra.mxu0 %v717
    %1178 = vmatprep.mubr.bf16.mxu0 %v269
    %1179 = vmatmul.mubr.bf16.gmra.mxu0 %v268
    %v1180 = vpop.f32.mrf.mxu0
    %v1181 = vadd.f32 %v1020, %v1180
    %v1182 = vpop.f32.mrf.mxu0
    %v1183 = vpop.f32.mrf.mxu0
    %v1184 = vadd.f32 %v1023, %v1183
    %v1185 = vpop.f32.mrf.mxu0
    %1186 = vmatprep.mubr.bf16.mxu0 %v276
    %1187 = vmatmul.mubr.bf16.gmra.mxu0 %v275
    %v1188 = vpop.f32.mrf.mxu0
    %v1189 = vadd.f32 %v1028, %v1188
    %v1190 = vpop.f32.mrf.mxu0
    %v1191 = vpop.f32.mrf.mxu0
    %v1192 = vadd.f32 %v1031, %v1191
    %v1193 = vpop.f32.mrf.mxu0
    %1194 = vmatprep.mubr.bf16.mxu0 %v283
    %1195 = vmatmul.mubr.bf16.gmra.mxu0 %v282
    %v1196 = vpop.f32.mrf.mxu0
    %v1197 = vadd.f32 %v1036, %v1196
    %v1198 = vpop.f32.mrf.mxu0
    %v1199 = vpop.f32.mrf.mxu0
    %v1200 = vadd.f32 %v1039, %v1199
    %v1201 = vpop.f32.mrf.mxu0
    %1202 = vmatprep.mubr.bf16.mxu0 %v290
    %1203 = vmatmul.mubr.bf16.gmra.mxu0 %v289
    %v1204 = vpop.f32.mrf.mxu0
    %v1205 = vadd.f32 %v1044, %v1204
    %v1206 = vpop.f32.mrf.mxu0
    %v1207 = vpop.f32.mrf.mxu0
    %v1208 = vadd.f32 %v1047, %v1207
    %v1209 = vpop.f32.mrf.mxu0
    %1210 = vmatprep.mubr.bf16.mxu0 %v297
    %1211 = vmatmul.mubr.bf16.gmra.mxu0 %v296
    %v1212 = vpop.f32.mrf.mxu0
    %v1213 = vadd.f32 %v1052, %v1212
    %v1214 = vpop.f32.mrf.mxu0
    %v1215 = vpop.f32.mrf.mxu0
    %v1216 = vadd.f32 %v1055, %v1215
    %v1217 = vpop.f32.mrf.mxu0
    %1218 = vmatprep.mubr.bf16.mxu0 %v304
    %1219 = vmatmul.mubr.bf16.gmra.mxu0 %v303
    %v1220 = vpop.f32.mrf.mxu0
    %v1221 = vadd.f32 %v1060, %v1220
    %v1222 = vpop.f32.mrf.mxu0
    %v1223 = vpop.f32.mrf.mxu0
    %v1224 = vadd.f32 %v1063, %v1223
    %v1225 = vpop.f32.mrf.mxu0
    %1226 = vmatprep.mubr.bf16.mxu0 %v311
    %1227 = vmatmul.mubr.bf16.gmra.mxu0 %v310
    %v1228 = vpop.f32.mrf.mxu0
    %v1229 = vadd.f32 %v1068, %v1228
    %v1230 = vpop.f32.mrf.mxu0
    %v1231 = vpop.f32.mrf.mxu0
    %v1232 = vadd.f32 %v1071, %v1231
    %v1233 = vpop.f32.mrf.mxu0
    %1234 = vmatprep.mubr.bf16.mxu0 %v318
    %1235 = vmatmul.mubr.bf16.gmra.mxu0 %v317
    %v1236 = vpop.f32.mrf.mxu0
    %v1237 = vadd.f32 %v1076, %v1236
    %v1238 = vpop.f32.mrf.mxu0
    %v1239 = vpop.f32.mrf.mxu0
    %v1240 = vadd.f32 %v1079, %v1239
    %v1241 = vpop.f32.mrf.mxu0
    %1242 = vmatprep.mubr.bf16.mxu0 %v325
    %1243 = vmatmul.mubr.bf16.gmra.mxu0 %v324
    %v1244 = vpop.f32.mrf.mxu0
    %v1245 = vadd.f32 %v1084, %v1244
    %v1246 = vpop.f32.mrf.mxu0
    %v1247 = vpop.f32.mrf.mxu0
    %v1248 = vadd.f32 %v1087, %v1247
    %v1249 = vpop.f32.mrf.mxu0
    %1250 = vmatprep.mubr.bf16.mxu0 %v332
    %1251 = vmatmul.mubr.bf16.gmra.mxu0 %v331
    %v1252 = vpop.f32.mrf.mxu0
    %v1253 = vadd.f32 %v1092, %v1252
    %v1254 = vpop.f32.mrf.mxu0
    %v1255 = vpop.f32.mrf.mxu0
    %v1256 = vadd.f32 %v1095, %v1255
    %v1257 = vpop.f32.mrf.mxu0
    %1258 = vmatprep.mubr.bf16.mxu0 %v339
    %1259 = vmatmul.mubr.bf16.gmra.mxu0 %v338
    %v1260 = vpop.f32.mrf.mxu0
    %v1261 = vadd.f32 %v1100, %v1260
    %v1262 = vpop.f32.mrf.mxu0
    %v1263 = vpop.f32.mrf.mxu0
    %v1264 = vadd.f32 %v1103, %v1263
    %v1265 = vpop.f32.mrf.mxu0
    %1266 = vmatprep.mubr.bf16.mxu0 %v346
    %1267 = vmatmul.mubr.bf16.gmra.mxu0 %v345
    %v1268 = vpop.f32.mrf.mxu0
    %v1269 = vadd.f32 %v1108, %v1268
    %v1270 = vpop.f32.mrf.mxu0
    %v1271 = vpop.f32.mrf.mxu0
    %v1272 = vadd.f32 %v1111, %v1271
    %v1273 = vpop.f32.mrf.mxu0
    %1274 = vmatprep.mubr.bf16.mxu0 %v353
    %1275 = vmatmul.mubr.bf16.gmra.mxu0 %v352
    %v1276 = vpop.f32.mrf.mxu0
    %v1277 = vadd.f32 %v1116, %v1276
    %v1278 = vpop.f32.mrf.mxu0
    %v1279 = vpop.f32.mrf.mxu0
    %v1280 = vadd.f32 %v1119, %v1279
    %v1281 = vpop.f32.mrf.mxu0
    %1282 = vmatprep.mubr.bf16.mxu0 %v360
    %1283 = vmatmul.mubr.bf16.gmra.mxu0 %v359
    %v1284 = vpop.f32.mrf.mxu0
    %v1285 = vadd.f32 %v1124, %v1284
    %v1286 = vpop.f32.mrf.mxu0
    %v1287 = vpop.f32.mrf.mxu0
    %v1288 = vadd.f32 %v1127, %v1287
    %v1289 = vpop.f32.mrf.mxu0
    %1290 = vmatprep.mubr.bf16.mxu0 %v367
    %1291 = vmatmul.mubr.bf16.gmra.mxu0 %v366
    %v1292 = vpop.f32.mrf.mxu0
    %v1293 = vadd.f32 %v1132, %v1292
    %v1294 = vpop.f32.mrf.mxu0
    %v1295 = vpop.f32.mrf.mxu0
    %v1296 = vadd.f32 %v1135, %v1295
    %v1297 = vpop.f32.mrf.mxu0
    %1298 = vmatprep.mubr.bf16.mxu0 %v374
    %1299 = vmatmul.mubr.bf16.gmra.mxu0 %v373
    %v1300 = vpop.f32.mrf.mxu0
    %v1301 = vadd.f32 %v1140, %v1300
    %v1302 = vpop.f32.mrf.mxu0
    %v1303 = vpop.f32.mrf.mxu0
    %v1304 = vadd.f32 %v1143, %v1303
    %v1305 = vpop.f32.mrf.mxu0
    %1306 = vdwg.mxu0
    %1307 = vmatprep.subr.bf16.mxu0 0
    %1308 = vmatpush1.bf16.msra.mxu0 0
    %1309 = vmatprep.subr.bf16.mxu0 0
    %1310 = vmatpush1.bf16.msra.mxu0 0
    %1311 = vmatprep.subr.bf16.mxu0 0
    %1312 = vmatpush1.bf16.msra.mxu0 0
    %1313 = vmatprep.subr.bf16.mxu0 0
    %1314 = vmatpush1.bf16.msra.mxu0 0
    %1315 = vmatprep.subr.bf16.mxu0 0
    %1316 = vmatpush1.bf16.msra.mxu0 0
    %1317 = vmatprep.subr.bf16.mxu0 0
    %1318 = vmatpush1.bf16.msra.mxu0 0
    %1319 = vmatprep.subr.bf16.mxu0 0
    %1320 = vmatpush1.bf16.msra.mxu0 0
    %1321 = vmatprep.subr.bf16.mxu0 0
    %1322 = vmatpush1.bf16.msra.mxu0 %v725
    %1323 = vmatprep.subr.bf16.mxu0 0
    %1324 = vmatpush2.bf16.msra.mxu0 0
    %1325 = vmatprep.subr.bf16.mxu0 0
    %1326 = vmatpush2.bf16.msra.mxu0 0
    %1327 = vmatprep.subr.bf16.mxu0 0
    %1328 = vmatpush2.bf16.msra.mxu0 0
    %1329 = vmatprep.subr.bf16.mxu0 0
    %1330 = vmatpush2.bf16.msra.mxu0 0
    %1331 = vmatprep.subr.bf16.mxu0 0
    %1332 = vmatpush2.bf16.msra.mxu0 0
    %1333 = vmatprep.subr.bf16.mxu0 0
    %1334 = vmatpush2.bf16.msra.mxu0 0
    %1335 = vmatprep.subr.bf16.mxu0 0
    %1336 = vmatpush2.bf16.msra.mxu0 0
    %1337 = vmatprep.subr.bf16.mxu0 0
    %1338 = vmatpush2.bf16.msra.mxu0 0
    %1339 = vmatprep.mubr.bf16.mxu0 0
    %1340 = vmatmul.mubr.bf16.gmra.mxu0 %v777
    %v1341 = vpop.f32.mrf.mxu0
    %v1342 = vadd.f32 %v1181, %v1341
    %v1343 = vpop.f32.mrf.mxu0
    %v1344 = vpop.f32.mrf.mxu0
    %v1345 = vadd.f32 %v1184, %v1344
    %v1346 = vpop.f32.mrf.mxu0
    %1347 = vmatprep.mubr.bf16.mxu0 0
    %1348 = vmatmul.mubr.bf16.gmra.mxu0 %v780
    %v1349 = vpop.f32.mrf.mxu0
    %v1350 = vadd.f32 %v1189, %v1349
    %v1351 = vpop.f32.mrf.mxu0
    %v1352 = vpop.f32.mrf.mxu0
    %v1353 = vadd.f32 %v1192, %v1352
    %v1354 = vpop.f32.mrf.mxu0
    %1355 = vmatprep.mubr.bf16.mxu0 0
    %1356 = vmatmul.mubr.bf16.gmra.mxu0 %v783
    %v1357 = vpop.f32.mrf.mxu0
    %v1358 = vadd.f32 %v1197, %v1357
    %v1359 = vpop.f32.mrf.mxu0
    %v1360 = vpop.f32.mrf.mxu0
    %v1361 = vadd.f32 %v1200, %v1360
    %v1362 = vpop.f32.mrf.mxu0
    %1363 = vmatprep.mubr.bf16.mxu0 0
    %1364 = vmatmul.mubr.bf16.gmra.mxu0 %v786
    %v1365 = vpop.f32.mrf.mxu0
    %v1366 = vadd.f32 %v1205, %v1365
    %v1367 = vpop.f32.mrf.mxu0
    %v1368 = vpop.f32.mrf.mxu0
    %v1369 = vadd.f32 %v1208, %v1368
    %v1370 = vpop.f32.mrf.mxu0
    %1371 = vmatprep.mubr.bf16.mxu0 0
    %1372 = vmatmul.mubr.bf16.gmra.mxu0 %v789
    %v1373 = vpop.f32.mrf.mxu0
    %v1374 = vadd.f32 %v1213, %v1373
    %v1375 = vpop.f32.mrf.mxu0
    %v1376 = vpop.f32.mrf.mxu0
    %v1377 = vadd.f32 %v1216, %v1376
    %v1378 = vpop.f32.mrf.mxu0
    %1379 = vmatprep.mubr.bf16.mxu0 0
    %1380 = vmatmul.mubr.bf16.gmra.mxu0 %v792
    %v1381 = vpop.f32.mrf.mxu0
    %v1382 = vadd.f32 %v1221, %v1381
    %v1383 = vpop.f32.mrf.mxu0
    %v1384 = vpop.f32.mrf.mxu0
    %v1385 = vadd.f32 %v1224, %v1384
    %v1386 = vpop.f32.mrf.mxu0
    %1387 = vmatprep.mubr.bf16.mxu0 0
    %1388 = vmatmul.mubr.bf16.gmra.mxu0 %v795
    %v1389 = vpop.f32.mrf.mxu0
    %v1390 = vadd.f32 %v1229, %v1389
    %v1391 = vpop.f32.mrf.mxu0
    %v1392 = vpop.f32.mrf.mxu0
    %v1393 = vadd.f32 %v1232, %v1392
    %v1394 = vpop.f32.mrf.mxu0
    %1395 = vmatprep.mubr.bf16.mxu0 0
    %1396 = vmatmul.mubr.bf16.gmra.mxu0 %v798
    %v1397 = vpop.f32.mrf.mxu0
    %v1398 = vadd.f32 %v1237, %v1397
    %v1399 = vpop.f32.mrf.mxu0
    %v1400 = vpop.f32.mrf.mxu0
    %v1401 = vadd.f32 %v1240, %v1400
    %v1402 = vpop.f32.mrf.mxu0
    %1403 = vmatprep.mubr.bf16.mxu0 0
    %1404 = vmatmul.mubr.bf16.gmra.mxu0 %v801
    %v1405 = vpop.f32.mrf.mxu0
    %v1406 = vadd.f32 %v1245, %v1405
    %v1407 = vpop.f32.mrf.mxu0
    %v1408 = vpop.f32.mrf.mxu0
    %v1409 = vadd.f32 %v1248, %v1408
    %v1410 = vpop.f32.mrf.mxu0
    %1411 = vmatprep.mubr.bf16.mxu0 0
    %1412 = vmatmul.mubr.bf16.gmra.mxu0 %v804
    %v1413 = vpop.f32.mrf.mxu0
    %v1414 = vadd.f32 %v1253, %v1413
    %v1415 = vpop.f32.mrf.mxu0
    %v1416 = vpop.f32.mrf.mxu0
    %v1417 = vadd.f32 %v1256, %v1416
    %v1418 = vpop.f32.mrf.mxu0
    %1419 = vmatprep.mubr.bf16.mxu0 0
    %1420 = vmatmul.mubr.bf16.gmra.mxu0 %v807
    %v1421 = vpop.f32.mrf.mxu0
    %v1422 = vadd.f32 %v1261, %v1421
    %v1423 = vpop.f32.mrf.mxu0
    %v1424 = vpop.f32.mrf.mxu0
    %v1425 = vadd.f32 %v1264, %v1424
    %v1426 = vpop.f32.mrf.mxu0
    %1427 = vmatprep.mubr.bf16.mxu0 0
    %1428 = vmatmul.mubr.bf16.gmra.mxu0 %v810
    %v1429 = vpop.f32.mrf.mxu0
    %v1430 = vadd.f32 %v1269, %v1429
    %v1431 = vpop.f32.mrf.mxu0
    %v1432 = vpop.f32.mrf.mxu0
    %v1433 = vadd.f32 %v1272, %v1432
    %v1434 = vpop.f32.mrf.mxu0
    %1435 = vmatprep.mubr.bf16.mxu0 0
    %1436 = vmatmul.mubr.bf16.gmra.mxu0 %v813
    %v1437 = vpop.f32.mrf.mxu0
    %v1438 = vadd.f32 %v1277, %v1437
    %v1439 = vpop.f32.mrf.mxu0
    %v1440 = vpop.f32.mrf.mxu0
    %v1441 = vadd.f32 %v1280, %v1440
    %v1442 = vpop.f32.mrf.mxu0
    %1443 = vmatprep.mubr.bf16.mxu0 0
    %1444 = vmatmul.mubr.bf16.gmra.mxu0 %v816
    %v1445 = vpop.f32.mrf.mxu0
    %v1446 = vadd.f32 %v1285, %v1445
    %v1447 = vpop.f32.mrf.mxu0
    %v1448 = vpop.f32.mrf.mxu0
    %v1449 = vadd.f32 %v1288, %v1448
    %v1450 = vpop.f32.mrf.mxu0
    %1451 = vmatprep.mubr.bf16.mxu0 0
    %1452 = vmatmul.mubr.bf16.gmra.mxu0 %v819
    %v1453 = vpop.f32.mrf.mxu0
    %v1454 = vadd.f32 %v1293, %v1453
    %v1455 = vpop.f32.mrf.mxu0
    %v1456 = vpop.f32.mrf.mxu0
    %v1457 = vadd.f32 %v1296, %v1456
    %v1458 = vpop.f32.mrf.mxu0
    %1459 = vmatprep.mubr.bf16.mxu0 0
    %1460 = vmatmul.mubr.bf16.gmra.mxu0 %v822
    %v1461 = vpop.f32.mrf.mxu0
    %v1462 = vadd.f32 %v1301, %v1461
    %v1463 = vpop.f32.mrf.mxu0
    %v1464 = vpop.f32.mrf.mxu0
    %v1465 = vadd.f32 %v1304, %v1464
    %v1466 = vpop.f32.mrf.mxu0
    %1467 = vdwg.mxu0
    %v1468 = vmax.f32 %v1342, 0.0
    %v1469 = vmax.f32 %v1345, 0.0
    %v1470 = vmax.f32 %v1350, 0.0
    %v1471 = vmax.f32 %v1353, 0.0
    %v1472 = vmax.f32 %v1358, 0.0
    %v1473 = vmax.f32 %v1361, 0.0
    %v1474 = vmax.f32 %v1366, 0.0
    %v1475 = vmax.f32 %v1369, 0.0
    %v1476 = vmax.f32 %v1374, 0.0
    %v1477 = vmax.f32 %v1377, 0.0
    %v1478 = vmax.f32 %v1382, 0.0
    %v1479 = vmax.f32 %v1385, 0.0
    %v1480 = vmax.f32 %v1390, 0.0
    %v1481 = vmax.f32 %v1393, 0.0
    %v1482 = vmax.f32 %v1398, 0.0
    %v1483 = vmax.f32 %v1401, 0.0
    %v1484 = vmax.f32 %v1406, 0.0
    %v1485 = vmax.f32 %v1409, 0.0
    %v1486 = vmax.f32 %v1414, 0.0
    %v1487 = vmax.f32 %v1417, 0.0
    %v1488 = vmax.f32 %v1422, 0.0
    %v1489 = vmax.f32 %v1425, 0.0
    %v1490 = vmax.f32 %v1430, 0.0
    %v1491 = vmax.f32 %v1433, 0.0
    %v1492 = vmax.f32 %v1438, 0.0
    %v1493 = vmax.f32 %v1441, 0.0
    %v1494 = vmax.f32 %v1446, 0.0
    %v1495 = vmax.f32 %v1449, 0.0
    %v1496 = vmax.f32 %v1454, 0.0
    %v1497 = vmax.f32 %v1457, 0.0
    %v1498 = vmax.f32 %v1462, 0.0
    %v1499 = vmax.f32 %v1465, 0.0
    %v1500 = vpack.c.bf16 %v1469, %v1468
    %v1501 = vpack.c.bf16 %v1471, %v1470
    %v1502 = vpack.c.bf16 %v1473, %v1472
    %v1503 = vpack.c.bf16 %v1475, %v1474
    %v1504 = vpack.c.bf16 %v1477, %v1476
    %v1505 = vpack.c.bf16 %v1479, %v1478
    %v1506 = vpack.c.bf16 %v1481, %v1480
    %v1507 = vpack.c.bf16 %v1483, %v1482
    %v1508 = vpack.c.bf16 %v1485, %v1484
    %v1509 = vpack.c.bf16 %v1487, %v1486
    %v1510 = vpack.c.bf16 %v1489, %v1488
    %v1511 = vpack.c.bf16 %v1491, %v1490
    %v1512 = vpack.c.bf16 %v1493, %v1492
    %v1513 = vpack.c.bf16 %v1495, %v1494
    %v1514 = vpack.c.bf16 %v1497, %v1496
    %v1515 = vpack.c.bf16 %v1499, %v1498
    %v1516 = vld [vmem:[%s3] sm:$0xff]
    %v1517 = vld [vmem:[%s3 + $0x8] sm:$0xff]
    %v1518 = vld [vmem:[%s3 + $0x10] sm:$0xff]
    %v1519 = vld [vmem:[%s3 + $0x18] sm:$0xff]
    %v1520 = vld [vmem:[%s3 + $0x20] sm:$0xff]
    %v1521 = vld [vmem:[%s3 + $0x28] sm:$0xff]
    %v1522 = vld [vmem:[%s3 + $0x30] sm:$0xff]
    %v1523 = vld [vmem:[%s3 + $0x38] sm:$0xff]
    %v1524 = vld [vmem:[%s3 + $0x40] sm:$0xff]
    %v1525 = vld [vmem:[%s3 + $0x48] sm:$0xff]
    %v1526 = vld [vmem:[%s3 + $0x50] sm:$0xff]
    %v1527 = vld [vmem:[%s3 + $0x58] sm:$0xff]
    %v1528 = vld [vmem:[%s3 + $0x60] sm:$0xff]
    %v1529 = vld [vmem:[%s3 + $0x68] sm:$0xff]
    %v1530 = vld [vmem:[%s3 + $0x70] sm:$0xff]
    %v1531 = vld [vmem:[%s3 + $0x78] sm:$0xff]
    %v1532 = vld [vmem:[%s4] sm:$0x3]
    %v1534 = vlaneseq
    %v1535 = vshrl.u32 %v1534, 7
    %v1536 = vsub.s32 0, %v1535
    %v1537 = vrot.slane %v1532, %v1536
    %v1538 = vlaneseq
    %v1539 = vshrl.u32 %v1538, 7
    %v1540 = vsub.s32 1, %v1539
    %v1541 = vrot.slane %v1532, %v1540
    %v1560 = vunpack.c.l.b16 %v1516
    %v1561 = vunpack.c.h.b16 %v1516
    %v1562 = vunpack.c.l.b16 %v1517
    %v1563 = vunpack.c.h.b16 %v1517
    %v1564 = vunpack.c.l.b16 %v1518
    %v1565 = vunpack.c.h.b16 %v1518
    %v1566 = vunpack.c.l.b16 %v1519
    %v1567 = vunpack.c.h.b16 %v1519
    %v1568 = vunpack.c.l.b16 %v1520
    %v1569 = vunpack.c.h.b16 %v1520
    %v1570 = vunpack.c.l.b16 %v1521
    %v1571 = vunpack.c.h.b16 %v1521
    %v1572 = vunpack.c.l.b16 %v1522
    %v1573 = vunpack.c.h.b16 %v1522
    %v1574 = vunpack.c.l.b16 %v1523
    %v1575 = vunpack.c.h.b16 %v1523
    %v1576 = vunpack.c.l.b16 %v1524
    %v1577 = vunpack.c.h.b16 %v1524
    %v1578 = vunpack.c.l.b16 %v1525
    %v1579 = vunpack.c.h.b16 %v1525
    %v1580 = vunpack.c.l.b16 %v1526
    %v1581 = vunpack.c.h.b16 %v1526
    %v1582 = vunpack.c.l.b16 %v1527
    %v1583 = vunpack.c.h.b16 %v1527
    %v1584 = vunpack.c.l.b16 %v1528
    %v1585 = vunpack.c.h.b16 %v1528
    %v1586 = vunpack.c.l.b16 %v1529
    %v1587 = vunpack.c.h.b16 %v1529
    %v1588 = vunpack.c.l.b16 %v1530
    %v1589 = vunpack.c.h.b16 %v1530
    %v1590 = vunpack.c.l.b16 %v1531
    %v1591 = vunpack.c.h.b16 %v1531
    %v1592 = vpack.c.b16 %v1562, %v1560
    %v1593 = vpack.c.b16 %v1563, %v1561
    %v1594 = vpack.c.b16 %v1566, %v1564
    %v1595 = vpack.c.b16 %v1567, %v1565
    %v1596 = vpack.c.b16 %v1570, %v1568
    %v1597 = vpack.c.b16 %v1571, %v1569
    %v1598 = vpack.c.b16 %v1574, %v1572
    %v1599 = vpack.c.b16 %v1575, %v1573
    %v1600 = vpack.c.b16 %v1578, %v1576
    %v1601 = vpack.c.b16 %v1579, %v1577
    %v1602 = vpack.c.b16 %v1582, %v1580
    %v1603 = vpack.c.b16 %v1583, %v1581
    %v1604 = vpack.c.b16 %v1586, %v1584
    %v1605 = vpack.c.b16 %v1587, %v1585
    %v1606 = vpack.c.b16 %v1590, %v1588
    %v1607 = vpack.c.b16 %v1591, %v1589
    %1624 = vmatprep.subr.bf16.mxu0 %v1607
    %1625 = vmatpush1.bf16.msra.mxu0 %v1606
    %1626 = vmatprep.subr.bf16.mxu0 %v1605
    %1627 = vmatpush1.bf16.msra.mxu0 %v1604
    %1628 = vmatprep.subr.bf16.mxu0 %v1603
    %1629 = vmatpush1.bf16.msra.mxu0 %v1602
    %1630 = vmatprep.subr.bf16.mxu0 %v1601
    %1631 = vmatpush1.bf16.msra.mxu0 %v1600
    %1632 = vmatprep.subr.bf16.mxu0 %v1599
    %1633 = vmatpush1.bf16.msra.mxu0 %v1598
    %1634 = vmatprep.subr.bf16.mxu0 %v1597
    %1635 = vmatpush1.bf16.msra.mxu0 %v1596
    %1636 = vmatprep.subr.bf16.mxu0 %v1595
    %1637 = vmatpush1.bf16.msra.mxu0 %v1594
    %1638 = vmatprep.subr.bf16.mxu0 %v1593
    %1639 = vmatpush1.bf16.msra.mxu0 %v1592
    %1640 = vmatprep.subr.bf16.mxu0 0
    %1641 = vmatpush2.bf16.msra.mxu0 0
    %1642 = vmatprep.subr.bf16.mxu0 0
    %1643 = vmatpush2.bf16.msra.mxu0 0
    %1644 = vmatprep.subr.bf16.mxu0 0
    %1645 = vmatpush2.bf16.msra.mxu0 0
    %1646 = vmatprep.subr.bf16.mxu0 0
    %1647 = vmatpush2.bf16.msra.mxu0 0
    %1648 = vmatprep.subr.bf16.mxu0 0
    %1649 = vmatpush2.bf16.msra.mxu0 0
    %1650 = vmatprep.subr.bf16.mxu0 0
    %1651 = vmatpush2.bf16.msra.mxu0 0
    %1652 = vmatprep.subr.bf16.mxu0 0
    %1653 = vmatpush2.bf16.msra.mxu0 0
    %1654 = vmatprep.subr.bf16.mxu0 0
    %1655 = vmatpush2.bf16.msra.mxu0 0
    %1656 = vmatprep.mubr.bf16.mxu0 0
    %1657 = vmatmul.mubr.bf16.gmra.mxu0 %v1500
    %v1658 = vpop.f32.mrf.mxu0
    %v1659 = vadd.f32 %v1537, %v1658
    %v1660 = vpop.f32.mrf.mxu0
    %v1661 = vadd.f32 %v1541, %v1660
    %v1662 = vpop.f32.mrf.mxu0
    %v1663 = vadd.f32 %v1537, %v1662
    %v1664 = vpop.f32.mrf.mxu0
    %v1665 = vadd.f32 %v1541, %v1664
    %1666 = vmatprep.mubr.bf16.mxu0 0
    %1667 = vmatmul.mubr.bf16.gmra.mxu0 %v1501
    %v1668 = vpop.f32.mrf.mxu0
    %v1669 = vadd.f32 %v1537, %v1668
    %v1670 = vpop.f32.mrf.mxu0
    %v1671 = vadd.f32 %v1541, %v1670
    %v1672 = vpop.f32.mrf.mxu0
    %v1673 = vadd.f32 %v1537, %v1672
    %v1674 = vpop.f32.mrf.mxu0
    %v1675 = vadd.f32 %v1541, %v1674
    %1676 = vmatprep.mubr.bf16.mxu0 0
    %1677 = vmatmul.mubr.bf16.gmra.mxu0 %v1502
    %v1678 = vpop.f32.mrf.mxu0
    %v1679 = vadd.f32 %v1537, %v1678
    %v1680 = vpop.f32.mrf.mxu0
    %v1681 = vadd.f32 %v1541, %v1680
    %v1682 = vpop.f32.mrf.mxu0
    %v1683 = vadd.f32 %v1537, %v1682
    %v1684 = vpop.f32.mrf.mxu0
    %v1685 = vadd.f32 %v1541, %v1684
    %1686 = vmatprep.mubr.bf16.mxu0 0
    %1687 = vmatmul.mubr.bf16.gmra.mxu0 %v1503
    %v1688 = vpop.f32.mrf.mxu0
    %v1689 = vadd.f32 %v1537, %v1688
    %v1690 = vpop.f32.mrf.mxu0
    %v1691 = vadd.f32 %v1541, %v1690
    %v1692 = vpop.f32.mrf.mxu0
    %v1693 = vadd.f32 %v1537, %v1692
    %v1694 = vpop.f32.mrf.mxu0
    %v1695 = vadd.f32 %v1541, %v1694
    %1696 = vmatprep.mubr.bf16.mxu0 0
    %1697 = vmatmul.mubr.bf16.gmra.mxu0 %v1504
    %v1698 = vpop.f32.mrf.mxu0
    %v1699 = vadd.f32 %v1537, %v1698
    %v1700 = vpop.f32.mrf.mxu0
    %v1701 = vadd.f32 %v1541, %v1700
    %v1702 = vpop.f32.mrf.mxu0
    %v1703 = vadd.f32 %v1537, %v1702
    %v1704 = vpop.f32.mrf.mxu0
    %v1705 = vadd.f32 %v1541, %v1704
    %1706 = vmatprep.mubr.bf16.mxu0 0
    %1707 = vmatmul.mubr.bf16.gmra.mxu0 %v1505
    %v1708 = vpop.f32.mrf.mxu0
    %v1709 = vadd.f32 %v1537, %v1708
    %v1710 = vpop.f32.mrf.mxu0
    %v1711 = vadd.f32 %v1541, %v1710
    %v1712 = vpop.f32.mrf.mxu0
    %v1713 = vadd.f32 %v1537, %v1712
    %v1714 = vpop.f32.mrf.mxu0
    %v1715 = vadd.f32 %v1541, %v1714
    %1716 = vmatprep.mubr.bf16.mxu0 0
    %1717 = vmatmul.mubr.bf16.gmra.mxu0 %v1506
    %v1718 = vpop.f32.mrf.mxu0
    %v1719 = vadd.f32 %v1537, %v1718
    %v1720 = vpop.f32.mrf.mxu0
    %v1721 = vadd.f32 %v1541, %v1720
    %v1722 = vpop.f32.mrf.mxu0
    %v1723 = vadd.f32 %v1537, %v1722
    %v1724 = vpop.f32.mrf.mxu0
    %v1725 = vadd.f32 %v1541, %v1724
    %1726 = vmatprep.mubr.bf16.mxu0 0
    %1727 = vmatmul.mubr.bf16.gmra.mxu0 %v1507
    %v1728 = vpop.f32.mrf.mxu0
    %v1729 = vadd.f32 %v1537, %v1728
    %v1730 = vpop.f32.mrf.mxu0
    %v1731 = vadd.f32 %v1541, %v1730
    %v1732 = vpop.f32.mrf.mxu0
    %v1733 = vadd.f32 %v1537, %v1732
    %v1734 = vpop.f32.mrf.mxu0
    %v1735 = vadd.f32 %v1541, %v1734
    %1736 = vmatprep.mubr.bf16.mxu0 0
    %1737 = vmatmul.mubr.bf16.gmra.mxu0 %v1508
    %v1738 = vpop.f32.mrf.mxu0
    %v1739 = vadd.f32 %v1537, %v1738
    %v1740 = vpop.f32.mrf.mxu0
    %v1741 = vadd.f32 %v1541, %v1740
    %v1742 = vpop.f32.mrf.mxu0
    %v1743 = vadd.f32 %v1537, %v1742
    %v1744 = vpop.f32.mrf.mxu0
    %v1745 = vadd.f32 %v1541, %v1744
    %1746 = vmatprep.mubr.bf16.mxu0 0
    %1747 = vmatmul.mubr.bf16.gmra.mxu0 %v1509
    %v1748 = vpop.f32.mrf.mxu0
    %v1749 = vadd.f32 %v1537, %v1748
    %v1750 = vpop.f32.mrf.mxu0
    %v1751 = vadd.f32 %v1541, %v1750
    %v1752 = vpop.f32.mrf.mxu0
    %v1753 = vadd.f32 %v1537, %v1752
    %v1754 = vpop.f32.mrf.mxu0
    %v1755 = vadd.f32 %v1541, %v1754
    %1756 = vmatprep.mubr.bf16.mxu0 0
    %1757 = vmatmul.mubr.bf16.gmra.mxu0 %v1510
    %v1758 = vpop.f32.mrf.mxu0
    %v1759 = vadd.f32 %v1537, %v1758
    %v1760 = vpop.f32.mrf.mxu0
    %v1761 = vadd.f32 %v1541, %v1760
    %v1762 = vpop.f32.mrf.mxu0
    %v1763 = vadd.f32 %v1537, %v1762
    %v1764 = vpop.f32.mrf.mxu0
    %v1765 = vadd.f32 %v1541, %v1764
    %1766 = vmatprep.mubr.bf16.mxu0 0
    %1767 = vmatmul.mubr.bf16.gmra.mxu0 %v1511
    %v1768 = vpop.f32.mrf.mxu0
    %v1769 = vadd.f32 %v1537, %v1768
    %v1770 = vpop.f32.mrf.mxu0
    %v1771 = vadd.f32 %v1541, %v1770
    %v1772 = vpop.f32.mrf.mxu0
    %v1773 = vadd.f32 %v1537, %v1772
    %v1774 = vpop.f32.mrf.mxu0
    %v1775 = vadd.f32 %v1541, %v1774
    %1776 = vmatprep.mubr.bf16.mxu0 0
    %1777 = vmatmul.mubr.bf16.gmra.mxu0 %v1512
    %v1778 = vpop.f32.mrf.mxu0
    %v1779 = vadd.f32 %v1537, %v1778
    %v1780 = vpop.f32.mrf.mxu0
    %v1781 = vadd.f32 %v1541, %v1780
    %v1782 = vpop.f32.mrf.mxu0
    %v1783 = vadd.f32 %v1537, %v1782
    %v1784 = vpop.f32.mrf.mxu0
    %v1785 = vadd.f32 %v1541, %v1784
    %1786 = vmatprep.mubr.bf16.mxu0 0
    %1787 = vmatmul.mubr.bf16.gmra.mxu0 %v1513
    %v1788 = vpop.f32.mrf.mxu0
    %v1789 = vadd.f32 %v1537, %v1788
    %v1790 = vpop.f32.mrf.mxu0
    %v1791 = vadd.f32 %v1541, %v1790
    %v1792 = vpop.f32.mrf.mxu0
    %v1793 = vadd.f32 %v1537, %v1792
    %v1794 = vpop.f32.mrf.mxu0
    %v1795 = vadd.f32 %v1541, %v1794
    %1796 = vmatprep.mubr.bf16.mxu0 0
    %1797 = vmatmul.mubr.bf16.gmra.mxu0 %v1514
    %v1798 = vpop.f32.mrf.mxu0
    %v1799 = vadd.f32 %v1537, %v1798
    %v1800 = vpop.f32.mrf.mxu0
    %v1801 = vadd.f32 %v1541, %v1800
    %v1802 = vpop.f32.mrf.mxu0
    %v1803 = vadd.f32 %v1537, %v1802
    %v1804 = vpop.f32.mrf.mxu0
    %v1805 = vadd.f32 %v1541, %v1804
    %1806 = vmatprep.mubr.bf16.mxu0 0
    %1807 = vmatmul.mubr.bf16.gmra.mxu0 %v1515
    %v1808 = vpop.f32.mrf.mxu0
    %v1809 = vadd.f32 %v1537, %v1808
    %v1810 = vpop.f32.mrf.mxu0
    %v1811 = vadd.f32 %v1541, %v1810
    %v1812 = vpop.f32.mrf.mxu0
    %v1813 = vadd.f32 %v1537, %v1812
    %v1814 = vpop.f32.mrf.mxu0
    %v1815 = vadd.f32 %v1541, %v1814
    %1816 = vdwg.mxu0
    %v1817 = vmax.f32 %v1659, 0.0
    %v1818 = vmax.f32 %v1661, 0.0
    %v1819 = vmax.f32 %v1663, 0.0
    %v1820 = vmax.f32 %v1665, 0.0
    %v1821 = vmax.f32 %v1669, 0.0
    %v1822 = vmax.f32 %v1671, 0.0
    %v1823 = vmax.f32 %v1673, 0.0
    %v1824 = vmax.f32 %v1675, 0.0
    %v1825 = vmax.f32 %v1679, 0.0
    %v1826 = vmax.f32 %v1681, 0.0
    %v1827 = vmax.f32 %v1683, 0.0
    %v1828 = vmax.f32 %v1685, 0.0
    %v1829 = vmax.f32 %v1689, 0.0
    %v1830 = vmax.f32 %v1691, 0.0
    %v1831 = vmax.f32 %v1693, 0.0
    %v1832 = vmax.f32 %v1695, 0.0
    %v1833 = vmax.f32 %v1699, 0.0
    %v1834 = vmax.f32 %v1701, 0.0
    %v1835 = vmax.f32 %v1703, 0.0
    %v1836 = vmax.f32 %v1705, 0.0
    %v1837 = vmax.f32 %v1709, 0.0
    %v1838 = vmax.f32 %v1711, 0.0
    %v1839 = vmax.f32 %v1713, 0.0
    %v1840 = vmax.f32 %v1715, 0.0
    %v1841 = vmax.f32 %v1719, 0.0
    %v1842 = vmax.f32 %v1721, 0.0
    %v1843 = vmax.f32 %v1723, 0.0
    %v1844 = vmax.f32 %v1725, 0.0
    %v1845 = vmax.f32 %v1729, 0.0
    %v1846 = vmax.f32 %v1731, 0.0
    %v1847 = vmax.f32 %v1733, 0.0
    %v1848 = vmax.f32 %v1735, 0.0
    %v1849 = vmax.f32 %v1739, 0.0
    %v1850 = vmax.f32 %v1741, 0.0
    %v1851 = vmax.f32 %v1743, 0.0
    %v1852 = vmax.f32 %v1745, 0.0
    %v1853 = vmax.f32 %v1749, 0.0
    %v1854 = vmax.f32 %v1751, 0.0
    %v1855 = vmax.f32 %v1753, 0.0
    %v1856 = vmax.f32 %v1755, 0.0
    %v1857 = vmax.f32 %v1759, 0.0
    %v1858 = vmax.f32 %v1761, 0.0
    %v1859 = vmax.f32 %v1763, 0.0
    %v1860 = vmax.f32 %v1765, 0.0
    %v1861 = vmax.f32 %v1769, 0.0
    %v1862 = vmax.f32 %v1771, 0.0
    %v1863 = vmax.f32 %v1773, 0.0
    %v1864 = vmax.f32 %v1775, 0.0
    %v1865 = vmax.f32 %v1779, 0.0
    %v1866 = vmax.f32 %v1781, 0.0
    %v1867 = vmax.f32 %v1783, 0.0
    %v1868 = vmax.f32 %v1785, 0.0
    %v1869 = vmax.f32 %v1789, 0.0
    %v1870 = vmax.f32 %v1791, 0.0
    %v1871 = vmax.f32 %v1793, 0.0
    %v1872 = vmax.f32 %v1795, 0.0
    %v1873 = vmax.f32 %v1799, 0.0
    %v1874 = vmax.f32 %v1801, 0.0
    %v1875 = vmax.f32 %v1803, 0.0
    %v1876 = vmax.f32 %v1805, 0.0
    %v1877 = vmax.f32 %v1809, 0.0
    %v1878 = vmax.f32 %v1811, 0.0
    %v1879 = vmax.f32 %v1813, 0.0
    %v1880 = vmax.f32 %v1815, 0.0
    %v1881 = vpack.c.bf16 %v1819, %v1817
    %v1882 = vpack.c.bf16 %v1820, %v1818
    %v1883 = vpack.c.bf16 %v1823, %v1821
    %v1884 = vpack.c.bf16 %v1824, %v1822
    %v1885 = vpack.c.bf16 %v1827, %v1825
    %v1886 = vpack.c.bf16 %v1828, %v1826
    %v1887 = vpack.c.bf16 %v1831, %v1829
    %v1888 = vpack.c.bf16 %v1832, %v1830
    %v1889 = vpack.c.bf16 %v1835, %v1833
    %v1890 = vpack.c.bf16 %v1836, %v1834
    %v1891 = vpack.c.bf16 %v1839, %v1837
    %v1892 = vpack.c.bf16 %v1840, %v1838
    %v1893 = vpack.c.bf16 %v1843, %v1841
    %v1894 = vpack.c.bf16 %v1844, %v1842
    %v1895 = vpack.c.bf16 %v1847, %v1845
    %v1896 = vpack.c.bf16 %v1848, %v1846
    %v1897 = vpack.c.bf16 %v1851, %v1849
    %v1898 = vpack.c.bf16 %v1852, %v1850
    %v1899 = vpack.c.bf16 %v1855, %v1853
    %v1900 = vpack.c.bf16 %v1856, %v1854
    %v1901 = vpack.c.bf16 %v1859, %v1857
    %v1902 = vpack.c.bf16 %v1860, %v1858
    %v1903 = vpack.c.bf16 %v1863, %v1861
    %v1904 = vpack.c.bf16 %v1864, %v1862
    %v1905 = vpack.c.bf16 %v1867, %v1865
    %v1906 = vpack.c.bf16 %v1868, %v1866
    %v1907 = vpack.c.bf16 %v1871, %v1869
    %v1908 = vpack.c.bf16 %v1872, %v1870
    %v1909 = vpack.c.bf16 %v1875, %v1873
    %v1910 = vpack.c.bf16 %v1876, %v1874
    %v1911 = vpack.c.bf16 %v1879, %v1877
    %v1912 = vpack.c.bf16 %v1880, %v1878
    %v1913 = vld [vmem:[%s5] sm:$0xff]
    %v1914 = vld [vmem:[%s5 + $0x8] sm:$0xff]
    %v1915 = vld [vmem:[%s5 + $0x10] sm:$0xff]
    %v1916 = vld [vmem:[%s5 + $0x18] sm:$0xff]
    %v1917 = vld [vmem:[%s5 + $0x20] sm:$0xff]
    %v1918 = vld [vmem:[%s5 + $0x28] sm:$0xff]
    %v1919 = vld [vmem:[%s5 + $0x30] sm:$0xff]
    %v1920 = vld [vmem:[%s5 + $0x38] sm:$0xff]
    %v1921 = vld [vmem:[%s5 + $0x40] sm:$0xff]
    %v1922 = vld [vmem:[%s5 + $0x48] sm:$0xff]
    %v1923 = vld [vmem:[%s5 + $0x50] sm:$0xff]
    %v1924 = vld [vmem:[%s5 + $0x58] sm:$0xff]
    %v1925 = vld [vmem:[%s5 + $0x60] sm:$0xff]
    %v1926 = vld [vmem:[%s5 + $0x68] sm:$0xff]
    %v1927 = vld [vmem:[%s5 + $0x70] sm:$0xff]
    %v1928 = vld [vmem:[%s5 + $0x78] sm:$0xff]
    %v1929 = vld [vmem:[%s5 + $0x80] sm:$0xff]
    %v1930 = vld [vmem:[%s5 + $0x88] sm:$0xff]
    %v1931 = vld [vmem:[%s5 + $0x90] sm:$0xff]
    %v1932 = vld [vmem:[%s5 + $0x98] sm:$0xff]
    %v1933 = vld [vmem:[%s5 + $0xa0] sm:$0xff]
    %v1934 = vld [vmem:[%s5 + $0xa8] sm:$0xff]
    %v1935 = vld [vmem:[%s5 + $0xb0] sm:$0xff]
    %v1936 = vld [vmem:[%s5 + $0xb8] sm:$0xff]
    %v1937 = vld [vmem:[%s5 + $0xc0] sm:$0xff]
    %v1938 = vld [vmem:[%s5 + $0xc8] sm:$0xff]
    %v1939 = vld [vmem:[%s5 + $0xd0] sm:$0xff]
    %v1940 = vld [vmem:[%s5 + $0xd8] sm:$0xff]
    %v1941 = vld [vmem:[%s5 + $0xe0] sm:$0xff]
    %v1942 = vld [vmem:[%s5 + $0xe8] sm:$0xff]
    %v1943 = vld [vmem:[%s5 + $0xf0] sm:$0xff]
    %v1944 = vld [vmem:[%s5 + $0xf8] sm:$0xff]
    %v1945 = vld [vmem:[%s5 + $0x100] sm:$0xff]
    %v1946 = vld [vmem:[%s5 + $0x108] sm:$0xff]
    %v1947 = vld [vmem:[%s5 + $0x110] sm:$0xff]
    %v1948 = vld [vmem:[%s5 + $0x118] sm:$0xff]
    %v1949 = vld [vmem:[%s5 + $0x120] sm:$0xff]
    %v1950 = vld [vmem:[%s5 + $0x128] sm:$0xff]
    %v1951 = vld [vmem:[%s5 + $0x130] sm:$0xff]
    %v1952 = vld [vmem:[%s5 + $0x138] sm:$0xff]
    %v1953 = vld [vmem:[%s5 + $0x140] sm:$0xff]
    %v1954 = vld [vmem:[%s5 + $0x148] sm:$0xff]
    %v1955 = vld [vmem:[%s5 + $0x150] sm:$0xff]
    %v1956 = vld [vmem:[%s5 + $0x158] sm:$0xff]
    %v1957 = vld [vmem:[%s5 + $0x160] sm:$0xff]
    %v1958 = vld [vmem:[%s5 + $0x168] sm:$0xff]
    %v1959 = vld [vmem:[%s5 + $0x170] sm:$0xff]
    %v1960 = vld [vmem:[%s5 + $0x178] sm:$0xff]
    %v1961 = vld [vmem:[%s5 + $0x180] sm:$0xff]
    %v1962 = vld [vmem:[%s5 + $0x188] sm:$0xff]
    %v1963 = vld [vmem:[%s5 + $0x190] sm:$0xff]
    %v1964 = vld [vmem:[%s5 + $0x198] sm:$0xff]
    %v1965 = vld [vmem:[%s5 + $0x1a0] sm:$0xff]
    %v1966 = vld [vmem:[%s5 + $0x1a8] sm:$0xff]
    %v1967 = vld [vmem:[%s5 + $0x1b0] sm:$0xff]
    %v1968 = vld [vmem:[%s5 + $0x1b8] sm:$0xff]
    %v1969 = vld [vmem:[%s5 + $0x1c0] sm:$0xff]
    %v1970 = vld [vmem:[%s5 + $0x1c8] sm:$0xff]
    %v1971 = vld [vmem:[%s5 + $0x1d0] sm:$0xff]
    %v1972 = vld [vmem:[%s5 + $0x1d8] sm:$0xff]
    %v1973 = vld [vmem:[%s5 + $0x1e0] sm:$0xff]
    %v1974 = vld [vmem:[%s5 + $0x1e8] sm:$0xff]
    %v1975 = vld [vmem:[%s5 + $0x1f0] sm:$0xff]
    %v1976 = vld [vmem:[%s5 + $0x1f8] sm:$0xff]
    %v1977 = vld [vmem:[%s6] sm:$0xf]
    %v1979 = vlaneseq
    %v1980 = vshrl.u32 %v1979, 7
    %v1981 = vsub.s32 0, %v1980
    %v1982 = vrot.slane %v1977, %v1981
    %v1983 = vlaneseq
    %v1984 = vshrl.u32 %v1983, 7
    %v1985 = vsub.s32 1, %v1984
    %v1986 = vrot.slane %v1977, %v1985
    %v1987 = vlaneseq
    %v1988 = vshrl.u32 %v1987, 7
    %v1989 = vsub.s32 2, %v1988
    %v1990 = vrot.slane %v1977, %v1989
    %v1991 = vlaneseq
    %v1992 = vshrl.u32 %v1991, 7
    %v1993 = vsub.s32 3, %v1992
    %v1994 = vrot.slane %v1977, %v1993
    %v2063 = vunpack.c.l.b16 %v1913
    %v2064 = vunpack.c.h.b16 %v1913
    %v2065 = vunpack.c.l.b16 %v1914
    %v2066 = vunpack.c.h.b16 %v1914
    %v2067 = vunpack.c.l.b16 %v1915
    %v2068 = vunpack.c.h.b16 %v1915
    %v2069 = vunpack.c.l.b16 %v1916
    %v2070 = vunpack.c.h.b16 %v1916
    %v2071 = vunpack.c.l.b16 %v1917
    %v2072 = vunpack.c.h.b16 %v1917
    %v2073 = vunpack.c.l.b16 %v1918
    %v2074 = vunpack.c.h.b16 %v1918
    %v2075 = vunpack.c.l.b16 %v1919
    %v2076 = vunpack.c.h.b16 %v1919
    %v2077 = vunpack.c.l.b16 %v1920
    %v2078 = vunpack.c.h.b16 %v1920
    %v2079 = vunpack.c.l.b16 %v1921
    %v2080 = vunpack.c.h.b16 %v1921
    %v2081 = vunpack.c.l.b16 %v1922
    %v2082 = vunpack.c.h.b16 %v1922
    %v2083 = vunpack.c.l.b16 %v1923
    %v2084 = vunpack.c.h.b16 %v1923
    %v2085 = vunpack.c.l.b16 %v1924
    %v2086 = vunpack.c.h.b16 %v1924
    %v2087 = vunpack.c.l.b16 %v1925
    %v2088 = vunpack.c.h.b16 %v1925
    %v2089 = vunpack.c.l.b16 %v1926
    %v2090 = vunpack.c.h.b16 %v1926
    %v2091 = vunpack.c.l.b16 %v1927
    %v2092 = vunpack.c.h.b16 %v1927
    %v2093 = vunpack.c.l.b16 %v1928
    %v2094 = vunpack.c.h.b16 %v1928
    %v2095 = vunpack.c.l.b16 %v1929
    %v2096 = vunpack.c.h.b16 %v1929
    %v2097 = vunpack.c.l.b16 %v1930
    %v2098 = vunpack.c.h.b16 %v1930
    %v2099 = vunpack.c.l.b16 %v1931
    %v2100 = vunpack.c.h.b16 %v1931
    %v2101 = vunpack.c.l.b16 %v1932
    %v2102 = vunpack.c.h.b16 %v1932
    %v2103 = vunpack.c.l.b16 %v1933
    %v2104 = vunpack.c.h.b16 %v1933
    %v2105 = vunpack.c.l.b16 %v1934
    %v2106 = vunpack.c.h.b16 %v1934
    %v2107 = vunpack.c.l.b16 %v1935
    %v2108 = vunpack.c.h.b16 %v1935
    %v2109 = vunpack.c.l.b16 %v1936
    %v2110 = vunpack.c.h.b16 %v1936
    %v2111 = vunpack.c.l.b16 %v1937
    %v2112 = vunpack.c.h.b16 %v1937
    %v2113 = vunpack.c.l.b16 %v1938
    %v2114 = vunpack.c.h.b16 %v1938
    %v2115 = vunpack.c.l.b16 %v1939
    %v2116 = vunpack.c.h.b16 %v1939
    %v2117 = vunpack.c.l.b16 %v1940
    %v2118 = vunpack.c.h.b16 %v1940
    %v2119 = vunpack.c.l.b16 %v1941
    %v2120 = vunpack.c.h.b16 %v1941
    %v2121 = vunpack.c.l.b16 %v1942
    %v2122 = vunpack.c.h.b16 %v1942
    %v2123 = vunpack.c.l.b16 %v1943
    %v2124 = vunpack.c.h.b16 %v1943
    %v2125 = vunpack.c.l.b16 %v1944
    %v2126 = vunpack.c.h.b16 %v1944
    %v2127 = vunpack.c.l.b16 %v1945
    %v2128 = vunpack.c.h.b16 %v1945
    %v2129 = vunpack.c.l.b16 %v1946
    %v2130 = vunpack.c.h.b16 %v1946
    %v2131 = vunpack.c.l.b16 %v1947
    %v2132 = vunpack.c.h.b16 %v1947
    %v2133 = vunpack.c.l.b16 %v1948
    %v2134 = vunpack.c.h.b16 %v1948
    %v2135 = vunpack.c.l.b16 %v1949
    %v2136 = vunpack.c.h.b16 %v1949
    %v2137 = vunpack.c.l.b16 %v1950
    %v2138 = vunpack.c.h.b16 %v1950
    %v2139 = vunpack.c.l.b16 %v1951
    %v2140 = vunpack.c.h.b16 %v1951
    %v2141 = vunpack.c.l.b16 %v1952
    %v2142 = vunpack.c.h.b16 %v1952
    %v2143 = vunpack.c.l.b16 %v1953
    %v2144 = vunpack.c.h.b16 %v1953
    %v2145 = vunpack.c.l.b16 %v1954
    %v2146 = vunpack.c.h.b16 %v1954
    %v2147 = vunpack.c.l.b16 %v1955
    %v2148 = vunpack.c.h.b16 %v1955
    %v2149 = vunpack.c.l.b16 %v1956
    %v2150 = vunpack.c.h.b16 %v1956
    %v2151 = vunpack.c.l.b16 %v1957
    %v2152 = vunpack.c.h.b16 %v1957
    %v2153 = vunpack.c.l.b16 %v1958
    %v2154 = vunpack.c.h.b16 %v1958
    %v2155 = vunpack.c.l.b16 %v1959
    %v2156 = vunpack.c.h.b16 %v1959
    %v2157 = vunpack.c.l.b16 %v1960
    %v2158 = vunpack.c.h.b16 %v1960
    %v2159 = vunpack.c.l.b16 %v1961
    %v2160 = vunpack.c.h.b16 %v1961
    %v2161 = vunpack.c.l.b16 %v1962
    %v2162 = vunpack.c.h.b16 %v1962
    %v2163 = vunpack.c.l.b16 %v1963
    %v2164 = vunpack.c.h.b16 %v1963
    %v2165 = vunpack.c.l.b16 %v1964
    %v2166 = vunpack.c.h.b16 %v1964
    %v2167 = vunpack.c.l.b16 %v1965
    %v2168 = vunpack.c.h.b16 %v1965
    %v2169 = vunpack.c.l.b16 %v1966
    %v2170 = vunpack.c.h.b16 %v1966
    %v2171 = vunpack.c.l.b16 %v1967
    %v2172 = vunpack.c.h.b16 %v1967
    %v2173 = vunpack.c.l.b16 %v1968
    %v2174 = vunpack.c.h.b16 %v1968
    %v2175 = vunpack.c.l.b16 %v1969
    %v2176 = vunpack.c.h.b16 %v1969
    %v2177 = vunpack.c.l.b16 %v1970
    %v2178 = vunpack.c.h.b16 %v1970
    %v2179 = vunpack.c.l.b16 %v1971
    %v2180 = vunpack.c.h.b16 %v1971
    %v2181 = vunpack.c.l.b16 %v1972
    %v2182 = vunpack.c.h.b16 %v1972
    %v2183 = vunpack.c.l.b16 %v1973
    %v2184 = vunpack.c.h.b16 %v1973
    %v2185 = vunpack.c.l.b16 %v1974
    %v2186 = vunpack.c.h.b16 %v1974
    %v2187 = vunpack.c.l.b16 %v1975
    %v2188 = vunpack.c.h.b16 %v1975
    %v2189 = vunpack.c.l.b16 %v1976
    %v2190 = vunpack.c.h.b16 %v1976
    %v2191 = vpack.c.b16 %v2067, %v2063
    %v2192 = vpack.c.b16 %v2068, %v2064
    %v2193 = vpack.c.b16 %v2069, %v2065
    %v2194 = vpack.c.b16 %v2070, %v2066
    %v2195 = vpack.c.b16 %v2075, %v2071
    %v2196 = vpack.c.b16 %v2076, %v2072
    %v2197 = vpack.c.b16 %v2077, %v2073
    %v2198 = vpack.c.b16 %v2078, %v2074
    %v2199 = vpack.c.b16 %v2083, %v2079
    %v2200 = vpack.c.b16 %v2084, %v2080
    %v2201 = vpack.c.b16 %v2085, %v2081
    %v2202 = vpack.c.b16 %v2086, %v2082
    %v2203 = vpack.c.b16 %v2091, %v2087
    %v2204 = vpack.c.b16 %v2092, %v2088
    %v2205 = vpack.c.b16 %v2093, %v2089
    %v2206 = vpack.c.b16 %v2094, %v2090
    %v2207 = vpack.c.b16 %v2099, %v2095
    %v2208 = vpack.c.b16 %v2100, %v2096
    %v2209 = vpack.c.b16 %v2101, %v2097
    %v2210 = vpack.c.b16 %v2102, %v2098
    %v2211 = vpack.c.b16 %v2107, %v2103
    %v2212 = vpack.c.b16 %v2108, %v2104
    %v2213 = vpack.c.b16 %v2109, %v2105
    %v2214 = vpack.c.b16 %v2110, %v2106
    %v2215 = vpack.c.b16 %v2115, %v2111
    %v2216 = vpack.c.b16 %v2116, %v2112
    %v2217 = vpack.c.b16 %v2117, %v2113
    %v2218 = vpack.c.b16 %v2118, %v2114
    %v2219 = vpack.c.b16 %v2123, %v2119
    %v2220 = vpack.c.b16 %v2124, %v2120
    %v2221 = vpack.c.b16 %v2125, %v2121
    %v2222 = vpack.c.b16 %v2126, %v2122
    %v2223 = vpack.c.b16 %v2131, %v2127
    %v2224 = vpack.c.b16 %v2132, %v2128
    %v2225 = vpack.c.b16 %v2133, %v2129
    %v2226 = vpack.c.b16 %v2134, %v2130
    %v2227 = vpack.c.b16 %v2139, %v2135
    %v2228 = vpack.c.b16 %v2140, %v2136
    %v2229 = vpack.c.b16 %v2141, %v2137
    %v2230 = vpack.c.b16 %v2142, %v2138
    %v2231 = vpack.c.b16 %v2147, %v2143
    %v2232 = vpack.c.b16 %v2148, %v2144
    %v2233 = vpack.c.b16 %v2149, %v2145
    %v2234 = vpack.c.b16 %v2150, %v2146
    %v2235 = vpack.c.b16 %v2155, %v2151
    %v2236 = vpack.c.b16 %v2156, %v2152
    %v2237 = vpack.c.b16 %v2157, %v2153
    %v2238 = vpack.c.b16 %v2158, %v2154
    %v2239 = vpack.c.b16 %v2163, %v2159
    %v2240 = vpack.c.b16 %v2164, %v2160
    %v2241 = vpack.c.b16 %v2165, %v2161
    %v2242 = vpack.c.b16 %v2166, %v2162
    %v2243 = vpack.c.b16 %v2171, %v2167
    %v2244 = vpack.c.b16 %v2172, %v2168
    %v2245 = vpack.c.b16 %v2173, %v2169
    %v2246 = vpack.c.b16 %v2174, %v2170
    %v2247 = vpack.c.b16 %v2179, %v2175
    %v2248 = vpack.c.b16 %v2180, %v2176
    %v2249 = vpack.c.b16 %v2181, %v2177
    %v2250 = vpack.c.b16 %v2182, %v2178
    %v2251 = vpack.c.b16 %v2187, %v2183
    %v2252 = vpack.c.b16 %v2188, %v2184
    %v2253 = vpack.c.b16 %v2189, %v2185
    %v2254 = vpack.c.b16 %v2190, %v2186
    %2319 = vmatprep.subr.bf16.mxu0 %v2220
    %2320 = vmatpush1.bf16.msra.mxu0 %v2219
    %2321 = vmatprep.subr.bf16.mxu0 %v2216
    %2322 = vmatpush1.bf16.msra.mxu0 %v2215
    %2323 = vmatprep.subr.bf16.mxu0 %v2212
    %2324 = vmatpush1.bf16.msra.mxu0 %v2211
    %2325 = vmatprep.subr.bf16.mxu0 %v2208
    %2326 = vmatpush1.bf16.msra.mxu0 %v2207
    %2327 = vmatprep.subr.bf16.mxu0 %v2204
    %2328 = vmatpush1.bf16.msra.mxu0 %v2203
    %2329 = vmatprep.subr.bf16.mxu0 %v2200
    %2330 = vmatpush1.bf16.msra.mxu0 %v2199
    %2331 = vmatprep.subr.bf16.mxu0 %v2196
    %2332 = vmatpush1.bf16.msra.mxu0 %v2195
    %2333 = vmatprep.subr.bf16.mxu0 %v2192
    %2334 = vmatpush1.bf16.msra.mxu0 %v2191
    %2335 = vmatprep.subr.bf16.mxu0 %v2252
    %2336 = vmatpush2.bf16.msra.mxu0 %v2251
    %2337 = vmatprep.subr.bf16.mxu0 %v2248
    %2338 = vmatpush2.bf16.msra.mxu0 %v2247
    %2339 = vmatprep.subr.bf16.mxu0 %v2244
    %2340 = vmatpush2.bf16.msra.mxu0 %v2243
    %2341 = vmatprep.subr.bf16.mxu0 %v2240
    %2342 = vmatpush2.bf16.msra.mxu0 %v2239
    %2343 = vmatprep.subr.bf16.mxu0 %v2236
    %2344 = vmatpush2.bf16.msra.mxu0 %v2235
    %2345 = vmatprep.subr.bf16.mxu0 %v2232
    %2346 = vmatpush2.bf16.msra.mxu0 %v2231
    %2347 = vmatprep.subr.bf16.mxu0 %v2228
    %2348 = vmatpush2.bf16.msra.mxu0 %v2227
    %2349 = vmatprep.subr.bf16.mxu0 %v2224
    %2350 = vmatpush2.bf16.msra.mxu0 %v2223
    %2351 = vmatprep.mubr.bf16.mxu0 %v1882
    %2352 = vmatmul.mubr.bf16.gmra.mxu0 %v1881
    %v2353 = vpop.f32.mrf.mxu0
    %v2354 = vadd.f32 %v1982, %v2353
    %v2355 = vpop.f32.mrf.mxu0
    %v2356 = vadd.f32 %v1986, %v2355
    %v2357 = vpop.f32.mrf.mxu0
    %v2358 = vadd.f32 %v1982, %v2357
    %v2359 = vpop.f32.mrf.mxu0
    %v2360 = vadd.f32 %v1986, %v2359
    %2361 = vmatprep.mubr.bf16.mxu0 %v1884
    %2362 = vmatmul.mubr.bf16.gmra.mxu0 %v1883
    %v2363 = vpop.f32.mrf.mxu0
    %v2364 = vadd.f32 %v1982, %v2363
    %v2365 = vpop.f32.mrf.mxu0
    %v2366 = vadd.f32 %v1986, %v2365
    %v2367 = vpop.f32.mrf.mxu0
    %v2368 = vadd.f32 %v1982, %v2367
    %v2369 = vpop.f32.mrf.mxu0
    %v2370 = vadd.f32 %v1986, %v2369
    %2371 = vmatprep.mubr.bf16.mxu0 %v1886
    %2372 = vmatmul.mubr.bf16.gmra.mxu0 %v1885
    %v2373 = vpop.f32.mrf.mxu0
    %v2374 = vadd.f32 %v1982, %v2373
    %v2375 = vpop.f32.mrf.mxu0
    %v2376 = vadd.f32 %v1986, %v2375
    %v2377 = vpop.f32.mrf.mxu0
    %v2378 = vadd.f32 %v1982, %v2377
    %v2379 = vpop.f32.mrf.mxu0
    %v2380 = vadd.f32 %v1986, %v2379
    %2381 = vmatprep.mubr.bf16.mxu0 %v1888
    %2382 = vmatmul.mubr.bf16.gmra.mxu0 %v1887
    %v2383 = vpop.f32.mrf.mxu0
    %v2384 = vadd.f32 %v1982, %v2383
    %v2385 = vpop.f32.mrf.mxu0
    %v2386 = vadd.f32 %v1986, %v2385
    %v2387 = vpop.f32.mrf.mxu0
    %v2388 = vadd.f32 %v1982, %v2387
    %v2389 = vpop.f32.mrf.mxu0
    %v2390 = vadd.f32 %v1986, %v2389
    %2391 = vmatprep.mubr.bf16.mxu0 %v1890
    %2392 = vmatmul.mubr.bf16.gmra.mxu0 %v1889
    %v2393 = vpop.f32.mrf.mxu0
    %v2394 = vadd.f32 %v1982, %v2393
    %v2395 = vpop.f32.mrf.mxu0
    %v2396 = vadd.f32 %v1986, %v2395
    %v2397 = vpop.f32.mrf.mxu0
    %v2398 = vadd.f32 %v1982, %v2397
    %v2399 = vpop.f32.mrf.mxu0
    %v2400 = vadd.f32 %v1986, %v2399
    %2401 = vmatprep.mubr.bf16.mxu0 %v1892
    %2402 = vmatmul.mubr.bf16.gmra.mxu0 %v1891
    %v2403 = vpop.f32.mrf.mxu0
    %v2404 = vadd.f32 %v1982, %v2403
    %v2405 = vpop.f32.mrf.mxu0
    %v2406 = vadd.f32 %v1986, %v2405
    %v2407 = vpop.f32.mrf.mxu0
    %v2408 = vadd.f32 %v1982, %v2407
    %v2409 = vpop.f32.mrf.mxu0
    %v2410 = vadd.f32 %v1986, %v2409
    %2411 = vmatprep.mubr.bf16.mxu0 %v1894
    %2412 = vmatmul.mubr.bf16.gmra.mxu0 %v1893
    %v2413 = vpop.f32.mrf.mxu0
    %v2414 = vadd.f32 %v1982, %v2413
    %v2415 = vpop.f32.mrf.mxu0
    %v2416 = vadd.f32 %v1986, %v2415
    %v2417 = vpop.f32.mrf.mxu0
    %v2418 = vadd.f32 %v1982, %v2417
    %v2419 = vpop.f32.mrf.mxu0
    %v2420 = vadd.f32 %v1986, %v2419
    %2421 = vmatprep.mubr.bf16.mxu0 %v1896
    %2422 = vmatmul.mubr.bf16.gmra.mxu0 %v1895
    %v2423 = vpop.f32.mrf.mxu0
    %v2424 = vadd.f32 %v1982, %v2423
    %v2425 = vpop.f32.mrf.mxu0
    %v2426 = vadd.f32 %v1986, %v2425
    %v2427 = vpop.f32.mrf.mxu0
    %v2428 = vadd.f32 %v1982, %v2427
    %v2429 = vpop.f32.mrf.mxu0
    %v2430 = vadd.f32 %v1986, %v2429
    %2431 = vmatprep.mubr.bf16.mxu0 %v1898
    %2432 = vmatmul.mubr.bf16.gmra.mxu0 %v1897
    %v2433 = vpop.f32.mrf.mxu0
    %v2434 = vadd.f32 %v1982, %v2433
    %v2435 = vpop.f32.mrf.mxu0
    %v2436 = vadd.f32 %v1986, %v2435
    %v2437 = vpop.f32.mrf.mxu0
    %v2438 = vadd.f32 %v1982, %v2437
    %v2439 = vpop.f32.mrf.mxu0
    %v2440 = vadd.f32 %v1986, %v2439
    %2441 = vmatprep.mubr.bf16.mxu0 %v1900
    %2442 = vmatmul.mubr.bf16.gmra.mxu0 %v1899
    %v2443 = vpop.f32.mrf.mxu0
    %v2444 = vadd.f32 %v1982, %v2443
    %v2445 = vpop.f32.mrf.mxu0
    %v2446 = vadd.f32 %v1986, %v2445
    %v2447 = vpop.f32.mrf.mxu0
    %v2448 = vadd.f32 %v1982, %v2447
    %v2449 = vpop.f32.mrf.mxu0
    %v2450 = vadd.f32 %v1986, %v2449
    %2451 = vmatprep.mubr.bf16.mxu0 %v1902
    %2452 = vmatmul.mubr.bf16.gmra.mxu0 %v1901
    %v2453 = vpop.f32.mrf.mxu0
    %v2454 = vadd.f32 %v1982, %v2453
    %v2455 = vpop.f32.mrf.mxu0
    %v2456 = vadd.f32 %v1986, %v2455
    %v2457 = vpop.f32.mrf.mxu0
    %v2458 = vadd.f32 %v1982, %v2457
    %v2459 = vpop.f32.mrf.mxu0
    %v2460 = vadd.f32 %v1986, %v2459
    %2461 = vmatprep.mubr.bf16.mxu0 %v1904
    %2462 = vmatmul.mubr.bf16.gmra.mxu0 %v1903
    %v2463 = vpop.f32.mrf.mxu0
    %v2464 = vadd.f32 %v1982, %v2463
    %v2465 = vpop.f32.mrf.mxu0
    %v2466 = vadd.f32 %v1986, %v2465
    %v2467 = vpop.f32.mrf.mxu0
    %v2468 = vadd.f32 %v1982, %v2467
    %v2469 = vpop.f32.mrf.mxu0
    %v2470 = vadd.f32 %v1986, %v2469
    %2471 = vmatprep.mubr.bf16.mxu0 %v1906
    %2472 = vmatmul.mubr.bf16.gmra.mxu0 %v1905
    %v2473 = vpop.f32.mrf.mxu0
    %v2474 = vadd.f32 %v1982, %v2473
    %v2475 = vpop.f32.mrf.mxu0
    %v2476 = vadd.f32 %v1986, %v2475
    %v2477 = vpop.f32.mrf.mxu0
    %v2478 = vadd.f32 %v1982, %v2477
    %v2479 = vpop.f32.mrf.mxu0
    %v2480 = vadd.f32 %v1986, %v2479
    %2481 = vmatprep.mubr.bf16.mxu0 %v1908
    %2482 = vmatmul.mubr.bf16.gmra.mxu0 %v1907
    %v2483 = vpop.f32.mrf.mxu0
    %v2484 = vadd.f32 %v1982, %v2483
    %v2485 = vpop.f32.mrf.mxu0
    %v2486 = vadd.f32 %v1986, %v2485
    %v2487 = vpop.f32.mrf.mxu0
    %v2488 = vadd.f32 %v1982, %v2487
    %v2489 = vpop.f32.mrf.mxu0
    %v2490 = vadd.f32 %v1986, %v2489
    %2491 = vmatprep.mubr.bf16.mxu0 %v1910
    %2492 = vmatmul.mubr.bf16.gmra.mxu0 %v1909
    %v2493 = vpop.f32.mrf.mxu0
    %v2494 = vadd.f32 %v1982, %v2493
    %v2495 = vpop.f32.mrf.mxu0
    %v2496 = vadd.f32 %v1986, %v2495
    %v2497 = vpop.f32.mrf.mxu0
    %v2498 = vadd.f32 %v1982, %v2497
    %v2499 = vpop.f32.mrf.mxu0
    %v2500 = vadd.f32 %v1986, %v2499
    %2501 = vmatprep.mubr.bf16.mxu0 %v1912
    %2502 = vmatmul.mubr.bf16.gmra.mxu0 %v1911
    %v2503 = vpop.f32.mrf.mxu0
    %v2504 = vadd.f32 %v1982, %v2503
    %v2505 = vpop.f32.mrf.mxu0
    %v2506 = vadd.f32 %v1986, %v2505
    %v2507 = vpop.f32.mrf.mxu0
    %v2508 = vadd.f32 %v1982, %v2507
    %v2509 = vpop.f32.mrf.mxu0
    %v2510 = vadd.f32 %v1986, %v2509
    %2511 = vdwg.mxu0
    %2512 = vmatprep.subr.bf16.mxu0 %v2222
    %2513 = vmatpush1.bf16.msra.mxu0 %v2221
    %2514 = vmatprep.subr.bf16.mxu0 %v2218
    %2515 = vmatpush1.bf16.msra.mxu0 %v2217
    %2516 = vmatprep.subr.bf16.mxu0 %v2214
    %2517 = vmatpush1.bf16.msra.mxu0 %v2213
    %2518 = vmatprep.subr.bf16.mxu0 %v2210
    %2519 = vmatpush1.bf16.msra.mxu0 %v2209
    %2520 = vmatprep.subr.bf16.mxu0 %v2206
    %2521 = vmatpush1.bf16.msra.mxu0 %v2205
    %2522 = vmatprep.subr.bf16.mxu0 %v2202
    %2523 = vmatpush1.bf16.msra.mxu0 %v2201
    %2524 = vmatprep.subr.bf16.mxu0 %v2198
    %2525 = vmatpush1.bf16.msra.mxu0 %v2197
    %2526 = vmatprep.subr.bf16.mxu0 %v2194
    %2527 = vmatpush1.bf16.msra.mxu0 %v2193
    %2528 = vmatprep.subr.bf16.mxu0 %v2254
    %2529 = vmatpush2.bf16.msra.mxu0 %v2253
    %2530 = vmatprep.subr.bf16.mxu0 %v2250
    %2531 = vmatpush2.bf16.msra.mxu0 %v2249
    %2532 = vmatprep.subr.bf16.mxu0 %v2246
    %2533 = vmatpush2.bf16.msra.mxu0 %v2245
    %2534 = vmatprep.subr.bf16.mxu0 %v2242
    %2535 = vmatpush2.bf16.msra.mxu0 %v2241
    %2536 = vmatprep.subr.bf16.mxu0 %v2238
    %2537 = vmatpush2.bf16.msra.mxu0 %v2237
    %2538 = vmatprep.subr.bf16.mxu0 %v2234
    %2539 = vmatpush2.bf16.msra.mxu0 %v2233
    %2540 = vmatprep.subr.bf16.mxu0 %v2230
    %2541 = vmatpush2.bf16.msra.mxu0 %v2229
    %2542 = vmatprep.subr.bf16.mxu0 %v2226
    %2543 = vmatpush2.bf16.msra.mxu0 %v2225
    %2544 = vmatprep.mubr.bf16.mxu0 %v1882
    %2545 = vmatmul.mubr.bf16.gmra.mxu0 %v1881
    %v2546 = vpop.f32.mrf.mxu0
    %v2547 = vadd.f32 %v1990, %v2546
    %v2548 = vpop.f32.mrf.mxu0
    %v2549 = vadd.f32 %v1994, %v2548
    %v2550 = vpop.f32.mrf.mxu0
    %v2551 = vadd.f32 %v1990, %v2550
    %v2552 = vpop.f32.mrf.mxu0
    %v2553 = vadd.f32 %v1994, %v2552
    %2554 = vmatprep.mubr.bf16.mxu0 %v1884
    %2555 = vmatmul.mubr.bf16.gmra.mxu0 %v1883
    %v2556 = vpop.f32.mrf.mxu0
    %v2557 = vadd.f32 %v1990, %v2556
    %v2558 = vpop.f32.mrf.mxu0
    %v2559 = vadd.f32 %v1994, %v2558
    %v2560 = vpop.f32.mrf.mxu0
    %v2561 = vadd.f32 %v1990, %v2560
    %v2562 = vpop.f32.mrf.mxu0
    %v2563 = vadd.f32 %v1994, %v2562
    %2564 = vmatprep.mubr.bf16.mxu0 %v1886
    %2565 = vmatmul.mubr.bf16.gmra.mxu0 %v1885
    %v2566 = vpop.f32.mrf.mxu0
    %v2567 = vadd.f32 %v1990, %v2566
    %v2568 = vpop.f32.mrf.mxu0
    %v2569 = vadd.f32 %v1994, %v2568
    %v2570 = vpop.f32.mrf.mxu0
    %v2571 = vadd.f32 %v1990, %v2570
    %v2572 = vpop.f32.mrf.mxu0
    %v2573 = vadd.f32 %v1994, %v2572
    %2574 = vmatprep.mubr.bf16.mxu0 %v1888
    %2575 = vmatmul.mubr.bf16.gmra.mxu0 %v1887
    %v2576 = vpop.f32.mrf.mxu0
    %v2577 = vadd.f32 %v1990, %v2576
    %v2578 = vpop.f32.mrf.mxu0
    %v2579 = vadd.f32 %v1994, %v2578
    %v2580 = vpop.f32.mrf.mxu0
    %v2581 = vadd.f32 %v1990, %v2580
    %v2582 = vpop.f32.mrf.mxu0
    %v2583 = vadd.f32 %v1994, %v2582
    %2584 = vmatprep.mubr.bf16.mxu0 %v1890
    %2585 = vmatmul.mubr.bf16.gmra.mxu0 %v1889
    %v2586 = vpop.f32.mrf.mxu0
    %v2587 = vadd.f32 %v1990, %v2586
    %v2588 = vpop.f32.mrf.mxu0
    %v2589 = vadd.f32 %v1994, %v2588
    %v2590 = vpop.f32.mrf.mxu0
    %v2591 = vadd.f32 %v1990, %v2590
    %v2592 = vpop.f32.mrf.mxu0
    %v2593 = vadd.f32 %v1994, %v2592
    %2594 = vmatprep.mubr.bf16.mxu0 %v1892
    %2595 = vmatmul.mubr.bf16.gmra.mxu0 %v1891
    %v2596 = vpop.f32.mrf.mxu0
    %v2597 = vadd.f32 %v1990, %v2596
    %v2598 = vpop.f32.mrf.mxu0
    %v2599 = vadd.f32 %v1994, %v2598
    %v2600 = vpop.f32.mrf.mxu0
    %v2601 = vadd.f32 %v1990, %v2600
    %v2602 = vpop.f32.mrf.mxu0
    %v2603 = vadd.f32 %v1994, %v2602
    %2604 = vmatprep.mubr.bf16.mxu0 %v1894
    %2605 = vmatmul.mubr.bf16.gmra.mxu0 %v1893
    %v2606 = vpop.f32.mrf.mxu0
    %v2607 = vadd.f32 %v1990, %v2606
    %v2608 = vpop.f32.mrf.mxu0
    %v2609 = vadd.f32 %v1994, %v2608
    %v2610 = vpop.f32.mrf.mxu0
    %v2611 = vadd.f32 %v1990, %v2610
    %v2612 = vpop.f32.mrf.mxu0
    %v2613 = vadd.f32 %v1994, %v2612
    %2614 = vmatprep.mubr.bf16.mxu0 %v1896
    %2615 = vmatmul.mubr.bf16.gmra.mxu0 %v1895
    %v2616 = vpop.f32.mrf.mxu0
    %v2617 = vadd.f32 %v1990, %v2616
    %v2618 = vpop.f32.mrf.mxu0
    %v2619 = vadd.f32 %v1994, %v2618
    %v2620 = vpop.f32.mrf.mxu0
    %v2621 = vadd.f32 %v1990, %v2620
    %v2622 = vpop.f32.mrf.mxu0
    %v2623 = vadd.f32 %v1994, %v2622
    %2624 = vmatprep.mubr.bf16.mxu0 %v1898
    %2625 = vmatmul.mubr.bf16.gmra.mxu0 %v1897
    %v2626 = vpop.f32.mrf.mxu0
    %v2627 = vadd.f32 %v1990, %v2626
    %v2628 = vpop.f32.mrf.mxu0
    %v2629 = vadd.f32 %v1994, %v2628
    %v2630 = vpop.f32.mrf.mxu0
    %v2631 = vadd.f32 %v1990, %v2630
    %v2632 = vpop.f32.mrf.mxu0
    %v2633 = vadd.f32 %v1994, %v2632
    %2634 = vmatprep.mubr.bf16.mxu0 %v1900
    %2635 = vmatmul.mubr.bf16.gmra.mxu0 %v1899
    %v2636 = vpop.f32.mrf.mxu0
    %v2637 = vadd.f32 %v1990, %v2636
    %v2638 = vpop.f32.mrf.mxu0
    %v2639 = vadd.f32 %v1994, %v2638
    %v2640 = vpop.f32.mrf.mxu0
    %v2641 = vadd.f32 %v1990, %v2640
    %v2642 = vpop.f32.mrf.mxu0
    %v2643 = vadd.f32 %v1994, %v2642
    %2644 = vmatprep.mubr.bf16.mxu0 %v1902
    %2645 = vmatmul.mubr.bf16.gmra.mxu0 %v1901
    %v2646 = vpop.f32.mrf.mxu0
    %v2647 = vadd.f32 %v1990, %v2646
    %v2648 = vpop.f32.mrf.mxu0
    %v2649 = vadd.f32 %v1994, %v2648
    %v2650 = vpop.f32.mrf.mxu0
    %v2651 = vadd.f32 %v1990, %v2650
    %v2652 = vpop.f32.mrf.mxu0
    %v2653 = vadd.f32 %v1994, %v2652
    %2654 = vmatprep.mubr.bf16.mxu0 %v1904
    %2655 = vmatmul.mubr.bf16.gmra.mxu0 %v1903
    %v2656 = vpop.f32.mrf.mxu0
    %v2657 = vadd.f32 %v1990, %v2656
    %v2658 = vpop.f32.mrf.mxu0
    %v2659 = vadd.f32 %v1994, %v2658
    %v2660 = vpop.f32.mrf.mxu0
    %v2661 = vadd.f32 %v1990, %v2660
    %v2662 = vpop.f32.mrf.mxu0
    %v2663 = vadd.f32 %v1994, %v2662
    %2664 = vmatprep.mubr.bf16.mxu0 %v1906
    %2665 = vmatmul.mubr.bf16.gmra.mxu0 %v1905
    %v2666 = vpop.f32.mrf.mxu0
    %v2667 = vadd.f32 %v1990, %v2666
    %v2668 = vpop.f32.mrf.mxu0
    %v2669 = vadd.f32 %v1994, %v2668
    %v2670 = vpop.f32.mrf.mxu0
    %v2671 = vadd.f32 %v1990, %v2670
    %v2672 = vpop.f32.mrf.mxu0
    %v2673 = vadd.f32 %v1994, %v2672
    %2674 = vmatprep.mubr.bf16.mxu0 %v1908
    %2675 = vmatmul.mubr.bf16.gmra.mxu0 %v1907
    %v2676 = vpop.f32.mrf.mxu0
    %v2677 = vadd.f32 %v1990, %v2676
    %v2678 = vpop.f32.mrf.mxu0
    %v2679 = vadd.f32 %v1994, %v2678
    %v2680 = vpop.f32.mrf.mxu0
    %v2681 = vadd.f32 %v1990, %v2680
    %v2682 = vpop.f32.mrf.mxu0
    %v2683 = vadd.f32 %v1994, %v2682
    %2684 = vmatprep.mubr.bf16.mxu0 %v1910
    %2685 = vmatmul.mubr.bf16.gmra.mxu0 %v1909
    %v2686 = vpop.f32.mrf.mxu0
    %v2687 = vadd.f32 %v1990, %v2686
    %v2688 = vpop.f32.mrf.mxu0
    %v2689 = vadd.f32 %v1994, %v2688
    %v2690 = vpop.f32.mrf.mxu0
    %v2691 = vadd.f32 %v1990, %v2690
    %v2692 = vpop.f32.mrf.mxu0
    %v2693 = vadd.f32 %v1994, %v2692
    %2694 = vmatprep.mubr.bf16.mxu0 %v1912
    %2695 = vmatmul.mubr.bf16.gmra.mxu0 %v1911
    %v2696 = vpop.f32.mrf.mxu0
    %v2697 = vadd.f32 %v1990, %v2696
    %v2698 = vpop.f32.mrf.mxu0
    %v2699 = vadd.f32 %v1994, %v2698
    %v2700 = vpop.f32.mrf.mxu0
    %v2701 = vadd.f32 %v1990, %v2700
    %v2702 = vpop.f32.mrf.mxu0
    %v2703 = vadd.f32 %v1994, %v2702
    %2704 = vdwg.mxu0
    %v2705 = vmax.f32 %v2354, 0.0
    %v2706 = vmax.f32 %v2356, 0.0
    %v2707 = vmax.f32 %v2547, 0.0
    %v2708 = vmax.f32 %v2549, 0.0
    %v2709 = vmax.f32 %v2358, 0.0
    %v2710 = vmax.f32 %v2360, 0.0
    %v2711 = vmax.f32 %v2551, 0.0
    %v2712 = vmax.f32 %v2553, 0.0
    %v2713 = vmax.f32 %v2364, 0.0
    %v2714 = vmax.f32 %v2366, 0.0
    %v2715 = vmax.f32 %v2557, 0.0
    %v2716 = vmax.f32 %v2559, 0.0
    %v2717 = vmax.f32 %v2368, 0.0
    %v2718 = vmax.f32 %v2370, 0.0
    %v2719 = vmax.f32 %v2561, 0.0
    %v2720 = vmax.f32 %v2563, 0.0
    %v2721 = vmax.f32 %v2374, 0.0
    %v2722 = vmax.f32 %v2376, 0.0
    %v2723 = vmax.f32 %v2567, 0.0
    %v2724 = vmax.f32 %v2569, 0.0
    %v2725 = vmax.f32 %v2378, 0.0
    %v2726 = vmax.f32 %v2380, 0.0
    %v2727 = vmax.f32 %v2571, 0.0
    %v2728 = vmax.f32 %v2573, 0.0
    %v2729 = vmax.f32 %v2384, 0.0
    %v2730 = vmax.f32 %v2386, 0.0
    %v2731 = vmax.f32 %v2577, 0.0
    %v2732 = vmax.f32 %v2579, 0.0
    %v2733 = vmax.f32 %v2388, 0.0
    %v2734 = vmax.f32 %v2390, 0.0
    %v2735 = vmax.f32 %v2581, 0.0
    %v2736 = vmax.f32 %v2583, 0.0
    %v2737 = vmax.f32 %v2394, 0.0
    %v2738 = vmax.f32 %v2396, 0.0
    %v2739 = vmax.f32 %v2587, 0.0
    %v2740 = vmax.f32 %v2589, 0.0
    %v2741 = vmax.f32 %v2398, 0.0
    %v2742 = vmax.f32 %v2400, 0.0
    %v2743 = vmax.f32 %v2591, 0.0
    %v2744 = vmax.f32 %v2593, 0.0
    %v2745 = vmax.f32 %v2404, 0.0
    %v2746 = vmax.f32 %v2406, 0.0
    %v2747 = vmax.f32 %v2597, 0.0
    %v2748 = vmax.f32 %v2599, 0.0
    %v2749 = vmax.f32 %v2408, 0.0
    %v2750 = vmax.f32 %v2410, 0.0
    %v2751 = vmax.f32 %v2601, 0.0
    %v2752 = vmax.f32 %v2603, 0.0
    %v2753 = vmax.f32 %v2414, 0.0
    %v2754 = vmax.f32 %v2416, 0.0
    %v2755 = vmax.f32 %v2607, 0.0
    %v2756 = vmax.f32 %v2609, 0.0
    %v2757 = vmax.f32 %v2418, 0.0
    %v2758 = vmax.f32 %v2420, 0.0
    %v2759 = vmax.f32 %v2611, 0.0
    %v2760 = vmax.f32 %v2613, 0.0
    %v2761 = vmax.f32 %v2424, 0.0
    %v2762 = vmax.f32 %v2426, 0.0
    %v2763 = vmax.f32 %v2617, 0.0
    %v2764 = vmax.f32 %v2619, 0.0
    %v2765 = vmax.f32 %v2428, 0.0
    %v2766 = vmax.f32 %v2430, 0.0
    %v2767 = vmax.f32 %v2621, 0.0
    %v2768 = vmax.f32 %v2623, 0.0
    %v2769 = vmax.f32 %v2434, 0.0
    %v2770 = vmax.f32 %v2436, 0.0
    %v2771 = vmax.f32 %v2627, 0.0
    %v2772 = vmax.f32 %v2629, 0.0
    %v2773 = vmax.f32 %v2438, 0.0
    %v2774 = vmax.f32 %v2440, 0.0
    %v2775 = vmax.f32 %v2631, 0.0
    %v2776 = vmax.f32 %v2633, 0.0
    %v2777 = vmax.f32 %v2444, 0.0
    %v2778 = vmax.f32 %v2446, 0.0
    %v2779 = vmax.f32 %v2637, 0.0
    %v2780 = vmax.f32 %v2639, 0.0
    %v2781 = vmax.f32 %v2448, 0.0
    %v2782 = vmax.f32 %v2450, 0.0
    %v2783 = vmax.f32 %v2641, 0.0
    %v2784 = vmax.f32 %v2643, 0.0
    %v2785 = vmax.f32 %v2454, 0.0
    %v2786 = vmax.f32 %v2456, 0.0
    %v2787 = vmax.f32 %v2647, 0.0
    %v2788 = vmax.f32 %v2649, 0.0
    %v2789 = vmax.f32 %v2458, 0.0
    %v2790 = vmax.f32 %v2460, 0.0
    %v2791 = vmax.f32 %v2651, 0.0
    %v2792 = vmax.f32 %v2653, 0.0
    %v2793 = vmax.f32 %v2464, 0.0
    %v2794 = vmax.f32 %v2466, 0.0
    %v2795 = vmax.f32 %v2657, 0.0
    %v2796 = vmax.f32 %v2659, 0.0
    %v2797 = vmax.f32 %v2468, 0.0
    %v2798 = vmax.f32 %v2470, 0.0
    %v2799 = vmax.f32 %v2661, 0.0
    %v2800 = vmax.f32 %v2663, 0.0
    %v2801 = vmax.f32 %v2474, 0.0
    %v2802 = vmax.f32 %v2476, 0.0
    %v2803 = vmax.f32 %v2667, 0.0
    %v2804 = vmax.f32 %v2669, 0.0
    %v2805 = vmax.f32 %v2478, 0.0
    %v2806 = vmax.f32 %v2480, 0.0
    %v2807 = vmax.f32 %v2671, 0.0
    %v2808 = vmax.f32 %v2673, 0.0
    %v2809 = vmax.f32 %v2484, 0.0
    %v2810 = vmax.f32 %v2486, 0.0
    %v2811 = vmax.f32 %v2677, 0.0
    %v2812 = vmax.f32 %v2679, 0.0
    %v2813 = vmax.f32 %v2488, 0.0
    %v2814 = vmax.f32 %v2490, 0.0
    %v2815 = vmax.f32 %v2681, 0.0
    %v2816 = vmax.f32 %v2683, 0.0
    %v2817 = vmax.f32 %v2494, 0.0
    %v2818 = vmax.f32 %v2496, 0.0
    %v2819 = vmax.f32 %v2687, 0.0
    %v2820 = vmax.f32 %v2689, 0.0
    %v2821 = vmax.f32 %v2498, 0.0
    %v2822 = vmax.f32 %v2500, 0.0
    %v2823 = vmax.f32 %v2691, 0.0
    %v2824 = vmax.f32 %v2693, 0.0
    %v2825 = vmax.f32 %v2504, 0.0
    %v2826 = vmax.f32 %v2506, 0.0
    %v2827 = vmax.f32 %v2697, 0.0
    %v2828 = vmax.f32 %v2699, 0.0
    %v2829 = vmax.f32 %v2508, 0.0
    %v2830 = vmax.f32 %v2510, 0.0
    %v2831 = vmax.f32 %v2701, 0.0
    %v2832 = vmax.f32 %v2703, 0.0
    %v2833 = vpack.c.bf16 %v2709, %v2705
    %v2834 = vpack.c.bf16 %v2710, %v2706
    %v2835 = vpack.c.bf16 %v2711, %v2707
    %v2836 = vpack.c.bf16 %v2712, %v2708
    %v2837 = vpack.c.bf16 %v2717, %v2713
    %v2838 = vpack.c.bf16 %v2718, %v2714
    %v2839 = vpack.c.bf16 %v2719, %v2715
    %v2840 = vpack.c.bf16 %v2720, %v2716
    %v2841 = vpack.c.bf16 %v2725, %v2721
    %v2842 = vpack.c.bf16 %v2726, %v2722
    %v2843 = vpack.c.bf16 %v2727, %v2723
    %v2844 = vpack.c.bf16 %v2728, %v2724
    %v2845 = vpack.c.bf16 %v2733, %v2729
    %v2846 = vpack.c.bf16 %v2734, %v2730
    %v2847 = vpack.c.bf16 %v2735, %v2731
    %v2848 = vpack.c.bf16 %v2736, %v2732
    %v2849 = vpack.c.bf16 %v2741, %v2737
    %v2850 = vpack.c.bf16 %v2742, %v2738
    %v2851 = vpack.c.bf16 %v2743, %v2739
    %v2852 = vpack.c.bf16 %v2744, %v2740
    %v2853 = vpack.c.bf16 %v2749, %v2745
    %v2854 = vpack.c.bf16 %v2750, %v2746
    %v2855 = vpack.c.bf16 %v2751, %v2747
    %v2856 = vpack.c.bf16 %v2752, %v2748
    %v2857 = vpack.c.bf16 %v2757, %v2753
    %v2858 = vpack.c.bf16 %v2758, %v2754
    %v2859 = vpack.c.bf16 %v2759, %v2755
    %v2860 = vpack.c.bf16 %v2760, %v2756
    %v2861 = vpack.c.bf16 %v2765, %v2761
    %v2862 = vpack.c.bf16 %v2766, %v2762
    %v2863 = vpack.c.bf16 %v2767, %v2763
    %v2864 = vpack.c.bf16 %v2768, %v2764
    %v2865 = vpack.c.bf16 %v2773, %v2769
    %v2866 = vpack.c.bf16 %v2774, %v2770
    %v2867 = vpack.c.bf16 %v2775, %v2771
    %v2868 = vpack.c.bf16 %v2776, %v2772
    %v2869 = vpack.c.bf16 %v2781, %v2777
    %v2870 = vpack.c.bf16 %v2782, %v2778
    %v2871 = vpack.c.bf16 %v2783, %v2779
    %v2872 = vpack.c.bf16 %v2784, %v2780
    %v2873 = vpack.c.bf16 %v2789, %v2785
    %v2874 = vpack.c.bf16 %v2790, %v2786
    %v2875 = vpack.c.bf16 %v2791, %v2787
    %v2876 = vpack.c.bf16 %v2792, %v2788
    %v2877 = vpack.c.bf16 %v2797, %v2793
    %v2878 = vpack.c.bf16 %v2798, %v2794
    %v2879 = vpack.c.bf16 %v2799, %v2795
    %v2880 = vpack.c.bf16 %v2800, %v2796
    %v2881 = vpack.c.bf16 %v2805, %v2801
    %v2882 = vpack.c.bf16 %v2806, %v2802
    %v2883 = vpack.c.bf16 %v2807, %v2803
    %v2884 = vpack.c.bf16 %v2808, %v2804
    %v2885 = vpack.c.bf16 %v2813, %v2809
    %v2886 = vpack.c.bf16 %v2814, %v2810
    %v2887 = vpack.c.bf16 %v2815, %v2811
    %v2888 = vpack.c.bf16 %v2816, %v2812
    %v2889 = vpack.c.bf16 %v2821, %v2817
    %v2890 = vpack.c.bf16 %v2822, %v2818
    %v2891 = vpack.c.bf16 %v2823, %v2819
    %v2892 = vpack.c.bf16 %v2824, %v2820
    %v2893 = vpack.c.bf16 %v2829, %v2825
    %v2894 = vpack.c.bf16 %v2830, %v2826
    %v2895 = vpack.c.bf16 %v2831, %v2827
    %v2896 = vpack.c.bf16 %v2832, %v2828
    %v2897 = vld [vmem:[%s7] sm:$0xff]
    %v2898 = vld [vmem:[%s7 + $0x8] sm:$0xff]
    %v2899 = vld [vmem:[%s7 + $0x10] sm:$0xff]
    %v2900 = vld [vmem:[%s7 + $0x18] sm:$0xff]
    %v2901 = vld [vmem:[%s7 + $0x20] sm:$0xff]
    %v2902 = vld [vmem:[%s7 + $0x28] sm:$0xff]
    %v2903 = vld [vmem:[%s7 + $0x30] sm:$0xff]
    %v2904 = vld [vmem:[%s7 + $0x38] sm:$0xff]
    %v2905 = vld [vmem:[%s7 + $0x40] sm:$0xff]
    %v2906 = vld [vmem:[%s7 + $0x48] sm:$0xff]
    %v2907 = vld [vmem:[%s7 + $0x50] sm:$0xff]
    %v2908 = vld [vmem:[%s7 + $0x58] sm:$0xff]
    %v2909 = vld [vmem:[%s7 + $0x60] sm:$0xff]
    %v2910 = vld [vmem:[%s7 + $0x68] sm:$0xff]
    %v2911 = vld [vmem:[%s7 + $0x70] sm:$0xff]
    %v2912 = vld [vmem:[%s7 + $0x78] sm:$0xff]
    %v2913 = vld [vmem:[%s7 + $0x80] sm:$0xff]
    %v2914 = vld [vmem:[%s7 + $0x88] sm:$0xff]
    %v2915 = vld [vmem:[%s7 + $0x90] sm:$0xff]
    %v2916 = vld [vmem:[%s7 + $0x98] sm:$0xff]
    %v2917 = vld [vmem:[%s7 + $0xa0] sm:$0xff]
    %v2918 = vld [vmem:[%s7 + $0xa8] sm:$0xff]
    %v2919 = vld [vmem:[%s7 + $0xb0] sm:$0xff]
    %v2920 = vld [vmem:[%s7 + $0xb8] sm:$0xff]
    %v2921 = vld [vmem:[%s7 + $0xc0] sm:$0xff]
    %v2922 = vld [vmem:[%s7 + $0xc8] sm:$0xff]
    %v2923 = vld [vmem:[%s7 + $0xd0] sm:$0xff]
    %v2924 = vld [vmem:[%s7 + $0xd8] sm:$0xff]
    %v2925 = vld [vmem:[%s7 + $0xe0] sm:$0xff]
    %v2926 = vld [vmem:[%s7 + $0xe8] sm:$0xff]
    %v2927 = vld [vmem:[%s7 + $0xf0] sm:$0xff]
    %v2928 = vld [vmem:[%s7 + $0xf8] sm:$0xff]
    %v2929 = vld [vmem:[%s7 + $0x100] sm:$0xff]
    %v2930 = vld [vmem:[%s7 + $0x108] sm:$0xff]
    %v2931 = vld [vmem:[%s7 + $0x110] sm:$0xff]
    %v2932 = vld [vmem:[%s7 + $0x118] sm:$0xff]
    %v2933 = vld [vmem:[%s7 + $0x120] sm:$0xff]
    %v2934 = vld [vmem:[%s7 + $0x128] sm:$0xff]
    %v2935 = vld [vmem:[%s7 + $0x130] sm:$0xff]
    %v2936 = vld [vmem:[%s7 + $0x138] sm:$0xff]
    %v2937 = vld [vmem:[%s7 + $0x140] sm:$0xff]
    %v2938 = vld [vmem:[%s7 + $0x148] sm:$0xff]
    %v2939 = vld [vmem:[%s7 + $0x150] sm:$0xff]
    %v2940 = vld [vmem:[%s7 + $0x158] sm:$0xff]
    %v2941 = vld [vmem:[%s7 + $0x160] sm:$0xff]
    %v2942 = vld [vmem:[%s7 + $0x168] sm:$0xff]
    %v2943 = vld [vmem:[%s7 + $0x170] sm:$0xff]
    %v2944 = vld [vmem:[%s7 + $0x178] sm:$0xff]
    %v2945 = vld [vmem:[%s7 + $0x180] sm:$0xff]
    %v2946 = vld [vmem:[%s7 + $0x188] sm:$0xff]
    %v2947 = vld [vmem:[%s7 + $0x190] sm:$0xff]
    %v2948 = vld [vmem:[%s7 + $0x198] sm:$0xff]
    %v2949 = vld [vmem:[%s7 + $0x1a0] sm:$0xff]
    %v2950 = vld [vmem:[%s7 + $0x1a8] sm:$0xff]
    %v2951 = vld [vmem:[%s7 + $0x1b0] sm:$0xff]
    %v2952 = vld [vmem:[%s7 + $0x1b8] sm:$0xff]
    %v2953 = vld [vmem:[%s7 + $0x1c0] sm:$0xff]
    %v2954 = vld [vmem:[%s7 + $0x1c8] sm:$0xff]
    %v2955 = vld [vmem:[%s7 + $0x1d0] sm:$0xff]
    %v2956 = vld [vmem:[%s7 + $0x1d8] sm:$0xff]
    %v2957 = vld [vmem:[%s7 + $0x1e0] sm:$0xff]
    %v2958 = vld [vmem:[%s7 + $0x1e8] sm:$0xff]
    %v2959 = vld [vmem:[%s7 + $0x1f0] sm:$0xff]
    %v2960 = vld [vmem:[%s7 + $0x1f8] sm:$0xff]
    %v2961 = vld [vmem:[%s7 + $0x200] sm:$0xff]
    %v2962 = vld [vmem:[%s7 + $0x208] sm:$0xff]
    %v2963 = vld [vmem:[%s7 + $0x210] sm:$0xff]
    %v2964 = vld [vmem:[%s7 + $0x218] sm:$0xff]
    %v2965 = vld [vmem:[%s7 + $0x220] sm:$0xff]
    %v2966 = vld [vmem:[%s7 + $0x228] sm:$0xff]
    %v2967 = vld [vmem:[%s7 + $0x230] sm:$0xff]
    %v2968 = vld [vmem:[%s7 + $0x238] sm:$0xff]
    %v2969 = vld [vmem:[%s7 + $0x240] sm:$0xff]
    %v2970 = vld [vmem:[%s7 + $0x248] sm:$0xff]
    %v2971 = vld [vmem:[%s7 + $0x250] sm:$0xff]
    %v2972 = vld [vmem:[%s7 + $0x258] sm:$0xff]
    %v2973 = vld [vmem:[%s7 + $0x260] sm:$0xff]
    %v2974 = vld [vmem:[%s7 + $0x268] sm:$0xff]
    %v2975 = vld [vmem:[%s7 + $0x270] sm:$0xff]
    %v2976 = vld [vmem:[%s7 + $0x278] sm:$0xff]
    %v2977 = vld [vmem:[%s7 + $0x280] sm:$0xff]
    %v2978 = vld [vmem:[%s7 + $0x288] sm:$0xff]
    %v2979 = vld [vmem:[%s7 + $0x290] sm:$0xff]
    %v2980 = vld [vmem:[%s7 + $0x298] sm:$0xff]
    %v2981 = vld [vmem:[%s7 + $0x2a0] sm:$0xff]
    %v2982 = vld [vmem:[%s7 + $0x2a8] sm:$0xff]
    %v2983 = vld [vmem:[%s7 + $0x2b0] sm:$0xff]
    %v2984 = vld [vmem:[%s7 + $0x2b8] sm:$0xff]
    %v2985 = vld [vmem:[%s7 + $0x2c0] sm:$0xff]
    %v2986 = vld [vmem:[%s7 + $0x2c8] sm:$0xff]
    %v2987 = vld [vmem:[%s7 + $0x2d0] sm:$0xff]
    %v2988 = vld [vmem:[%s7 + $0x2d8] sm:$0xff]
    %v2989 = vld [vmem:[%s7 + $0x2e0] sm:$0xff]
    %v2990 = vld [vmem:[%s7 + $0x2e8] sm:$0xff]
    %v2991 = vld [vmem:[%s7 + $0x2f0] sm:$0xff]
    %v2992 = vld [vmem:[%s7 + $0x2f8] sm:$0xff]
    %v2993 = vld [vmem:[%s7 + $0x300] sm:$0xff]
    %v2994 = vld [vmem:[%s7 + $0x308] sm:$0xff]
    %v2995 = vld [vmem:[%s7 + $0x310] sm:$0xff]
    %v2996 = vld [vmem:[%s7 + $0x318] sm:$0xff]
    %v2997 = vld [vmem:[%s7 + $0x320] sm:$0xff]
    %v2998 = vld [vmem:[%s7 + $0x328] sm:$0xff]
    %v2999 = vld [vmem:[%s7 + $0x330] sm:$0xff]
    %v3000 = vld [vmem:[%s7 + $0x338] sm:$0xff]
    %v3001 = vld [vmem:[%s7 + $0x340] sm:$0xff]
    %v3002 = vld [vmem:[%s7 + $0x348] sm:$0xff]
    %v3003 = vld [vmem:[%s7 + $0x350] sm:$0xff]
    %v3004 = vld [vmem:[%s7 + $0x358] sm:$0xff]
    %v3005 = vld [vmem:[%s7 + $0x360] sm:$0xff]
    %v3006 = vld [vmem:[%s7 + $0x368] sm:$0xff]
    %v3007 = vld [vmem:[%s7 + $0x370] sm:$0xff]
    %v3008 = vld [vmem:[%s7 + $0x378] sm:$0xff]
    %v3009 = vld [vmem:[%s7 + $0x380] sm:$0xff]
    %v3010 = vld [vmem:[%s7 + $0x388] sm:$0xff]
    %v3011 = vld [vmem:[%s7 + $0x390] sm:$0xff]
    %v3012 = vld [vmem:[%s7 + $0x398] sm:$0xff]
    %v3013 = vld [vmem:[%s7 + $0x3a0] sm:$0xff]
    %v3014 = vld [vmem:[%s7 + $0x3a8] sm:$0xff]
    %v3015 = vld [vmem:[%s7 + $0x3b0] sm:$0xff]
    %v3016 = vld [vmem:[%s7 + $0x3b8] sm:$0xff]
    %v3017 = vld [vmem:[%s7 + $0x3c0] sm:$0xff]
    %v3018 = vld [vmem:[%s7 + $0x3c8] sm:$0xff]
    %v3019 = vld [vmem:[%s7 + $0x3d0] sm:$0xff]
    %v3020 = vld [vmem:[%s7 + $0x3d8] sm:$0xff]
    %v3021 = vld [vmem:[%s7 + $0x3e0] sm:$0xff]
    %v3022 = vld [vmem:[%s7 + $0x3e8] sm:$0xff]
    %v3023 = vld [vmem:[%s7 + $0x3f0] sm:$0xff]
    %v3024 = vld [vmem:[%s7 + $0x3f8] sm:$0xff]
    %v3025 = vld [vmem:[%s8] sm:$0xf]
    %v3027 = vlaneseq
    %v3028 = vshrl.u32 %v3027, 7
    %v3029 = vsub.s32 0, %v3028
    %v3030 = vrot.slane %v3025, %v3029
    %v3031 = vlaneseq
    %v3032 = vshrl.u32 %v3031, 7
    %v3033 = vsub.s32 1, %v3032
    %v3034 = vrot.slane %v3025, %v3033
    %v3035 = vlaneseq
    %v3036 = vshrl.u32 %v3035, 7
    %v3037 = vsub.s32 2, %v3036
    %v3038 = vrot.slane %v3025, %v3037
    %v3039 = vlaneseq
    %v3040 = vshrl.u32 %v3039, 7
    %v3041 = vsub.s32 3, %v3040
    %v3042 = vrot.slane %v3025, %v3041
    %v3175 = vunpack.c.l.b16 %v2897
    %v3176 = vunpack.c.h.b16 %v2897
    %v3177 = vunpack.c.l.b16 %v2898
    %v3178 = vunpack.c.h.b16 %v2898
    %v3179 = vunpack.c.l.b16 %v2899
    %v3180 = vunpack.c.h.b16 %v2899
    %v3181 = vunpack.c.l.b16 %v2900
    %v3182 = vunpack.c.h.b16 %v2900
    %v3183 = vunpack.c.l.b16 %v2901
    %v3184 = vunpack.c.h.b16 %v2901
    %v3185 = vunpack.c.l.b16 %v2902
    %v3186 = vunpack.c.h.b16 %v2902
    %v3187 = vunpack.c.l.b16 %v2903
    %v3188 = vunpack.c.h.b16 %v2903
    %v3189 = vunpack.c.l.b16 %v2904
    %v3190 = vunpack.c.h.b16 %v2904
    %v3191 = vunpack.c.l.b16 %v2905
    %v3192 = vunpack.c.h.b16 %v2905
    %v3193 = vunpack.c.l.b16 %v2906
    %v3194 = vunpack.c.h.b16 %v2906
    %v3195 = vunpack.c.l.b16 %v2907
    %v3196 = vunpack.c.h.b16 %v2907
    %v3197 = vunpack.c.l.b16 %v2908
    %v3198 = vunpack.c.h.b16 %v2908
    %v3199 = vunpack.c.l.b16 %v2909
    %v3200 = vunpack.c.h.b16 %v2909
    %v3201 = vunpack.c.l.b16 %v2910
    %v3202 = vunpack.c.h.b16 %v2910
    %v3203 = vunpack.c.l.b16 %v2911
    %v3204 = vunpack.c.h.b16 %v2911
    %v3205 = vunpack.c.l.b16 %v2912
    %v3206 = vunpack.c.h.b16 %v2912
    %v3207 = vunpack.c.l.b16 %v2913
    %v3208 = vunpack.c.h.b16 %v2913
    %v3209 = vunpack.c.l.b16 %v2914
    %v3210 = vunpack.c.h.b16 %v2914
    %v3211 = vunpack.c.l.b16 %v2915
    %v3212 = vunpack.c.h.b16 %v2915
    %v3213 = vunpack.c.l.b16 %v2916
    %v3214 = vunpack.c.h.b16 %v2916
    %v3215 = vunpack.c.l.b16 %v2917
    %v3216 = vunpack.c.h.b16 %v2917
    %v3217 = vunpack.c.l.b16 %v2918
    %v3218 = vunpack.c.h.b16 %v2918
    %v3219 = vunpack.c.l.b16 %v2919
    %v3220 = vunpack.c.h.b16 %v2919
    %v3221 = vunpack.c.l.b16 %v2920
    %v3222 = vunpack.c.h.b16 %v2920
    %v3223 = vunpack.c.l.b16 %v2921
    %v3224 = vunpack.c.h.b16 %v2921
    %v3225 = vunpack.c.l.b16 %v2922
    %v3226 = vunpack.c.h.b16 %v2922
    %v3227 = vunpack.c.l.b16 %v2923
    %v3228 = vunpack.c.h.b16 %v2923
    %v3229 = vunpack.c.l.b16 %v2924
    %v3230 = vunpack.c.h.b16 %v2924
    %v3231 = vunpack.c.l.b16 %v2925
    %v3232 = vunpack.c.h.b16 %v2925
    %v3233 = vunpack.c.l.b16 %v2926
    %v3234 = vunpack.c.h.b16 %v2926
    %v3235 = vunpack.c.l.b16 %v2927
    %v3236 = vunpack.c.h.b16 %v2927
    %v3237 = vunpack.c.l.b16 %v2928
    %v3238 = vunpack.c.h.b16 %v2928
    %v3239 = vunpack.c.l.b16 %v2929
    %v3240 = vunpack.c.h.b16 %v2929
    %v3241 = vunpack.c.l.b16 %v2930
    %v3242 = vunpack.c.h.b16 %v2930
    %v3243 = vunpack.c.l.b16 %v2931
    %v3244 = vunpack.c.h.b16 %v2931
    %v3245 = vunpack.c.l.b16 %v2932
    %v3246 = vunpack.c.h.b16 %v2932
    %v3247 = vunpack.c.l.b16 %v2933
    %v3248 = vunpack.c.h.b16 %v2933
    %v3249 = vunpack.c.l.b16 %v2934
    %v3250 = vunpack.c.h.b16 %v2934
    %v3251 = vunpack.c.l.b16 %v2935
    %v3252 = vunpack.c.h.b16 %v2935
    %v3253 = vunpack.c.l.b16 %v2936
    %v3254 = vunpack.c.h.b16 %v2936
    %v3255 = vunpack.c.l.b16 %v2937
    %v3256 = vunpack.c.h.b16 %v2937
    %v3257 = vunpack.c.l.b16 %v2938
    %v3258 = vunpack.c.h.b16 %v2938
    %v3259 = vunpack.c.l.b16 %v2939
    %v3260 = vunpack.c.h.b16 %v2939
    %v3261 = vunpack.c.l.b16 %v2940
    %v3262 = vunpack.c.h.b16 %v2940
    %v3263 = vunpack.c.l.b16 %v2941
    %v3264 = vunpack.c.h.b16 %v2941
    %v3265 = vunpack.c.l.b16 %v2942
    %v3266 = vunpack.c.h.b16 %v2942
    %v3267 = vunpack.c.l.b16 %v2943
    %v3268 = vunpack.c.h.b16 %v2943
    %v3269 = vunpack.c.l.b16 %v2944
    %v3270 = vunpack.c.h.b16 %v2944
    %v3271 = vunpack.c.l.b16 %v2945
    %v3272 = vunpack.c.h.b16 %v2945
    %v3273 = vunpack.c.l.b16 %v2946
    %v3274 = vunpack.c.h.b16 %v2946
    %v3275 = vunpack.c.l.b16 %v2947
    %v3276 = vunpack.c.h.b16 %v2947
    %v3277 = vunpack.c.l.b16 %v2948
    %v3278 = vunpack.c.h.b16 %v2948
    %v3279 = vunpack.c.l.b16 %v2949
    %v3280 = vunpack.c.h.b16 %v2949
    %v3281 = vunpack.c.l.b16 %v2950
    %v3282 = vunpack.c.h.b16 %v2950
    %v3283 = vunpack.c.l.b16 %v2951
    %v3284 = vunpack.c.h.b16 %v2951
    %v3285 = vunpack.c.l.b16 %v2952
    %v3286 = vunpack.c.h.b16 %v2952
    %v3287 = vunpack.c.l.b16 %v2953
    %v3288 = vunpack.c.h.b16 %v2953
    %v3289 = vunpack.c.l.b16 %v2954
    %v3290 = vunpack.c.h.b16 %v2954
    %v3291 = vunpack.c.l.b16 %v2955
    %v3292 = vunpack.c.h.b16 %v2955
    %v3293 = vunpack.c.l.b16 %v2956
    %v3294 = vunpack.c.h.b16 %v2956
    %v3295 = vunpack.c.l.b16 %v2957
    %v3296 = vunpack.c.h.b16 %v2957
    %v3297 = vunpack.c.l.b16 %v2958
    %v3298 = vunpack.c.h.b16 %v2958
    %v3299 = vunpack.c.l.b16 %v2959
    %v3300 = vunpack.c.h.b16 %v2959
    %v3301 = vunpack.c.l.b16 %v2960
    %v3302 = vunpack.c.h.b16 %v2960
    %v3303 = vunpack.c.l.b16 %v2961
    %v3304 = vunpack.c.h.b16 %v2961
    %v3305 = vunpack.c.l.b16 %v2962
    %v3306 = vunpack.c.h.b16 %v2962
    %v3307 = vunpack.c.l.b16 %v2963
    %v3308 = vunpack.c.h.b16 %v2963
    %v3309 = vunpack.c.l.b16 %v2964
    %v3310 = vunpack.c.h.b16 %v2964
    %v3311 = vunpack.c.l.b16 %v2965
    %v3312 = vunpack.c.h.b16 %v2965
    %v3313 = vunpack.c.l.b16 %v2966
    %v3314 = vunpack.c.h.b16 %v2966
    %v3315 = vunpack.c.l.b16 %v2967
    %v3316 = vunpack.c.h.b16 %v2967
    %v3317 = vunpack.c.l.b16 %v2968
    %v3318 = vunpack.c.h.b16 %v2968
    %v3319 = vunpack.c.l.b16 %v2969
    %v3320 = vunpack.c.h.b16 %v2969
    %v3321 = vunpack.c.l.b16 %v2970
    %v3322 = vunpack.c.h.b16 %v2970
    %v3323 = vunpack.c.l.b16 %v2971
    %v3324 = vunpack.c.h.b16 %v2971
    %v3325 = vunpack.c.l.b16 %v2972
    %v3326 = vunpack.c.h.b16 %v2972
    %v3327 = vunpack.c.l.b16 %v2973
    %v3328 = vunpack.c.h.b16 %v2973
    %v3329 = vunpack.c.l.b16 %v2974
    %v3330 = vunpack.c.h.b16 %v2974
    %v3331 = vunpack.c.l.b16 %v2975
    %v3332 = vunpack.c.h.b16 %v2975
    %v3333 = vunpack.c.l.b16 %v2976
    %v3334 = vunpack.c.h.b16 %v2976
    %v3335 = vunpack.c.l.b16 %v2977
    %v3336 = vunpack.c.h.b16 %v2977
    %v3337 = vunpack.c.l.b16 %v2978
    %v3338 = vunpack.c.h.b16 %v2978
    %v3339 = vunpack.c.l.b16 %v2979
    %v3340 = vunpack.c.h.b16 %v2979
    %v3341 = vunpack.c.l.b16 %v2980
    %v3342 = vunpack.c.h.b16 %v2980
    %v3343 = vunpack.c.l.b16 %v2981
    %v3344 = vunpack.c.h.b16 %v2981
    %v3345 = vunpack.c.l.b16 %v2982
    %v3346 = vunpack.c.h.b16 %v2982
    %v3347 = vunpack.c.l.b16 %v2983
    %v3348 = vunpack.c.h.b16 %v2983
    %v3349 = vunpack.c.l.b16 %v2984
    %v3350 = vunpack.c.h.b16 %v2984
    %v3351 = vunpack.c.l.b16 %v2985
    %v3352 = vunpack.c.h.b16 %v2985
    %v3353 = vunpack.c.l.b16 %v2986
    %v3354 = vunpack.c.h.b16 %v2986
    %v3355 = vunpack.c.l.b16 %v2987
    %v3356 = vunpack.c.h.b16 %v2987
    %v3357 = vunpack.c.l.b16 %v2988
    %v3358 = vunpack.c.h.b16 %v2988
    %v3359 = vunpack.c.l.b16 %v2989
    %v3360 = vunpack.c.h.b16 %v2989
    %v3361 = vunpack.c.l.b16 %v2990
    %v3362 = vunpack.c.h.b16 %v2990
    %v3363 = vunpack.c.l.b16 %v2991
    %v3364 = vunpack.c.h.b16 %v2991
    %v3365 = vunpack.c.l.b16 %v2992
    %v3366 = vunpack.c.h.b16 %v2992
    %v3367 = vunpack.c.l.b16 %v2993
    %v3368 = vunpack.c.h.b16 %v2993
    %v3369 = vunpack.c.l.b16 %v2994
    %v3370 = vunpack.c.h.b16 %v2994
    %v3371 = vunpack.c.l.b16 %v2995
    %v3372 = vunpack.c.h.b16 %v2995
    %v3373 = vunpack.c.l.b16 %v2996
    %v3374 = vunpack.c.h.b16 %v2996
    %v3375 = vunpack.c.l.b16 %v2997
    %v3376 = vunpack.c.h.b16 %v2997
    %v3377 = vunpack.c.l.b16 %v2998
    %v3378 = vunpack.c.h.b16 %v2998
    %v3379 = vunpack.c.l.b16 %v2999
    %v3380 = vunpack.c.h.b16 %v2999
    %v3381 = vunpack.c.l.b16 %v3000
    %v3382 = vunpack.c.h.b16 %v3000
    %v3383 = vunpack.c.l.b16 %v3001
    %v3384 = vunpack.c.h.b16 %v3001
    %v3385 = vunpack.c.l.b16 %v3002
    %v3386 = vunpack.c.h.b16 %v3002
    %v3387 = vunpack.c.l.b16 %v3003
    %v3388 = vunpack.c.h.b16 %v3003
    %v3389 = vunpack.c.l.b16 %v3004
    %v3390 = vunpack.c.h.b16 %v3004
    %v3391 = vunpack.c.l.b16 %v3005
    %v3392 = vunpack.c.h.b16 %v3005
    %v3393 = vunpack.c.l.b16 %v3006
    %v3394 = vunpack.c.h.b16 %v3006
    %v3395 = vunpack.c.l.b16 %v3007
    %v3396 = vunpack.c.h.b16 %v3007
    %v3397 = vunpack.c.l.b16 %v3008
    %v3398 = vunpack.c.h.b16 %v3008
    %v3399 = vunpack.c.l.b16 %v3009
    %v3400 = vunpack.c.h.b16 %v3009
    %v3401 = vunpack.c.l.b16 %v3010
    %v3402 = vunpack.c.h.b16 %v3010
    %v3403 = vunpack.c.l.b16 %v3011
    %v3404 = vunpack.c.h.b16 %v3011
    %v3405 = vunpack.c.l.b16 %v3012
    %v3406 = vunpack.c.h.b16 %v3012
    %v3407 = vunpack.c.l.b16 %v3013
    %v3408 = vunpack.c.h.b16 %v3013
    %v3409 = vunpack.c.l.b16 %v3014
    %v3410 = vunpack.c.h.b16 %v3014
    %v3411 = vunpack.c.l.b16 %v3015
    %v3412 = vunpack.c.h.b16 %v3015
    %v3413 = vunpack.c.l.b16 %v3016
    %v3414 = vunpack.c.h.b16 %v3016
    %v3415 = vunpack.c.l.b16 %v3017
    %v3416 = vunpack.c.h.b16 %v3017
    %v3417 = vunpack.c.l.b16 %v3018
    %v3418 = vunpack.c.h.b16 %v3018
    %v3419 = vunpack.c.l.b16 %v3019
    %v3420 = vunpack.c.h.b16 %v3019
    %v3421 = vunpack.c.l.b16 %v3020
    %v3422 = vunpack.c.h.b16 %v3020
    %v3423 = vunpack.c.l.b16 %v3021
    %v3424 = vunpack.c.h.b16 %v3021
    %v3425 = vunpack.c.l.b16 %v3022
    %v3426 = vunpack.c.h.b16 %v3022
    %v3427 = vunpack.c.l.b16 %v3023
    %v3428 = vunpack.c.h.b16 %v3023
    %v3429 = vunpack.c.l.b16 %v3024
    %v3430 = vunpack.c.h.b16 %v3024
    %v3431 = vpack.c.b16 %v3179, %v3175
    %v3432 = vpack.c.b16 %v3180, %v3176
    %v3433 = vpack.c.b16 %v3181, %v3177
    %v3434 = vpack.c.b16 %v3182, %v3178
    %v3435 = vpack.c.b16 %v3187, %v3183
    %v3436 = vpack.c.b16 %v3188, %v3184
    %v3437 = vpack.c.b16 %v3189, %v3185
    %v3438 = vpack.c.b16 %v3190, %v3186
    %v3439 = vpack.c.b16 %v3195, %v3191
    %v3440 = vpack.c.b16 %v3196, %v3192
    %v3441 = vpack.c.b16 %v3197, %v3193
    %v3442 = vpack.c.b16 %v3198, %v3194
    %v3443 = vpack.c.b16 %v3203, %v3199
    %v3444 = vpack.c.b16 %v3204, %v3200
    %v3445 = vpack.c.b16 %v3205, %v3201
    %v3446 = vpack.c.b16 %v3206, %v3202
    %v3447 = vpack.c.b16 %v3211, %v3207
    %v3448 = vpack.c.b16 %v3212, %v3208
    %v3449 = vpack.c.b16 %v3213, %v3209
    %v3450 = vpack.c.b16 %v3214, %v3210
    %v3451 = vpack.c.b16 %v3219, %v3215
    %v3452 = vpack.c.b16 %v3220, %v3216
    %v3453 = vpack.c.b16 %v3221, %v3217
    %v3454 = vpack.c.b16 %v3222, %v3218
    %v3455 = vpack.c.b16 %v3227, %v3223
    %v3456 = vpack.c.b16 %v3228, %v3224
    %v3457 = vpack.c.b16 %v3229, %v3225
    %v3458 = vpack.c.b16 %v3230, %v3226
    %v3459 = vpack.c.b16 %v3235, %v3231
    %v3460 = vpack.c.b16 %v3236, %v3232
    %v3461 = vpack.c.b16 %v3237, %v3233
    %v3462 = vpack.c.b16 %v3238, %v3234
    %v3463 = vpack.c.b16 %v3243, %v3239
    %v3464 = vpack.c.b16 %v3244, %v3240
    %v3465 = vpack.c.b16 %v3245, %v3241
    %v3466 = vpack.c.b16 %v3246, %v3242
    %v3467 = vpack.c.b16 %v3251, %v3247
    %v3468 = vpack.c.b16 %v3252, %v3248
    %v3469 = vpack.c.b16 %v3253, %v3249
    %v3470 = vpack.c.b16 %v3254, %v3250
    %v3471 = vpack.c.b16 %v3259, %v3255
    %v3472 = vpack.c.b16 %v3260, %v3256
    %v3473 = vpack.c.b16 %v3261, %v3257
    %v3474 = vpack.c.b16 %v3262, %v3258
    %v3475 = vpack.c.b16 %v3267, %v3263
    %v3476 = vpack.c.b16 %v3268, %v3264
    %v3477 = vpack.c.b16 %v3269, %v3265
    %v3478 = vpack.c.b16 %v3270, %v3266
    %v3479 = vpack.c.b16 %v3275, %v3271
    %v3480 = vpack.c.b16 %v3276, %v3272
    %v3481 = vpack.c.b16 %v3277, %v3273
    %v3482 = vpack.c.b16 %v3278, %v3274
    %v3483 = vpack.c.b16 %v3283, %v3279
    %v3484 = vpack.c.b16 %v3284, %v3280
    %v3485 = vpack.c.b16 %v3285, %v3281
    %v3486 = vpack.c.b16 %v3286, %v3282
    %v3487 = vpack.c.b16 %v3291, %v3287
    %v3488 = vpack.c.b16 %v3292, %v3288
    %v3489 = vpack.c.b16 %v3293, %v3289
    %v3490 = vpack.c.b16 %v3294, %v3290
    %v3491 = vpack.c.b16 %v3299, %v3295
    %v3492 = vpack.c.b16 %v3300, %v3296
    %v3493 = vpack.c.b16 %v3301, %v3297
    %v3494 = vpack.c.b16 %v3302, %v3298
    %v3495 = vpack.c.b16 %v3307, %v3303
    %v3496 = vpack.c.b16 %v3308, %v3304
    %v3497 = vpack.c.b16 %v3309, %v3305
    %v3498 = vpack.c.b16 %v3310, %v3306
    %v3499 = vpack.c.b16 %v3315, %v3311
    %v3500 = vpack.c.b16 %v3316, %v3312
    %v3501 = vpack.c.b16 %v3317, %v3313
    %v3502 = vpack.c.b16 %v3318, %v3314
    %v3503 = vpack.c.b16 %v3323, %v3319
    %v3504 = vpack.c.b16 %v3324, %v3320
    %v3505 = vpack.c.b16 %v3325, %v3321
    %v3506 = vpack.c.b16 %v3326, %v3322
    %v3507 = vpack.c.b16 %v3331, %v3327
    %v3508 = vpack.c.b16 %v3332, %v3328
    %v3509 = vpack.c.b16 %v3333, %v3329
    %v3510 = vpack.c.b16 %v3334, %v3330
    %v3511 = vpack.c.b16 %v3339, %v3335
    %v3512 = vpack.c.b16 %v3340, %v3336
    %v3513 = vpack.c.b16 %v3341, %v3337
    %v3514 = vpack.c.b16 %v3342, %v3338
    %v3515 = vpack.c.b16 %v3347, %v3343
    %v3516 = vpack.c.b16 %v3348, %v3344
    %v3517 = vpack.c.b16 %v3349, %v3345
    %v3518 = vpack.c.b16 %v3350, %v3346
    %v3519 = vpack.c.b16 %v3355, %v3351
    %v3520 = vpack.c.b16 %v3356, %v3352
    %v3521 = vpack.c.b16 %v3357, %v3353
    %v3522 = vpack.c.b16 %v3358, %v3354
    %v3523 = vpack.c.b16 %v3363, %v3359
    %v3524 = vpack.c.b16 %v3364, %v3360
    %v3525 = vpack.c.b16 %v3365, %v3361
    %v3526 = vpack.c.b16 %v3366, %v3362
    %v3527 = vpack.c.b16 %v3371, %v3367
    %v3528 = vpack.c.b16 %v3372, %v3368
    %v3529 = vpack.c.b16 %v3373, %v3369
    %v3530 = vpack.c.b16 %v3374, %v3370
    %v3531 = vpack.c.b16 %v3379, %v3375
    %v3532 = vpack.c.b16 %v3380, %v3376
    %v3533 = vpack.c.b16 %v3381, %v3377
    %v3534 = vpack.c.b16 %v3382, %v3378
    %v3535 = vpack.c.b16 %v3387, %v3383
    %v3536 = vpack.c.b16 %v3388, %v3384
    %v3537 = vpack.c.b16 %v3389, %v3385
    %v3538 = vpack.c.b16 %v3390, %v3386
    %v3539 = vpack.c.b16 %v3395, %v3391
    %v3540 = vpack.c.b16 %v3396, %v3392
    %v3541 = vpack.c.b16 %v3397, %v3393
    %v3542 = vpack.c.b16 %v3398, %v3394
    %v3543 = vpack.c.b16 %v3403, %v3399
    %v3544 = vpack.c.b16 %v3404, %v3400
    %v3545 = vpack.c.b16 %v3405, %v3401
    %v3546 = vpack.c.b16 %v3406, %v3402
    %v3547 = vpack.c.b16 %v3411, %v3407
    %v3548 = vpack.c.b16 %v3412, %v3408
    %v3549 = vpack.c.b16 %v3413, %v3409
    %v3550 = vpack.c.b16 %v3414, %v3410
    %v3551 = vpack.c.b16 %v3419, %v3415
    %v3552 = vpack.c.b16 %v3420, %v3416
    %v3553 = vpack.c.b16 %v3421, %v3417
    %v3554 = vpack.c.b16 %v3422, %v3418
    %v3555 = vpack.c.b16 %v3427, %v3423
    %v3556 = vpack.c.b16 %v3428, %v3424
    %v3557 = vpack.c.b16 %v3429, %v3425
    %v3558 = vpack.c.b16 %v3430, %v3426
    %3687 = vmatprep.subr.bf16.mxu0 %v3460
    %3688 = vmatpush1.bf16.msra.mxu0 %v3459
    %3689 = vmatprep.subr.bf16.mxu0 %v3456
    %3690 = vmatpush1.bf16.msra.mxu0 %v3455
    %3691 = vmatprep.subr.bf16.mxu0 %v3452
    %3692 = vmatpush1.bf16.msra.mxu0 %v3451
    %3693 = vmatprep.subr.bf16.mxu0 %v3448
    %3694 = vmatpush1.bf16.msra.mxu0 %v3447
    %3695 = vmatprep.subr.bf16.mxu0 %v3444
    %3696 = vmatpush1.bf16.msra.mxu0 %v3443
    %3697 = vmatprep.subr.bf16.mxu0 %v3440
    %3698 = vmatpush1.bf16.msra.mxu0 %v3439
    %3699 = vmatprep.subr.bf16.mxu0 %v3436
    %3700 = vmatpush1.bf16.msra.mxu0 %v3435
    %3701 = vmatprep.subr.bf16.mxu0 %v3432
    %3702 = vmatpush1.bf16.msra.mxu0 %v3431
    %3703 = vmatprep.subr.bf16.mxu0 %v3492
    %3704 = vmatpush2.bf16.msra.mxu0 %v3491
    %3705 = vmatprep.subr.bf16.mxu0 %v3488
    %3706 = vmatpush2.bf16.msra.mxu0 %v3487
    %3707 = vmatprep.subr.bf16.mxu0 %v3484
    %3708 = vmatpush2.bf16.msra.mxu0 %v3483
    %3709 = vmatprep.subr.bf16.mxu0 %v3480
    %3710 = vmatpush2.bf16.msra.mxu0 %v3479
    %3711 = vmatprep.subr.bf16.mxu0 %v3476
    %3712 = vmatpush2.bf16.msra.mxu0 %v3475
    %3713 = vmatprep.subr.bf16.mxu0 %v3472
    %3714 = vmatpush2.bf16.msra.mxu0 %v3471
    %3715 = vmatprep.subr.bf16.mxu0 %v3468
    %3716 = vmatpush2.bf16.msra.mxu0 %v3467
    %3717 = vmatprep.subr.bf16.mxu0 %v3464
    %3718 = vmatpush2.bf16.msra.mxu0 %v3463
    %3719 = vmatprep.mubr.bf16.mxu0 %v2834
    %3720 = vmatmul.mubr.bf16.gmra.mxu0 %v2833
    %v3721 = vpop.f32.mrf.mxu0
    %v3722 = vadd.f32 %v3030, %v3721
    %v3723 = vpop.f32.mrf.mxu0
    %v3724 = vadd.f32 %v3034, %v3723
    %v3725 = vpop.f32.mrf.mxu0
    %v3726 = vadd.f32 %v3030, %v3725
    %v3727 = vpop.f32.mrf.mxu0
    %v3728 = vadd.f32 %v3034, %v3727
    %3729 = vmatprep.mubr.bf16.mxu0 %v2838
    %3730 = vmatmul.mubr.bf16.gmra.mxu0 %v2837
    %v3731 = vpop.f32.mrf.mxu0
    %v3732 = vadd.f32 %v3030, %v3731
    %v3733 = vpop.f32.mrf.mxu0
    %v3734 = vadd.f32 %v3034, %v3733
    %v3735 = vpop.f32.mrf.mxu0
    %v3736 = vadd.f32 %v3030, %v3735
    %v3737 = vpop.f32.mrf.mxu0
    %v3738 = vadd.f32 %v3034, %v3737
    %3739 = vmatprep.mubr.bf16.mxu0 %v2842
    %3740 = vmatmul.mubr.bf16.gmra.mxu0 %v2841
    %v3741 = vpop.f32.mrf.mxu0
    %v3742 = vadd.f32 %v3030, %v3741
    %v3743 = vpop.f32.mrf.mxu0
    %v3744 = vadd.f32 %v3034, %v3743
    %v3745 = vpop.f32.mrf.mxu0
    %v3746 = vadd.f32 %v3030, %v3745
    %v3747 = vpop.f32.mrf.mxu0
    %v3748 = vadd.f32 %v3034, %v3747
    %3749 = vmatprep.mubr.bf16.mxu0 %v2846
    %3750 = vmatmul.mubr.bf16.gmra.mxu0 %v2845
    %v3751 = vpop.f32.mrf.mxu0
    %v3752 = vadd.f32 %v3030, %v3751
    %v3753 = vpop.f32.mrf.mxu0
    %v3754 = vadd.f32 %v3034, %v3753
    %v3755 = vpop.f32.mrf.mxu0
    %v3756 = vadd.f32 %v3030, %v3755
    %v3757 = vpop.f32.mrf.mxu0
    %v3758 = vadd.f32 %v3034, %v3757
    %3759 = vmatprep.mubr.bf16.mxu0 %v2850
    %3760 = vmatmul.mubr.bf16.gmra.mxu0 %v2849
    %v3761 = vpop.f32.mrf.mxu0
    %v3762 = vadd.f32 %v3030, %v3761
    %v3763 = vpop.f32.mrf.mxu0
    %v3764 = vadd.f32 %v3034, %v3763
    %v3765 = vpop.f32.mrf.mxu0
    %v3766 = vadd.f32 %v3030, %v3765
    %v3767 = vpop.f32.mrf.mxu0
    %v3768 = vadd.f32 %v3034, %v3767
    %3769 = vmatprep.mubr.bf16.mxu0 %v2854
    %3770 = vmatmul.mubr.bf16.gmra.mxu0 %v2853
    %v3771 = vpop.f32.mrf.mxu0
    %v3772 = vadd.f32 %v3030, %v3771
    %v3773 = vpop.f32.mrf.mxu0
    %v3774 = vadd.f32 %v3034, %v3773
    %v3775 = vpop.f32.mrf.mxu0
    %v3776 = vadd.f32 %v3030, %v3775
    %v3777 = vpop.f32.mrf.mxu0
    %v3778 = vadd.f32 %v3034, %v3777
    %3779 = vmatprep.mubr.bf16.mxu0 %v2858
    %3780 = vmatmul.mubr.bf16.gmra.mxu0 %v2857
    %v3781 = vpop.f32.mrf.mxu0
    %v3782 = vadd.f32 %v3030, %v3781
    %v3783 = vpop.f32.mrf.mxu0
    %v3784 = vadd.f32 %v3034, %v3783
    %v3785 = vpop.f32.mrf.mxu0
    %v3786 = vadd.f32 %v3030, %v3785
    %v3787 = vpop.f32.mrf.mxu0
    %v3788 = vadd.f32 %v3034, %v3787
    %3789 = vmatprep.mubr.bf16.mxu0 %v2862
    %3790 = vmatmul.mubr.bf16.gmra.mxu0 %v2861
    %v3791 = vpop.f32.mrf.mxu0
    %v3792 = vadd.f32 %v3030, %v3791
    %v3793 = vpop.f32.mrf.mxu0
    %v3794 = vadd.f32 %v3034, %v3793
    %v3795 = vpop.f32.mrf.mxu0
    %v3796 = vadd.f32 %v3030, %v3795
    %v3797 = vpop.f32.mrf.mxu0
    %v3798 = vadd.f32 %v3034, %v3797
    %3799 = vmatprep.mubr.bf16.mxu0 %v2866
    %3800 = vmatmul.mubr.bf16.gmra.mxu0 %v2865
    %v3801 = vpop.f32.mrf.mxu0
    %v3802 = vadd.f32 %v3030, %v3801
    %v3803 = vpop.f32.mrf.mxu0
    %v3804 = vadd.f32 %v3034, %v3803
    %v3805 = vpop.f32.mrf.mxu0
    %v3806 = vadd.f32 %v3030, %v3805
    %v3807 = vpop.f32.mrf.mxu0
    %v3808 = vadd.f32 %v3034, %v3807
    %3809 = vmatprep.mubr.bf16.mxu0 %v2870
    %3810 = vmatmul.mubr.bf16.gmra.mxu0 %v2869
    %v3811 = vpop.f32.mrf.mxu0
    %v3812 = vadd.f32 %v3030, %v3811
    %v3813 = vpop.f32.mrf.mxu0
    %v3814 = vadd.f32 %v3034, %v3813
    %v3815 = vpop.f32.mrf.mxu0
    %v3816 = vadd.f32 %v3030, %v3815
    %v3817 = vpop.f32.mrf.mxu0
    %v3818 = vadd.f32 %v3034, %v3817
    %3819 = vmatprep.mubr.bf16.mxu0 %v2874
    %3820 = vmatmul.mubr.bf16.gmra.mxu0 %v2873
    %v3821 = vpop.f32.mrf.mxu0
    %v3822 = vadd.f32 %v3030, %v3821
    %v3823 = vpop.f32.mrf.mxu0
    %v3824 = vadd.f32 %v3034, %v3823
    %v3825 = vpop.f32.mrf.mxu0
    %v3826 = vadd.f32 %v3030, %v3825
    %v3827 = vpop.f32.mrf.mxu0
    %v3828 = vadd.f32 %v3034, %v3827
    %3829 = vmatprep.mubr.bf16.mxu0 %v2878
    %3830 = vmatmul.mubr.bf16.gmra.mxu0 %v2877
    %v3831 = vpop.f32.mrf.mxu0
    %v3832 = vadd.f32 %v3030, %v3831
    %v3833 = vpop.f32.mrf.mxu0
    %v3834 = vadd.f32 %v3034, %v3833
    %v3835 = vpop.f32.mrf.mxu0
    %v3836 = vadd.f32 %v3030, %v3835
    %v3837 = vpop.f32.mrf.mxu0
    %v3838 = vadd.f32 %v3034, %v3837
    %3839 = vmatprep.mubr.bf16.mxu0 %v2882
    %3840 = vmatmul.mubr.bf16.gmra.mxu0 %v2881
    %v3841 = vpop.f32.mrf.mxu0
    %v3842 = vadd.f32 %v3030, %v3841
    %v3843 = vpop.f32.mrf.mxu0
    %v3844 = vadd.f32 %v3034, %v3843
    %v3845 = vpop.f32.mrf.mxu0
    %v3846 = vadd.f32 %v3030, %v3845
    %v3847 = vpop.f32.mrf.mxu0
    %v3848 = vadd.f32 %v3034, %v3847
    %3849 = vmatprep.mubr.bf16.mxu0 %v2886
    %3850 = vmatmul.mubr.bf16.gmra.mxu0 %v2885
    %v3851 = vpop.f32.mrf.mxu0
    %v3852 = vadd.f32 %v3030, %v3851
    %v3853 = vpop.f32.mrf.mxu0
    %v3854 = vadd.f32 %v3034, %v3853
    %v3855 = vpop.f32.mrf.mxu0
    %v3856 = vadd.f32 %v3030, %v3855
    %v3857 = vpop.f32.mrf.mxu0
    %v3858 = vadd.f32 %v3034, %v3857
    %3859 = vmatprep.mubr.bf16.mxu0 %v2890
    %3860 = vmatmul.mubr.bf16.gmra.mxu0 %v2889
    %v3861 = vpop.f32.mrf.mxu0
    %v3862 = vadd.f32 %v3030, %v3861
    %v3863 = vpop.f32.mrf.mxu0
    %v3864 = vadd.f32 %v3034, %v3863
    %v3865 = vpop.f32.mrf.mxu0
    %v3866 = vadd.f32 %v3030, %v3865
    %v3867 = vpop.f32.mrf.mxu0
    %v3868 = vadd.f32 %v3034, %v3867
    %3869 = vmatprep.mubr.bf16.mxu0 %v2894
    %3870 = vmatmul.mubr.bf16.gmra.mxu0 %v2893
    %v3871 = vpop.f32.mrf.mxu0
    %v3872 = vadd.f32 %v3030, %v3871
    %v3873 = vpop.f32.mrf.mxu0
    %v3874 = vadd.f32 %v3034, %v3873
    %v3875 = vpop.f32.mrf.mxu0
    %v3876 = vadd.f32 %v3030, %v3875
    %v3877 = vpop.f32.mrf.mxu0
    %v3878 = vadd.f32 %v3034, %v3877
    %3879 = vdwg.mxu0
    %3880 = vmatprep.subr.bf16.mxu0 %v3524
    %3881 = vmatpush1.bf16.msra.mxu0 %v3523
    %3882 = vmatprep.subr.bf16.mxu0 %v3520
    %3883 = vmatpush1.bf16.msra.mxu0 %v3519
    %3884 = vmatprep.subr.bf16.mxu0 %v3516
    %3885 = vmatpush1.bf16.msra.mxu0 %v3515
    %3886 = vmatprep.subr.bf16.mxu0 %v3512
    %3887 = vmatpush1.bf16.msra.mxu0 %v3511
    %3888 = vmatprep.subr.bf16.mxu0 %v3508
    %3889 = vmatpush1.bf16.msra.mxu0 %v3507
    %3890 = vmatprep.subr.bf16.mxu0 %v3504
    %3891 = vmatpush1.bf16.msra.mxu0 %v3503
    %3892 = vmatprep.subr.bf16.mxu0 %v3500
    %3893 = vmatpush1.bf16.msra.mxu0 %v3499
    %3894 = vmatprep.subr.bf16.mxu0 %v3496
    %3895 = vmatpush1.bf16.msra.mxu0 %v3495
    %3896 = vmatprep.subr.bf16.mxu0 %v3556
    %3897 = vmatpush2.bf16.msra.mxu0 %v3555
    %3898 = vmatprep.subr.bf16.mxu0 %v3552
    %3899 = vmatpush2.bf16.msra.mxu0 %v3551
    %3900 = vmatprep.subr.bf16.mxu0 %v3548
    %3901 = vmatpush2.bf16.msra.mxu0 %v3547
    %3902 = vmatprep.subr.bf16.mxu0 %v3544
    %3903 = vmatpush2.bf16.msra.mxu0 %v3543
    %3904 = vmatprep.subr.bf16.mxu0 %v3540
    %3905 = vmatpush2.bf16.msra.mxu0 %v3539
    %3906 = vmatprep.subr.bf16.mxu0 %v3536
    %3907 = vmatpush2.bf16.msra.mxu0 %v3535
    %3908 = vmatprep.subr.bf16.mxu0 %v3532
    %3909 = vmatpush2.bf16.msra.mxu0 %v3531
    %3910 = vmatprep.subr.bf16.mxu0 %v3528
    %3911 = vmatpush2.bf16.msra.mxu0 %v3527
    %3912 = vmatprep.mubr.bf16.mxu0 %v2836
    %3913 = vmatmul.mubr.bf16.gmra.mxu0 %v2835
    %v3914 = vpop.f32.mrf.mxu0
    %v3915 = vadd.f32 %v3722, %v3914
    %v3916 = vpop.f32.mrf.mxu0
    %v3917 = vadd.f32 %v3724, %v3916
    %v3918 = vpop.f32.mrf.mxu0
    %v3919 = vadd.f32 %v3726, %v3918
    %v3920 = vpop.f32.mrf.mxu0
    %v3921 = vadd.f32 %v3728, %v3920
    %3922 = vmatprep.mubr.bf16.mxu0 %v2840
    %3923 = vmatmul.mubr.bf16.gmra.mxu0 %v2839
    %v3924 = vpop.f32.mrf.mxu0
    %v3925 = vadd.f32 %v3732, %v3924
    %v3926 = vpop.f32.mrf.mxu0
    %v3927 = vadd.f32 %v3734, %v3926
    %v3928 = vpop.f32.mrf.mxu0
    %v3929 = vadd.f32 %v3736, %v3928
    %v3930 = vpop.f32.mrf.mxu0
    %v3931 = vadd.f32 %v3738, %v3930
    %3932 = vmatprep.mubr.bf16.mxu0 %v2844
    %3933 = vmatmul.mubr.bf16.gmra.mxu0 %v2843
    %v3934 = vpop.f32.mrf.mxu0
    %v3935 = vadd.f32 %v3742, %v3934
    %v3936 = vpop.f32.mrf.mxu0
    %v3937 = vadd.f32 %v3744, %v3936
    %v3938 = vpop.f32.mrf.mxu0
    %v3939 = vadd.f32 %v3746, %v3938
    %v3940 = vpop.f32.mrf.mxu0
    %v3941 = vadd.f32 %v3748, %v3940
    %3942 = vmatprep.mubr.bf16.mxu0 %v2848
    %3943 = vmatmul.mubr.bf16.gmra.mxu0 %v2847
    %v3944 = vpop.f32.mrf.mxu0
    %v3945 = vadd.f32 %v3752, %v3944
    %v3946 = vpop.f32.mrf.mxu0
    %v3947 = vadd.f32 %v3754, %v3946
    %v3948 = vpop.f32.mrf.mxu0
    %v3949 = vadd.f32 %v3756, %v3948
    %v3950 = vpop.f32.mrf.mxu0
    %v3951 = vadd.f32 %v3758, %v3950
    %3952 = vmatprep.mubr.bf16.mxu0 %v2852
    %3953 = vmatmul.mubr.bf16.gmra.mxu0 %v2851
    %v3954 = vpop.f32.mrf.mxu0
    %v3955 = vadd.f32 %v3762, %v3954
    %v3956 = vpop.f32.mrf.mxu0
    %v3957 = vadd.f32 %v3764, %v3956
    %v3958 = vpop.f32.mrf.mxu0
    %v3959 = vadd.f32 %v3766, %v3958
    %v3960 = vpop.f32.mrf.mxu0
    %v3961 = vadd.f32 %v3768, %v3960
    %3962 = vmatprep.mubr.bf16.mxu0 %v2856
    %3963 = vmatmul.mubr.bf16.gmra.mxu0 %v2855
    %v3964 = vpop.f32.mrf.mxu0
    %v3965 = vadd.f32 %v3772, %v3964
    %v3966 = vpop.f32.mrf.mxu0
    %v3967 = vadd.f32 %v3774, %v3966
    %v3968 = vpop.f32.mrf.mxu0
    %v3969 = vadd.f32 %v3776, %v3968
    %v3970 = vpop.f32.mrf.mxu0
    %v3971 = vadd.f32 %v3778, %v3970
    %3972 = vmatprep.mubr.bf16.mxu0 %v2860
    %3973 = vmatmul.mubr.bf16.gmra.mxu0 %v2859
    %v3974 = vpop.f32.mrf.mxu0
    %v3975 = vadd.f32 %v3782, %v3974
    %v3976 = vpop.f32.mrf.mxu0
    %v3977 = vadd.f32 %v3784, %v3976
    %v3978 = vpop.f32.mrf.mxu0
    %v3979 = vadd.f32 %v3786, %v3978
    %v3980 = vpop.f32.mrf.mxu0
    %v3981 = vadd.f32 %v3788, %v3980
    %3982 = vmatprep.mubr.bf16.mxu0 %v2864
    %3983 = vmatmul.mubr.bf16.gmra.mxu0 %v2863
    %v3984 = vpop.f32.mrf.mxu0
    %v3985 = vadd.f32 %v3792, %v3984
    %v3986 = vpop.f32.mrf.mxu0
    %v3987 = vadd.f32 %v3794, %v3986
    %v3988 = vpop.f32.mrf.mxu0
    %v3989 = vadd.f32 %v3796, %v3988
    %v3990 = vpop.f32.mrf.mxu0
    %v3991 = vadd.f32 %v3798, %v3990
    %3992 = vmatprep.mubr.bf16.mxu0 %v2868
    %3993 = vmatmul.mubr.bf16.gmra.mxu0 %v2867
    %v3994 = vpop.f32.mrf.mxu0
    %v3995 = vadd.f32 %v3802, %v3994
    %v3996 = vpop.f32.mrf.mxu0
    %v3997 = vadd.f32 %v3804, %v3996
    %v3998 = vpop.f32.mrf.mxu0
    %v3999 = vadd.f32 %v3806, %v3998
    %v4000 = vpop.f32.mrf.mxu0
    %v4001 = vadd.f32 %v3808, %v4000
    %4002 = vmatprep.mubr.bf16.mxu0 %v2872
    %4003 = vmatmul.mubr.bf16.gmra.mxu0 %v2871
    %v4004 = vpop.f32.mrf.mxu0
    %v4005 = vadd.f32 %v3812, %v4004
    %v4006 = vpop.f32.mrf.mxu0
    %v4007 = vadd.f32 %v3814, %v4006
    %v4008 = vpop.f32.mrf.mxu0
    %v4009 = vadd.f32 %v3816, %v4008
    %v4010 = vpop.f32.mrf.mxu0
    %v4011 = vadd.f32 %v3818, %v4010
    %4012 = vmatprep.mubr.bf16.mxu0 %v2876
    %4013 = vmatmul.mubr.bf16.gmra.mxu0 %v2875
    %v4014 = vpop.f32.mrf.mxu0
    %v4015 = vadd.f32 %v3822, %v4014
    %v4016 = vpop.f32.mrf.mxu0
    %v4017 = vadd.f32 %v3824, %v4016
    %v4018 = vpop.f32.mrf.mxu0
    %v4019 = vadd.f32 %v3826, %v4018
    %v4020 = vpop.f32.mrf.mxu0
    %v4021 = vadd.f32 %v3828, %v4020
    %4022 = vmatprep.mubr.bf16.mxu0 %v2880
    %4023 = vmatmul.mubr.bf16.gmra.mxu0 %v2879
    %v4024 = vpop.f32.mrf.mxu0
    %v4025 = vadd.f32 %v3832, %v4024
    %v4026 = vpop.f32.mrf.mxu0
    %v4027 = vadd.f32 %v3834, %v4026
    %v4028 = vpop.f32.mrf.mxu0
    %v4029 = vadd.f32 %v3836, %v4028
    %v4030 = vpop.f32.mrf.mxu0
    %v4031 = vadd.f32 %v3838, %v4030
    %4032 = vmatprep.mubr.bf16.mxu0 %v2884
    %4033 = vmatmul.mubr.bf16.gmra.mxu0 %v2883
    %v4034 = vpop.f32.mrf.mxu0
    %v4035 = vadd.f32 %v3842, %v4034
    %v4036 = vpop.f32.mrf.mxu0
    %v4037 = vadd.f32 %v3844, %v4036
    %v4038 = vpop.f32.mrf.mxu0
    %v4039 = vadd.f32 %v3846, %v4038
    %v4040 = vpop.f32.mrf.mxu0
    %v4041 = vadd.f32 %v3848, %v4040
    %4042 = vmatprep.mubr.bf16.mxu0 %v2888
    %4043 = vmatmul.mubr.bf16.gmra.mxu0 %v2887
    %v4044 = vpop.f32.mrf.mxu0
    %v4045 = vadd.f32 %v3852, %v4044
    %v4046 = vpop.f32.mrf.mxu0
    %v4047 = vadd.f32 %v3854, %v4046
    %v4048 = vpop.f32.mrf.mxu0
    %v4049 = vadd.f32 %v3856, %v4048
    %v4050 = vpop.f32.mrf.mxu0
    %v4051 = vadd.f32 %v3858, %v4050
    %4052 = vmatprep.mubr.bf16.mxu0 %v2892
    %4053 = vmatmul.mubr.bf16.gmra.mxu0 %v2891
    %v4054 = vpop.f32.mrf.mxu0
    %v4055 = vadd.f32 %v3862, %v4054
    %v4056 = vpop.f32.mrf.mxu0
    %v4057 = vadd.f32 %v3864, %v4056
    %v4058 = vpop.f32.mrf.mxu0
    %v4059 = vadd.f32 %v3866, %v4058
    %v4060 = vpop.f32.mrf.mxu0
    %v4061 = vadd.f32 %v3868, %v4060
    %4062 = vmatprep.mubr.bf16.mxu0 %v2896
    %4063 = vmatmul.mubr.bf16.gmra.mxu0 %v2895
    %v4064 = vpop.f32.mrf.mxu0
    %v4065 = vadd.f32 %v3872, %v4064
    %v4066 = vpop.f32.mrf.mxu0
    %v4067 = vadd.f32 %v3874, %v4066
    %v4068 = vpop.f32.mrf.mxu0
    %v4069 = vadd.f32 %v3876, %v4068
    %v4070 = vpop.f32.mrf.mxu0
    %v4071 = vadd.f32 %v3878, %v4070
    %4072 = vdwg.mxu0
    %4073 = vmatprep.subr.bf16.mxu0 %v3462
    %4074 = vmatpush1.bf16.msra.mxu0 %v3461
    %4075 = vmatprep.subr.bf16.mxu0 %v3458
    %4076 = vmatpush1.bf16.msra.mxu0 %v3457
    %4077 = vmatprep.subr.bf16.mxu0 %v3454
    %4078 = vmatpush1.bf16.msra.mxu0 %v3453
    %4079 = vmatprep.subr.bf16.mxu0 %v3450
    %4080 = vmatpush1.bf16.msra.mxu0 %v3449
    %4081 = vmatprep.subr.bf16.mxu0 %v3446
    %4082 = vmatpush1.bf16.msra.mxu0 %v3445
    %4083 = vmatprep.subr.bf16.mxu0 %v3442
    %4084 = vmatpush1.bf16.msra.mxu0 %v3441
    %4085 = vmatprep.subr.bf16.mxu0 %v3438
    %4086 = vmatpush1.bf16.msra.mxu0 %v3437
    %4087 = vmatprep.subr.bf16.mxu0 %v3434
    %4088 = vmatpush1.bf16.msra.mxu0 %v3433
    %4089 = vmatprep.subr.bf16.mxu0 %v3494
    %4090 = vmatpush2.bf16.msra.mxu0 %v3493
    %4091 = vmatprep.subr.bf16.mxu0 %v3490
    %4092 = vmatpush2.bf16.msra.mxu0 %v3489
    %4093 = vmatprep.subr.bf16.mxu0 %v3486
    %4094 = vmatpush2.bf16.msra.mxu0 %v3485
    %4095 = vmatprep.subr.bf16.mxu0 %v3482
    %4096 = vmatpush2.bf16.msra.mxu0 %v3481
    %4097 = vmatprep.subr.bf16.mxu0 %v3478
    %4098 = vmatpush2.bf16.msra.mxu0 %v3477
    %4099 = vmatprep.subr.bf16.mxu0 %v3474
    %4100 = vmatpush2.bf16.msra.mxu0 %v3473
    %4101 = vmatprep.subr.bf16.mxu0 %v3470
    %4102 = vmatpush2.bf16.msra.mxu0 %v3469
    %4103 = vmatprep.subr.bf16.mxu0 %v3466
    %4104 = vmatpush2.bf16.msra.mxu0 %v3465
    %4105 = vmatprep.mubr.bf16.mxu0 %v2834
    %4106 = vmatmul.mubr.bf16.gmra.mxu0 %v2833
    %v4107 = vpop.f32.mrf.mxu0
    %v4108 = vadd.f32 %v3038, %v4107
    %v4109 = vpop.f32.mrf.mxu0
    %v4110 = vadd.f32 %v3042, %v4109
    %v4111 = vpop.f32.mrf.mxu0
    %v4112 = vadd.f32 %v3038, %v4111
    %v4113 = vpop.f32.mrf.mxu0
    %v4114 = vadd.f32 %v3042, %v4113
    %4115 = vmatprep.mubr.bf16.mxu0 %v2838
    %4116 = vmatmul.mubr.bf16.gmra.mxu0 %v2837
    %v4117 = vpop.f32.mrf.mxu0
    %v4118 = vadd.f32 %v3038, %v4117
    %v4119 = vpop.f32.mrf.mxu0
    %v4120 = vadd.f32 %v3042, %v4119
    %v4121 = vpop.f32.mrf.mxu0
    %v4122 = vadd.f32 %v3038, %v4121
    %v4123 = vpop.f32.mrf.mxu0
    %v4124 = vadd.f32 %v3042, %v4123
    %4125 = vmatprep.mubr.bf16.mxu0 %v2842
    %4126 = vmatmul.mubr.bf16.gmra.mxu0 %v2841
    %v4127 = vpop.f32.mrf.mxu0
    %v4128 = vadd.f32 %v3038, %v4127
    %v4129 = vpop.f32.mrf.mxu0
    %v4130 = vadd.f32 %v3042, %v4129
    %v4131 = vpop.f32.mrf.mxu0
    %v4132 = vadd.f32 %v3038, %v4131
    %v4133 = vpop.f32.mrf.mxu0
    %v4134 = vadd.f32 %v3042, %v4133
    %4135 = vmatprep.mubr.bf16.mxu0 %v2846
    %4136 = vmatmul.mubr.bf16.gmra.mxu0 %v2845
    %v4137 = vpop.f32.mrf.mxu0
    %v4138 = vadd.f32 %v3038, %v4137
    %v4139 = vpop.f32.mrf.mxu0
    %v4140 = vadd.f32 %v3042, %v4139
    %v4141 = vpop.f32.mrf.mxu0
    %v4142 = vadd.f32 %v3038, %v4141
    %v4143 = vpop.f32.mrf.mxu0
    %v4144 = vadd.f32 %v3042, %v4143
    %4145 = vmatprep.mubr.bf16.mxu0 %v2850
    %4146 = vmatmul.mubr.bf16.gmra.mxu0 %v2849
    %v4147 = vpop.f32.mrf.mxu0
    %v4148 = vadd.f32 %v3038, %v4147
    %v4149 = vpop.f32.mrf.mxu0
    %v4150 = vadd.f32 %v3042, %v4149
    %v4151 = vpop.f32.mrf.mxu0
    %v4152 = vadd.f32 %v3038, %v4151
    %v4153 = vpop.f32.mrf.mxu0
    %v4154 = vadd.f32 %v3042, %v4153
    %4155 = vmatprep.mubr.bf16.mxu0 %v2854
    %4156 = vmatmul.mubr.bf16.gmra.mxu0 %v2853
    %v4157 = vpop.f32.mrf.mxu0
    %v4158 = vadd.f32 %v3038, %v4157
    %v4159 = vpop.f32.mrf.mxu0
    %v4160 = vadd.f32 %v3042, %v4159
    %v4161 = vpop.f32.mrf.mxu0
    %v4162 = vadd.f32 %v3038, %v4161
    %v4163 = vpop.f32.mrf.mxu0
    %v4164 = vadd.f32 %v3042, %v4163
    %4165 = vmatprep.mubr.bf16.mxu0 %v2858
    %4166 = vmatmul.mubr.bf16.gmra.mxu0 %v2857
    %v4167 = vpop.f32.mrf.mxu0
    %v4168 = vadd.f32 %v3038, %v4167
    %v4169 = vpop.f32.mrf.mxu0
    %v4170 = vadd.f32 %v3042, %v4169
    %v4171 = vpop.f32.mrf.mxu0
    %v4172 = vadd.f32 %v3038, %v4171
    %v4173 = vpop.f32.mrf.mxu0
    %v4174 = vadd.f32 %v3042, %v4173
    %4175 = vmatprep.mubr.bf16.mxu0 %v2862
    %4176 = vmatmul.mubr.bf16.gmra.mxu0 %v2861
    %v4177 = vpop.f32.mrf.mxu0
    %v4178 = vadd.f32 %v3038, %v4177
    %v4179 = vpop.f32.mrf.mxu0
    %v4180 = vadd.f32 %v3042, %v4179
    %v4181 = vpop.f32.mrf.mxu0
    %v4182 = vadd.f32 %v3038, %v4181
    %v4183 = vpop.f32.mrf.mxu0
    %v4184 = vadd.f32 %v3042, %v4183
    %4185 = vmatprep.mubr.bf16.mxu0 %v2866
    %4186 = vmatmul.mubr.bf16.gmra.mxu0 %v2865
    %v4187 = vpop.f32.mrf.mxu0
    %v4188 = vadd.f32 %v3038, %v4187
    %v4189 = vpop.f32.mrf.mxu0
    %v4190 = vadd.f32 %v3042, %v4189
    %v4191 = vpop.f32.mrf.mxu0
    %v4192 = vadd.f32 %v3038, %v4191
    %v4193 = vpop.f32.mrf.mxu0
    %v4194 = vadd.f32 %v3042, %v4193
    %4195 = vmatprep.mubr.bf16.mxu0 %v2870
    %4196 = vmatmul.mubr.bf16.gmra.mxu0 %v2869
    %v4197 = vpop.f32.mrf.mxu0
    %v4198 = vadd.f32 %v3038, %v4197
    %v4199 = vpop.f32.mrf.mxu0
    %v4200 = vadd.f32 %v3042, %v4199
    %v4201 = vpop.f32.mrf.mxu0
    %v4202 = vadd.f32 %v3038, %v4201
    %v4203 = vpop.f32.mrf.mxu0
    %v4204 = vadd.f32 %v3042, %v4203
    %4205 = vmatprep.mubr.bf16.mxu0 %v2874
    %4206 = vmatmul.mubr.bf16.gmra.mxu0 %v2873
    %v4207 = vpop.f32.mrf.mxu0
    %v4208 = vadd.f32 %v3038, %v4207
    %v4209 = vpop.f32.mrf.mxu0
    %v4210 = vadd.f32 %v3042, %v4209
    %v4211 = vpop.f32.mrf.mxu0
    %v4212 = vadd.f32 %v3038, %v4211
    %v4213 = vpop.f32.mrf.mxu0
    %v4214 = vadd.f32 %v3042, %v4213
    %4215 = vmatprep.mubr.bf16.mxu0 %v2878
    %4216 = vmatmul.mubr.bf16.gmra.mxu0 %v2877
    %v4217 = vpop.f32.mrf.mxu0
    %v4218 = vadd.f32 %v3038, %v4217
    %v4219 = vpop.f32.mrf.mxu0
    %v4220 = vadd.f32 %v3042, %v4219
    %v4221 = vpop.f32.mrf.mxu0
    %v4222 = vadd.f32 %v3038, %v4221
    %v4223 = vpop.f32.mrf.mxu0
    %v4224 = vadd.f32 %v3042, %v4223
    %4225 = vmatprep.mubr.bf16.mxu0 %v2882
    %4226 = vmatmul.mubr.bf16.gmra.mxu0 %v2881
    %v4227 = vpop.f32.mrf.mxu0
    %v4228 = vadd.f32 %v3038, %v4227
    %v4229 = vpop.f32.mrf.mxu0
    %v4230 = vadd.f32 %v3042, %v4229
    %v4231 = vpop.f32.mrf.mxu0
    %v4232 = vadd.f32 %v3038, %v4231
    %v4233 = vpop.f32.mrf.mxu0
    %v4234 = vadd.f32 %v3042, %v4233
    %4235 = vmatprep.mubr.bf16.mxu0 %v2886
    %4236 = vmatmul.mubr.bf16.gmra.mxu0 %v2885
    %v4237 = vpop.f32.mrf.mxu0
    %v4238 = vadd.f32 %v3038, %v4237
    %v4239 = vpop.f32.mrf.mxu0
    %v4240 = vadd.f32 %v3042, %v4239
    %v4241 = vpop.f32.mrf.mxu0
    %v4242 = vadd.f32 %v3038, %v4241
    %v4243 = vpop.f32.mrf.mxu0
    %v4244 = vadd.f32 %v3042, %v4243
    %4245 = vmatprep.mubr.bf16.mxu0 %v2890
    %4246 = vmatmul.mubr.bf16.gmra.mxu0 %v2889
    %v4247 = vpop.f32.mrf.mxu0
    %v4248 = vadd.f32 %v3038, %v4247
    %v4249 = vpop.f32.mrf.mxu0
    %v4250 = vadd.f32 %v3042, %v4249
    %v4251 = vpop.f32.mrf.mxu0
    %v4252 = vadd.f32 %v3038, %v4251
    %v4253 = vpop.f32.mrf.mxu0
    %v4254 = vadd.f32 %v3042, %v4253
    %4255 = vmatprep.mubr.bf16.mxu0 %v2894
    %4256 = vmatmul.mubr.bf16.gmra.mxu0 %v2893
    %v4257 = vpop.f32.mrf.mxu0
    %v4258 = vadd.f32 %v3038, %v4257
    %v4259 = vpop.f32.mrf.mxu0
    %v4260 = vadd.f32 %v3042, %v4259
    %v4261 = vpop.f32.mrf.mxu0
    %v4262 = vadd.f32 %v3038, %v4261
    %v4263 = vpop.f32.mrf.mxu0
    %v4264 = vadd.f32 %v3042, %v4263
    %4265 = vdwg.mxu0
    %4266 = vmatprep.subr.bf16.mxu0 %v3526
    %4267 = vmatpush1.bf16.msra.mxu0 %v3525
    %4268 = vmatprep.subr.bf16.mxu0 %v3522
    %4269 = vmatpush1.bf16.msra.mxu0 %v3521
    %4270 = vmatprep.subr.bf16.mxu0 %v3518
    %4271 = vmatpush1.bf16.msra.mxu0 %v3517
    %4272 = vmatprep.subr.bf16.mxu0 %v3514
    %4273 = vmatpush1.bf16.msra.mxu0 %v3513
    %4274 = vmatprep.subr.bf16.mxu0 %v3510
    %4275 = vmatpush1.bf16.msra.mxu0 %v3509
    %4276 = vmatprep.subr.bf16.mxu0 %v3506
    %4277 = vmatpush1.bf16.msra.mxu0 %v3505
    %4278 = vmatprep.subr.bf16.mxu0 %v3502
    %4279 = vmatpush1.bf16.msra.mxu0 %v3501
    %4280 = vmatprep.subr.bf16.mxu0 %v3498
    %4281 = vmatpush1.bf16.msra.mxu0 %v3497
    %4282 = vmatprep.subr.bf16.mxu0 %v3558
    %4283 = vmatpush2.bf16.msra.mxu0 %v3557
    %4284 = vmatprep.subr.bf16.mxu0 %v3554
    %4285 = vmatpush2.bf16.msra.mxu0 %v3553
    %4286 = vmatprep.subr.bf16.mxu0 %v3550
    %4287 = vmatpush2.bf16.msra.mxu0 %v3549
    %4288 = vmatprep.subr.bf16.mxu0 %v3546
    %4289 = vmatpush2.bf16.msra.mxu0 %v3545
    %4290 = vmatprep.subr.bf16.mxu0 %v3542
    %4291 = vmatpush2.bf16.msra.mxu0 %v3541
    %4292 = vmatprep.subr.bf16.mxu0 %v3538
    %4293 = vmatpush2.bf16.msra.mxu0 %v3537
    %4294 = vmatprep.subr.bf16.mxu0 %v3534
    %4295 = vmatpush2.bf16.msra.mxu0 %v3533
    %4296 = vmatprep.subr.bf16.mxu0 %v3530
    %4297 = vmatpush2.bf16.msra.mxu0 %v3529
    %4298 = vmatprep.mubr.bf16.mxu0 %v2836
    %4299 = vmatmul.mubr.bf16.gmra.mxu0 %v2835
    %v4300 = vpop.f32.mrf.mxu0
    %v4301 = vadd.f32 %v4108, %v4300
    %v4302 = vpop.f32.mrf.mxu0
    %v4303 = vadd.f32 %v4110, %v4302
    %v4304 = vpop.f32.mrf.mxu0
    %v4305 = vadd.f32 %v4112, %v4304
    %v4306 = vpop.f32.mrf.mxu0
    %v4307 = vadd.f32 %v4114, %v4306
    %4308 = vmatprep.mubr.bf16.mxu0 %v2840
    %4309 = vmatmul.mubr.bf16.gmra.mxu0 %v2839
    %v4310 = vpop.f32.mrf.mxu0
    %v4311 = vadd.f32 %v4118, %v4310
    %v4312 = vpop.f32.mrf.mxu0
    %v4313 = vadd.f32 %v4120, %v4312
    %v4314 = vpop.f32.mrf.mxu0
    %v4315 = vadd.f32 %v4122, %v4314
    %v4316 = vpop.f32.mrf.mxu0
    %v4317 = vadd.f32 %v4124, %v4316
    %4318 = vmatprep.mubr.bf16.mxu0 %v2844
    %4319 = vmatmul.mubr.bf16.gmra.mxu0 %v2843
    %v4320 = vpop.f32.mrf.mxu0
    %v4321 = vadd.f32 %v4128, %v4320
    %v4322 = vpop.f32.mrf.mxu0
    %v4323 = vadd.f32 %v4130, %v4322
    %v4324 = vpop.f32.mrf.mxu0
    %v4325 = vadd.f32 %v4132, %v4324
    %v4326 = vpop.f32.mrf.mxu0
    %v4327 = vadd.f32 %v4134, %v4326
    %4328 = vmatprep.mubr.bf16.mxu0 %v2848
    %4329 = vmatmul.mubr.bf16.gmra.mxu0 %v2847
    %v4330 = vpop.f32.mrf.mxu0
    %v4331 = vadd.f32 %v4138, %v4330
    %v4332 = vpop.f32.mrf.mxu0
    %v4333 = vadd.f32 %v4140, %v4332
    %v4334 = vpop.f32.mrf.mxu0
    %v4335 = vadd.f32 %v4142, %v4334
    %v4336 = vpop.f32.mrf.mxu0
    %v4337 = vadd.f32 %v4144, %v4336
    %4338 = vmatprep.mubr.bf16.mxu0 %v2852
    %4339 = vmatmul.mubr.bf16.gmra.mxu0 %v2851
    %v4340 = vpop.f32.mrf.mxu0
    %v4341 = vadd.f32 %v4148, %v4340
    %v4342 = vpop.f32.mrf.mxu0
    %v4343 = vadd.f32 %v4150, %v4342
    %v4344 = vpop.f32.mrf.mxu0
    %v4345 = vadd.f32 %v4152, %v4344
    %v4346 = vpop.f32.mrf.mxu0
    %v4347 = vadd.f32 %v4154, %v4346
    %4348 = vmatprep.mubr.bf16.mxu0 %v2856
    %4349 = vmatmul.mubr.bf16.gmra.mxu0 %v2855
    %v4350 = vpop.f32.mrf.mxu0
    %v4351 = vadd.f32 %v4158, %v4350
    %v4352 = vpop.f32.mrf.mxu0
    %v4353 = vadd.f32 %v4160, %v4352
    %v4354 = vpop.f32.mrf.mxu0
    %v4355 = vadd.f32 %v4162, %v4354
    %v4356 = vpop.f32.mrf.mxu0
    %v4357 = vadd.f32 %v4164, %v4356
    %4358 = vmatprep.mubr.bf16.mxu0 %v2860
    %4359 = vmatmul.mubr.bf16.gmra.mxu0 %v2859
    %v4360 = vpop.f32.mrf.mxu0
    %v4361 = vadd.f32 %v4168, %v4360
    %v4362 = vpop.f32.mrf.mxu0
    %v4363 = vadd.f32 %v4170, %v4362
    %v4364 = vpop.f32.mrf.mxu0
    %v4365 = vadd.f32 %v4172, %v4364
    %v4366 = vpop.f32.mrf.mxu0
    %v4367 = vadd.f32 %v4174, %v4366
    %4368 = vmatprep.mubr.bf16.mxu0 %v2864
    %4369 = vmatmul.mubr.bf16.gmra.mxu0 %v2863
    %v4370 = vpop.f32.mrf.mxu0
    %v4371 = vadd.f32 %v4178, %v4370
    %v4372 = vpop.f32.mrf.mxu0
    %v4373 = vadd.f32 %v4180, %v4372
    %v4374 = vpop.f32.mrf.mxu0
    %v4375 = vadd.f32 %v4182, %v4374
    %v4376 = vpop.f32.mrf.mxu0
    %v4377 = vadd.f32 %v4184, %v4376
    %4378 = vmatprep.mubr.bf16.mxu0 %v2868
    %4379 = vmatmul.mubr.bf16.gmra.mxu0 %v2867
    %v4380 = vpop.f32.mrf.mxu0
    %v4381 = vadd.f32 %v4188, %v4380
    %v4382 = vpop.f32.mrf.mxu0
    %v4383 = vadd.f32 %v4190, %v4382
    %v4384 = vpop.f32.mrf.mxu0
    %v4385 = vadd.f32 %v4192, %v4384
    %v4386 = vpop.f32.mrf.mxu0
    %v4387 = vadd.f32 %v4194, %v4386
    %4388 = vmatprep.mubr.bf16.mxu0 %v2872
    %4389 = vmatmul.mubr.bf16.gmra.mxu0 %v2871
    %v4390 = vpop.f32.mrf.mxu0
    %v4391 = vadd.f32 %v4198, %v4390
    %v4392 = vpop.f32.mrf.mxu0
    %v4393 = vadd.f32 %v4200, %v4392
    %v4394 = vpop.f32.mrf.mxu0
    %v4395 = vadd.f32 %v4202, %v4394
    %v4396 = vpop.f32.mrf.mxu0
    %v4397 = vadd.f32 %v4204, %v4396
    %4398 = vmatprep.mubr.bf16.mxu0 %v2876
    %4399 = vmatmul.mubr.bf16.gmra.mxu0 %v2875
    %v4400 = vpop.f32.mrf.mxu0
    %v4401 = vadd.f32 %v4208, %v4400
    %v4402 = vpop.f32.mrf.mxu0
    %v4403 = vadd.f32 %v4210, %v4402
    %v4404 = vpop.f32.mrf.mxu0
    %v4405 = vadd.f32 %v4212, %v4404
    %v4406 = vpop.f32.mrf.mxu0
    %v4407 = vadd.f32 %v4214, %v4406
    %4408 = vmatprep.mubr.bf16.mxu0 %v2880
    %4409 = vmatmul.mubr.bf16.gmra.mxu0 %v2879
    %v4410 = vpop.f32.mrf.mxu0
    %v4411 = vadd.f32 %v4218, %v4410
    %v4412 = vpop.f32.mrf.mxu0
    %v4413 = vadd.f32 %v4220, %v4412
    %v4414 = vpop.f32.mrf.mxu0
    %v4415 = vadd.f32 %v4222, %v4414
    %v4416 = vpop.f32.mrf.mxu0
    %v4417 = vadd.f32 %v4224, %v4416
    %4418 = vmatprep.mubr.bf16.mxu0 %v2884
    %4419 = vmatmul.mubr.bf16.gmra.mxu0 %v2883
    %v4420 = vpop.f32.mrf.mxu0
    %v4421 = vadd.f32 %v4228, %v4420
    %v4422 = vpop.f32.mrf.mxu0
    %v4423 = vadd.f32 %v4230, %v4422
    %v4424 = vpop.f32.mrf.mxu0
    %v4425 = vadd.f32 %v4232, %v4424
    %v4426 = vpop.f32.mrf.mxu0
    %v4427 = vadd.f32 %v4234, %v4426
    %4428 = vmatprep.mubr.bf16.mxu0 %v2888
    %4429 = vmatmul.mubr.bf16.gmra.mxu0 %v2887
    %v4430 = vpop.f32.mrf.mxu0
    %v4431 = vadd.f32 %v4238, %v4430
    %v4432 = vpop.f32.mrf.mxu0
    %v4433 = vadd.f32 %v4240, %v4432
    %v4434 = vpop.f32.mrf.mxu0
    %v4435 = vadd.f32 %v4242, %v4434
    %v4436 = vpop.f32.mrf.mxu0
    %v4437 = vadd.f32 %v4244, %v4436
    %4438 = vmatprep.mubr.bf16.mxu0 %v2892
    %4439 = vmatmul.mubr.bf16.gmra.mxu0 %v2891
    %v4440 = vpop.f32.mrf.mxu0
    %v4441 = vadd.f32 %v4248, %v4440
    %v4442 = vpop.f32.mrf.mxu0
    %v4443 = vadd.f32 %v4250, %v4442
    %v4444 = vpop.f32.mrf.mxu0
    %v4445 = vadd.f32 %v4252, %v4444
    %v4446 = vpop.f32.mrf.mxu0
    %v4447 = vadd.f32 %v4254, %v4446
    %4448 = vmatprep.mubr.bf16.mxu0 %v2896
    %4449 = vmatmul.mubr.bf16.gmra.mxu0 %v2895
    %v4450 = vpop.f32.mrf.mxu0
    %v4451 = vadd.f32 %v4258, %v4450
    %v4452 = vpop.f32.mrf.mxu0
    %v4453 = vadd.f32 %v4260, %v4452
    %v4454 = vpop.f32.mrf.mxu0
    %v4455 = vadd.f32 %v4262, %v4454
    %v4456 = vpop.f32.mrf.mxu0
    %v4457 = vadd.f32 %v4264, %v4456
    %4458 = vdwg.mxu0
    %v4459 = vmax.f32 %v3915, 0.0
    %v4460 = vmax.f32 %v3917, 0.0
    %v4461 = vmax.f32 %v4301, 0.0
    %v4462 = vmax.f32 %v4303, 0.0
    %v4463 = vmax.f32 %v3919, 0.0
    %v4464 = vmax.f32 %v3921, 0.0
    %v4465 = vmax.f32 %v4305, 0.0
    %v4466 = vmax.f32 %v4307, 0.0
    %v4467 = vmax.f32 %v3925, 0.0
    %v4468 = vmax.f32 %v3927, 0.0
    %v4469 = vmax.f32 %v4311, 0.0
    %v4470 = vmax.f32 %v4313, 0.0
    %v4471 = vmax.f32 %v3929, 0.0
    %v4472 = vmax.f32 %v3931, 0.0
    %v4473 = vmax.f32 %v4315, 0.0
    %v4474 = vmax.f32 %v4317, 0.0
    %v4475 = vmax.f32 %v3935, 0.0
    %v4476 = vmax.f32 %v3937, 0.0
    %v4477 = vmax.f32 %v4321, 0.0
    %v4478 = vmax.f32 %v4323, 0.0
    %v4479 = vmax.f32 %v3939, 0.0
    %v4480 = vmax.f32 %v3941, 0.0
    %v4481 = vmax.f32 %v4325, 0.0
    %v4482 = vmax.f32 %v4327, 0.0
    %v4483 = vmax.f32 %v3945, 0.0
    %v4484 = vmax.f32 %v3947, 0.0
    %v4485 = vmax.f32 %v4331, 0.0
    %v4486 = vmax.f32 %v4333, 0.0
    %v4487 = vmax.f32 %v3949, 0.0
    %v4488 = vmax.f32 %v3951, 0.0
    %v4489 = vmax.f32 %v4335, 0.0
    %v4490 = vmax.f32 %v4337, 0.0
    %v4491 = vmax.f32 %v3955, 0.0
    %v4492 = vmax.f32 %v3957, 0.0
    %v4493 = vmax.f32 %v4341, 0.0
    %v4494 = vmax.f32 %v4343, 0.0
    %v4495 = vmax.f32 %v3959, 0.0
    %v4496 = vmax.f32 %v3961, 0.0
    %v4497 = vmax.f32 %v4345, 0.0
    %v4498 = vmax.f32 %v4347, 0.0
    %v4499 = vmax.f32 %v3965, 0.0
    %v4500 = vmax.f32 %v3967, 0.0
    %v4501 = vmax.f32 %v4351, 0.0
    %v4502 = vmax.f32 %v4353, 0.0
    %v4503 = vmax.f32 %v3969, 0.0
    %v4504 = vmax.f32 %v3971, 0.0
    %v4505 = vmax.f32 %v4355, 0.0
    %v4506 = vmax.f32 %v4357, 0.0
    %v4507 = vmax.f32 %v3975, 0.0
    %v4508 = vmax.f32 %v3977, 0.0
    %v4509 = vmax.f32 %v4361, 0.0
    %v4510 = vmax.f32 %v4363, 0.0
    %v4511 = vmax.f32 %v3979, 0.0
    %v4512 = vmax.f32 %v3981, 0.0
    %v4513 = vmax.f32 %v4365, 0.0
    %v4514 = vmax.f32 %v4367, 0.0
    %v4515 = vmax.f32 %v3985, 0.0
    %v4516 = vmax.f32 %v3987, 0.0
    %v4517 = vmax.f32 %v4371, 0.0
    %v4518 = vmax.f32 %v4373, 0.0
    %v4519 = vmax.f32 %v3989, 0.0
    %v4520 = vmax.f32 %v3991, 0.0
    %v4521 = vmax.f32 %v4375, 0.0
    %v4522 = vmax.f32 %v4377, 0.0
    %v4523 = vmax.f32 %v3995, 0.0
    %v4524 = vmax.f32 %v3997, 0.0
    %v4525 = vmax.f32 %v4381, 0.0
    %v4526 = vmax.f32 %v4383, 0.0
    %v4527 = vmax.f32 %v3999, 0.0
    %v4528 = vmax.f32 %v4001, 0.0
    %v4529 = vmax.f32 %v4385, 0.0
    %v4530 = vmax.f32 %v4387, 0.0
    %v4531 = vmax.f32 %v4005, 0.0
    %v4532 = vmax.f32 %v4007, 0.0
    %v4533 = vmax.f32 %v4391, 0.0
    %v4534 = vmax.f32 %v4393, 0.0
    %v4535 = vmax.f32 %v4009, 0.0
    %v4536 = vmax.f32 %v4011, 0.0
    %v4537 = vmax.f32 %v4395, 0.0
    %v4538 = vmax.f32 %v4397, 0.0
    %v4539 = vmax.f32 %v4015, 0.0
    %v4540 = vmax.f32 %v4017, 0.0
    %v4541 = vmax.f32 %v4401, 0.0
    %v4542 = vmax.f32 %v4403, 0.0
    %v4543 = vmax.f32 %v4019, 0.0
    %v4544 = vmax.f32 %v4021, 0.0
    %v4545 = vmax.f32 %v4405, 0.0
    %v4546 = vmax.f32 %v4407, 0.0
    %v4547 = vmax.f32 %v4025, 0.0
    %v4548 = vmax.f32 %v4027, 0.0
    %v4549 = vmax.f32 %v4411, 0.0
    %v4550 = vmax.f32 %v4413, 0.0
    %v4551 = vmax.f32 %v4029, 0.0
    %v4552 = vmax.f32 %v4031, 0.0
    %v4553 = vmax.f32 %v4415, 0.0
    %v4554 = vmax.f32 %v4417, 0.0
    %v4555 = vmax.f32 %v4035, 0.0
    %v4556 = vmax.f32 %v4037, 0.0
    %v4557 = vmax.f32 %v4421, 0.0
    %v4558 = vmax.f32 %v4423, 0.0
    %v4559 = vmax.f32 %v4039, 0.0
    %v4560 = vmax.f32 %v4041, 0.0
    %v4561 = vmax.f32 %v4425, 0.0
    %v4562 = vmax.f32 %v4427, 0.0
    %v4563 = vmax.f32 %v4045, 0.0
    %v4564 = vmax.f32 %v4047, 0.0
    %v4565 = vmax.f32 %v4431, 0.0
    %v4566 = vmax.f32 %v4433, 0.0
    %v4567 = vmax.f32 %v4049, 0.0
    %v4568 = vmax.f32 %v4051, 0.0
    %v4569 = vmax.f32 %v4435, 0.0
    %v4570 = vmax.f32 %v4437, 0.0
    %v4571 = vmax.f32 %v4055, 0.0
    %v4572 = vmax.f32 %v4057, 0.0
    %v4573 = vmax.f32 %v4441, 0.0
    %v4574 = vmax.f32 %v4443, 0.0
    %v4575 = vmax.f32 %v4059, 0.0
    %v4576 = vmax.f32 %v4061, 0.0
    %v4577 = vmax.f32 %v4445, 0.0
    %v4578 = vmax.f32 %v4447, 0.0
    %v4579 = vmax.f32 %v4065, 0.0
    %v4580 = vmax.f32 %v4067, 0.0
    %v4581 = vmax.f32 %v4451, 0.0
    %v4582 = vmax.f32 %v4453, 0.0
    %v4583 = vmax.f32 %v4069, 0.0
    %v4584 = vmax.f32 %v4071, 0.0
    %v4585 = vmax.f32 %v4455, 0.0
    %v4586 = vmax.f32 %v4457, 0.0
    %v4587 = vpack.c.bf16 %v4463, %v4459
    %v4588 = vpack.c.bf16 %v4464, %v4460
    %v4589 = vpack.c.bf16 %v4465, %v4461
    %v4590 = vpack.c.bf16 %v4466, %v4462
    %v4591 = vpack.c.bf16 %v4471, %v4467
    %v4592 = vpack.c.bf16 %v4472, %v4468
    %v4593 = vpack.c.bf16 %v4473, %v4469
    %v4594 = vpack.c.bf16 %v4474, %v4470
    %v4595 = vpack.c.bf16 %v4479, %v4475
    %v4596 = vpack.c.bf16 %v4480, %v4476
    %v4597 = vpack.c.bf16 %v4481, %v4477
    %v4598 = vpack.c.bf16 %v4482, %v4478
    %v4599 = vpack.c.bf16 %v4487, %v4483
    %v4600 = vpack.c.bf16 %v4488, %v4484
    %v4601 = vpack.c.bf16 %v4489, %v4485
    %v4602 = vpack.c.bf16 %v4490, %v4486
    %v4603 = vpack.c.bf16 %v4495, %v4491
    %v4604 = vpack.c.bf16 %v4496, %v4492
    %v4605 = vpack.c.bf16 %v4497, %v4493
    %v4606 = vpack.c.bf16 %v4498, %v4494
    %v4607 = vpack.c.bf16 %v4503, %v4499
    %v4608 = vpack.c.bf16 %v4504, %v4500
    %v4609 = vpack.c.bf16 %v4505, %v4501
    %v4610 = vpack.c.bf16 %v4506, %v4502
    %v4611 = vpack.c.bf16 %v4511, %v4507
    %v4612 = vpack.c.bf16 %v4512, %v4508
    %v4613 = vpack.c.bf16 %v4513, %v4509
    %v4614 = vpack.c.bf16 %v4514, %v4510
    %v4615 = vpack.c.bf16 %v4519, %v4515
    %v4616 = vpack.c.bf16 %v4520, %v4516
    %v4617 = vpack.c.bf16 %v4521, %v4517
    %v4618 = vpack.c.bf16 %v4522, %v4518
    %v4619 = vpack.c.bf16 %v4527, %v4523
    %v4620 = vpack.c.bf16 %v4528, %v4524
    %v4621 = vpack.c.bf16 %v4529, %v4525
    %v4622 = vpack.c.bf16 %v4530, %v4526
    %v4623 = vpack.c.bf16 %v4535, %v4531
    %v4624 = vpack.c.bf16 %v4536, %v4532
    %v4625 = vpack.c.bf16 %v4537, %v4533
    %v4626 = vpack.c.bf16 %v4538, %v4534
    %v4627 = vpack.c.bf16 %v4543, %v4539
    %v4628 = vpack.c.bf16 %v4544, %v4540
    %v4629 = vpack.c.bf16 %v4545, %v4541
    %v4630 = vpack.c.bf16 %v4546, %v4542
    %v4631 = vpack.c.bf16 %v4551, %v4547
    %v4632 = vpack.c.bf16 %v4552, %v4548
    %v4633 = vpack.c.bf16 %v4553, %v4549
    %v4634 = vpack.c.bf16 %v4554, %v4550
    %v4635 = vpack.c.bf16 %v4559, %v4555
    %v4636 = vpack.c.bf16 %v4560, %v4556
    %v4637 = vpack.c.bf16 %v4561, %v4557
    %v4638 = vpack.c.bf16 %v4562, %v4558
    %v4639 = vpack.c.bf16 %v4567, %v4563
    %v4640 = vpack.c.bf16 %v4568, %v4564
    %v4641 = vpack.c.bf16 %v4569, %v4565
    %v4642 = vpack.c.bf16 %v4570, %v4566
    %v4643 = vpack.c.bf16 %v4575, %v4571
    %v4644 = vpack.c.bf16 %v4576, %v4572
    %v4645 = vpack.c.bf16 %v4577, %v4573
    %v4646 = vpack.c.bf16 %v4578, %v4574
    %v4647 = vpack.c.bf16 %v4583, %v4579
    %v4648 = vpack.c.bf16 %v4584, %v4580
    %v4649 = vpack.c.bf16 %v4585, %v4581
    %v4650 = vpack.c.bf16 %v4586, %v4582
    %v4651 = vld [vmem:[%s9] sm:$0xf]
    %v4652 = vld [vmem:[%s9 + $0x4] sm:$0xf]
    %v4653 = vld [vmem:[%s9 + $0x8] sm:$0xf]
    %v4654 = vld [vmem:[%s9 + $0xc] sm:$0xf]
    %v4655 = vld [vmem:[%s9 + $0x10] sm:$0xf]
    %v4656 = vld [vmem:[%s9 + $0x14] sm:$0xf]
    %v4657 = vld [vmem:[%s9 + $0x18] sm:$0xf]
    %v4658 = vld [vmem:[%s9 + $0x1c] sm:$0xf]
    %v4659 = vld [vmem:[%s9 + $0x20] sm:$0xf]
    %v4660 = vld [vmem:[%s9 + $0x24] sm:$0xf]
    %v4661 = vld [vmem:[%s9 + $0x28] sm:$0xf]
    %v4662 = vld [vmem:[%s9 + $0x2c] sm:$0xf]
    %v4663 = vld [vmem:[%s9 + $0x30] sm:$0xf]
    %v4664 = vld [vmem:[%s9 + $0x34] sm:$0xf]
    %v4665 = vld [vmem:[%s9 + $0x38] sm:$0xf]
    %v4666 = vld [vmem:[%s9 + $0x3c] sm:$0xf]
    %v4667 = vld [vmem:[%s9 + $0x40] sm:$0xf]
    %v4668 = vld [vmem:[%s9 + $0x44] sm:$0xf]
    %v4669 = vld [vmem:[%s9 + $0x48] sm:$0xf]
    %v4670 = vld [vmem:[%s9 + $0x4c] sm:$0xf]
    %v4671 = vld [vmem:[%s9 + $0x50] sm:$0xf]
    %v4672 = vld [vmem:[%s9 + $0x54] sm:$0xf]
    %v4673 = vld [vmem:[%s9 + $0x58] sm:$0xf]
    %v4674 = vld [vmem:[%s9 + $0x5c] sm:$0xf]
    %v4675 = vld [vmem:[%s9 + $0x60] sm:$0xf]
    %v4676 = vld [vmem:[%s9 + $0x64] sm:$0xf]
    %v4677 = vld [vmem:[%s9 + $0x68] sm:$0xf]
    %v4678 = vld [vmem:[%s9 + $0x6c] sm:$0xf]
    %v4679 = vld [vmem:[%s9 + $0x70] sm:$0xf]
    %v4680 = vld [vmem:[%s9 + $0x74] sm:$0xf]
    %v4681 = vld [vmem:[%s9 + $0x78] sm:$0xf]
    %v4682 = vld [vmem:[%s9 + $0x7c] sm:$0xf]
    %v4683 = vld [vmem:[%s9 + $0x80] sm:$0xf]
    %v4684 = vld [vmem:[%s9 + $0x84] sm:$0xf]
    %v4685 = vld [vmem:[%s9 + $0x88] sm:$0xf]
    %v4686 = vld [vmem:[%s9 + $0x8c] sm:$0xf]
    %v4687 = vld [vmem:[%s9 + $0x90] sm:$0xf]
    %v4688 = vld [vmem:[%s9 + $0x94] sm:$0xf]
    %v4689 = vld [vmem:[%s9 + $0x98] sm:$0xf]
    %v4690 = vld [vmem:[%s9 + $0x9c] sm:$0xf]
    %v4691 = vld [vmem:[%s9 + $0xa0] sm:$0xf]
    %v4692 = vld [vmem:[%s9 + $0xa4] sm:$0xf]
    %v4693 = vld [vmem:[%s9 + $0xa8] sm:$0xf]
    %v4694 = vld [vmem:[%s9 + $0xac] sm:$0xf]
    %v4695 = vld [vmem:[%s9 + $0xb0] sm:$0xf]
    %v4696 = vld [vmem:[%s9 + $0xb4] sm:$0xf]
    %v4697 = vld [vmem:[%s9 + $0xb8] sm:$0xf]
    %v4698 = vld [vmem:[%s9 + $0xbc] sm:$0xf]
    %v4699 = vld [vmem:[%s9 + $0xc0] sm:$0xf]
    %v4700 = vld [vmem:[%s9 + $0xc4] sm:$0xf]
    %v4701 = vld [vmem:[%s9 + $0xc8] sm:$0xf]
    %v4702 = vld [vmem:[%s9 + $0xcc] sm:$0xf]
    %v4703 = vld [vmem:[%s9 + $0xd0] sm:$0xf]
    %v4704 = vld [vmem:[%s9 + $0xd4] sm:$0xf]
    %v4705 = vld [vmem:[%s9 + $0xd8] sm:$0xf]
    %v4706 = vld [vmem:[%s9 + $0xdc] sm:$0xf]
    %v4707 = vld [vmem:[%s9 + $0xe0] sm:$0xf]
    %v4708 = vld [vmem:[%s9 + $0xe4] sm:$0xf]
    %v4709 = vld [vmem:[%s9 + $0xe8] sm:$0xf]
    %v4710 = vld [vmem:[%s9 + $0xec] sm:$0xf]
    %v4711 = vld [vmem:[%s9 + $0xf0] sm:$0xf]
    %v4712 = vld [vmem:[%s9 + $0xf4] sm:$0xf]
    %v4713 = vld [vmem:[%s9 + $0xf8] sm:$0xf]
    %v4714 = vld [vmem:[%s9 + $0xfc] sm:$0xf]
    %v4715 = vld [vmem:[%s10] sm:$0x1]
    %v4717 = vlaneseq
    %v4718 = vshrl.u32 %v4717, 7
    %v4719 = vsub.s32 0, %v4718
    %v4720 = vrot.slane %v4715, %v4719
    %v4786 = vunpack.c.l.b16 %v4651
    %v4787 = vunpack.c.l.b16 %v4652
    %v4788 = vunpack.c.l.b16 %v4653
    %v4789 = vunpack.c.l.b16 %v4654
    %v4790 = vunpack.c.l.b16 %v4655
    %v4791 = vunpack.c.l.b16 %v4656
    %v4792 = vunpack.c.l.b16 %v4657
    %v4793 = vunpack.c.l.b16 %v4658
    %v4794 = vunpack.c.l.b16 %v4659
    %v4795 = vunpack.c.l.b16 %v4660
    %v4796 = vunpack.c.l.b16 %v4661
    %v4797 = vunpack.c.l.b16 %v4662
    %v4798 = vunpack.c.l.b16 %v4663
    %v4799 = vunpack.c.l.b16 %v4664
    %v4800 = vunpack.c.l.b16 %v4665
    %v4801 = vunpack.c.l.b16 %v4666
    %v4802 = vunpack.c.l.b16 %v4667
    %v4803 = vunpack.c.l.b16 %v4668
    %v4804 = vunpack.c.l.b16 %v4669
    %v4805 = vunpack.c.l.b16 %v4670
    %v4806 = vunpack.c.l.b16 %v4671
    %v4807 = vunpack.c.l.b16 %v4672
    %v4808 = vunpack.c.l.b16 %v4673
    %v4809 = vunpack.c.l.b16 %v4674
    %v4810 = vunpack.c.l.b16 %v4675
    %v4811 = vunpack.c.l.b16 %v4676
    %v4812 = vunpack.c.l.b16 %v4677
    %v4813 = vunpack.c.l.b16 %v4678
    %v4814 = vunpack.c.l.b16 %v4679
    %v4815 = vunpack.c.l.b16 %v4680
    %v4816 = vunpack.c.l.b16 %v4681
    %v4817 = vunpack.c.l.b16 %v4682
    %v4818 = vunpack.c.l.b16 %v4683
    %v4819 = vunpack.c.l.b16 %v4684
    %v4820 = vunpack.c.l.b16 %v4685
    %v4821 = vunpack.c.l.b16 %v4686
    %v4822 = vunpack.c.l.b16 %v4687
    %v4823 = vunpack.c.l.b16 %v4688
    %v4824 = vunpack.c.l.b16 %v4689
    %v4825 = vunpack.c.l.b16 %v4690
    %v4826 = vunpack.c.l.b16 %v4691
    %v4827 = vunpack.c.l.b16 %v4692
    %v4828 = vunpack.c.l.b16 %v4693
    %v4829 = vunpack.c.l.b16 %v4694
    %v4830 = vunpack.c.l.b16 %v4695
    %v4831 = vunpack.c.l.b16 %v4696
    %v4832 = vunpack.c.l.b16 %v4697
    %v4833 = vunpack.c.l.b16 %v4698
    %v4834 = vunpack.c.l.b16 %v4699
    %v4835 = vunpack.c.l.b16 %v4700
    %v4836 = vunpack.c.l.b16 %v4701
    %v4837 = vunpack.c.l.b16 %v4702
    %v4838 = vunpack.c.l.b16 %v4703
    %v4839 = vunpack.c.l.b16 %v4704
    %v4840 = vunpack.c.l.b16 %v4705
    %v4841 = vunpack.c.l.b16 %v4706
    %v4842 = vunpack.c.l.b16 %v4707
    %v4843 = vunpack.c.l.b16 %v4708
    %v4844 = vunpack.c.l.b16 %v4709
    %v4845 = vunpack.c.l.b16 %v4710
    %v4846 = vunpack.c.l.b16 %v4711
    %v4847 = vunpack.c.l.b16 %v4712
    %v4848 = vunpack.c.l.b16 %v4713
    %v4849 = vunpack.c.l.b16 %v4714
    %v4850 = vpack.c.b16 %v4787, %v4786
    %v4851 = vpack.c.b16 %v4789, %v4788
    %v4852 = vpack.c.b16 %v4791, %v4790
    %v4853 = vpack.c.b16 %v4793, %v4792
    %v4854 = vpack.c.b16 %v4795, %v4794
    %v4855 = vpack.c.b16 %v4797, %v4796
    %v4856 = vpack.c.b16 %v4799, %v4798
    %v4857 = vpack.c.b16 %v4801, %v4800
    %v4858 = vpack.c.b16 %v4803, %v4802
    %v4859 = vpack.c.b16 %v4805, %v4804
    %v4860 = vpack.c.b16 %v4807, %v4806
    %v4861 = vpack.c.b16 %v4809, %v4808
    %v4862 = vpack.c.b16 %v4811, %v4810
    %v4863 = vpack.c.b16 %v4813, %v4812
    %v4864 = vpack.c.b16 %v4815, %v4814
    %v4865 = vpack.c.b16 %v4817, %v4816
    %v4866 = vpack.c.b16 %v4819, %v4818
    %v4867 = vpack.c.b16 %v4821, %v4820
    %v4868 = vpack.c.b16 %v4823, %v4822
    %v4869 = vpack.c.b16 %v4825, %v4824
    %v4870 = vpack.c.b16 %v4827, %v4826
    %v4871 = vpack.c.b16 %v4829, %v4828
    %v4872 = vpack.c.b16 %v4831, %v4830
    %v4873 = vpack.c.b16 %v4833, %v4832
    %v4874 = vpack.c.b16 %v4835, %v4834
    %v4875 = vpack.c.b16 %v4837, %v4836
    %v4876 = vpack.c.b16 %v4839, %v4838
    %v4877 = vpack.c.b16 %v4841, %v4840
    %v4878 = vpack.c.b16 %v4843, %v4842
    %v4879 = vpack.c.b16 %v4845, %v4844
    %v4880 = vpack.c.b16 %v4847, %v4846
    %v4881 = vpack.c.b16 %v4849, %v4848
    %4914 = vmatprep.subr.bf16.mxu0 0
    %4915 = vmatpush1.bf16.msra.mxu0 %v4857
    %4916 = vmatprep.subr.bf16.mxu0 0
    %4917 = vmatpush1.bf16.msra.mxu0 %v4856
    %4918 = vmatprep.subr.bf16.mxu0 0
    %4919 = vmatpush1.bf16.msra.mxu0 %v4855
    %4920 = vmatprep.subr.bf16.mxu0 0
    %4921 = vmatpush1.bf16.msra.mxu0 %v4854
    %4922 = vmatprep.subr.bf16.mxu0 0
    %4923 = vmatpush1.bf16.msra.mxu0 %v4853
    %4924 = vmatprep.subr.bf16.mxu0 0
    %4925 = vmatpush1.bf16.msra.mxu0 %v4852
    %4926 = vmatprep.subr.bf16.mxu0 0
    %4927 = vmatpush1.bf16.msra.mxu0 %v4851
    %4928 = vmatprep.subr.bf16.mxu0 0
    %4929 = vmatpush1.bf16.msra.mxu0 %v4850
    %4930 = vmatprep.subr.bf16.mxu0 0
    %4931 = vmatpush2.bf16.msra.mxu0 %v4865
    %4932 = vmatprep.subr.bf16.mxu0 0
    %4933 = vmatpush2.bf16.msra.mxu0 %v4864
    %4934 = vmatprep.subr.bf16.mxu0 0
    %4935 = vmatpush2.bf16.msra.mxu0 %v4863
    %4936 = vmatprep.subr.bf16.mxu0 0
    %4937 = vmatpush2.bf16.msra.mxu0 %v4862
    %4938 = vmatprep.subr.bf16.mxu0 0
    %4939 = vmatpush2.bf16.msra.mxu0 %v4861
    %4940 = vmatprep.subr.bf16.mxu0 0
    %4941 = vmatpush2.bf16.msra.mxu0 %v4860
    %4942 = vmatprep.subr.bf16.mxu0 0
    %4943 = vmatpush2.bf16.msra.mxu0 %v4859
    %4944 = vmatprep.subr.bf16.mxu0 0
    %4945 = vmatpush2.bf16.msra.mxu0 %v4858
    %4946 = vmatprep.mubr.bf16.mxu0 %v4588
    %4947 = vmatmul.mubr.bf16.gmra.mxu0 %v4587
    %v4948 = vpop.f32.mrf.mxu0
    %v4949 = vadd.f32 %v4720, %v4948
    %v4950 = vpop.f32.mrf.mxu0
    %v4951 = vpop.f32.mrf.mxu0
    %v4952 = vadd.f32 %v4720, %v4951
    %v4953 = vpop.f32.mrf.mxu0
    %4954 = vmatprep.mubr.bf16.mxu0 %v4592
    %4955 = vmatmul.mubr.bf16.gmra.mxu0 %v4591
    %v4956 = vpop.f32.mrf.mxu0
    %v4957 = vadd.f32 %v4720, %v4956
    %v4958 = vpop.f32.mrf.mxu0
    %v4959 = vpop.f32.mrf.mxu0
    %v4960 = vadd.f32 %v4720, %v4959
    %v4961 = vpop.f32.mrf.mxu0
    %4962 = vmatprep.mubr.bf16.mxu0 %v4596
    %4963 = vmatmul.mubr.bf16.gmra.mxu0 %v4595
    %v4964 = vpop.f32.mrf.mxu0
    %v4965 = vadd.f32 %v4720, %v4964
    %v4966 = vpop.f32.mrf.mxu0
    %v4967 = vpop.f32.mrf.mxu0
    %v4968 = vadd.f32 %v4720, %v4967
    %v4969 = vpop.f32.mrf.mxu0
    %4970 = vmatprep.mubr.bf16.mxu0 %v4600
    %4971 = vmatmul.mubr.bf16.gmra.mxu0 %v4599
    %v4972 = vpop.f32.mrf.mxu0
    %v4973 = vadd.f32 %v4720, %v4972
    %v4974 = vpop.f32.mrf.mxu0
    %v4975 = vpop.f32.mrf.mxu0
    %v4976 = vadd.f32 %v4720, %v4975
    %v4977 = vpop.f32.mrf.mxu0
    %4978 = vmatprep.mubr.bf16.mxu0 %v4604
    %4979 = vmatmul.mubr.bf16.gmra.mxu0 %v4603
    %v4980 = vpop.f32.mrf.mxu0
    %v4981 = vadd.f32 %v4720, %v4980
    %v4982 = vpop.f32.mrf.mxu0
    %v4983 = vpop.f32.mrf.mxu0
    %v4984 = vadd.f32 %v4720, %v4983
    %v4985 = vpop.f32.mrf.mxu0
    %4986 = vmatprep.mubr.bf16.mxu0 %v4608
    %4987 = vmatmul.mubr.bf16.gmra.mxu0 %v4607
    %v4988 = vpop.f32.mrf.mxu0
    %v4989 = vadd.f32 %v4720, %v4988
    %v4990 = vpop.f32.mrf.mxu0
    %v4991 = vpop.f32.mrf.mxu0
    %v4992 = vadd.f32 %v4720, %v4991
    %v4993 = vpop.f32.mrf.mxu0
    %4994 = vmatprep.mubr.bf16.mxu0 %v4612
    %4995 = vmatmul.mubr.bf16.gmra.mxu0 %v4611
    %v4996 = vpop.f32.mrf.mxu0
    %v4997 = vadd.f32 %v4720, %v4996
    %v4998 = vpop.f32.mrf.mxu0
    %v4999 = vpop.f32.mrf.mxu0
    %v5000 = vadd.f32 %v4720, %v4999
    %v5001 = vpop.f32.mrf.mxu0
    %5002 = vmatprep.mubr.bf16.mxu0 %v4616
    %5003 = vmatmul.mubr.bf16.gmra.mxu0 %v4615
    %v5004 = vpop.f32.mrf.mxu0
    %v5005 = vadd.f32 %v4720, %v5004
    %v5006 = vpop.f32.mrf.mxu0
    %v5007 = vpop.f32.mrf.mxu0
    %v5008 = vadd.f32 %v4720, %v5007
    %v5009 = vpop.f32.mrf.mxu0
    %5010 = vmatprep.mubr.bf16.mxu0 %v4620
    %5011 = vmatmul.mubr.bf16.gmra.mxu0 %v4619
    %v5012 = vpop.f32.mrf.mxu0
    %v5013 = vadd.f32 %v4720, %v5012
    %v5014 = vpop.f32.mrf.mxu0
    %v5015 = vpop.f32.mrf.mxu0
    %v5016 = vadd.f32 %v4720, %v5015
    %v5017 = vpop.f32.mrf.mxu0
    %5018 = vmatprep.mubr.bf16.mxu0 %v4624
    %5019 = vmatmul.mubr.bf16.gmra.mxu0 %v4623
    %v5020 = vpop.f32.mrf.mxu0
    %v5021 = vadd.f32 %v4720, %v5020
    %v5022 = vpop.f32.mrf.mxu0
    %v5023 = vpop.f32.mrf.mxu0
    %v5024 = vadd.f32 %v4720, %v5023
    %v5025 = vpop.f32.mrf.mxu0
    %5026 = vmatprep.mubr.bf16.mxu0 %v4628
    %5027 = vmatmul.mubr.bf16.gmra.mxu0 %v4627
    %v5028 = vpop.f32.mrf.mxu0
    %v5029 = vadd.f32 %v4720, %v5028
    %v5030 = vpop.f32.mrf.mxu0
    %v5031 = vpop.f32.mrf.mxu0
    %v5032 = vadd.f32 %v4720, %v5031
    %v5033 = vpop.f32.mrf.mxu0
    %5034 = vmatprep.mubr.bf16.mxu0 %v4632
    %5035 = vmatmul.mubr.bf16.gmra.mxu0 %v4631
    %v5036 = vpop.f32.mrf.mxu0
    %v5037 = vadd.f32 %v4720, %v5036
    %v5038 = vpop.f32.mrf.mxu0
    %v5039 = vpop.f32.mrf.mxu0
    %v5040 = vadd.f32 %v4720, %v5039
    %v5041 = vpop.f32.mrf.mxu0
    %5042 = vmatprep.mubr.bf16.mxu0 %v4636
    %5043 = vmatmul.mubr.bf16.gmra.mxu0 %v4635
    %v5044 = vpop.f32.mrf.mxu0
    %v5045 = vadd.f32 %v4720, %v5044
    %v5046 = vpop.f32.mrf.mxu0
    %v5047 = vpop.f32.mrf.mxu0
    %v5048 = vadd.f32 %v4720, %v5047
    %v5049 = vpop.f32.mrf.mxu0
    %5050 = vmatprep.mubr.bf16.mxu0 %v4640
    %5051 = vmatmul.mubr.bf16.gmra.mxu0 %v4639
    %v5052 = vpop.f32.mrf.mxu0
    %v5053 = vadd.f32 %v4720, %v5052
    %v5054 = vpop.f32.mrf.mxu0
    %v5055 = vpop.f32.mrf.mxu0
    %v5056 = vadd.f32 %v4720, %v5055
    %v5057 = vpop.f32.mrf.mxu0
    %5058 = vmatprep.mubr.bf16.mxu0 %v4644
    %5059 = vmatmul.mubr.bf16.gmra.mxu0 %v4643
    %v5060 = vpop.f32.mrf.mxu0
    %v5061 = vadd.f32 %v4720, %v5060
    %v5062 = vpop.f32.mrf.mxu0
    %v5063 = vpop.f32.mrf.mxu0
    %v5064 = vadd.f32 %v4720, %v5063
    %v5065 = vpop.f32.mrf.mxu0
    %5066 = vmatprep.mubr.bf16.mxu0 %v4648
    %5067 = vmatmul.mubr.bf16.gmra.mxu0 %v4647
    %v5068 = vpop.f32.mrf.mxu0
    %v5069 = vadd.f32 %v4720, %v5068
    %v5070 = vpop.f32.mrf.mxu0
    %v5071 = vpop.f32.mrf.mxu0
    %v5072 = vadd.f32 %v4720, %v5071
    %v5073 = vpop.f32.mrf.mxu0
    %5074 = vdwg.mxu0
    %5075 = vmatprep.subr.bf16.mxu0 0
    %5076 = vmatpush1.bf16.msra.mxu0 %v4873
    %5077 = vmatprep.subr.bf16.mxu0 0
    %5078 = vmatpush1.bf16.msra.mxu0 %v4872
    %5079 = vmatprep.subr.bf16.mxu0 0
    %5080 = vmatpush1.bf16.msra.mxu0 %v4871
    %5081 = vmatprep.subr.bf16.mxu0 0
    %5082 = vmatpush1.bf16.msra.mxu0 %v4870
    %5083 = vmatprep.subr.bf16.mxu0 0
    %5084 = vmatpush1.bf16.msra.mxu0 %v4869
    %5085 = vmatprep.subr.bf16.mxu0 0
    %5086 = vmatpush1.bf16.msra.mxu0 %v4868
    %5087 = vmatprep.subr.bf16.mxu0 0
    %5088 = vmatpush1.bf16.msra.mxu0 %v4867
    %5089 = vmatprep.subr.bf16.mxu0 0
    %5090 = vmatpush1.bf16.msra.mxu0 %v4866
    %5091 = vmatprep.subr.bf16.mxu0 0
    %5092 = vmatpush2.bf16.msra.mxu0 %v4881
    %5093 = vmatprep.subr.bf16.mxu0 0
    %5094 = vmatpush2.bf16.msra.mxu0 %v4880
    %5095 = vmatprep.subr.bf16.mxu0 0
    %5096 = vmatpush2.bf16.msra.mxu0 %v4879
    %5097 = vmatprep.subr.bf16.mxu0 0
    %5098 = vmatpush2.bf16.msra.mxu0 %v4878
    %5099 = vmatprep.subr.bf16.mxu0 0
    %5100 = vmatpush2.bf16.msra.mxu0 %v4877
    %5101 = vmatprep.subr.bf16.mxu0 0
    %5102 = vmatpush2.bf16.msra.mxu0 %v4876
    %5103 = vmatprep.subr.bf16.mxu0 0
    %5104 = vmatpush2.bf16.msra.mxu0 %v4875
    %5105 = vmatprep.subr.bf16.mxu0 0
    %5106 = vmatpush2.bf16.msra.mxu0 %v4874
    %5107 = vmatprep.mubr.bf16.mxu0 %v4590
    %5108 = vmatmul.mubr.bf16.gmra.mxu0 %v4589
    %v5109 = vpop.f32.mrf.mxu0
    %v5110 = vadd.f32 %v4949, %v5109
    %v5111 = vpop.f32.mrf.mxu0
    %v5112 = vpop.f32.mrf.mxu0
    %v5113 = vadd.f32 %v4952, %v5112
    %v5114 = vpop.f32.mrf.mxu0
    %5115 = vmatprep.mubr.bf16.mxu0 %v4594
    %5116 = vmatmul.mubr.bf16.gmra.mxu0 %v4593
    %v5117 = vpop.f32.mrf.mxu0
    %v5118 = vadd.f32 %v4957, %v5117
    %v5119 = vpop.f32.mrf.mxu0
    %v5120 = vpop.f32.mrf.mxu0
    %v5121 = vadd.f32 %v4960, %v5120
    %v5122 = vpop.f32.mrf.mxu0
    %5123 = vmatprep.mubr.bf16.mxu0 %v4598
    %5124 = vmatmul.mubr.bf16.gmra.mxu0 %v4597
    %v5125 = vpop.f32.mrf.mxu0
    %v5126 = vadd.f32 %v4965, %v5125
    %v5127 = vpop.f32.mrf.mxu0
    %v5128 = vpop.f32.mrf.mxu0
    %v5129 = vadd.f32 %v4968, %v5128
    %v5130 = vpop.f32.mrf.mxu0
    %5131 = vmatprep.mubr.bf16.mxu0 %v4602
    %5132 = vmatmul.mubr.bf16.gmra.mxu0 %v4601
    %v5133 = vpop.f32.mrf.mxu0
    %v5134 = vadd.f32 %v4973, %v5133
    %v5135 = vpop.f32.mrf.mxu0
    %v5136 = vpop.f32.mrf.mxu0
    %v5137 = vadd.f32 %v4976, %v5136
    %v5138 = vpop.f32.mrf.mxu0
    %5139 = vmatprep.mubr.bf16.mxu0 %v4606
    %5140 = vmatmul.mubr.bf16.gmra.mxu0 %v4605
    %v5141 = vpop.f32.mrf.mxu0
    %v5142 = vadd.f32 %v4981, %v5141
    %v5143 = vpop.f32.mrf.mxu0
    %v5144 = vpop.f32.mrf.mxu0
    %v5145 = vadd.f32 %v4984, %v5144
    %v5146 = vpop.f32.mrf.mxu0
    %5147 = vmatprep.mubr.bf16.mxu0 %v4610
    %5148 = vmatmul.mubr.bf16.gmra.mxu0 %v4609
    %v5149 = vpop.f32.mrf.mxu0
    %v5150 = vadd.f32 %v4989, %v5149
    %v5151 = vpop.f32.mrf.mxu0
    %v5152 = vpop.f32.mrf.mxu0
    %v5153 = vadd.f32 %v4992, %v5152
    %v5154 = vpop.f32.mrf.mxu0
    %5155 = vmatprep.mubr.bf16.mxu0 %v4614
    %5156 = vmatmul.mubr.bf16.gmra.mxu0 %v4613
    %v5157 = vpop.f32.mrf.mxu0
    %v5158 = vadd.f32 %v4997, %v5157
    %v5159 = vpop.f32.mrf.mxu0
    %v5160 = vpop.f32.mrf.mxu0
    %v5161 = vadd.f32 %v5000, %v5160
    %v5162 = vpop.f32.mrf.mxu0
    %5163 = vmatprep.mubr.bf16.mxu0 %v4618
    %5164 = vmatmul.mubr.bf16.gmra.mxu0 %v4617
    %v5165 = vpop.f32.mrf.mxu0
    %v5166 = vadd.f32 %v5005, %v5165
    %v5167 = vpop.f32.mrf.mxu0
    %v5168 = vpop.f32.mrf.mxu0
    %v5169 = vadd.f32 %v5008, %v5168
    %v5170 = vpop.f32.mrf.mxu0
    %5171 = vmatprep.mubr.bf16.mxu0 %v4622
    %5172 = vmatmul.mubr.bf16.gmra.mxu0 %v4621
    %v5173 = vpop.f32.mrf.mxu0
    %v5174 = vadd.f32 %v5013, %v5173
    %v5175 = vpop.f32.mrf.mxu0
    %v5176 = vpop.f32.mrf.mxu0
    %v5177 = vadd.f32 %v5016, %v5176
    %v5178 = vpop.f32.mrf.mxu0
    %5179 = vmatprep.mubr.bf16.mxu0 %v4626
    %5180 = vmatmul.mubr.bf16.gmra.mxu0 %v4625
    %v5181 = vpop.f32.mrf.mxu0
    %v5182 = vadd.f32 %v5021, %v5181
    %v5183 = vpop.f32.mrf.mxu0
    %v5184 = vpop.f32.mrf.mxu0
    %v5185 = vadd.f32 %v5024, %v5184
    %v5186 = vpop.f32.mrf.mxu0
    %5187 = vmatprep.mubr.bf16.mxu0 %v4630
    %5188 = vmatmul.mubr.bf16.gmra.mxu0 %v4629
    %v5189 = vpop.f32.mrf.mxu0
    %v5190 = vadd.f32 %v5029, %v5189
    %v5191 = vpop.f32.mrf.mxu0
    %v5192 = vpop.f32.mrf.mxu0
    %v5193 = vadd.f32 %v5032, %v5192
    %v5194 = vpop.f32.mrf.mxu0
    %5195 = vmatprep.mubr.bf16.mxu0 %v4634
    %5196 = vmatmul.mubr.bf16.gmra.mxu0 %v4633
    %v5197 = vpop.f32.mrf.mxu0
    %v5198 = vadd.f32 %v5037, %v5197
    %v5199 = vpop.f32.mrf.mxu0
    %v5200 = vpop.f32.mrf.mxu0
    %v5201 = vadd.f32 %v5040, %v5200
    %v5202 = vpop.f32.mrf.mxu0
    %5203 = vmatprep.mubr.bf16.mxu0 %v4638
    %5204 = vmatmul.mubr.bf16.gmra.mxu0 %v4637
    %v5205 = vpop.f32.mrf.mxu0
    %v5206 = vadd.f32 %v5045, %v5205
    %v5207 = vpop.f32.mrf.mxu0
    %v5208 = vpop.f32.mrf.mxu0
    %v5209 = vadd.f32 %v5048, %v5208
    %v5210 = vpop.f32.mrf.mxu0
    %5211 = vmatprep.mubr.bf16.mxu0 %v4642
    %5212 = vmatmul.mubr.bf16.gmra.mxu0 %v4641
    %v5213 = vpop.f32.mrf.mxu0
    %v5214 = vadd.f32 %v5053, %v5213
    %v5215 = vpop.f32.mrf.mxu0
    %v5216 = vpop.f32.mrf.mxu0
    %v5217 = vadd.f32 %v5056, %v5216
    %v5218 = vpop.f32.mrf.mxu0
    %5219 = vmatprep.mubr.bf16.mxu0 %v4646
    %5220 = vmatmul.mubr.bf16.gmra.mxu0 %v4645
    %v5221 = vpop.f32.mrf.mxu0
    %v5222 = vadd.f32 %v5061, %v5221
    %v5223 = vpop.f32.mrf.mxu0
    %v5224 = vpop.f32.mrf.mxu0
    %v5225 = vadd.f32 %v5064, %v5224
    %v5226 = vpop.f32.mrf.mxu0
    %5227 = vmatprep.mubr.bf16.mxu0 %v4650
    %5228 = vmatmul.mubr.bf16.gmra.mxu0 %v4649
    %v5229 = vpop.f32.mrf.mxu0
    %v5230 = vadd.f32 %v5069, %v5229
    %v5231 = vpop.f32.mrf.mxu0
    %v5232 = vpop.f32.mrf.mxu0
    %v5233 = vadd.f32 %v5072, %v5232
    %v5234 = vpop.f32.mrf.mxu0
    %5235 = vdwg.mxu0
    %v5236 = vpack.c.bf16 %v5113, %v5110
    %v5237 = vpack.c.bf16 %v5121, %v5118
    %v5238 = vpack.c.bf16 %v5129, %v5126
    %v5239 = vpack.c.bf16 %v5137, %v5134
    %v5240 = vpack.c.bf16 %v5145, %v5142
    %v5241 = vpack.c.bf16 %v5153, %v5150
    %v5242 = vpack.c.bf16 %v5161, %v5158
    %v5243 = vpack.c.bf16 %v5169, %v5166
    %v5244 = vpack.c.bf16 %v5177, %v5174
    %v5245 = vpack.c.bf16 %v5185, %v5182
    %v5246 = vpack.c.bf16 %v5193, %v5190
    %v5247 = vpack.c.bf16 %v5201, %v5198
    %v5248 = vpack.c.bf16 %v5209, %v5206
    %v5249 = vpack.c.bf16 %v5217, %v5214
    %v5250 = vpack.c.bf16 %v5225, %v5222
    %v5251 = vpack.c.bf16 %v5233, %v5230
    %v5268 = vunpack.c.l.b16 %v5236
    %v5269 = vunpack.c.h.b16 %v5236
    %v5270 = vunpack.c.l.b16 %v5237
    %v5271 = vunpack.c.h.b16 %v5237
    %v5272 = vunpack.c.l.b16 %v5238
    %v5273 = vunpack.c.h.b16 %v5238
    %v5274 = vunpack.c.l.b16 %v5239
    %v5275 = vunpack.c.h.b16 %v5239
    %v5276 = vunpack.c.l.b16 %v5240
    %v5277 = vunpack.c.h.b16 %v5240
    %v5278 = vunpack.c.l.b16 %v5241
    %v5279 = vunpack.c.h.b16 %v5241
    %v5280 = vunpack.c.l.b16 %v5242
    %v5281 = vunpack.c.h.b16 %v5242
    %v5282 = vunpack.c.l.b16 %v5243
    %v5283 = vunpack.c.h.b16 %v5243
    %v5284 = vunpack.c.l.b16 %v5244
    %v5285 = vunpack.c.h.b16 %v5244
    %v5286 = vunpack.c.l.b16 %v5245
    %v5287 = vunpack.c.h.b16 %v5245
    %v5288 = vunpack.c.l.b16 %v5246
    %v5289 = vunpack.c.h.b16 %v5246
    %v5290 = vunpack.c.l.b16 %v5247
    %v5291 = vunpack.c.h.b16 %v5247
    %v5292 = vunpack.c.l.b16 %v5248
    %v5293 = vunpack.c.h.b16 %v5248
    %v5294 = vunpack.c.l.b16 %v5249
    %v5295 = vunpack.c.h.b16 %v5249
    %v5296 = vunpack.c.l.b16 %v5250
    %v5297 = vunpack.c.h.b16 %v5250
    %v5298 = vunpack.c.l.b16 %v5251
    %v5299 = vunpack.c.h.b16 %v5251
    %v5300 = vpack.c.b16 %v5268, %v5268
    %v5301 = vpack.c.b16 %v5269, %v5269
    %v5302 = vpack.c.b16 %v5270, %v5270
    %v5303 = vpack.c.b16 %v5271, %v5271
    %v5304 = vpack.c.b16 %v5272, %v5272
    %v5305 = vpack.c.b16 %v5273, %v5273
    %v5306 = vpack.c.b16 %v5274, %v5274
    %v5307 = vpack.c.b16 %v5275, %v5275
    %v5308 = vpack.c.b16 %v5276, %v5276
    %v5309 = vpack.c.b16 %v5277, %v5277
    %v5310 = vpack.c.b16 %v5278, %v5278
    %v5311 = vpack.c.b16 %v5279, %v5279
    %v5312 = vpack.c.b16 %v5280, %v5280
    %v5313 = vpack.c.b16 %v5281, %v5281
    %v5314 = vpack.c.b16 %v5282, %v5282
    %v5315 = vpack.c.b16 %v5283, %v5283
    %v5316 = vpack.c.b16 %v5284, %v5284
    %v5317 = vpack.c.b16 %v5285, %v5285
    %v5318 = vpack.c.b16 %v5286, %v5286
    %v5319 = vpack.c.b16 %v5287, %v5287
    %v5320 = vpack.c.b16 %v5288, %v5288
    %v5321 = vpack.c.b16 %v5289, %v5289
    %v5322 = vpack.c.b16 %v5290, %v5290
    %v5323 = vpack.c.b16 %v5291, %v5291
    %v5324 = vpack.c.b16 %v5292, %v5292
    %v5325 = vpack.c.b16 %v5293, %v5293
    %v5326 = vpack.c.b16 %v5294, %v5294
    %v5327 = vpack.c.b16 %v5295, %v5295
    %v5328 = vpack.c.b16 %v5296, %v5296
    %v5329 = vpack.c.b16 %v5297, %v5297
    %v5330 = vpack.c.b16 %v5298, %v5298
    %v5331 = vpack.c.b16 %v5299, %v5299
    %5364 = vst [vmem:[#allocation2] sm:$0xf] %v5300
    %5365 = vst [vmem:[#allocation2 + $0x4] sm:$0xf] %v5301
    %5366 = vst [vmem:[#allocation2 + $0x8] sm:$0xf] %v5302
    %5367 = vst [vmem:[#allocation2 + $0xc] sm:$0xf] %v5303
    %5368 = vst [vmem:[#allocation2 + $0x10] sm:$0xf] %v5304
    %5369 = vst [vmem:[#allocation2 + $0x14] sm:$0xf] %v5305
    %5370 = vst [vmem:[#allocation2 + $0x18] sm:$0xf] %v5306
    %5371 = vst [vmem:[#allocation2 + $0x1c] sm:$0xf] %v5307
    %5372 = vst [vmem:[#allocation2 + $0x20] sm:$0xf] %v5308
    %5373 = vst [vmem:[#allocation2 + $0x24] sm:$0xf] %v5309
    %5374 = vst [vmem:[#allocation2 + $0x28] sm:$0xf] %v5310
    %5375 = vst [vmem:[#allocation2 + $0x2c] sm:$0xf] %v5311
    %5376 = vst [vmem:[#allocation2 + $0x30] sm:$0xf] %v5312
    %5377 = vst [vmem:[#allocation2 + $0x34] sm:$0xf] %v5313
    %5378 = vst [vmem:[#allocation2 + $0x38] sm:$0xf] %v5314
    %5379 = vst [vmem:[#allocation2 + $0x3c] sm:$0xf] %v5315
    %5380 = vst [vmem:[#allocation2 + $0x40] sm:$0xf] %v5316
    %5381 = vst [vmem:[#allocation2 + $0x44] sm:$0xf] %v5317
    %5382 = vst [vmem:[#allocation2 + $0x48] sm:$0xf] %v5318
    %5383 = vst [vmem:[#allocation2 + $0x4c] sm:$0xf] %v5319
    %5384 = vst [vmem:[#allocation2 + $0x50] sm:$0xf] %v5320
    %5385 = vst [vmem:[#allocation2 + $0x54] sm:$0xf] %v5321
    %5386 = vst [vmem:[#allocation2 + $0x58] sm:$0xf] %v5322
    %5387 = vst [vmem:[#allocation2 + $0x5c] sm:$0xf] %v5323
    %5388 = vst [vmem:[#allocation2 + $0x60] sm:$0xf] %v5324
    %5389 = vst [vmem:[#allocation2 + $0x64] sm:$0xf] %v5325
    %5390 = vst [vmem:[#allocation2 + $0x68] sm:$0xf] %v5326
    %5391 = vst [vmem:[#allocation2 + $0x6c] sm:$0xf] %v5327
    %5392 = vst [vmem:[#allocation2 + $0x70] sm:$0xf] %v5328
    %5393 = vst [vmem:[#allocation2 + $0x74] sm:$0xf] %v5329
    %5394 = vst [vmem:[#allocation2 + $0x78] sm:$0xf] %v5330
    %5395 = vst [vmem:[#allocation2 + $0x7c] sm:$0xf] %v5331
    // Predicated region
    $region46: #{tpu_custom_call.1} parent=1 // pred_check
      _
    $region47: #{tpu_custom_call.1} parent=1 // pred_check_branch
      %5397 = sbr.rel (0) target = $region49
    $region48: #{tpu_custom_call.1} parent=1 // pred_region
      %s5399 = ssub.s32 2048, 2048
      %5400 = vsyncadd [#allocation3], %s5399
      %s5401 = sshll.u32 [#allocation2], 4
      %s5402 = int_to_ptr.vmem [resolvable:$true] %s5401
      %5407 = dma.vmem_to_hbm [thread:$0]  %s5402, 2048, %s11, [#allocation3], 64, 64, 4
    $region49: #{tpu_custom_call.1} parent=1 // pred_fallthru
      _
    // Predicated region
    $region50: #{tpu_custom_call.1} parent=1 // pred_check
      _
    $region51: #{tpu_custom_call.1} parent=1 // pred_check_branch
      %5409 = sbr.rel (0) target = $region53
    $region52: #{tpu_custom_call.1} parent=1 // pred_region
      %5410 = dma.done [#allocation3], 2048
    $region53: #{tpu_custom_call.1} parent=1 // pred_fallthru
      _
    %5411 = vsyncpa [#allocation3], 1

// kernel: tpu_custom_call.1
$region0: #{tpu_custom_call.1}
  #allocation0 [shape = 'u32[]', space=smem, size = 0x4, offset = 0x4, fixed_abs, tag = 'smem constant byte address 0x4 - core index']
  #allocation1 [shape = 'u32[144,128]{1,0:T(1,128)}', space=vmem, size = 0x12000, scoped, tag = 'internal scratch']
  %s0 = inlined_call_operand.vmem [shape: f32[256,784], index: 0, kind: input, shape index: {}]
  %s1 = inlined_call_operand.vmem [shape: bf16[784,128], index: 1, kind: input, shape index: {}]
  %s2 = inlined_call_operand.vmem [shape: f32[1,128], index: 2, kind: input, shape index: {}]
  %s3 = inlined_call_operand.vmem [shape: bf16[128,256], index: 3, kind: input, shape index: {}]
  %s4 = inlined_call_operand.vmem [shape: f32[1,256], index: 4, kind: input, shape index: {}]
  %s5 = inlined_call_operand.vmem [shape: bf16[256,512], index: 5, kind: input, shape index: {}]
  %s6 = inlined_call_operand.vmem [shape: f32[1,512], index: 6, kind: input, shape index: {}]
  %s7 = inlined_call_operand.vmem [shape: bf16[512,512], index: 7, kind: input, shape index: {}]
  %s8 = inlined_call_operand.vmem [shape: f32[1,512], index: 8, kind: input, shape index: {}]
  %s9 = inlined_call_operand.vmem [shape: bf16[512,128], index: 9, kind: input, shape index: {}]
  %s10 = inlined_call_operand.vmem [shape: f32[1,128], index: 10, kind: input, shape index: {}]
  %s11 = inlined_call_operand.hbm [shape: bf16[256,128], index: 11, kind: output, shape index: {}]
  %s12 = sld [smem:[#allocation0]]
  $region54: #{tpu_custom_call.1} parent=0
    _
  %s14 = ssub.s32 1, %s12
  %s15 = scalar_select 0, %s14, %s12
  $region1: #{tpu_custom_call.1} parent=0
    #allocation2 [shape = 'u8[65536]{0}', space=vmem, size = 0x10000, scoped, tag = 'output window, operand 0, single buffered']
    #allocation3 [shape = 's32[1]{0}', space=sflag, size = 0x4, scoped, tag = 'scoped memory for tpu_custom_call.1']
    %16 = vsyncpa [#allocation3], 0
    // Predicated region
    $region2: #{tpu_custom_call.1} parent=1 // pred_check
      _
    $region3: #{tpu_custom_call.1} parent=1 // pred_check_branch
      %18 = sbr.rel (0) target = $region5
    $region4: #{tpu_custom_call.1} parent=1 // pred_region
      _
    $region5: #{tpu_custom_call.1} parent=1 // pred_fallthru
      _
    // Predicated region
    $region6: #{tpu_custom_call.1} parent=1 // pred_check
      _
    $region7: #{tpu_custom_call.1} parent=1 // pred_check_branch
      %20 = sbr.rel (0) target = $region9
    $region8: #{tpu_custom_call.1} parent=1 // pred_region
      _
    $region9: #{tpu_custom_call.1} parent=1 // pred_fallthru
      _
    // Predicated region
    $region10: #{tpu_custom_call.1} parent=1 // pred_check
      _
    $region11: #{tpu_custom_call.1} parent=1 // pred_check_branch
      %22 = sbr.rel (0) target = $region13
    $region12: #{tpu_custom_call.1} parent=1 // pred_region
      _
    $region13: #{tpu_custom_call.1} parent=1 // pred_fallthru
      _
    // Predicated region
    $region14: #{tpu_custom_call.1} parent=1 // pred_check
      _
    $region15: #{tpu_custom_call.1} parent=1 // pred_check_branch
      %24 = sbr.rel (0) target = $region17
    $region16: #{tpu_custom_call.1} parent=1 // pred_region
      _
    $region17: #{tpu_custom_call.1} parent=1 // pred_fallthru
      _
    // Predicated region
    $region18: #{tpu_custom_call.1} parent=1 // pred_check
      _
    $region19: #{tpu_custom_call.1} parent=1 // pred_check_branch
      %26 = sbr.rel (0) target = $region21
    $region20: #{tpu_custom_call.1} parent=1 // pred_region
      _
    $region21: #{tpu_custom_call.1} parent=1 // pred_fallthru
      _
    // Predicated region
    $region22: #{tpu_custom_call.1} parent=1 // pred_check
      _
    $region23: #{tpu_custom_call.1} parent=1 // pred_check_branch
      %28 = sbr.rel (0) target = $region25
    $region24: #{tpu_custom_call.1} parent=1 // pred_region
      _
    $region25: #{tpu_custom_call.1} parent=1 // pred_fallthru
      _
    // Predicated region
    $region26: #{tpu_custom_call.1} parent=1 // pred_check
      _
    $region27: #{tpu_custom_call.1} parent=1 // pred_check_branch
      %30 = sbr.rel (0) target = $region29
    $region28: #{tpu_custom_call.1} parent=1 // pred_region
      _
    $region29: #{tpu_custom_call.1} parent=1 // pred_fallthru
      _
    // Predicated region
    $region30: #{tpu_custom_call.1} parent=1 // pred_check
      _
    $region31: #{tpu_custom_call.1} parent=1 // pred_check_branch
      %32 = sbr.rel (0) target = $region33
    $region32: #{tpu_custom_call.1} parent=1 // pred_region
      _
    $region33: #{tpu_custom_call.1} parent=1 // pred_fallthru
      _
    // Predicated region
    $region34: #{tpu_custom_call.1} parent=1 // pred_check
      _
    $region35: #{tpu_custom_call.1} parent=1 // pred_check_branch
      %34 = sbr.rel (0) target = $region37
    $region36: #{tpu_custom_call.1} parent=1 // pred_region
      _
    $region37: #{tpu_custom_call.1} parent=1 // pred_fallthru
      _
    // Predicated region
    $region38: #{tpu_custom_call.1} parent=1 // pred_check
      _
    $region39: #{tpu_custom_call.1} parent=1 // pred_check_branch
      %36 = sbr.rel (0) target = $region41
    $region40: #{tpu_custom_call.1} parent=1 // pred_region
      _
    $region41: #{tpu_custom_call.1} parent=1 // pred_fallthru
      _
    // Predicated region
    $region42: #{tpu_custom_call.1} parent=1 // pred_check
      _
    $region43: #{tpu_custom_call.1} parent=1 // pred_check_branch
      %38 = sbr.rel (0) target = $region45
    $region44: #{tpu_custom_call.1} parent=1 // pred_region
      _
    $region45: #{tpu_custom_call.1} parent=1 // pred_fallthru
      _
    %v40 = vld [vmem:[%s0] sm:$0xff]
    %v41 = vld [vmem:[%s0 + $0x8] sm:$0xff]
    %v42 = vld [vmem:[%s0 + $0x10] sm:$0xff]
    %v43 = vld [vmem:[%s0 + $0x18] sm:$0xff]
    %v44 = vld [vmem:[%s0 + $0x20] sm:$0xff]
    %v45 = vld [vmem:[%s0 + $0x28] sm:$0xff]
    %v46 = vld [vmem:[%s0 + $0x30] sm:$0xff]
    %v47 = vld [vmem:[%s0 + $0x38] sm:$0xff]
    %v48 = vld [vmem:[%s0 + $0x40] sm:$0xff]
    %v49 = vld [vmem:[%s0 + $0x48] sm:$0xff]
    %v50 = vld [vmem:[%s0 + $0x50] sm:$0xff]
    %v51 = vld [vmem:[%s0 + $0x58] sm:$0xff]
    %v52 = vld [vmem:[%s0 + $0x60] sm:$0xff]
    %v53 = vld [vmem:[%s0 + $0x68] sm:$0xff]
    %v54 = vld [vmem:[%s0 + $0x70] sm:$0xff]
    %v55 = vld [vmem:[%s0 + $0x78] sm:$0xff]
    %v56 = vld [vmem:[%s0 + $0x80] sm:$0xff]
    %v57 = vld [vmem:[%s0 + $0x88] sm:$0xff]
    %v58 = vld [vmem:[%s0 + $0x90] sm:$0xff]
    %v59 = vld [vmem:[%s0 + $0x98] sm:$0xff]
    %v60 = vld [vmem:[%s0 + $0xa0] sm:$0xff]
    %v61 = vld [vmem:[%s0 + $0xa8] sm:$0xff]
    %v62 = vld [vmem:[%s0 + $0xb0] sm:$0xff]
    %v63 = vld [vmem:[%s0 + $0xb8] sm:$0xff]
    %v64 = vld [vmem:[%s0 + $0xc0] sm:$0xff]
    %v65 = vld [vmem:[%s0 + $0xc8] sm:$0xff]
    %v66 = vld [vmem:[%s0 + $0xd0] sm:$0xff]
    %v67 = vld [vmem:[%s0 + $0xd8] sm:$0xff]
    %v68 = vld [vmem:[%s0 + $0xe0] sm:$0xff]
    %v69 = vld [vmem:[%s0 + $0xe8] sm:$0xff]
    %v70 = vld [vmem:[%s0 + $0xf0] sm:$0xff]
    %v71 = vld [vmem:[%s0 + $0xf8] sm:$0xff]
    %v72 = vld [vmem:[%s0 + $0x100] sm:$0xff]
    %v73 = vld [vmem:[%s0 + $0x108] sm:$0xff]
    %v74 = vld [vmem:[%s0 + $0x110] sm:$0xff]
    %v75 = vld [vmem:[%s0 + $0x118] sm:$0xff]
    %v76 = vld [vmem:[%s0 + $0x120] sm:$0xff]
    %v77 = vld [vmem:[%s0 + $0x128] sm:$0xff]
    %v78 = vld [vmem:[%s0 + $0x130] sm:$0xff]
    %v79 = vld [vmem:[%s0 + $0x138] sm:$0xff]
    %v80 = vld [vmem:[%s0 + $0x140] sm:$0xff]
    %v81 = vld [vmem:[%s0 + $0x148] sm:$0xff]
    %v82 = vld [vmem:[%s0 + $0x150] sm:$0xff]
    %v83 = vld [vmem:[%s0 + $0x158] sm:$0xff]
    %v84 = vld [vmem:[%s0 + $0x160] sm:$0xff]
    %v85 = vld [vmem:[%s0 + $0x168] sm:$0xff]
    %v86 = vld [vmem:[%s0 + $0x170] sm:$0xff]
    %v87 = vld [vmem:[%s0 + $0x178] sm:$0xff]
    %v88 = vld [vmem:[%s0 + $0x180] sm:$0xff]
    %v89 = vld [vmem:[%s0 + $0x188] sm:$0xff]
    %v90 = vld [vmem:[%s0 + $0x190] sm:$0xff]
    %v91 = vld [vmem:[%s0 + $0x198] sm:$0xff]
    %v92 = vld [vmem:[%s0 + $0x1a0] sm:$0xff]
    %v93 = vld [vmem:[%s0 + $0x1a8] sm:$0xff]
    %v94 = vld [vmem:[%s0 + $0x1b0] sm:$0xff]
    %v95 = vld [vmem:[%s0 + $0x1b8] sm:$0xff]
    %v96 = vld [vmem:[%s0 + $0x1c0] sm:$0xff]
    %v97 = vld [vmem:[%s0 + $0x1c8] sm:$0xff]
    %v98 = vld [vmem:[%s0 + $0x1d0] sm:$0xff]
    %v99 = vld [vmem:[%s0 + $0x1d8] sm:$0xff]
    %v100 = vld [vmem:[%s0 + $0x1e0] sm:$0xff]
    %v101 = vld [vmem:[%s0 + $0x1e8] sm:$0xff]
    %v102 = vld [vmem:[%s0 + $0x1f0] sm:$0xff]
    %v103 = vld [vmem:[%s0 + $0x1f8] sm:$0xff]
    %v104 = vld [vmem:[%s0 + $0x200] sm:$0xff]
    %v105 = vld [vmem:[%s0 + $0x208] sm:$0xff]
    %v106 = vld [vmem:[%s0 + $0x210] sm:$0xff]
    %v107 = vld [vmem:[%s0 + $0x218] sm:$0xff]
    %v108 = vld [vmem:[%s0 + $0x220] sm:$0xff]
    %v109 = vld [vmem:[%s0 + $0x228] sm:$0xff]
    %v110 = vld [vmem:[%s0 + $0x230] sm:$0xff]
    %v111 = vld [vmem:[%s0 + $0x238] sm:$0xff]
    %v112 = vld [vmem:[%s0 + $0x240] sm:$0xff]
    %v113 = vld [vmem:[%s0 + $0x248] sm:$0xff]
    %v114 = vld [vmem:[%s0 + $0x250] sm:$0xff]
    %v115 = vld [vmem:[%s0 + $0x258] sm:$0xff]
    %v116 = vld [vmem:[%s0 + $0x260] sm:$0xff]
    %v117 = vld [vmem:[%s0 + $0x268] sm:$0xff]
    %v118 = vld [vmem:[%s0 + $0x270] sm:$0xff]
    %v119 = vld [vmem:[%s0 + $0x278] sm:$0xff]
    %v120 = vld [vmem:[%s0 + $0x280] sm:$0xff]
    %v121 = vld [vmem:[%s0 + $0x288] sm:$0xff]
    %v122 = vld [vmem:[%s0 + $0x290] sm:$0xff]
    %v123 = vld [vmem:[%s0 + $0x298] sm:$0xff]
    %v124 = vld [vmem:[%s0 + $0x2a0] sm:$0xff]
    %v125 = vld [vmem:[%s0 + $0x2a8] sm:$0xff]
    %v126 = vld [vmem:[%s0 + $0x2b0] sm:$0xff]
    %v127 = vld [vmem:[%s0 + $0x2b8] sm:$0xff]
    %v128 = vld [vmem:[%s0 + $0x2c0] sm:$0xff]
    %v129 = vld [vmem:[%s0 + $0x2c8] sm:$0xff]
    %v130 = vld [vmem:[%s0 + $0x2d0] sm:$0xff]
    %v131 = vld [vmem:[%s0 + $0x2d8] sm:$0xff]
    %v132 = vld [vmem:[%s0 + $0x2e0] sm:$0xff]
    %v133 = vld [vmem:[%s0 + $0x2e8] sm:$0xff]
    %v134 = vld [vmem:[%s0 + $0x2f0] sm:$0xff]
    %v135 = vld [vmem:[%s0 + $0x2f8] sm:$0xff]
    %v136 = vld [vmem:[%s0 + $0x300] sm:$0xff]
    %v137 = vld [vmem:[%s0 + $0x308] sm:$0xff]
    %v138 = vld [vmem:[%s0 + $0x310] sm:$0xff]
    %v139 = vld [vmem:[%s0 + $0x318] sm:$0xff]
    %v140 = vld [vmem:[%s0 + $0x320] sm:$0xff]
    %v141 = vld [vmem:[%s0 + $0x328] sm:$0xff]
    %v142 = vld [vmem:[%s0 + $0x330] sm:$0xff]
    %v143 = vld [vmem:[%s0 + $0x338] sm:$0xff]
    %v144 = vld [vmem:[%s0 + $0x340] sm:$0xff]
    %v145 = vld [vmem:[%s0 + $0x348] sm:$0xff]
    %v146 = vld [vmem:[%s0 + $0x350] sm:$0xff]
    %v147 = vld [vmem:[%s0 + $0x358] sm:$0xff]
    %v148 = vld [vmem:[%s0 + $0x360] sm:$0xff]
    %v149 = vld [vmem:[%s0 + $0x368] sm:$0xff]
    %v150 = vld [vmem:[%s0 + $0x370] sm:$0xff]
    %v151 = vld [vmem:[%s0 + $0x378] sm:$0xff]
    %v152 = vld [vmem:[%s0 + $0x380] sm:$0xff]
    %v153 = vld [vmem:[%s0 + $0x388] sm:$0xff]
    %v154 = vld [vmem:[%s0 + $0x390] sm:$0xff]
    %v155 = vld [vmem:[%s0 + $0x398] sm:$0xff]
    %v156 = vld [vmem:[%s0 + $0x3a0] sm:$0xff]
    %v157 = vld [vmem:[%s0 + $0x3a8] sm:$0xff]
    %v158 = vld [vmem:[%s0 + $0x3b0] sm:$0xff]
    %v159 = vld [vmem:[%s0 + $0x3b8] sm:$0xff]
    %v160 = vld [vmem:[%s0 + $0x3c0] sm:$0xff]
    %v161 = vld [vmem:[%s0 + $0x3c8] sm:$0xff]
    %v162 = vld [vmem:[%s0 + $0x3d0] sm:$0xff]
    %v163 = vld [vmem:[%s0 + $0x3d8] sm:$0xff]
    %v164 = vld [vmem:[%s0 + $0x3e0] sm:$0xff]
    %v165 = vld [vmem:[%s0 + $0x3e8] sm:$0xff]
    %v166 = vld [vmem:[%s0 + $0x3f0] sm:$0xff]
    %v167 = vld [vmem:[%s0 + $0x3f8] sm:$0xff]
    %v168 = vld [vmem:[%s0 + $0x400] sm:$0xff]
    %v169 = vld [vmem:[%s0 + $0x408] sm:$0xff]
    %v170 = vld [vmem:[%s0 + $0x410] sm:$0xff]
    %v171 = vld [vmem:[%s0 + $0x418] sm:$0xff]
    %v172 = vld [vmem:[%s0 + $0x420] sm:$0xff]
    %v173 = vld [vmem:[%s0 + $0x428] sm:$0xff]
    %v174 = vld [vmem:[%s0 + $0x430] sm:$0xff]
    %v175 = vld [vmem:[%s0 + $0x438] sm:$0xff]
    %v176 = vld [vmem:[%s0 + $0x440] sm:$0xff]
    %v177 = vld [vmem:[%s0 + $0x448] sm:$0xff]
    %v178 = vld [vmem:[%s0 + $0x450] sm:$0xff]
    %v179 = vld [vmem:[%s0 + $0x458] sm:$0xff]
    %v180 = vld [vmem:[%s0 + $0x460] sm:$0xff]
    %v181 = vld [vmem:[%s0 + $0x468] sm:$0xff]
    %v182 = vld [vmem:[%s0 + $0x470] sm:$0xff]
    %v183 = vld [vmem:[%s0 + $0x478] sm:$0xff]
    %v184 = vld [vmem:[%s0 + $0x480] sm:$0xff]
    %v185 = vld [vmem:[%s0 + $0x488] sm:$0xff]
    %v186 = vld [vmem:[%s0 + $0x490] sm:$0xff]
    %v187 = vld [vmem:[%s0 + $0x498] sm:$0xff]
    %v188 = vld [vmem:[%s0 + $0x4a0] sm:$0xff]
    %v189 = vld [vmem:[%s0 + $0x4a8] sm:$0xff]
    %v190 = vld [vmem:[%s0 + $0x4b0] sm:$0xff]
    %v191 = vld [vmem:[%s0 + $0x4b8] sm:$0xff]
    %v192 = vld [vmem:[%s0 + $0x4c0] sm:$0xff]
    %v193 = vld [vmem:[%s0 + $0x4c8] sm:$0xff]
    %v194 = vld [vmem:[%s0 + $0x4d0] sm:$0xff]
    %v195 = vld [vmem:[%s0 + $0x4d8] sm:$0xff]
    %v196 = vld [vmem:[%s0 + $0x4e0] sm:$0xff]
    %v197 = vld [vmem:[%s0 + $0x4e8] sm:$0xff]
    %v198 = vld [vmem:[%s0 + $0x4f0] sm:$0xff]
    %v199 = vld [vmem:[%s0 + $0x4f8] sm:$0xff]
    %v200 = vld [vmem:[%s0 + $0x500] sm:$0xff]
    %v201 = vld [vmem:[%s0 + $0x508] sm:$0xff]
    %v202 = vld [vmem:[%s0 + $0x510] sm:$0xff]
    %v203 = vld [vmem:[%s0 + $0x518] sm:$0xff]
    %v204 = vld [vmem:[%s0 + $0x520] sm:$0xff]
    %v205 = vld [vmem:[%s0 + $0x528] sm:$0xff]
    %v206 = vld [vmem:[%s0 + $0x530] sm:$0xff]
    %v207 = vld [vmem:[%s0 + $0x538] sm:$0xff]
    %v208 = vld [vmem:[%s0 + $0x540] sm:$0xff]
    %v209 = vld [vmem:[%s0 + $0x548] sm:$0xff]
    %v210 = vld [vmem:[%s0 + $0x550] sm:$0xff]
    %v211 = vld [vmem:[%s0 + $0x558] sm:$0xff]
    %v212 = vld [vmem:[%s0 + $0x560] sm:$0xff]
    %v213 = vld [vmem:[%s0 + $0x568] sm:$0xff]
    %v214 = vld [vmem:[%s0 + $0x570] sm:$0xff]
    %v215 = vld [vmem:[%s0 + $0x578] sm:$0xff]
    %v216 = vld [vmem:[%s0 + $0x580] sm:$0xff]
    %v217 = vld [vmem:[%s0 + $0x588] sm:$0xff]
    %v218 = vld [vmem:[%s0 + $0x590] sm:$0xff]
    %v219 = vld [vmem:[%s0 + $0x598] sm:$0xff]
    %v220 = vld [vmem:[%s0 + $0x5a0] sm:$0xff]
    %v221 = vld [vmem:[%s0 + $0x5a8] sm:$0xff]
    %v222 = vld [vmem:[%s0 + $0x5b0] sm:$0xff]
    %v223 = vld [vmem:[%s0 + $0x5b8] sm:$0xff]
    %v224 = vld [vmem:[%s0 + $0x5c0] sm:$0xff]
    %v225 = vld [vmem:[%s0 + $0x5c8] sm:$0xff]
    %v226 = vld [vmem:[%s0 + $0x5d0] sm:$0xff]
    %v227 = vld [vmem:[%s0 + $0x5d8] sm:$0xff]
    %v228 = vld [vmem:[%s0 + $0x5e0] sm:$0xff]
    %v229 = vld [vmem:[%s0 + $0x5e8] sm:$0xff]
    %v230 = vld [vmem:[%s0 + $0x5f0] sm:$0xff]
    %v231 = vld [vmem:[%s0 + $0x5f8] sm:$0xff]
    %v232 = vld [vmem:[%s0 + $0x600] sm:$0xff]
    %v233 = vld [vmem:[%s0 + $0x608] sm:$0xff]
    %v234 = vld [vmem:[%s0 + $0x610] sm:$0xff]
    %v235 = vld [vmem:[%s0 + $0x618] sm:$0xff]
    %v236 = vld [vmem:[%s0 + $0x620] sm:$0xff]
    %v237 = vld [vmem:[%s0 + $0x628] sm:$0xff]
    %v238 = vld [vmem:[%s0 + $0x630] sm:$0xff]
    %v239 = vld [vmem:[%s0 + $0x638] sm:$0xff]
    %v240 = vld [vmem:[%s0 + $0x640] sm:$0xff]
    %v241 = vld [vmem:[%s0 + $0x648] sm:$0xff]
    %v242 = vld [vmem:[%s0 + $0x650] sm:$0xff]
    %v243 = vld [vmem:[%s0 + $0x658] sm:$0xff]
    %v244 = vld [vmem:[%s0 + $0x660] sm:$0xff]
    %v245 = vld [vmem:[%s0 + $0x668] sm:$0xff]
    %v246 = vld [vmem:[%s0 + $0x670] sm:$0xff]
    %v247 = vld [vmem:[%s0 + $0x678] sm:$0xff]
    %v248 = vld [vmem:[%s0 + $0x680] sm:$0xff]
    %v249 = vld [vmem:[%s0 + $0x688] sm:$0xff]
    %v250 = vld [vmem:[%s0 + $0x690] sm:$0xff]
    %v251 = vld [vmem:[%s0 + $0x698] sm:$0xff]
    %v252 = vld [vmem:[%s0 + $0x6a0] sm:$0xff]
    %v253 = vld [vmem:[%s0 + $0x6a8] sm:$0xff]
    %v254 = vld [vmem:[%s0 + $0x6b0] sm:$0xff]
    %v255 = vld [vmem:[%s0 + $0x6b8] sm:$0xff]
    %v256 = vld [vmem:[%s0 + $0x6c0] sm:$0xff]
    %v257 = vld [vmem:[%s0 + $0x6c8] sm:$0xff]
    %v258 = vld [vmem:[%s0 + $0x6d0] sm:$0xff]
    %v259 = vld [vmem:[%s0 + $0x6d8] sm:$0xff]
    %v260 = vld [vmem:[%s0 + $0x6e0] sm:$0xff]
    %v261 = vld [vmem:[%s0 + $0x6e8] sm:$0xff]
    %v262 = vld [vmem:[%s0 + $0x6f0] sm:$0xff]
    %v263 = vld [vmem:[%s0 + $0x6f8] sm:$0xff]
    %v264 = vpack.c.bf16 %v47, %v40
    %v265 = vpack.c.bf16 %v48, %v41
    %v266 = vpack.c.bf16 %v49, %v42
    %v267 = vpack.c.bf16 %v50, %v43
    %v268 = vpack.c.bf16 %v51, %v44
    %v269 = vpack.c.bf16 %v52, %v45
    %v270 = vpack.c.bf16 %v53, %v46
    %v271 = vpack.c.bf16 %v61, %v54
    %v272 = vpack.c.bf16 %v62, %v55
    %v273 = vpack.c.bf16 %v63, %v56
    %v274 = vpack.c.bf16 %v64, %v57
    %v275 = vpack.c.bf16 %v65, %v58
    %v276 = vpack.c.bf16 %v66, %v59
    %v277 = vpack.c.bf16 %v67, %v60
    %v278 = vpack.c.bf16 %v75, %v68
    %v279 = vpack.c.bf16 %v76, %v69
    %v280 = vpack.c.bf16 %v77, %v70
    %v281 = vpack.c.bf16 %v78, %v71
    %v282 = vpack.c.bf16 %v79, %v72
    %v283 = vpack.c.bf16 %v80, %v73
    %v284 = vpack.c.bf16 %v81, %v74
    %v285 = vpack.c.bf16 %v89, %v82
    %v286 = vpack.c.bf16 %v90, %v83
    %v287 = vpack.c.bf16 %v91, %v84
    %v288 = vpack.c.bf16 %v92, %v85
    %v289 = vpack.c.bf16 %v93, %v86
    %v290 = vpack.c.bf16 %v94, %v87
    %v291 = vpack.c.bf16 %v95, %v88
    %v292 = vpack.c.bf16 %v103, %v96
    %v293 = vpack.c.bf16 %v104, %v97
    %v294 = vpack.c.bf16 %v105, %v98
    %v295 = vpack.c.bf16 %v106, %v99
    %v296 = vpack.c.bf16 %v107, %v100
    %v297 = vpack.c.bf16 %v108, %v101
    %v298 = vpack.c.bf16 %v109, %v102
    %v299 = vpack.c.bf16 %v117, %v110
    %v300 = vpack.c.bf16 %v118, %v111
    %v301 = vpack.c.bf16 %v119, %v112
    %v302 = vpack.c.bf16 %v120, %v113
    %v303 = vpack.c.bf16 %v121, %v114
    %v304 = vpack.c.bf16 %v122, %v115
    %v305 = vpack.c.bf16 %v123, %v116
    %v306 = vpack.c.bf16 %v131, %v124
    %v307 = vpack.c.bf16 %v132, %v125
    %v308 = vpack.c.bf16 %v133, %v126
    %v309 = vpack.c.bf16 %v134, %v127
    %v310 = vpack.c.bf16 %v135, %v128
    %v311 = vpack.c.bf16 %v136, %v129
    %v312 = vpack.c.bf16 %v137, %v130
    %v313 = vpack.c.bf16 %v145, %v138
    %v314 = vpack.c.bf16 %v146, %v139
    %v315 = vpack.c.bf16 %v147, %v140
    %v316 = vpack.c.bf16 %v148, %v141
    %v317 = vpack.c.bf16 %v149, %v142
    %v318 = vpack.c.bf16 %v150, %v143
    %v319 = vpack.c.bf16 %v151, %v144
    %v320 = vpack.c.bf16 %v159, %v152
    %v321 = vpack.c.bf16 %v160, %v153
    %v322 = vpack.c.bf16 %v161, %v154
    %v323 = vpack.c.bf16 %v162, %v155
    %v324 = vpack.c.bf16 %v163, %v156
    %v325 = vpack.c.bf16 %v164, %v157
    %v326 = vpack.c.bf16 %v165, %v158
    %v327 = vpack.c.bf16 %v173, %v166
    %v328 = vpack.c.bf16 %v174, %v167
    %v329 = vpack.c.bf16 %v175, %v168
    %v330 = vpack.c.bf16 %v176, %v169
    %v331 = vpack.c.bf16 %v177, %v170
    %v332 = vpack.c.bf16 %v178, %v171
    %v333 = vpack.c.bf16 %v179, %v172
    %v334 = vpack.c.bf16 %v187, %v180
    %v335 = vpack.c.bf16 %v188, %v181
    %v336 = vpack.c.bf16 %v189, %v182
    %v337 = vpack.c.bf16 %v190, %v183
    %v338 = vpack.c.bf16 %v191, %v184
    %v339 = vpack.c.bf16 %v192, %v185
    %v340 = vpack.c.bf16 %v193, %v186
    %v341 = vpack.c.bf16 %v201, %v194
    %v342 = vpack.c.bf16 %v202, %v195
    %v343 = vpack.c.bf16 %v203, %v196
    %v344 = vpack.c.bf16 %v204, %v197
    %v345 = vpack.c.bf16 %v205, %v198
    %v346 = vpack.c.bf16 %v206, %v199
    %v347 = vpack.c.bf16 %v207, %v200
    %v348 = vpack.c.bf16 %v215, %v208
    %v349 = vpack.c.bf16 %v216, %v209
    %v350 = vpack.c.bf16 %v217, %v210
    %v351 = vpack.c.bf16 %v218, %v211
    %v352 = vpack.c.bf16 %v219, %v212
    %v353 = vpack.c.bf16 %v220, %v213
    %v354 = vpack.c.bf16 %v221, %v214
    %v355 = vpack.c.bf16 %v229, %v222
    %v356 = vpack.c.bf16 %v230, %v223
    %v357 = vpack.c.bf16 %v231, %v224
    %v358 = vpack.c.bf16 %v232, %v225
    %v359 = vpack.c.bf16 %v233, %v226
    %v360 = vpack.c.bf16 %v234, %v227
    %v361 = vpack.c.bf16 %v235, %v228
    %v362 = vpack.c.bf16 %v243, %v236
    %v363 = vpack.c.bf16 %v244, %v237
    %v364 = vpack.c.bf16 %v245, %v238
    %v365 = vpack.c.bf16 %v246, %v239
    %v366 = vpack.c.bf16 %v247, %v240
    %v367 = vpack.c.bf16 %v248, %v241
    %v368 = vpack.c.bf16 %v249, %v242
    %v369 = vpack.c.bf16 %v257, %v250
    %v370 = vpack.c.bf16 %v258, %v251
    %v371 = vpack.c.bf16 %v259, %v252
    %v372 = vpack.c.bf16 %v260, %v253
    %v373 = vpack.c.bf16 %v261, %v254
    %v374 = vpack.c.bf16 %v262, %v255
    %v375 = vpack.c.bf16 %v263, %v256
    %v376 = vld [vmem:[%s1] sm:$0xf]
    %v377 = vld [vmem:[%s1 + $0x4] sm:$0xf]
    %v378 = vld [vmem:[%s1 + $0x8] sm:$0xf]
    %v379 = vld [vmem:[%s1 + $0xc] sm:$0xf]
    %v380 = vld [vmem:[%s1 + $0x10] sm:$0xf]
    %v381 = vld [vmem:[%s1 + $0x14] sm:$0xf]
    %v382 = vld [vmem:[%s1 + $0x18] sm:$0xf]
    %v383 = vld [vmem:[%s1 + $0x1c] sm:$0xf]
    %v384 = vld [vmem:[%s1 + $0x20] sm:$0xf]
    %v385 = vld [vmem:[%s1 + $0x24] sm:$0xf]
    %v386 = vld [vmem:[%s1 + $0x28] sm:$0xf]
    %v387 = vld [vmem:[%s1 + $0x2c] sm:$0xf]
    %v388 = vld [vmem:[%s1 + $0x30] sm:$0xf]
    %v389 = vld [vmem:[%s1 + $0x34] sm:$0xf]
    %v390 = vld [vmem:[%s1 + $0x38] sm:$0xf]
    %v391 = vld [vmem:[%s1 + $0x3c] sm:$0xf]
    %v392 = vld [vmem:[%s1 + $0x40] sm:$0xf]
    %v393 = vld [vmem:[%s1 + $0x44] sm:$0xf]
    %v394 = vld [vmem:[%s1 + $0x48] sm:$0xf]
    %v395 = vld [vmem:[%s1 + $0x4c] sm:$0xf]
    %v396 = vld [vmem:[%s1 + $0x50] sm:$0xf]
    %v397 = vld [vmem:[%s1 + $0x54] sm:$0xf]
    %v398 = vld [vmem:[%s1 + $0x58] sm:$0xf]
    %v399 = vld [vmem:[%s1 + $0x5c] sm:$0xf]
    %v400 = vld [vmem:[%s1 + $0x60] sm:$0xf]
    %v401 = vld [vmem:[%s1 + $0x64] sm:$0xf]
    %v402 = vld [vmem:[%s1 + $0x68] sm:$0xf]
    %v403 = vld [vmem:[%s1 + $0x6c] sm:$0xf]
    %v404 = vld [vmem:[%s1 + $0x70] sm:$0xf]
    %v405 = vld [vmem:[%s1 + $0x74] sm:$0xf]
    %v406 = vld [vmem:[%s1 + $0x78] sm:$0xf]
    %v407 = vld [vmem:[%s1 + $0x7c] sm:$0xf]
    %v408 = vld [vmem:[%s1 + $0x80] sm:$0xf]
    %v409 = vld [vmem:[%s1 + $0x84] sm:$0xf]
    %v410 = vld [vmem:[%s1 + $0x88] sm:$0xf]
    %v411 = vld [vmem:[%s1 + $0x8c] sm:$0xf]
    %v412 = vld [vmem:[%s1 + $0x90] sm:$0xf]
    %v413 = vld [vmem:[%s1 + $0x94] sm:$0xf]
    %v414 = vld [vmem:[%s1 + $0x98] sm:$0xf]
    %v415 = vld [vmem:[%s1 + $0x9c] sm:$0xf]
    %v416 = vld [vmem:[%s1 + $0xa0] sm:$0xf]
    %v417 = vld [vmem:[%s1 + $0xa4] sm:$0xf]
    %v418 = vld [vmem:[%s1 + $0xa8] sm:$0xf]
    %v419 = vld [vmem:[%s1 + $0xac] sm:$0xf]
    %v420 = vld [vmem:[%s1 + $0xb0] sm:$0xf]
    %v421 = vld [vmem:[%s1 + $0xb4] sm:$0xf]
    %v422 = vld [vmem:[%s1 + $0xb8] sm:$0xf]
    %v423 = vld [vmem:[%s1 + $0xbc] sm:$0xf]
    %v424 = vld [vmem:[%s1 + $0xc0] sm:$0xf]
    %v425 = vld [vmem:[%s1 + $0xc4] sm:$0xf]
    %v426 = vld [vmem:[%s1 + $0xc8] sm:$0xf]
    %v427 = vld [vmem:[%s1 + $0xcc] sm:$0xf]
    %v428 = vld [vmem:[%s1 + $0xd0] sm:$0xf]
    %v429 = vld [vmem:[%s1 + $0xd4] sm:$0xf]
    %v430 = vld [vmem:[%s1 + $0xd8] sm:$0xf]
    %v431 = vld [vmem:[%s1 + $0xdc] sm:$0xf]
    %v432 = vld [vmem:[%s1 + $0xe0] sm:$0xf]
    %v433 = vld [vmem:[%s1 + $0xe4] sm:$0xf]
    %v434 = vld [vmem:[%s1 + $0xe8] sm:$0xf]
    %v435 = vld [vmem:[%s1 + $0xec] sm:$0xf]
    %v436 = vld [vmem:[%s1 + $0xf0] sm:$0xf]
    %v437 = vld [vmem:[%s1 + $0xf4] sm:$0xf]
    %v438 = vld [vmem:[%s1 + $0xf8] sm:$0xf]
    %v439 = vld [vmem:[%s1 + $0xfc] sm:$0xf]
    %v440 = vld [vmem:[%s1 + $0x100] sm:$0xf]
    %v441 = vld [vmem:[%s1 + $0x104] sm:$0xf]
    %v442 = vld [vmem:[%s1 + $0x108] sm:$0xf]
    %v443 = vld [vmem:[%s1 + $0x10c] sm:$0xf]
    %v444 = vld [vmem:[%s1 + $0x110] sm:$0xf]
    %v445 = vld [vmem:[%s1 + $0x114] sm:$0xf]
    %v446 = vld [vmem:[%s1 + $0x118] sm:$0xf]
    %v447 = vld [vmem:[%s1 + $0x11c] sm:$0xf]
    %v448 = vld [vmem:[%s1 + $0x120] sm:$0xf]
    %v449 = vld [vmem:[%s1 + $0x124] sm:$0xf]
    %v450 = vld [vmem:[%s1 + $0x128] sm:$0xf]
    %v451 = vld [vmem:[%s1 + $0x12c] sm:$0xf]
    %v452 = vld [vmem:[%s1 + $0x130] sm:$0xf]
    %v453 = vld [vmem:[%s1 + $0x134] sm:$0xf]
    %v454 = vld [vmem:[%s1 + $0x138] sm:$0xf]
    %v455 = vld [vmem:[%s1 + $0x13c] sm:$0xf]
    %v456 = vld [vmem:[%s1 + $0x140] sm:$0xf]
    %v457 = vld [vmem:[%s1 + $0x144] sm:$0xf]
    %v458 = vld [vmem:[%s1 + $0x148] sm:$0xf]
    %v459 = vld [vmem:[%s1 + $0x14c] sm:$0xf]
    %v460 = vld [vmem:[%s1 + $0x150] sm:$0xf]
    %v461 = vld [vmem:[%s1 + $0x154] sm:$0xf]
    %v462 = vld [vmem:[%s1 + $0x158] sm:$0xf]
    %v463 = vld [vmem:[%s1 + $0x15c] sm:$0xf]
    %v464 = vld [vmem:[%s1 + $0x160] sm:$0xf]
    %v465 = vld [vmem:[%s1 + $0x164] sm:$0xf]
    %v466 = vld [vmem:[%s1 + $0x168] sm:$0xf]
    %v467 = vld [vmem:[%s1 + $0x16c] sm:$0xf]
    %v468 = vld [vmem:[%s1 + $0x170] sm:$0xf]
    %v469 = vld [vmem:[%s1 + $0x174] sm:$0xf]
    %v470 = vld [vmem:[%s1 + $0x178] sm:$0xf]
    %v471 = vld [vmem:[%s1 + $0x17c] sm:$0xf]
    %v472 = vld [vmem:[%s1 + $0x180] sm:$0xf]
    %v473 = vld [vmem:[%s1 + $0x184] sm:$0xf]
    %v474 = vld [vmem:[%s2] sm:$0x1]
    %v476 = vlaneseq
    %v477 = vshrl.u32 %v476, 7
    %v478 = vsub.s32 0, %v477
    %v479 = vrot.slane %v474, %v478
    %v579 = vunpack.c.l.b16 %v376
    %v580 = vunpack.c.l.b16 %v377
    %v581 = vunpack.c.l.b16 %v378
    %v582 = vunpack.c.l.b16 %v379
    %v583 = vunpack.c.l.b16 %v380
    %v584 = vunpack.c.l.b16 %v381
    %v585 = vunpack.c.l.b16 %v382
    %v586 = vunpack.c.l.b16 %v383
    %v587 = vunpack.c.l.b16 %v384
    %v588 = vunpack.c.l.b16 %v385
    %v589 = vunpack.c.l.b16 %v386
    %v590 = vunpack.c.l.b16 %v387
    %v591 = vunpack.c.l.b16 %v388
    %v592 = vunpack.c.l.b16 %v389
    %v593 = vunpack.c.l.b16 %v390
    %v594 = vunpack.c.l.b16 %v391
    %v595 = vunpack.c.l.b16 %v392
    %v596 = vunpack.c.l.b16 %v393
    %v597 = vunpack.c.l.b16 %v394
    %v598 = vunpack.c.l.b16 %v395
    %v599 = vunpack.c.l.b16 %v396
    %v600 = vunpack.c.l.b16 %v397
    %v601 = vunpack.c.l.b16 %v398
    %v602 = vunpack.c.l.b16 %v399
    %v603 = vunpack.c.l.b16 %v400
    %v604 = vunpack.c.l.b16 %v401
    %v605 = vunpack.c.l.b16 %v402
    %v606 = vunpack.c.l.b16 %v403
    %v607 = vunpack.c.l.b16 %v404
    %v608 = vunpack.c.l.b16 %v405
    %v609 = vunpack.c.l.b16 %v406
    %v610 = vunpack.c.l.b16 %v407
    %v611 = vunpack.c.l.b16 %v408
    %v612 = vunpack.c.l.b16 %v409
    %v613 = vunpack.c.l.b16 %v410
    %v614 = vunpack.c.l.b16 %v411
    %v615 = vunpack.c.l.b16 %v412
    %v616 = vunpack.c.l.b16 %v413
    %v617 = vunpack.c.l.b16 %v414
    %v618 = vunpack.c.l.b16 %v415
    %v619 = vunpack.c.l.b16 %v416
    %v620 = vunpack.c.l.b16 %v417
    %v621 = vunpack.c.l.b16 %v418
    %v622 = vunpack.c.l.b16 %v419
    %v623 = vunpack.c.l.b16 %v420
    %v624 = vunpack.c.l.b16 %v421
    %v625 = vunpack.c.l.b16 %v422
    %v626 = vunpack.c.l.b16 %v423
    %v627 = vunpack.c.l.b16 %v424
    %v628 = vunpack.c.l.b16 %v425
    %v629 = vunpack.c.l.b16 %v426
    %v630 = vunpack.c.l.b16 %v427
    %v631 = vunpack.c.l.b16 %v428
    %v632 = vunpack.c.l.b16 %v429
    %v633 = vunpack.c.l.b16 %v430
    %v634 = vunpack.c.l.b16 %v431
    %v635 = vunpack.c.l.b16 %v432
    %v636 = vunpack.c.l.b16 %v433
    %v637 = vunpack.c.l.b16 %v434
    %v638 = vunpack.c.l.b16 %v435
    %v639 = vunpack.c.l.b16 %v436
    %v640 = vunpack.c.l.b16 %v437
    %v641 = vunpack.c.l.b16 %v438
    %v642 = vunpack.c.l.b16 %v439
    %v643 = vunpack.c.l.b16 %v440
    %v644 = vunpack.c.l.b16 %v441
    %v645 = vunpack.c.l.b16 %v442
    %v646 = vunpack.c.l.b16 %v443
    %v647 = vunpack.c.l.b16 %v444
    %v648 = vunpack.c.l.b16 %v445
    %v649 = vunpack.c.l.b16 %v446
    %v650 = vunpack.c.l.b16 %v447
    %v651 = vunpack.c.l.b16 %v448
    %v652 = vunpack.c.l.b16 %v449
    %v653 = vunpack.c.l.b16 %v450
    %v654 = vunpack.c.l.b16 %v451
    %v655 = vunpack.c.l.b16 %v452
    %v656 = vunpack.c.l.b16 %v453
    %v657 = vunpack.c.l.b16 %v454
    %v658 = vunpack.c.l.b16 %v455
    %v659 = vunpack.c.l.b16 %v456
    %v660 = vunpack.c.l.b16 %v457
    %v661 = vunpack.c.l.b16 %v458
    %v662 = vunpack.c.l.b16 %v459
    %v663 = vunpack.c.l.b16 %v460
    %v664 = vunpack.c.l.b16 %v461
    %v665 = vunpack.c.l.b16 %v462
    %v666 = vunpack.c.l.b16 %v463
    %v667 = vunpack.c.l.b16 %v464
    %v668 = vunpack.c.l.b16 %v465
    %v669 = vunpack.c.l.b16 %v466
    %v670 = vunpack.c.l.b16 %v467
    %v671 = vunpack.c.l.b16 %v468
    %v672 = vunpack.c.l.b16 %v469
    %v673 = vunpack.c.l.b16 %v470
    %v674 = vunpack.c.l.b16 %v471
    %v675 = vunpack.c.l.b16 %v472
    %v676 = vunpack.c.l.b16 %v473
    %v677 = vpack.c.b16 %v580, %v579
    %v678 = vpack.c.b16 %v582, %v581
    %v679 = vpack.c.b16 %v584, %v583
    %v680 = vpack.c.b16 %v586, %v585
    %v681 = vpack.c.b16 %v588, %v587
    %v682 = vpack.c.b16 %v590, %v589
    %v683 = vpack.c.b16 %v592, %v591
    %v684 = vpack.c.b16 %v594, %v593
    %v685 = vpack.c.b16 %v596, %v595
    %v686 = vpack.c.b16 %v598, %v597
    %v687 = vpack.c.b16 %v600, %v599
    %v688 = vpack.c.b16 %v602, %v601
    %v689 = vpack.c.b16 %v604, %v603
    %v690 = vpack.c.b16 %v606, %v605
    %v691 = vpack.c.b16 %v608, %v607
    %v692 = vpack.c.b16 %v610, %v609
    %v693 = vpack.c.b16 %v612, %v611
    %v694 = vpack.c.b16 %v614, %v613
    %v695 = vpack.c.b16 %v616, %v615
    %v696 = vpack.c.b16 %v618, %v617
    %v697 = vpack.c.b16 %v620, %v619
    %v698 = vpack.c.b16 %v622, %v621
    %v699 = vpack.c.b16 %v624, %v623
    %v700 = vpack.c.b16 %v626, %v625
    %v701 = vpack.c.b16 %v628, %v627
    %v702 = vpack.c.b16 %v630, %v629
    %v703 = vpack.c.b16 %v632, %v631
    %v704 = vpack.c.b16 %v634, %v633
    %v705 = vpack.c.b16 %v636, %v635
    %v706 = vpack.c.b16 %v638, %v637
    %v707 = vpack.c.b16 %v640, %v639
    %v708 = vpack.c.b16 %v642, %v641
    %v709 = vpack.c.b16 %v644, %v643
    %v710 = vpack.c.b16 %v646, %v645
    %v711 = vpack.c.b16 %v648, %v647
    %v712 = vpack.c.b16 %v650, %v649
    %v713 = vpack.c.b16 %v652, %v651
    %v714 = vpack.c.b16 %v654, %v653
    %v715 = vpack.c.b16 %v656, %v655
    %v716 = vpack.c.b16 %v658, %v657
    %v717 = vpack.c.b16 %v660, %v659
    %v718 = vpack.c.b16 %v662, %v661
    %v719 = vpack.c.b16 %v664, %v663
    %v720 = vpack.c.b16 %v666, %v665
    %v721 = vpack.c.b16 %v668, %v667
    %v722 = vpack.c.b16 %v670, %v669
    %v723 = vpack.c.b16 %v672, %v671
    %v724 = vpack.c.b16 %v674, %v673
    %v725 = vpack.c.b16 %v676, %v675
    %vm775 = vcmask 130048
    %v777 = vsel %vm775, %v270, 0
    %v780 = vsel %vm775, %v277, 0
    %v783 = vsel %vm775, %v284, 0
    %v786 = vsel %vm775, %v291, 0
    %v789 = vsel %vm775, %v298, 0
    %v792 = vsel %vm775, %v305, 0
    %v795 = vsel %vm775, %v312, 0
    %v798 = vsel %vm775, %v319, 0
    %v801 = vsel %vm775, %v326, 0
    %v804 = vsel %vm775, %v333, 0
    %v807 = vsel %vm775, %v340, 0
    %v810 = vsel %vm775, %v347, 0
    %v813 = vsel %vm775, %v354, 0
    %v816 = vsel %vm775, %v361, 0
    %v819 = vsel %vm775, %v368, 0
    %v822 = vsel %vm775, %v375, 0
    %824 = vmatprep.subr.bf16.mxu0 0
    %825 = vmatpush1.bf16.msra.mxu0 %v684
    %826 = vmatprep.subr.bf16.mxu0 0
    %827 = vmatpush1.bf16.msra.mxu0 %v683
    %828 = vmatprep.subr.bf16.mxu0 0
    %829 = vmatpush1.bf16.msra.mxu0 %v682
    %830 = vmatprep.subr.bf16.mxu0 0
    %831 = vmatpush1.bf16.msra.mxu0 %v681
    %832 = vmatprep.subr.bf16.mxu0 0
    %833 = vmatpush1.bf16.msra.mxu0 %v680
    %834 = vmatprep.subr.bf16.mxu0 0
    %835 = vmatpush1.bf16.msra.mxu0 %v679
    %836 = vmatprep.subr.bf16.mxu0 0
    %837 = vmatpush1.bf16.msra.mxu0 %v678
    %838 = vmatprep.subr.bf16.mxu0 0
    %839 = vmatpush1.bf16.msra.mxu0 %v677
    %840 = vmatprep.subr.bf16.mxu0 0
    %841 = vmatpush2.bf16.msra.mxu0 %v692
    %842 = vmatprep.subr.bf16.mxu0 0
    %843 = vmatpush2.bf16.msra.mxu0 %v691
    %844 = vmatprep.subr.bf16.mxu0 0
    %845 = vmatpush2.bf16.msra.mxu0 %v690
    %846 = vmatprep.subr.bf16.mxu0 0
    %847 = vmatpush2.bf16.msra.mxu0 %v689
    %848 = vmatprep.subr.bf16.mxu0 0
    %849 = vmatpush2.bf16.msra.mxu0 %v688
    %850 = vmatprep.subr.bf16.mxu0 0
    %851 = vmatpush2.bf16.msra.mxu0 %v687
    %852 = vmatprep.subr.bf16.mxu0 0
    %853 = vmatpush2.bf16.msra.mxu0 %v686
    %854 = vmatprep.subr.bf16.mxu0 0
    %855 = vmatpush2.bf16.msra.mxu0 %v685
    %856 = vmatprep.mubr.bf16.mxu0 %v265
    %857 = vmatmul.mubr.bf16.gmra.mxu0 %v264
    %v858 = vpop.f32.mrf.mxu0
    %v859 = vadd.f32 %v479, %v858
    %v860 = vpop.f32.mrf.mxu0
    %v861 = vpop.f32.mrf.mxu0
    %v862 = vadd.f32 %v479, %v861
    %v863 = vpop.f32.mrf.mxu0
    %864 = vmatprep.mubr.bf16.mxu0 %v272
    %865 = vmatmul.mubr.bf16.gmra.mxu0 %v271
    %v866 = vpop.f32.mrf.mxu0
    %v867 = vadd.f32 %v479, %v866
    %v868 = vpop.f32.mrf.mxu0
    %v869 = vpop.f32.mrf.mxu0
    %v870 = vadd.f32 %v479, %v869
    %v871 = vpop.f32.mrf.mxu0
    %872 = vmatprep.mubr.bf16.mxu0 %v279
    %873 = vmatmul.mubr.bf16.gmra.mxu0 %v278
    %v874 = vpop.f32.mrf.mxu0
    %v875 = vadd.f32 %v479, %v874
    %v876 = vpop.f32.mrf.mxu0
    %v877 = vpop.f32.mrf.mxu0
    %v878 = vadd.f32 %v479, %v877
    %v879 = vpop.f32.mrf.mxu0
    %880 = vmatprep.mubr.bf16.mxu0 %v286
    %881 = vmatmul.mubr.bf16.gmra.mxu0 %v285
    %v882 = vpop.f32.mrf.mxu0
    %v883 = vadd.f32 %v479, %v882
    %v884 = vpop.f32.mrf.mxu0
    %v885 = vpop.f32.mrf.mxu0
    %v886 = vadd.f32 %v479, %v885
    %v887 = vpop.f32.mrf.mxu0
    %888 = vmatprep.mubr.bf16.mxu0 %v293
    %889 = vmatmul.mubr.bf16.gmra.mxu0 %v292
    %v890 = vpop.f32.mrf.mxu0
    %v891 = vadd.f32 %v479, %v890
    %v892 = vpop.f32.mrf.mxu0
    %v893 = vpop.f32.mrf.mxu0
    %v894 = vadd.f32 %v479, %v893
    %v895 = vpop.f32.mrf.mxu0
    %896 = vmatprep.mubr.bf16.mxu0 %v300
    %897 = vmatmul.mubr.bf16.gmra.mxu0 %v299
    %v898 = vpop.f32.mrf.mxu0
    %v899 = vadd.f32 %v479, %v898
    %v900 = vpop.f32.mrf.mxu0
    %v901 = vpop.f32.mrf.mxu0
    %v902 = vadd.f32 %v479, %v901
    %v903 = vpop.f32.mrf.mxu0
    %904 = vmatprep.mubr.bf16.mxu0 %v307
    %905 = vmatmul.mubr.bf16.gmra.mxu0 %v306
    %v906 = vpop.f32.mrf.mxu0
    %v907 = vadd.f32 %v479, %v906
    %v908 = vpop.f32.mrf.mxu0
    %v909 = vpop.f32.mrf.mxu0
    %v910 = vadd.f32 %v479, %v909
    %v911 = vpop.f32.mrf.mxu0
    %912 = vmatprep.mubr.bf16.mxu0 %v314
    %913 = vmatmul.mubr.bf16.gmra.mxu0 %v313
    %v914 = vpop.f32.mrf.mxu0
    %v915 = vadd.f32 %v479, %v914
    %v916 = vpop.f32.mrf.mxu0
    %v917 = vpop.f32.mrf.mxu0
    %v918 = vadd.f32 %v479, %v917
    %v919 = vpop.f32.mrf.mxu0
    %920 = vmatprep.mubr.bf16.mxu0 %v321
    %921 = vmatmul.mubr.bf16.gmra.mxu0 %v320
    %v922 = vpop.f32.mrf.mxu0
    %v923 = vadd.f32 %v479, %v922
    %v924 = vpop.f32.mrf.mxu0
    %v925 = vpop.f32.mrf.mxu0
    %v926 = vadd.f32 %v479, %v925
    %v927 = vpop.f32.mrf.mxu0
    %928 = vmatprep.mubr.bf16.mxu0 %v328
    %929 = vmatmul.mubr.bf16.gmra.mxu0 %v327
    %v930 = vpop.f32.mrf.mxu0
    %v931 = vadd.f32 %v479, %v930
    %v932 = vpop.f32.mrf.mxu0
    %v933 = vpop.f32.mrf.mxu0
    %v934 = vadd.f32 %v479, %v933
    %v935 = vpop.f32.mrf.mxu0
    %936 = vmatprep.mubr.bf16.mxu0 %v335
    %937 = vmatmul.mubr.bf16.gmra.mxu0 %v334
    %v938 = vpop.f32.mrf.mxu0
    %v939 = vadd.f32 %v479, %v938
    %v940 = vpop.f32.mrf.mxu0
    %v941 = vpop.f32.mrf.mxu0
    %v942 = vadd.f32 %v479, %v941
    %v943 = vpop.f32.mrf.mxu0
    %944 = vmatprep.mubr.bf16.mxu0 %v342
    %945 = vmatmul.mubr.bf16.gmra.mxu0 %v341
    %v946 = vpop.f32.mrf.mxu0
    %v947 = vadd.f32 %v479, %v946
    %v948 = vpop.f32.mrf.mxu0
    %v949 = vpop.f32.mrf.mxu0
    %v950 = vadd.f32 %v479, %v949
    %v951 = vpop.f32.mrf.mxu0
    %952 = vmatprep.mubr.bf16.mxu0 %v349
    %953 = vmatmul.mubr.bf16.gmra.mxu0 %v348
    %v954 = vpop.f32.mrf.mxu0
    %v955 = vadd.f32 %v479, %v954
    %v956 = vpop.f32.mrf.mxu0
    %v957 = vpop.f32.mrf.mxu0
    %v958 = vadd.f32 %v479, %v957
    %v959 = vpop.f32.mrf.mxu0
    %960 = vmatprep.mubr.bf16.mxu0 %v356
    %961 = vmatmul.mubr.bf16.gmra.mxu0 %v355
    %v962 = vpop.f32.mrf.mxu0
    %v963 = vadd.f32 %v479, %v962
    %v964 = vpop.f32.mrf.mxu0
    %v965 = vpop.f32.mrf.mxu0
    %v966 = vadd.f32 %v479, %v965
    %v967 = vpop.f32.mrf.mxu0
    %968 = vmatprep.mubr.bf16.mxu0 %v363
    %969 = vmatmul.mubr.bf16.gmra.mxu0 %v362
    %v970 = vpop.f32.mrf.mxu0
    %v971 = vadd.f32 %v479, %v970
    %v972 = vpop.f32.mrf.mxu0
    %v973 = vpop.f32.mrf.mxu0
    %v974 = vadd.f32 %v479, %v973
    %v975 = vpop.f32.mrf.mxu0
    %976 = vmatprep.mubr.bf16.mxu0 %v370
    %977 = vmatmul.mubr.bf16.gmra.mxu0 %v369
    %v978 = vpop.f32.mrf.mxu0
    %v979 = vadd.f32 %v479, %v978
    %v980 = vpop.f32.mrf.mxu0
    %v981 = vpop.f32.mrf.mxu0
    %v982 = vadd.f32 %v479, %v981
    %v983 = vpop.f32.mrf.mxu0
    %984 = vdwg.mxu0
    %985 = vmatprep.subr.bf16.mxu0 0
    %986 = vmatpush1.bf16.msra.mxu0 %v700
    %987 = vmatprep.subr.bf16.mxu0 0
    %988 = vmatpush1.bf16.msra.mxu0 %v699
    %989 = vmatprep.subr.bf16.mxu0 0
    %990 = vmatpush1.bf16.msra.mxu0 %v698
    %991 = vmatprep.subr.bf16.mxu0 0
    %992 = vmatpush1.bf16.msra.mxu0 %v697
    %993 = vmatprep.subr.bf16.mxu0 0
    %994 = vmatpush1.bf16.msra.mxu0 %v696
    %995 = vmatprep.subr.bf16.mxu0 0
    %996 = vmatpush1.bf16.msra.mxu0 %v695
    %997 = vmatprep.subr.bf16.mxu0 0
    %998 = vmatpush1.bf16.msra.mxu0 %v694
    %999 = vmatprep.subr.bf16.mxu0 0
    %1000 = vmatpush1.bf16.msra.mxu0 %v693
    %1001 = vmatprep.subr.bf16.mxu0 0
    %1002 = vmatpush2.bf16.msra.mxu0 %v708
    %1003 = vmatprep.subr.bf16.mxu0 0
    %1004 = vmatpush2.bf16.msra.mxu0 %v707
    %1005 = vmatprep.subr.bf16.mxu0 0
    %1006 = vmatpush2.bf16.msra.mxu0 %v706
    %1007 = vmatprep.subr.bf16.mxu0 0
    %1008 = vmatpush2.bf16.msra.mxu0 %v705
    %1009 = vmatprep.subr.bf16.mxu0 0
    %1010 = vmatpush2.bf16.msra.mxu0 %v704
    %1011 = vmatprep.subr.bf16.mxu0 0
    %1012 = vmatpush2.bf16.msra.mxu0 %v703
    %1013 = vmatprep.subr.bf16.mxu0 0
    %1014 = vmatpush2.bf16.msra.mxu0 %v702
    %1015 = vmatprep.subr.bf16.mxu0 0
    %1016 = vmatpush2.bf16.msra.mxu0 %v701
    %1017 = vmatprep.mubr.bf16.mxu0 %v267
    %1018 = vmatmul.mubr.bf16.gmra.mxu0 %v266
    %v1019 = vpop.f32.mrf.mxu0
    %v1020 = vadd.f32 %v859, %v1019
    %v1021 = vpop.f32.mrf.mxu0
    %v1022 = vpop.f32.mrf.mxu0
    %v1023 = vadd.f32 %v862, %v1022
    %v1024 = vpop.f32.mrf.mxu0
    %1025 = vmatprep.mubr.bf16.mxu0 %v274
    %1026 = vmatmul.mubr.bf16.gmra.mxu0 %v273
    %v1027 = vpop.f32.mrf.mxu0
    %v1028 = vadd.f32 %v867, %v1027
    %v1029 = vpop.f32.mrf.mxu0
    %v1030 = vpop.f32.mrf.mxu0
    %v1031 = vadd.f32 %v870, %v1030
    %v1032 = vpop.f32.mrf.mxu0
    %1033 = vmatprep.mubr.bf16.mxu0 %v281
    %1034 = vmatmul.mubr.bf16.gmra.mxu0 %v280
    %v1035 = vpop.f32.mrf.mxu0
    %v1036 = vadd.f32 %v875, %v1035
    %v1037 = vpop.f32.mrf.mxu0
    %v1038 = vpop.f32.mrf.mxu0
    %v1039 = vadd.f32 %v878, %v1038
    %v1040 = vpop.f32.mrf.mxu0
    %1041 = vmatprep.mubr.bf16.mxu0 %v288
    %1042 = vmatmul.mubr.bf16.gmra.mxu0 %v287
    %v1043 = vpop.f32.mrf.mxu0
    %v1044 = vadd.f32 %v883, %v1043
    %v1045 = vpop.f32.mrf.mxu0
    %v1046 = vpop.f32.mrf.mxu0
    %v1047 = vadd.f32 %v886, %v1046
    %v1048 = vpop.f32.mrf.mxu0
    %1049 = vmatprep.mubr.bf16.mxu0 %v295
    %1050 = vmatmul.mubr.bf16.gmra.mxu0 %v294
    %v1051 = vpop.f32.mrf.mxu0
    %v1052 = vadd.f32 %v891, %v1051
    %v1053 = vpop.f32.mrf.mxu0
    %v1054 = vpop.f32.mrf.mxu0
    %v1055 = vadd.f32 %v894, %v1054
    %v1056 = vpop.f32.mrf.mxu0
    %1057 = vmatprep.mubr.bf16.mxu0 %v302
    %1058 = vmatmul.mubr.bf16.gmra.mxu0 %v301
    %v1059 = vpop.f32.mrf.mxu0
    %v1060 = vadd.f32 %v899, %v1059
    %v1061 = vpop.f32.mrf.mxu0
    %v1062 = vpop.f32.mrf.mxu0
    %v1063 = vadd.f32 %v902, %v1062
    %v1064 = vpop.f32.mrf.mxu0
    %1065 = vmatprep.mubr.bf16.mxu0 %v309
    %1066 = vmatmul.mubr.bf16.gmra.mxu0 %v308
    %v1067 = vpop.f32.mrf.mxu0
    %v1068 = vadd.f32 %v907, %v1067
    %v1069 = vpop.f32.mrf.mxu0
    %v1070 = vpop.f32.mrf.mxu0
    %v1071 = vadd.f32 %v910, %v1070
    %v1072 = vpop.f32.mrf.mxu0
    %1073 = vmatprep.mubr.bf16.mxu0 %v316
    %1074 = vmatmul.mubr.bf16.gmra.mxu0 %v315
    %v1075 = vpop.f32.mrf.mxu0
    %v1076 = vadd.f32 %v915, %v1075
    %v1077 = vpop.f32.mrf.mxu0
    %v1078 = vpop.f32.mrf.mxu0
    %v1079 = vadd.f32 %v918, %v1078
    %v1080 = vpop.f32.mrf.mxu0
    %1081 = vmatprep.mubr.bf16.mxu0 %v323
    %1082 = vmatmul.mubr.bf16.gmra.mxu0 %v322
    %v1083 = vpop.f32.mrf.mxu0
    %v1084 = vadd.f32 %v923, %v1083
    %v1085 = vpop.f32.mrf.mxu0
    %v1086 = vpop.f32.mrf.mxu0
    %v1087 = vadd.f32 %v926, %v1086
    %v1088 = vpop.f32.mrf.mxu0
    %1089 = vmatprep.mubr.bf16.mxu0 %v330
    %1090 = vmatmul.mubr.bf16.gmra.mxu0 %v329
    %v1091 = vpop.f32.mrf.mxu0
    %v1092 = vadd.f32 %v931, %v1091
    %v1093 = vpop.f32.mrf.mxu0
    %v1094 = vpop.f32.mrf.mxu0
    %v1095 = vadd.f32 %v934, %v1094
    %v1096 = vpop.f32.mrf.mxu0
    %1097 = vmatprep.mubr.bf16.mxu0 %v337
    %1098 = vmatmul.mubr.bf16.gmra.mxu0 %v336
    %v1099 = vpop.f32.mrf.mxu0
    %v1100 = vadd.f32 %v939, %v1099
    %v1101 = vpop.f32.mrf.mxu0
    %v1102 = vpop.f32.mrf.mxu0
    %v1103 = vadd.f32 %v942, %v1102
    %v1104 = vpop.f32.mrf.mxu0
    %1105 = vmatprep.mubr.bf16.mxu0 %v344
    %1106 = vmatmul.mubr.bf16.gmra.mxu0 %v343
    %v1107 = vpop.f32.mrf.mxu0
    %v1108 = vadd.f32 %v947, %v1107
    %v1109 = vpop.f32.mrf.mxu0
    %v1110 = vpop.f32.mrf.mxu0
    %v1111 = vadd.f32 %v950, %v1110
    %v1112 = vpop.f32.mrf.mxu0
    %1113 = vmatprep.mubr.bf16.mxu0 %v351
    %1114 = vmatmul.mubr.bf16.gmra.mxu0 %v350
    %v1115 = vpop.f32.mrf.mxu0
    %v1116 = vadd.f32 %v955, %v1115
    %v1117 = vpop.f32.mrf.mxu0
    %v1118 = vpop.f32.mrf.mxu0
    %v1119 = vadd.f32 %v958, %v1118
    %v1120 = vpop.f32.mrf.mxu0
    %1121 = vmatprep.mubr.bf16.mxu0 %v358
    %1122 = vmatmul.mubr.bf16.gmra.mxu0 %v357
    %v1123 = vpop.f32.mrf.mxu0
    %v1124 = vadd.f32 %v963, %v1123
    %v1125 = vpop.f32.mrf.mxu0
    %v1126 = vpop.f32.mrf.mxu0
    %v1127 = vadd.f32 %v966, %v1126
    %v1128 = vpop.f32.mrf.mxu0
    %1129 = vmatprep.mubr.bf16.mxu0 %v365
    %1130 = vmatmul.mubr.bf16.gmra.mxu0 %v364
    %v1131 = vpop.f32.mrf.mxu0
    %v1132 = vadd.f32 %v971, %v1131
    %v1133 = vpop.f32.mrf.mxu0
    %v1134 = vpop.f32.mrf.mxu0
    %v1135 = vadd.f32 %v974, %v1134
    %v1136 = vpop.f32.mrf.mxu0
    %1137 = vmatprep.mubr.bf16.mxu0 %v372
    %1138 = vmatmul.mubr.bf16.gmra.mxu0 %v371
    %v1139 = vpop.f32.mrf.mxu0
    %v1140 = vadd.f32 %v979, %v1139
    %v1141 = vpop.f32.mrf.mxu0
    %v1142 = vpop.f32.mrf.mxu0
    %v1143 = vadd.f32 %v982, %v1142
    %v1144 = vpop.f32.mrf.mxu0
    %1145 = vdwg.mxu0
    %1146 = vmatprep.subr.bf16.mxu0 0
    %1147 = vmatpush1.bf16.msra.mxu0 %v716
    %1148 = vmatprep.subr.bf16.mxu0 0
    %1149 = vmatpush1.bf16.msra.mxu0 %v715
    %1150 = vmatprep.subr.bf16.mxu0 0
    %1151 = vmatpush1.bf16.msra.mxu0 %v714
    %1152 = vmatprep.subr.bf16.mxu0 0
    %1153 = vmatpush1.bf16.msra.mxu0 %v713
    %1154 = vmatprep.subr.bf16.mxu0 0
    %1155 = vmatpush1.bf16.msra.mxu0 %v712
    %1156 = vmatprep.subr.bf16.mxu0 0
    %1157 = vmatpush1.bf16.msra.mxu0 %v711
    %1158 = vmatprep.subr.bf16.mxu0 0
    %1159 = vmatpush1.bf16.msra.mxu0 %v710
    %1160 = vmatprep.subr.bf16.mxu0 0
    %1161 = vmatpush1.bf16.msra.mxu0 %v709
    %1162 = vmatprep.subr.bf16.mxu0 0
    %1163 = vmatpush2.bf16.msra.mxu0 %v724
    %1164 = vmatprep.subr.bf16.mxu0 0
    %1165 = vmatpush2.bf16.msra.mxu0 %v723
    %1166 = vmatprep.subr.bf16.mxu0 0
    %1167 = vmatpush2.bf16.msra.mxu0 %v722
    %1168 = vmatprep.subr.bf16.mxu0 0
    %1169 = vmatpush2.bf16.msra.mxu0 %v721
    %1170 = vmatprep.subr.bf16.mxu0 0
    %1171 = vmatpush2.bf16.msra.mxu0 %v720
    %1172 = vmatprep.subr.bf16.mxu0 0
    %1173 = vmatpush2.bf16.msra.mxu0 %v719
    %1174 = vmatprep.subr.bf16.mxu0 0
    %1175 = vmatpush2.bf16.msra.mxu0 %v718
    %1176 = vmatprep.subr.bf16.mxu0 0
    %1177 = vmatpush2.bf16.msra.mxu0 %v717
    %1178 = vmatprep.mubr.bf16.mxu0 %v269
    %1179 = vmatmul.mubr.bf16.gmra.mxu0 %v268
    %v1180 = vpop.f32.mrf.mxu0
    %v1181 = vadd.f32 %v1020, %v1180
    %v1182 = vpop.f32.mrf.mxu0
    %v1183 = vpop.f32.mrf.mxu0
    %v1184 = vadd.f32 %v1023, %v1183
    %v1185 = vpop.f32.mrf.mxu0
    %1186 = vmatprep.mubr.bf16.mxu0 %v276
    %1187 = vmatmul.mubr.bf16.gmra.mxu0 %v275
    %v1188 = vpop.f32.mrf.mxu0
    %v1189 = vadd.f32 %v1028, %v1188
    %v1190 = vpop.f32.mrf.mxu0
    %v1191 = vpop.f32.mrf.mxu0
    %v1192 = vadd.f32 %v1031, %v1191
    %v1193 = vpop.f32.mrf.mxu0
    %1194 = vmatprep.mubr.bf16.mxu0 %v283
    %1195 = vmatmul.mubr.bf16.gmra.mxu0 %v282
    %v1196 = vpop.f32.mrf.mxu0
    %v1197 = vadd.f32 %v1036, %v1196
    %v1198 = vpop.f32.mrf.mxu0
    %v1199 = vpop.f32.mrf.mxu0
    %v1200 = vadd.f32 %v1039, %v1199
    %v1201 = vpop.f32.mrf.mxu0
    %1202 = vmatprep.mubr.bf16.mxu0 %v290
    %1203 = vmatmul.mubr.bf16.gmra.mxu0 %v289
    %v1204 = vpop.f32.mrf.mxu0
    %v1205 = vadd.f32 %v1044, %v1204
    %v1206 = vpop.f32.mrf.mxu0
    %v1207 = vpop.f32.mrf.mxu0
    %v1208 = vadd.f32 %v1047, %v1207
    %v1209 = vpop.f32.mrf.mxu0
    %1210 = vmatprep.mubr.bf16.mxu0 %v297
    %1211 = vmatmul.mubr.bf16.gmra.mxu0 %v296
    %v1212 = vpop.f32.mrf.mxu0
    %v1213 = vadd.f32 %v1052, %v1212
    %v1214 = vpop.f32.mrf.mxu0
    %v1215 = vpop.f32.mrf.mxu0
    %v1216 = vadd.f32 %v1055, %v1215
    %v1217 = vpop.f32.mrf.mxu0
    %1218 = vmatprep.mubr.bf16.mxu0 %v304
    %1219 = vmatmul.mubr.bf16.gmra.mxu0 %v303
    %v1220 = vpop.f32.mrf.mxu0
    %v1221 = vadd.f32 %v1060, %v1220
    %v1222 = vpop.f32.mrf.mxu0
    %v1223 = vpop.f32.mrf.mxu0
    %v1224 = vadd.f32 %v1063, %v1223
    %v1225 = vpop.f32.mrf.mxu0
    %1226 = vmatprep.mubr.bf16.mxu0 %v311
    %1227 = vmatmul.mubr.bf16.gmra.mxu0 %v310
    %v1228 = vpop.f32.mrf.mxu0
    %v1229 = vadd.f32 %v1068, %v1228
    %v1230 = vpop.f32.mrf.mxu0
    %v1231 = vpop.f32.mrf.mxu0
    %v1232 = vadd.f32 %v1071, %v1231
    %v1233 = vpop.f32.mrf.mxu0
    %1234 = vmatprep.mubr.bf16.mxu0 %v318
    %1235 = vmatmul.mubr.bf16.gmra.mxu0 %v317
    %v1236 = vpop.f32.mrf.mxu0
    %v1237 = vadd.f32 %v1076, %v1236
    %v1238 = vpop.f32.mrf.mxu0
    %v1239 = vpop.f32.mrf.mxu0
    %v1240 = vadd.f32 %v1079, %v1239
    %v1241 = vpop.f32.mrf.mxu0
    %1242 = vmatprep.mubr.bf16.mxu0 %v325
    %1243 = vmatmul.mubr.bf16.gmra.mxu0 %v324
    %v1244 = vpop.f32.mrf.mxu0
    %v1245 = vadd.f32 %v1084, %v1244
    %v1246 = vpop.f32.mrf.mxu0
    %v1247 = vpop.f32.mrf.mxu0
    %v1248 = vadd.f32 %v1087, %v1247
    %v1249 = vpop.f32.mrf.mxu0
    %1250 = vmatprep.mubr.bf16.mxu0 %v332
    %1251 = vmatmul.mubr.bf16.gmra.mxu0 %v331
    %v1252 = vpop.f32.mrf.mxu0
    %v1253 = vadd.f32 %v1092, %v1252
    %v1254 = vpop.f32.mrf.mxu0
    %v1255 = vpop.f32.mrf.mxu0
    %v1256 = vadd.f32 %v1095, %v1255
    %v1257 = vpop.f32.mrf.mxu0
    %1258 = vmatprep.mubr.bf16.mxu0 %v339
    %1259 = vmatmul.mubr.bf16.gmra.mxu0 %v338
    %v1260 = vpop.f32.mrf.mxu0
    %v1261 = vadd.f32 %v1100, %v1260
    %v1262 = vpop.f32.mrf.mxu0
    %v1263 = vpop.f32.mrf.mxu0
    %v1264 = vadd.f32 %v1103, %v1263
    %v1265 = vpop.f32.mrf.mxu0
    %1266 = vmatprep.mubr.bf16.mxu0 %v346
    %1267 = vmatmul.mubr.bf16.gmra.mxu0 %v345
    %v1268 = vpop.f32.mrf.mxu0
    %v1269 = vadd.f32 %v1108, %v1268
    %v1270 = vpop.f32.mrf.mxu0
    %v1271 = vpop.f32.mrf.mxu0
    %v1272 = vadd.f32 %v1111, %v1271
    %v1273 = vpop.f32.mrf.mxu0
    %1274 = vmatprep.mubr.bf16.mxu0 %v353
    %1275 = vmatmul.mubr.bf16.gmra.mxu0 %v352
    %v1276 = vpop.f32.mrf.mxu0
    %v1277 = vadd.f32 %v1116, %v1276
    %v1278 = vpop.f32.mrf.mxu0
    %v1279 = vpop.f32.mrf.mxu0
    %v1280 = vadd.f32 %v1119, %v1279
    %v1281 = vpop.f32.mrf.mxu0
    %1282 = vmatprep.mubr.bf16.mxu0 %v360
    %1283 = vmatmul.mubr.bf16.gmra.mxu0 %v359
    %v1284 = vpop.f32.mrf.mxu0
    %v1285 = vadd.f32 %v1124, %v1284
    %v1286 = vpop.f32.mrf.mxu0
    %v1287 = vpop.f32.mrf.mxu0
    %v1288 = vadd.f32 %v1127, %v1287
    %v1289 = vpop.f32.mrf.mxu0
    %1290 = vmatprep.mubr.bf16.mxu0 %v367
    %1291 = vmatmul.mubr.bf16.gmra.mxu0 %v366
    %v1292 = vpop.f32.mrf.mxu0
    %v1293 = vadd.f32 %v1132, %v1292
    %v1294 = vpop.f32.mrf.mxu0
    %v1295 = vpop.f32.mrf.mxu0
    %v1296 = vadd.f32 %v1135, %v1295
    %v1297 = vpop.f32.mrf.mxu0
    %1298 = vmatprep.mubr.bf16.mxu0 %v374
    %1299 = vmatmul.mubr.bf16.gmra.mxu0 %v373
    %v1300 = vpop.f32.mrf.mxu0
    %v1301 = vadd.f32 %v1140, %v1300
    %v1302 = vpop.f32.mrf.mxu0
    %v1303 = vpop.f32.mrf.mxu0
    %v1304 = vadd.f32 %v1143, %v1303
    %v1305 = vpop.f32.mrf.mxu0
    %1306 = vdwg.mxu0
    %1307 = vmatprep.subr.bf16.mxu0 0
    %1308 = vmatpush1.bf16.msra.mxu0 0
    %1309 = vmatprep.subr.bf16.mxu0 0
    %1310 = vmatpush1.bf16.msra.mxu0 0
    %1311 = vmatprep.subr.bf16.mxu0 0
    %1312 = vmatpush1.bf16.msra.mxu0 0
    %1313 = vmatprep.subr.bf16.mxu0 0
    %1314 = vmatpush1.bf16.msra.mxu0 0
    %1315 = vmatprep.subr.bf16.mxu0 0
    %1316 = vmatpush1.bf16.msra.mxu0 0
    %1317 = vmatprep.subr.bf16.mxu0 0
    %1318 = vmatpush1.bf16.msra.mxu0 0
    %1319 = vmatprep.subr.bf16.mxu0 0
    %1320 = vmatpush1.bf16.msra.mxu0 0
    %1321 = vmatprep.subr.bf16.mxu0 0
    %1322 = vmatpush1.bf16.msra.mxu0 %v725
    %1323 = vmatprep.subr.bf16.mxu0 0
    %1324 = vmatpush2.bf16.msra.mxu0 0
    %1325 = vmatprep.subr.bf16.mxu0 0
    %1326 = vmatpush2.bf16.msra.mxu0 0
    %1327 = vmatprep.subr.bf16.mxu0 0
    %1328 = vmatpush2.bf16.msra.mxu0 0
    %1329 = vmatprep.subr.bf16.mxu0 0
    %1330 = vmatpush2.bf16.msra.mxu0 0
    %1331 = vmatprep.subr.bf16.mxu0 0
    %1332 = vmatpush2.bf16.msra.mxu0 0
    %1333 = vmatprep.subr.bf16.mxu0 0
    %1334 = vmatpush2.bf16.msra.mxu0 0
    %1335 = vmatprep.subr.bf16.mxu0 0
    %1336 = vmatpush2.bf16.msra.mxu0 0
    %1337 = vmatprep.subr.bf16.mxu0 0
    %1338 = vmatpush2.bf16.msra.mxu0 0
    %1339 = vmatprep.mubr.bf16.mxu0 0
    %1340 = vmatmul.mubr.bf16.gmra.mxu0 %v777
    %v1341 = vpop.f32.mrf.mxu0
    %v1342 = vadd.f32 %v1181, %v1341
    %v1343 = vpop.f32.mrf.mxu0
    %v1344 = vpop.f32.mrf.mxu0
    %v1345 = vadd.f32 %v1184, %v1344
    %v1346 = vpop.f32.mrf.mxu0
    %1347 = vmatprep.mubr.bf16.mxu0 0
    %1348 = vmatmul.mubr.bf16.gmra.mxu0 %v780
    %v1349 = vpop.f32.mrf.mxu0
    %v1350 = vadd.f32 %v1189, %v1349
    %v1351 = vpop.f32.mrf.mxu0
    %v1352 = vpop.f32.mrf.mxu0
    %v1353 = vadd.f32 %v1192, %v1352
    %v1354 = vpop.f32.mrf.mxu0
    %1355 = vmatprep.mubr.bf16.mxu0 0
    %1356 = vmatmul.mubr.bf16.gmra.mxu0 %v783
    %v1357 = vpop.f32.mrf.mxu0
    %v1358 = vadd.f32 %v1197, %v1357
    %v1359 = vpop.f32.mrf.mxu0
    %v1360 = vpop.f32.mrf.mxu0
    %v1361 = vadd.f32 %v1200, %v1360
    %v1362 = vpop.f32.mrf.mxu0
    %1363 = vmatprep.mubr.bf16.mxu0 0
    %1364 = vmatmul.mubr.bf16.gmra.mxu0 %v786
    %v1365 = vpop.f32.mrf.mxu0
    %v1366 = vadd.f32 %v1205, %v1365
    %v1367 = vpop.f32.mrf.mxu0
    %v1368 = vpop.f32.mrf.mxu0
    %v1369 = vadd.f32 %v1208, %v1368
    %v1370 = vpop.f32.mrf.mxu0
    %1371 = vmatprep.mubr.bf16.mxu0 0
    %1372 = vmatmul.mubr.bf16.gmra.mxu0 %v789
    %v1373 = vpop.f32.mrf.mxu0
    %v1374 = vadd.f32 %v1213, %v1373
    %v1375 = vpop.f32.mrf.mxu0
    %v1376 = vpop.f32.mrf.mxu0
    %v1377 = vadd.f32 %v1216, %v1376
    %v1378 = vpop.f32.mrf.mxu0
    %1379 = vmatprep.mubr.bf16.mxu0 0
    %1380 = vmatmul.mubr.bf16.gmra.mxu0 %v792
    %v1381 = vpop.f32.mrf.mxu0
    %v1382 = vadd.f32 %v1221, %v1381
    %v1383 = vpop.f32.mrf.mxu0
    %v1384 = vpop.f32.mrf.mxu0
    %v1385 = vadd.f32 %v1224, %v1384
    %v1386 = vpop.f32.mrf.mxu0
    %1387 = vmatprep.mubr.bf16.mxu0 0
    %1388 = vmatmul.mubr.bf16.gmra.mxu0 %v795
    %v1389 = vpop.f32.mrf.mxu0
    %v1390 = vadd.f32 %v1229, %v1389
    %v1391 = vpop.f32.mrf.mxu0
    %v1392 = vpop.f32.mrf.mxu0
    %v1393 = vadd.f32 %v1232, %v1392
    %v1394 = vpop.f32.mrf.mxu0
    %1395 = vmatprep.mubr.bf16.mxu0 0
    %1396 = vmatmul.mubr.bf16.gmra.mxu0 %v798
    %v1397 = vpop.f32.mrf.mxu0
    %v1398 = vadd.f32 %v1237, %v1397
    %v1399 = vpop.f32.mrf.mxu0
    %v1400 = vpop.f32.mrf.mxu0
    %v1401 = vadd.f32 %v1240, %v1400
    %v1402 = vpop.f32.mrf.mxu0
    %1403 = vmatprep.mubr.bf16.mxu0 0
    %1404 = vmatmul.mubr.bf16.gmra.mxu0 %v801
    %v1405 = vpop.f32.mrf.mxu0
    %v1406 = vadd.f32 %v1245, %v1405
    %v1407 = vpop.f32.mrf.mxu0
    %v1408 = vpop.f32.mrf.mxu0
    %v1409 = vadd.f32 %v1248, %v1408
    %v1410 = vpop.f32.mrf.mxu0
    %1411 = vmatprep.mubr.bf16.mxu0 0
    %1412 = vmatmul.mubr.bf16.gmra.mxu0 %v804
    %v1413 = vpop.f32.mrf.mxu0
    %v1414 = vadd.f32 %v1253, %v1413
    %v1415 = vpop.f32.mrf.mxu0
    %v1416 = vpop.f32.mrf.mxu0
    %v1417 = vadd.f32 %v1256, %v1416
    %v1418 = vpop.f32.mrf.mxu0
    %1419 = vmatprep.mubr.bf16.mxu0 0
    %1420 = vmatmul.mubr.bf16.gmra.mxu0 %v807
    %v1421 = vpop.f32.mrf.mxu0
    %v1422 = vadd.f32 %v1261, %v1421
    %v1423 = vpop.f32.mrf.mxu0
    %v1424 = vpop.f32.mrf.mxu0
    %v1425 = vadd.f32 %v1264, %v1424
    %v1426 = vpop.f32.mrf.mxu0
    %1427 = vmatprep.mubr.bf16.mxu0 0
    %1428 = vmatmul.mubr.bf16.gmra.mxu0 %v810
    %v1429 = vpop.f32.mrf.mxu0
    %v1430 = vadd.f32 %v1269, %v1429
    %v1431 = vpop.f32.mrf.mxu0
    %v1432 = vpop.f32.mrf.mxu0
    %v1433 = vadd.f32 %v1272, %v1432
    %v1434 = vpop.f32.mrf.mxu0
    %1435 = vmatprep.mubr.bf16.mxu0 0
    %1436 = vmatmul.mubr.bf16.gmra.mxu0 %v813
    %v1437 = vpop.f32.mrf.mxu0
    %v1438 = vadd.f32 %v1277, %v1437
    %v1439 = vpop.f32.mrf.mxu0
    %v1440 = vpop.f32.mrf.mxu0
    %v1441 = vadd.f32 %v1280, %v1440
    %v1442 = vpop.f32.mrf.mxu0
    %1443 = vmatprep.mubr.bf16.mxu0 0
    %1444 = vmatmul.mubr.bf16.gmra.mxu0 %v816
    %v1445 = vpop.f32.mrf.mxu0
    %v1446 = vadd.f32 %v1285, %v1445
    %v1447 = vpop.f32.mrf.mxu0
    %v1448 = vpop.f32.mrf.mxu0
    %v1449 = vadd.f32 %v1288, %v1448
    %v1450 = vpop.f32.mrf.mxu0
    %1451 = vmatprep.mubr.bf16.mxu0 0
    %1452 = vmatmul.mubr.bf16.gmra.mxu0 %v819
    %v1453 = vpop.f32.mrf.mxu0
    %v1454 = vadd.f32 %v1293, %v1453
    %v1455 = vpop.f32.mrf.mxu0
    %v1456 = vpop.f32.mrf.mxu0
    %v1457 = vadd.f32 %v1296, %v1456
    %v1458 = vpop.f32.mrf.mxu0
    %1459 = vmatprep.mubr.bf16.mxu0 0
    %1460 = vmatmul.mubr.bf16.gmra.mxu0 %v822
    %v1461 = vpop.f32.mrf.mxu0
    %v1462 = vadd.f32 %v1301, %v1461
    %v1463 = vpop.f32.mrf.mxu0
    %v1464 = vpop.f32.mrf.mxu0
    %v1465 = vadd.f32 %v1304, %v1464
    %v1466 = vpop.f32.mrf.mxu0
    %1467 = vdwg.mxu0
    %v1468 = vmax.f32 %v1342, 0.0
    %v1469 = vmax.f32 %v1345, 0.0
    %v1470 = vmax.f32 %v1350, 0.0
    %v1471 = vmax.f32 %v1353, 0.0
    %v1472 = vmax.f32 %v1358, 0.0
    %v1473 = vmax.f32 %v1361, 0.0
    %v1474 = vmax.f32 %v1366, 0.0
    %v1475 = vmax.f32 %v1369, 0.0
    %v1476 = vmax.f32 %v1374, 0.0
    %v1477 = vmax.f32 %v1377, 0.0
    %v1478 = vmax.f32 %v1382, 0.0
    %v1479 = vmax.f32 %v1385, 0.0
    %v1480 = vmax.f32 %v1390, 0.0
    %v1481 = vmax.f32 %v1393, 0.0
    %v1482 = vmax.f32 %v1398, 0.0
    %v1483 = vmax.f32 %v1401, 0.0
    %v1484 = vmax.f32 %v1406, 0.0
    %v1485 = vmax.f32 %v1409, 0.0
    %v1486 = vmax.f32 %v1414, 0.0
    %v1487 = vmax.f32 %v1417, 0.0
    %v1488 = vmax.f32 %v1422, 0.0
    %v1489 = vmax.f32 %v1425, 0.0
    %v1490 = vmax.f32 %v1430, 0.0
    %v1491 = vmax.f32 %v1433, 0.0
    %v1492 = vmax.f32 %v1438, 0.0
    %v1493 = vmax.f32 %v1441, 0.0
    %v1494 = vmax.f32 %v1446, 0.0
    %v1495 = vmax.f32 %v1449, 0.0
    %v1496 = vmax.f32 %v1454, 0.0
    %v1497 = vmax.f32 %v1457, 0.0
    %v1498 = vmax.f32 %v1462, 0.0
    %v1499 = vmax.f32 %v1465, 0.0
    %v1500 = vpack.c.bf16 %v1469, %v1468
    %v1501 = vpack.c.bf16 %v1471, %v1470
    %v1502 = vpack.c.bf16 %v1473, %v1472
    %v1503 = vpack.c.bf16 %v1475, %v1474
    %v1504 = vpack.c.bf16 %v1477, %v1476
    %v1505 = vpack.c.bf16 %v1479, %v1478
    %v1506 = vpack.c.bf16 %v1481, %v1480
    %v1507 = vpack.c.bf16 %v1483, %v1482
    %v1508 = vpack.c.bf16 %v1485, %v1484
    %v1509 = vpack.c.bf16 %v1487, %v1486
    %v1510 = vpack.c.bf16 %v1489, %v1488
    %v1511 = vpack.c.bf16 %v1491, %v1490
    %v1512 = vpack.c.bf16 %v1493, %v1492
    %v1513 = vpack.c.bf16 %v1495, %v1494
    %v1514 = vpack.c.bf16 %v1497, %v1496
    %v1515 = vpack.c.bf16 %v1499, %v1498
    %v1516 = vld [vmem:[%s3] sm:$0xff]
    %v1517 = vld [vmem:[%s3 + $0x8] sm:$0xff]
    %v1518 = vld [vmem:[%s3 + $0x10] sm:$0xff]
    %v1519 = vld [vmem:[%s3 + $0x18] sm:$0xff]
    %v1520 = vld [vmem:[%s3 + $0x20] sm:$0xff]
    %v1521 = vld [vmem:[%s3 + $0x28] sm:$0xff]
    %v1522 = vld [vmem:[%s3 + $0x30] sm:$0xff]
    %v1523 = vld [vmem:[%s3 + $0x38] sm:$0xff]
    %v1524 = vld [vmem:[%s3 + $0x40] sm:$0xff]
    %v1525 = vld [vmem:[%s3 + $0x48] sm:$0xff]
    %v1526 = vld [vmem:[%s3 + $0x50] sm:$0xff]
    %v1527 = vld [vmem:[%s3 + $0x58] sm:$0xff]
    %v1528 = vld [vmem:[%s3 + $0x60] sm:$0xff]
    %v1529 = vld [vmem:[%s3 + $0x68] sm:$0xff]
    %v1530 = vld [vmem:[%s3 + $0x70] sm:$0xff]
    %v1531 = vld [vmem:[%s3 + $0x78] sm:$0xff]
    %v1532 = vld [vmem:[%s4] sm:$0x3]
    %v1534 = vlaneseq
    %v1535 = vshrl.u32 %v1534, 7
    %v1536 = vsub.s32 0, %v1535
    %v1537 = vrot.slane %v1532, %v1536
    %v1538 = vlaneseq
    %v1539 = vshrl.u32 %v1538, 7
    %v1540 = vsub.s32 1, %v1539
    %v1541 = vrot.slane %v1532, %v1540
    %v1560 = vunpack.c.l.b16 %v1516
    %v1561 = vunpack.c.h.b16 %v1516
    %v1562 = vunpack.c.l.b16 %v1517
    %v1563 = vunpack.c.h.b16 %v1517
    %v1564 = vunpack.c.l.b16 %v1518
    %v1565 = vunpack.c.h.b16 %v1518
    %v1566 = vunpack.c.l.b16 %v1519
    %v1567 = vunpack.c.h.b16 %v1519
    %v1568 = vunpack.c.l.b16 %v1520
    %v1569 = vunpack.c.h.b16 %v1520
    %v1570 = vunpack.c.l.b16 %v1521
    %v1571 = vunpack.c.h.b16 %v1521
    %v1572 = vunpack.c.l.b16 %v1522
    %v1573 = vunpack.c.h.b16 %v1522
    %v1574 = vunpack.c.l.b16 %v1523
    %v1575 = vunpack.c.h.b16 %v1523
    %v1576 = vunpack.c.l.b16 %v1524
    %v1577 = vunpack.c.h.b16 %v1524
    %v1578 = vunpack.c.l.b16 %v1525
    %v1579 = vunpack.c.h.b16 %v1525
    %v1580 = vunpack.c.l.b16 %v1526
    %v1581 = vunpack.c.h.b16 %v1526
    %v1582 = vunpack.c.l.b16 %v1527
    %v1583 = vunpack.c.h.b16 %v1527
    %v1584 = vunpack.c.l.b16 %v1528
    %v1585 = vunpack.c.h.b16 %v1528
    %v1586 = vunpack.c.l.b16 %v1529
    %v1587 = vunpack.c.h.b16 %v1529
    %v1588 = vunpack.c.l.b16 %v1530
    %v1589 = vunpack.c.h.b16 %v1530
    %v1590 = vunpack.c.l.b16 %v1531
    %v1591 = vunpack.c.h.b16 %v1531
    %v1592 = vpack.c.b16 %v1562, %v1560
    %v1593 = vpack.c.b16 %v1563, %v1561
    %v1594 = vpack.c.b16 %v1566, %v1564
    %v1595 = vpack.c.b16 %v1567, %v1565
    %v1596 = vpack.c.b16 %v1570, %v1568
    %v1597 = vpack.c.b16 %v1571, %v1569
    %v1598 = vpack.c.b16 %v1574, %v1572
    %v1599 = vpack.c.b16 %v1575, %v1573
    %v1600 = vpack.c.b16 %v1578, %v1576
    %v1601 = vpack.c.b16 %v1579, %v1577
    %v1602 = vpack.c.b16 %v1582, %v1580
    %v1603 = vpack.c.b16 %v1583, %v1581
    %v1604 = vpack.c.b16 %v1586, %v1584
    %v1605 = vpack.c.b16 %v1587, %v1585
    %v1606 = vpack.c.b16 %v1590, %v1588
    %v1607 = vpack.c.b16 %v1591, %v1589
    %1624 = vmatprep.subr.bf16.mxu0 %v1607
    %1625 = vmatpush1.bf16.msra.mxu0 %v1606
    %1626 = vmatprep.subr.bf16.mxu0 %v1605
    %1627 = vmatpush1.bf16.msra.mxu0 %v1604
    %1628 = vmatprep.subr.bf16.mxu0 %v1603
    %1629 = vmatpush1.bf16.msra.mxu0 %v1602
    %1630 = vmatprep.subr.bf16.mxu0 %v1601
    %1631 = vmatpush1.bf16.msra.mxu0 %v1600
    %1632 = vmatprep.subr.bf16.mxu0 %v1599
    %1633 = vmatpush1.bf16.msra.mxu0 %v1598
    %1634 = vmatprep.subr.bf16.mxu0 %v1597
    %1635 = vmatpush1.bf16.msra.mxu0 %v1596
    %1636 = vmatprep.subr.bf16.mxu0 %v1595
    %1637 = vmatpush1.bf16.msra.mxu0 %v1594
    %1638 = vmatprep.subr.bf16.mxu0 %v1593
    %1639 = vmatpush1.bf16.msra.mxu0 %v1592
    %1640 = vmatprep.subr.bf16.mxu0 0
    %1641 = vmatpush2.bf16.msra.mxu0 0
    %1642 = vmatprep.subr.bf16.mxu0 0
    %1643 = vmatpush2.bf16.msra.mxu0 0
    %1644 = vmatprep.subr.bf16.mxu0 0
    %1645 = vmatpush2.bf16.msra.mxu0 0
    %1646 = vmatprep.subr.bf16.mxu0 0
    %1647 = vmatpush2.bf16.msra.mxu0 0
    %1648 = vmatprep.subr.bf16.mxu0 0
    %1649 = vmatpush2.bf16.msra.mxu0 0
    %1650 = vmatprep.subr.bf16.mxu0 0
    %1651 = vmatpush2.bf16.msra.mxu0 0
    %1652 = vmatprep.subr.bf16.mxu0 0
    %1653 = vmatpush2.bf16.msra.mxu0 0
    %1654 = vmatprep.subr.bf16.mxu0 0
    %1655 = vmatpush2.bf16.msra.mxu0 0
    %1656 = vmatprep.mubr.bf16.mxu0 0
    %1657 = vmatmul.mubr.bf16.gmra.mxu0 %v1500
    %v1658 = vpop.f32.mrf.mxu0
    %v1659 = vadd.f32 %v1537, %v1658
    %v1660 = vpop.f32.mrf.mxu0
    %v1661 = vadd.f32 %v1541, %v1660
    %v1662 = vpop.f32.mrf.mxu0
    %v1663 = vadd.f32 %v1537, %v1662
    %v1664 = vpop.f32.mrf.mxu0
    %v1665 = vadd.f32 %v1541, %v1664
    %1666 = vmatprep.mubr.bf16.mxu0 0
    %1667 = vmatmul.mubr.bf16.gmra.mxu0 %v1501
    %v1668 = vpop.f32.mrf.mxu0
    %v1669 = vadd.f32 %v1537, %v1668
    %v1670 = vpop.f32.mrf.mxu0
    %v1671 = vadd.f32 %v1541, %v1670
    %v1672 = vpop.f32.mrf.mxu0
    %v1673 = vadd.f32 %v1537, %v1672
    %v1674 = vpop.f32.mrf.mxu0
    %v1675 = vadd.f32 %v1541, %v1674
    %1676 = vmatprep.mubr.bf16.mxu0 0
    %1677 = vmatmul.mubr.bf16.gmra.mxu0 %v1502
    %v1678 = vpop.f32.mrf.mxu0
    %v1679 = vadd.f32 %v1537, %v1678
    %v1680 = vpop.f32.mrf.mxu0
    %v1681 = vadd.f32 %v1541, %v1680
    %v1682 = vpop.f32.mrf.mxu0
    %v1683 = vadd.f32 %v1537, %v1682
    %v1684 = vpop.f32.mrf.mxu0
    %v1685 = vadd.f32 %v1541, %v1684
    %1686 = vmatprep.mubr.bf16.mxu0 0
    %1687 = vmatmul.mubr.bf16.gmra.mxu0 %v1503
    %v1688 = vpop.f32.mrf.mxu0
    %v1689 = vadd.f32 %v1537, %v1688
    %v1690 = vpop.f32.mrf.mxu0
    %v1691 = vadd.f32 %v1541, %v1690
    %v1692 = vpop.f32.mrf.mxu0
    %v1693 = vadd.f32 %v1537, %v1692
    %v1694 = vpop.f32.mrf.mxu0
    %v1695 = vadd.f32 %v1541, %v1694
    %1696 = vmatprep.mubr.bf16.mxu0 0
    %1697 = vmatmul.mubr.bf16.gmra.mxu0 %v1504
    %v1698 = vpop.f32.mrf.mxu0
    %v1699 = vadd.f32 %v1537, %v1698
    %v1700 = vpop.f32.mrf.mxu0
    %v1701 = vadd.f32 %v1541, %v1700
    %v1702 = vpop.f32.mrf.mxu0
    %v1703 = vadd.f32 %v1537, %v1702
    %v1704 = vpop.f32.mrf.mxu0
    %v1705 = vadd.f32 %v1541, %v1704
    %1706 = vmatprep.mubr.bf16.mxu0 0
    %1707 = vmatmul.mubr.bf16.gmra.mxu0 %v1505
    %v1708 = vpop.f32.mrf.mxu0
    %v1709 = vadd.f32 %v1537, %v1708
    %v1710 = vpop.f32.mrf.mxu0
    %v1711 = vadd.f32 %v1541, %v1710
    %v1712 = vpop.f32.mrf.mxu0
    %v1713 = vadd.f32 %v1537, %v1712
    %v1714 = vpop.f32.mrf.mxu0
    %v1715 = vadd.f32 %v1541, %v1714
    %1716 = vmatprep.mubr.bf16.mxu0 0
    %1717 = vmatmul.mubr.bf16.gmra.mxu0 %v1506
    %v1718 = vpop.f32.mrf.mxu0
    %v1719 = vadd.f32 %v1537, %v1718
    %v1720 = vpop.f32.mrf.mxu0
    %v1721 = vadd.f32 %v1541, %v1720
    %v1722 = vpop.f32.mrf.mxu0
    %v1723 = vadd.f32 %v1537, %v1722
    %v1724 = vpop.f32.mrf.mxu0
    %v1725 = vadd.f32 %v1541, %v1724
    %1726 = vmatprep.mubr.bf16.mxu0 0
    %1727 = vmatmul.mubr.bf16.gmra.mxu0 %v1507
    %v1728 = vpop.f32.mrf.mxu0
    %v1729 = vadd.f32 %v1537, %v1728
    %v1730 = vpop.f32.mrf.mxu0
    %v1731 = vadd.f32 %v1541, %v1730
    %v1732 = vpop.f32.mrf.mxu0
    %v1733 = vadd.f32 %v1537, %v1732
    %v1734 = vpop.f32.mrf.mxu0
    %v1735 = vadd.f32 %v1541, %v1734
    %1736 = vmatprep.mubr.bf16.mxu0 0
    %1737 = vmatmul.mubr.bf16.gmra.mxu0 %v1508
    %v1738 = vpop.f32.mrf.mxu0
    %v1739 = vadd.f32 %v1537, %v1738
    %v1740 = vpop.f32.mrf.mxu0
    %v1741 = vadd.f32 %v1541, %v1740
    %v1742 = vpop.f32.mrf.mxu0
    %v1743 = vadd.f32 %v1537, %v1742
    %v1744 = vpop.f32.mrf.mxu0
    %v1745 = vadd.f32 %v1541, %v1744
    %1746 = vmatprep.mubr.bf16.mxu0 0
    %1747 = vmatmul.mubr.bf16.gmra.mxu0 %v1509
    %v1748 = vpop.f32.mrf.mxu0
    %v1749 = vadd.f32 %v1537, %v1748
    %v1750 = vpop.f32.mrf.mxu0
    %v1751 = vadd.f32 %v1541, %v1750
    %v1752 = vpop.f32.mrf.mxu0
    %v1753 = vadd.f32 %v1537, %v1752
    %v1754 = vpop.f32.mrf.mxu0
    %v1755 = vadd.f32 %v1541, %v1754
    %1756 = vmatprep.mubr.bf16.mxu0 0
    %1757 = vmatmul.mubr.bf16.gmra.mxu0 %v1510
    %v1758 = vpop.f32.mrf.mxu0
    %v1759 = vadd.f32 %v1537, %v1758
    %v1760 = vpop.f32.mrf.mxu0
    %v1761 = vadd.f32 %v1541, %v1760
    %v1762 = vpop.f32.mrf.mxu0
    %v1763 = vadd.f32 %v1537, %v1762
    %v1764 = vpop.f32.mrf.mxu0
    %v1765 = vadd.f32 %v1541, %v1764
    %1766 = vmatprep.mubr.bf16.mxu0 0
    %1767 = vmatmul.mubr.bf16.gmra.mxu0 %v1511
    %v1768 = vpop.f32.mrf.mxu0
    %v1769 = vadd.f32 %v1537, %v1768
    %v1770 = vpop.f32.mrf.mxu0
    %v1771 = vadd.f32 %v1541, %v1770
    %v1772 = vpop.f32.mrf.mxu0
    %v1773 = vadd.f32 %v1537, %v1772
    %v1774 = vpop.f32.mrf.mxu0
    %v1775 = vadd.f32 %v1541, %v1774
    %1776 = vmatprep.mubr.bf16.mxu0 0
    %1777 = vmatmul.mubr.bf16.gmra.mxu0 %v1512
    %v1778 = vpop.f32.mrf.mxu0
    %v1779 = vadd.f32 %v1537, %v1778
    %v1780 = vpop.f32.mrf.mxu0
    %v1781 = vadd.f32 %v1541, %v1780
    %v1782 = vpop.f32.mrf.mxu0
    %v1783 = vadd.f32 %v1537, %v1782
    %v1784 = vpop.f32.mrf.mxu0
    %v1785 = vadd.f32 %v1541, %v1784
    %1786 = vmatprep.mubr.bf16.mxu0 0
    %1787 = vmatmul.mubr.bf16.gmra.mxu0 %v1513
    %v1788 = vpop.f32.mrf.mxu0
    %v1789 = vadd.f32 %v1537, %v1788
    %v1790 = vpop.f32.mrf.mxu0
    %v1791 = vadd.f32 %v1541, %v1790
    %v1792 = vpop.f32.mrf.mxu0
    %v1793 = vadd.f32 %v1537, %v1792
    %v1794 = vpop.f32.mrf.mxu0
    %v1795 = vadd.f32 %v1541, %v1794
    %1796 = vmatprep.mubr.bf16.mxu0 0
    %1797 = vmatmul.mubr.bf16.gmra.mxu0 %v1514
    %v1798 = vpop.f32.mrf.mxu0
    %v1799 = vadd.f32 %v1537, %v1798
    %v1800 = vpop.f32.mrf.mxu0
    %v1801 = vadd.f32 %v1541, %v1800
    %v1802 = vpop.f32.mrf.mxu0
    %v1803 = vadd.f32 %v1537, %v1802
    %v1804 = vpop.f32.mrf.mxu0
    %v1805 = vadd.f32 %v1541, %v1804
    %1806 = vmatprep.mubr.bf16.mxu0 0
    %1807 = vmatmul.mubr.bf16.gmra.mxu0 %v1515
    %v1808 = vpop.f32.mrf.mxu0
    %v1809 = vadd.f32 %v1537, %v1808
    %v1810 = vpop.f32.mrf.mxu0
    %v1811 = vadd.f32 %v1541, %v1810
    %v1812 = vpop.f32.mrf.mxu0
    %v1813 = vadd.f32 %v1537, %v1812
    %v1814 = vpop.f32.mrf.mxu0
    %v1815 = vadd.f32 %v1541, %v1814
    %1816 = vdwg.mxu0
    %v1817 = vmax.f32 %v1659, 0.0
    %v1818 = vmax.f32 %v1661, 0.0
    %v1819 = vmax.f32 %v1663, 0.0
    %v1820 = vmax.f32 %v1665, 0.0
    %v1821 = vmax.f32 %v1669, 0.0
    %v1822 = vmax.f32 %v1671, 0.0
    %v1823 = vmax.f32 %v1673, 0.0
    %v1824 = vmax.f32 %v1675, 0.0
    %v1825 = vmax.f32 %v1679, 0.0
    %v1826 = vmax.f32 %v1681, 0.0
    %v1827 = vmax.f32 %v1683, 0.0
    %v1828 = vmax.f32 %v1685, 0.0
    %v1829 = vmax.f32 %v1689, 0.0
    %v1830 = vmax.f32 %v1691, 0.0
    %v1831 = vmax.f32 %v1693, 0.0
    %v1832 = vmax.f32 %v1695, 0.0
    %v1833 = vmax.f32 %v1699, 0.0
    %v1834 = vmax.f32 %v1701, 0.0
    %v1835 = vmax.f32 %v1703, 0.0
    %v1836 = vmax.f32 %v1705, 0.0
    %v1837 = vmax.f32 %v1709, 0.0
    %v1838 = vmax.f32 %v1711, 0.0
    %v1839 = vmax.f32 %v1713, 0.0
    %v1840 = vmax.f32 %v1715, 0.0
    %v1841 = vmax.f32 %v1719, 0.0
    %v1842 = vmax.f32 %v1721, 0.0
    %v1843 = vmax.f32 %v1723, 0.0
    %v1844 = vmax.f32 %v1725, 0.0
    %v1845 = vmax.f32 %v1729, 0.0
    %v1846 = vmax.f32 %v1731, 0.0
    %v1847 = vmax.f32 %v1733, 0.0
    %v1848 = vmax.f32 %v1735, 0.0
    %v1849 = vmax.f32 %v1739, 0.0
    %v1850 = vmax.f32 %v1741, 0.0
    %v1851 = vmax.f32 %v1743, 0.0
    %v1852 = vmax.f32 %v1745, 0.0
    %v1853 = vmax.f32 %v1749, 0.0
    %v1854 = vmax.f32 %v1751, 0.0
    %v1855 = vmax.f32 %v1753, 0.0
    %v1856 = vmax.f32 %v1755, 0.0
    %v1857 = vmax.f32 %v1759, 0.0
    %v1858 = vmax.f32 %v1761, 0.0
    %v1859 = vmax.f32 %v1763, 0.0
    %v1860 = vmax.f32 %v1765, 0.0
    %v1861 = vmax.f32 %v1769, 0.0
    %v1862 = vmax.f32 %v1771, 0.0
    %v1863 = vmax.f32 %v1773, 0.0
    %v1864 = vmax.f32 %v1775, 0.0
    %v1865 = vmax.f32 %v1779, 0.0
    %v1866 = vmax.f32 %v1781, 0.0
    %v1867 = vmax.f32 %v1783, 0.0
    %v1868 = vmax.f32 %v1785, 0.0
    %v1869 = vmax.f32 %v1789, 0.0
    %v1870 = vmax.f32 %v1791, 0.0
    %v1871 = vmax.f32 %v1793, 0.0
    %v1872 = vmax.f32 %v1795, 0.0
    %v1873 = vmax.f32 %v1799, 0.0
    %v1874 = vmax.f32 %v1801, 0.0
    %v1875 = vmax.f32 %v1803, 0.0
    %v1876 = vmax.f32 %v1805, 0.0
    %v1877 = vmax.f32 %v1809, 0.0
    %v1878 = vmax.f32 %v1811, 0.0
    %v1879 = vmax.f32 %v1813, 0.0
    %v1880 = vmax.f32 %v1815, 0.0
    %v1881 = vpack.c.bf16 %v1819, %v1817
    %v1882 = vpack.c.bf16 %v1820, %v1818
    %v1883 = vpack.c.bf16 %v1823, %v1821
    %v1884 = vpack.c.bf16 %v1824, %v1822
    %v1885 = vpack.c.bf16 %v1827, %v1825
    %v1886 = vpack.c.bf16 %v1828, %v1826
    %v1887 = vpack.c.bf16 %v1831, %v1829
    %v1888 = vpack.c.bf16 %v1832, %v1830
    %v1889 = vpack.c.bf16 %v1835, %v1833
    %v1890 = vpack.c.bf16 %v1836, %v1834
    %v1891 = vpack.c.bf16 %v1839, %v1837
    %v1892 = vpack.c.bf16 %v1840, %v1838
    %v1893 = vpack.c.bf16 %v1843, %v1841
    %v1894 = vpack.c.bf16 %v1844, %v1842
    %v1895 = vpack.c.bf16 %v1847, %v1845
    %v1896 = vpack.c.bf16 %v1848, %v1846
    %v1897 = vpack.c.bf16 %v1851, %v1849
    %v1898 = vpack.c.bf16 %v1852, %v1850
    %v1899 = vpack.c.bf16 %v1855, %v1853
    %v1900 = vpack.c.bf16 %v1856, %v1854
    %v1901 = vpack.c.bf16 %v1859, %v1857
    %v1902 = vpack.c.bf16 %v1860, %v1858
    %v1903 = vpack.c.bf16 %v1863, %v1861
    %v1904 = vpack.c.bf16 %v1864, %v1862
    %v1905 = vpack.c.bf16 %v1867, %v1865
    %v1906 = vpack.c.bf16 %v1868, %v1866
    %v1907 = vpack.c.bf16 %v1871, %v1869
    %v1908 = vpack.c.bf16 %v1872, %v1870
    %v1909 = vpack.c.bf16 %v1875, %v1873
    %v1910 = vpack.c.bf16 %v1876, %v1874
    %v1911 = vpack.c.bf16 %v1879, %v1877
    %v1912 = vpack.c.bf16 %v1880, %v1878
    %v1913 = vld [vmem:[%s5] sm:$0xff]
    %v1914 = vld [vmem:[%s5 + $0x8] sm:$0xff]
    %v1915 = vld [vmem:[%s5 + $0x10] sm:$0xff]
    %v1916 = vld [vmem:[%s5 + $0x18] sm:$0xff]
    %v1917 = vld [vmem:[%s5 + $0x20] sm:$0xff]
    %v1918 = vld [vmem:[%s5 + $0x28] sm:$0xff]
    %v1919 = vld [vmem:[%s5 + $0x30] sm:$0xff]
    %v1920 = vld [vmem:[%s5 + $0x38] sm:$0xff]
    %v1921 = vld [vmem:[%s5 + $0x40] sm:$0xff]
    %v1922 = vld [vmem:[%s5 + $0x48] sm:$0xff]
    %v1923 = vld [vmem:[%s5 + $0x50] sm:$0xff]
    %v1924 = vld [vmem:[%s5 + $0x58] sm:$0xff]
    %v1925 = vld [vmem:[%s5 + $0x60] sm:$0xff]
    %v1926 = vld [vmem:[%s5 + $0x68] sm:$0xff]
    %v1927 = vld [vmem:[%s5 + $0x70] sm:$0xff]
    %v1928 = vld [vmem:[%s5 + $0x78] sm:$0xff]
    %v1929 = vld [vmem:[%s5 + $0x80] sm:$0xff]
    %v1930 = vld [vmem:[%s5 + $0x88] sm:$0xff]
    %v1931 = vld [vmem:[%s5 + $0x90] sm:$0xff]
    %v1932 = vld [vmem:[%s5 + $0x98] sm:$0xff]
    %v1933 = vld [vmem:[%s5 + $0xa0] sm:$0xff]
    %v1934 = vld [vmem:[%s5 + $0xa8] sm:$0xff]
    %v1935 = vld [vmem:[%s5 + $0xb0] sm:$0xff]
    %v1936 = vld [vmem:[%s5 + $0xb8] sm:$0xff]
    %v1937 = vld [vmem:[%s5 + $0xc0] sm:$0xff]
    %v1938 = vld [vmem:[%s5 + $0xc8] sm:$0xff]
    %v1939 = vld [vmem:[%s5 + $0xd0] sm:$0xff]
    %v1940 = vld [vmem:[%s5 + $0xd8] sm:$0xff]
    %v1941 = vld [vmem:[%s5 + $0xe0] sm:$0xff]
    %v1942 = vld [vmem:[%s5 + $0xe8] sm:$0xff]
    %v1943 = vld [vmem:[%s5 + $0xf0] sm:$0xff]
    %v1944 = vld [vmem:[%s5 + $0xf8] sm:$0xff]
    %v1945 = vld [vmem:[%s5 + $0x100] sm:$0xff]
    %v1946 = vld [vmem:[%s5 + $0x108] sm:$0xff]
    %v1947 = vld [vmem:[%s5 + $0x110] sm:$0xff]
    %v1948 = vld [vmem:[%s5 + $0x118] sm:$0xff]
    %v1949 = vld [vmem:[%s5 + $0x120] sm:$0xff]
    %v1950 = vld [vmem:[%s5 + $0x128] sm:$0xff]
    %v1951 = vld [vmem:[%s5 + $0x130] sm:$0xff]
    %v1952 = vld [vmem:[%s5 + $0x138] sm:$0xff]
    %v1953 = vld [vmem:[%s5 + $0x140] sm:$0xff]
    %v1954 = vld [vmem:[%s5 + $0x148] sm:$0xff]
    %v1955 = vld [vmem:[%s5 + $0x150] sm:$0xff]
    %v1956 = vld [vmem:[%s5 + $0x158] sm:$0xff]
    %v1957 = vld [vmem:[%s5 + $0x160] sm:$0xff]
    %v1958 = vld [vmem:[%s5 + $0x168] sm:$0xff]
    %v1959 = vld [vmem:[%s5 + $0x170] sm:$0xff]
    %v1960 = vld [vmem:[%s5 + $0x178] sm:$0xff]
    %v1961 = vld [vmem:[%s5 + $0x180] sm:$0xff]
    %v1962 = vld [vmem:[%s5 + $0x188] sm:$0xff]
    %v1963 = vld [vmem:[%s5 + $0x190] sm:$0xff]
    %v1964 = vld [vmem:[%s5 + $0x198] sm:$0xff]
    %v1965 = vld [vmem:[%s5 + $0x1a0] sm:$0xff]
    %v1966 = vld [vmem:[%s5 + $0x1a8] sm:$0xff]
    %v1967 = vld [vmem:[%s5 + $0x1b0] sm:$0xff]
    %v1968 = vld [vmem:[%s5 + $0x1b8] sm:$0xff]
    %v1969 = vld [vmem:[%s5 + $0x1c0] sm:$0xff]
    %v1970 = vld [vmem:[%s5 + $0x1c8] sm:$0xff]
    %v1971 = vld [vmem:[%s5 + $0x1d0] sm:$0xff]
    %v1972 = vld [vmem:[%s5 + $0x1d8] sm:$0xff]
    %v1973 = vld [vmem:[%s5 + $0x1e0] sm:$0xff]
    %v1974 = vld [vmem:[%s5 + $0x1e8] sm:$0xff]
    %v1975 = vld [vmem:[%s5 + $0x1f0] sm:$0xff]
    %v1976 = vld [vmem:[%s5 + $0x1f8] sm:$0xff]
    %v1977 = vld [vmem:[%s6] sm:$0xf]
    %v1979 = vlaneseq
    %v1980 = vshrl.u32 %v1979, 7
    %v1981 = vsub.s32 0, %v1980
    %v1982 = vrot.slane %v1977, %v1981
    %v1983 = vlaneseq
    %v1984 = vshrl.u32 %v1983, 7
    %v1985 = vsub.s32 1, %v1984
    %v1986 = vrot.slane %v1977, %v1985
    %v1987 = vlaneseq
    %v1988 = vshrl.u32 %v1987, 7
    %v1989 = vsub.s32 2, %v1988
    %v1990 = vrot.slane %v1977, %v1989
    %v1991 = vlaneseq
    %v1992 = vshrl.u32 %v1991, 7
    %v1993 = vsub.s32 3, %v1992
    %v1994 = vrot.slane %v1977, %v1993
    %v2063 = vunpack.c.l.b16 %v1913
    %v2064 = vunpack.c.h.b16 %v1913
    %v2065 = vunpack.c.l.b16 %v1914
    %v2066 = vunpack.c.h.b16 %v1914
    %v2067 = vunpack.c.l.b16 %v1915
    %v2068 = vunpack.c.h.b16 %v1915
    %v2069 = vunpack.c.l.b16 %v1916
    %v2070 = vunpack.c.h.b16 %v1916
    %v2071 = vunpack.c.l.b16 %v1917
    %v2072 = vunpack.c.h.b16 %v1917
    %v2073 = vunpack.c.l.b16 %v1918
    %v2074 = vunpack.c.h.b16 %v1918
    %v2075 = vunpack.c.l.b16 %v1919
    %v2076 = vunpack.c.h.b16 %v1919
    %v2077 = vunpack.c.l.b16 %v1920
    %v2078 = vunpack.c.h.b16 %v1920
    %v2079 = vunpack.c.l.b16 %v1921
    %v2080 = vunpack.c.h.b16 %v1921
    %v2081 = vunpack.c.l.b16 %v1922
    %v2082 = vunpack.c.h.b16 %v1922
    %v2083 = vunpack.c.l.b16 %v1923
    %v2084 = vunpack.c.h.b16 %v1923
    %v2085 = vunpack.c.l.b16 %v1924
    %v2086 = vunpack.c.h.b16 %v1924
    %v2087 = vunpack.c.l.b16 %v1925
    %v2088 = vunpack.c.h.b16 %v1925
    %v2089 = vunpack.c.l.b16 %v1926
    %v2090 = vunpack.c.h.b16 %v1926
    %v2091 = vunpack.c.l.b16 %v1927
    %v2092 = vunpack.c.h.b16 %v1927
    %v2093 = vunpack.c.l.b16 %v1928
    %v2094 = vunpack.c.h.b16 %v1928
    %v2095 = vunpack.c.l.b16 %v1929
    %v2096 = vunpack.c.h.b16 %v1929
    %v2097 = vunpack.c.l.b16 %v1930
    %v2098 = vunpack.c.h.b16 %v1930
    %v2099 = vunpack.c.l.b16 %v1931
    %v2100 = vunpack.c.h.b16 %v1931
    %v2101 = vunpack.c.l.b16 %v1932
    %v2102 = vunpack.c.h.b16 %v1932
    %v2103 = vunpack.c.l.b16 %v1933
    %v2104 = vunpack.c.h.b16 %v1933
    %v2105 = vunpack.c.l.b16 %v1934
    %v2106 = vunpack.c.h.b16 %v1934
    %v2107 = vunpack.c.l.b16 %v1935
    %v2108 = vunpack.c.h.b16 %v1935
    %v2109 = vunpack.c.l.b16 %v1936
    %v2110 = vunpack.c.h.b16 %v1936
    %v2111 = vunpack.c.l.b16 %v1937
    %v2112 = vunpack.c.h.b16 %v1937
    %v2113 = vunpack.c.l.b16 %v1938
    %v2114 = vunpack.c.h.b16 %v1938
    %v2115 = vunpack.c.l.b16 %v1939
    %v2116 = vunpack.c.h.b16 %v1939
    %v2117 = vunpack.c.l.b16 %v1940
    %v2118 = vunpack.c.h.b16 %v1940
    %v2119 = vunpack.c.l.b16 %v1941
    %v2120 = vunpack.c.h.b16 %v1941
    %v2121 = vunpack.c.l.b16 %v1942
    %v2122 = vunpack.c.h.b16 %v1942
    %v2123 = vunpack.c.l.b16 %v1943
    %v2124 = vunpack.c.h.b16 %v1943
    %v2125 = vunpack.c.l.b16 %v1944
    %v2126 = vunpack.c.h.b16 %v1944
    %v2127 = vunpack.c.l.b16 %v1945
    %v2128 = vunpack.c.h.b16 %v1945
    %v2129 = vunpack.c.l.b16 %v1946
    %v2130 = vunpack.c.h.b16 %v1946
    %v2131 = vunpack.c.l.b16 %v1947
    %v2132 = vunpack.c.h.b16 %v1947
    %v2133 = vunpack.c.l.b16 %v1948
    %v2134 = vunpack.c.h.b16 %v1948
    %v2135 = vunpack.c.l.b16 %v1949
    %v2136 = vunpack.c.h.b16 %v1949
    %v2137 = vunpack.c.l.b16 %v1950
    %v2138 = vunpack.c.h.b16 %v1950
    %v2139 = vunpack.c.l.b16 %v1951
    %v2140 = vunpack.c.h.b16 %v1951
    %v2141 = vunpack.c.l.b16 %v1952
    %v2142 = vunpack.c.h.b16 %v1952
    %v2143 = vunpack.c.l.b16 %v1953
    %v2144 = vunpack.c.h.b16 %v1953
    %v2145 = vunpack.c.l.b16 %v1954
    %v2146 = vunpack.c.h.b16 %v1954
    %v2147 = vunpack.c.l.b16 %v1955
    %v2148 = vunpack.c.h.b16 %v1955
    %v2149 = vunpack.c.l.b16 %v1956
    %v2150 = vunpack.c.h.b16 %v1956
    %v2151 = vunpack.c.l.b16 %v1957
    %v2152 = vunpack.c.h.b16 %v1957
    %v2153 = vunpack.c.l.b16 %v1958
    %v2154 = vunpack.c.h.b16 %v1958
    %v2155 = vunpack.c.l.b16 %v1959
    %v2156 = vunpack.c.h.b16 %v1959
    %v2157 = vunpack.c.l.b16 %v1960
    %v2158 = vunpack.c.h.b16 %v1960
    %v2159 = vunpack.c.l.b16 %v1961
    %v2160 = vunpack.c.h.b16 %v1961
    %v2161 = vunpack.c.l.b16 %v1962
    %v2162 = vunpack.c.h.b16 %v1962
    %v2163 = vunpack.c.l.b16 %v1963
    %v2164 = vunpack.c.h.b16 %v1963
    %v2165 = vunpack.c.l.b16 %v1964
    %v2166 = vunpack.c.h.b16 %v1964
    %v2167 = vunpack.c.l.b16 %v1965
    %v2168 = vunpack.c.h.b16 %v1965
    %v2169 = vunpack.c.l.b16 %v1966
    %v2170 = vunpack.c.h.b16 %v1966
    %v2171 = vunpack.c.l.b16 %v1967
    %v2172 = vunpack.c.h.b16 %v1967
    %v2173 = vunpack.c.l.b16 %v1968
    %v2174 = vunpack.c.h.b16 %v1968
    %v2175 = vunpack.c.l.b16 %v1969
    %v2176 = vunpack.c.h.b16 %v1969
    %v2177 = vunpack.c.l.b16 %v1970
    %v2178 = vunpack.c.h.b16 %v1970
    %v2179 = vunpack.c.l.b16 %v1971
    %v2180 = vunpack.c.h.b16 %v1971
    %v2181 = vunpack.c.l.b16 %v1972
    %v2182 = vunpack.c.h.b16 %v1972
    %v2183 = vunpack.c.l.b16 %v1973
    %v2184 = vunpack.c.h.b16 %v1973
    %v2185 = vunpack.c.l.b16 %v1974
    %v2186 = vunpack.c.h.b16 %v1974
    %v2187 = vunpack.c.l.b16 %v1975
    %v2188 = vunpack.c.h.b16 %v1975
    %v2189 = vunpack.c.l.b16 %v1976
    %v2190 = vunpack.c.h.b16 %v1976
    %v2191 = vpack.c.b16 %v2067, %v2063
    %v2192 = vpack.c.b16 %v2068, %v2064
    %v2193 = vpack.c.b16 %v2069, %v2065
    %v2194 = vpack.c.b16 %v2070, %v2066
    %v2195 = vpack.c.b16 %v2075, %v2071
    %v2196 = vpack.c.b16 %v2076, %v2072
    %v2197 = vpack.c.b16 %v2077, %v2073
    %v2198 = vpack.c.b16 %v2078, %v2074
    %v2199 = vpack.c.b16 %v2083, %v2079
    %v2200 = vpack.c.b16 %v2084, %v2080
    %v2201 = vpack.c.b16 %v2085, %v2081
    %v2202 = vpack.c.b16 %v2086, %v2082
    %v2203 = vpack.c.b16 %v2091, %v2087
    %v2204 = vpack.c.b16 %v2092, %v2088
    %v2205 = vpack.c.b16 %v2093, %v2089
    %v2206 = vpack.c.b16 %v2094, %v2090
    %v2207 = vpack.c.b16 %v2099, %v2095
    %v2208 = vpack.c.b16 %v2100, %v2096
    %v2209 = vpack.c.b16 %v2101, %v2097
    %v2210 = vpack.c.b16 %v2102, %v2098
    %v2211 = vpack.c.b16 %v2107, %v2103
    %v2212 = vpack.c.b16 %v2108, %v2104
    %v2213 = vpack.c.b16 %v2109, %v2105
    %v2214 = vpack.c.b16 %v2110, %v2106
    %v2215 = vpack.c.b16 %v2115, %v2111
    %v2216 = vpack.c.b16 %v2116, %v2112
    %v2217 = vpack.c.b16 %v2117, %v2113
    %v2218 = vpack.c.b16 %v2118, %v2114
    %v2219 = vpack.c.b16 %v2123, %v2119
    %v2220 = vpack.c.b16 %v2124, %v2120
    %v2221 = vpack.c.b16 %v2125, %v2121
    %v2222 = vpack.c.b16 %v2126, %v2122
    %v2223 = vpack.c.b16 %v2131, %v2127
    %v2224 = vpack.c.b16 %v2132, %v2128
    %v2225 = vpack.c.b16 %v2133, %v2129
    %v2226 = vpack.c.b16 %v2134, %v2130
    %v2227 = vpack.c.b16 %v2139, %v2135
    %v2228 = vpack.c.b16 %v2140, %v2136
    %v2229 = vpack.c.b16 %v2141, %v2137
    %v2230 = vpack.c.b16 %v2142, %v2138
    %v2231 = vpack.c.b16 %v2147, %v2143
    %v2232 = vpack.c.b16 %v2148, %v2144
    %v2233 = vpack.c.b16 %v2149, %v2145
    %v2234 = vpack.c.b16 %v2150, %v2146
    %v2235 = vpack.c.b16 %v2155, %v2151
    %v2236 = vpack.c.b16 %v2156, %v2152
    %v2237 = vpack.c.b16 %v2157, %v2153
    %v2238 = vpack.c.b16 %v2158, %v2154
    %v2239 = vpack.c.b16 %v2163, %v2159
    %v2240 = vpack.c.b16 %v2164, %v2160
    %v2241 = vpack.c.b16 %v2165, %v2161
    %v2242 = vpack.c.b16 %v2166, %v2162
    %v2243 = vpack.c.b16 %v2171, %v2167
    %v2244 = vpack.c.b16 %v2172, %v2168
    %v2245 = vpack.c.b16 %v2173, %v2169
    %v2246 = vpack.c.b16 %v2174, %v2170
    %v2247 = vpack.c.b16 %v2179, %v2175
    %v2248 = vpack.c.b16 %v2180, %v2176
    %v2249 = vpack.c.b16 %v2181, %v2177
    %v2250 = vpack.c.b16 %v2182, %v2178
    %v2251 = vpack.c.b16 %v2187, %v2183
    %v2252 = vpack.c.b16 %v2188, %v2184
    %v2253 = vpack.c.b16 %v2189, %v2185
    %v2254 = vpack.c.b16 %v2190, %v2186
    %2319 = vmatprep.subr.bf16.mxu0 %v2220
    %2320 = vmatpush1.bf16.msra.mxu0 %v2219
    %2321 = vmatprep.subr.bf16.mxu0 %v2216
    %2322 = vmatpush1.bf16.msra.mxu0 %v2215
    %2323 = vmatprep.subr.bf16.mxu0 %v2212
    %2324 = vmatpush1.bf16.msra.mxu0 %v2211
    %2325 = vmatprep.subr.bf16.mxu0 %v2208
    %2326 = vmatpush1.bf16.msra.mxu0 %v2207
    %2327 = vmatprep.subr.bf16.mxu0 %v2204
    %2328 = vmatpush1.bf16.msra.mxu0 %v2203
    %2329 = vmatprep.subr.bf16.mxu0 %v2200
    %2330 = vmatpush1.bf16.msra.mxu0 %v2199
    %2331 = vmatprep.subr.bf16.mxu0 %v2196
    %2332 = vmatpush1.bf16.msra.mxu0 %v2195
    %2333 = vmatprep.subr.bf16.mxu0 %v2192
    %2334 = vmatpush1.bf16.msra.mxu0 %v2191
    %2335 = vmatprep.subr.bf16.mxu0 %v2252
    %2336 = vmatpush2.bf16.msra.mxu0 %v2251
    %2337 = vmatprep.subr.bf16.mxu0 %v2248
    %2338 = vmatpush2.bf16.msra.mxu0 %v2247
    %2339 = vmatprep.subr.bf16.mxu0 %v2244
    %2340 = vmatpush2.bf16.msra.mxu0 %v2243
    %2341 = vmatprep.subr.bf16.mxu0 %v2240
    %2342 = vmatpush2.bf16.msra.mxu0 %v2239
    %2343 = vmatprep.subr.bf16.mxu0 %v2236
    %2344 = vmatpush2.bf16.msra.mxu0 %v2235
    %2345 = vmatprep.subr.bf16.mxu0 %v2232
    %2346 = vmatpush2.bf16.msra.mxu0 %v2231
    %2347 = vmatprep.subr.bf16.mxu0 %v2228
    %2348 = vmatpush2.bf16.msra.mxu0 %v2227
    %2349 = vmatprep.subr.bf16.mxu0 %v2224
    %2350 = vmatpush2.bf16.msra.mxu0 %v2223
    %2351 = vmatprep.mubr.bf16.mxu0 %v1882
    %2352 = vmatmul.mubr.bf16.gmra.mxu0 %v1881
    %v2353 = vpop.f32.mrf.mxu0
    %v2354 = vadd.f32 %v1982, %v2353
    %v2355 = vpop.f32.mrf.mxu0
    %v2356 = vadd.f32 %v1986, %v2355
    %v2357 = vpop.f32.mrf.mxu0
    %v2358 = vadd.f32 %v1982, %v2357
    %v2359 = vpop.f32.mrf.mxu0
    %v2360 = vadd.f32 %v1986, %v2359
    %2361 = vmatprep.mubr.bf16.mxu0 %v1884
    %2362 = vmatmul.mubr.bf16.gmra.mxu0 %v1883
    %v2363 = vpop.f32.mrf.mxu0
    %v2364 = vadd.f32 %v1982, %v2363
    %v2365 = vpop.f32.mrf.mxu0
    %v2366 = vadd.f32 %v1986, %v2365
    %v2367 = vpop.f32.mrf.mxu0
    %v2368 = vadd.f32 %v1982, %v2367
    %v2369 = vpop.f32.mrf.mxu0
    %v2370 = vadd.f32 %v1986, %v2369
    %2371 = vmatprep.mubr.bf16.mxu0 %v1886
    %2372 = vmatmul.mubr.bf16.gmra.mxu0 %v1885
    %v2373 = vpop.f32.mrf.mxu0
    %v2374 = vadd.f32 %v1982, %v2373
    %v2375 = vpop.f32.mrf.mxu0
    %v2376 = vadd.f32 %v1986, %v2375
    %v2377 = vpop.f32.mrf.mxu0
    %v2378 = vadd.f32 %v1982, %v2377
    %v2379 = vpop.f32.mrf.mxu0
    %v2380 = vadd.f32 %v1986, %v2379
    %2381 = vmatprep.mubr.bf16.mxu0 %v1888
    %2382 = vmatmul.mubr.bf16.gmra.mxu0 %v1887
    %v2383 = vpop.f32.mrf.mxu0
    %v2384 = vadd.f32 %v1982, %v2383
    %v2385 = vpop.f32.mrf.mxu0
    %v2386 = vadd.f32 %v1986, %v2385
    %v2387 = vpop.f32.mrf.mxu0
    %v2388 = vadd.f32 %v1982, %v2387
    %v2389 = vpop.f32.mrf.mxu0
    %v2390 = vadd.f32 %v1986, %v2389
    %2391 = vmatprep.mubr.bf16.mxu0 %v1890
    %2392 = vmatmul.mubr.bf16.gmra.mxu0 %v1889
    %v2393 = vpop.f32.mrf.mxu0
    %v2394 = vadd.f32 %v1982, %v2393
    %v2395 = vpop.f32.mrf.mxu0
    %v2396 = vadd.f32 %v1986, %v2395
    %v2397 = vpop.f32.mrf.mxu0
    %v2398 = vadd.f32 %v1982, %v2397
    %v2399 = vpop.f32.mrf.mxu0
    %v2400 = vadd.f32 %v1986, %v2399
    %2401 = vmatprep.mubr.bf16.mxu0 %v1892
    %2402 = vmatmul.mubr.bf16.gmra.mxu0 %v1891
    %v2403 = vpop.f32.mrf.mxu0
    %v2404 = vadd.f32 %v1982, %v2403
    %v2405 = vpop.f32.mrf.mxu0
    %v2406 = vadd.f32 %v1986, %v2405
    %v2407 = vpop.f32.mrf.mxu0
    %v2408 = vadd.f32 %v1982, %v2407
    %v2409 = vpop.f32.mrf.mxu0
    %v2410 = vadd.f32 %v1986, %v2409
    %2411 = vmatprep.mubr.bf16.mxu0 %v1894
    %2412 = vmatmul.mubr.bf16.gmra.mxu0 %v1893
    %v2413 = vpop.f32.mrf.mxu0
    %v2414 = vadd.f32 %v1982, %v2413
    %v2415 = vpop.f32.mrf.mxu0
    %v2416 = vadd.f32 %v1986, %v2415
    %v2417 = vpop.f32.mrf.mxu0
    %v2418 = vadd.f32 %v1982, %v2417
    %v2419 = vpop.f32.mrf.mxu0
    %v2420 = vadd.f32 %v1986, %v2419
    %2421 = vmatprep.mubr.bf16.mxu0 %v1896
    %2422 = vmatmul.mubr.bf16.gmra.mxu0 %v1895
    %v2423 = vpop.f32.mrf.mxu0
    %v2424 = vadd.f32 %v1982, %v2423
    %v2425 = vpop.f32.mrf.mxu0
    %v2426 = vadd.f32 %v1986, %v2425
    %v2427 = vpop.f32.mrf.mxu0
    %v2428 = vadd.f32 %v1982, %v2427
    %v2429 = vpop.f32.mrf.mxu0
    %v2430 = vadd.f32 %v1986, %v2429
    %2431 = vmatprep.mubr.bf16.mxu0 %v1898
    %2432 = vmatmul.mubr.bf16.gmra.mxu0 %v1897
    %v2433 = vpop.f32.mrf.mxu0
    %v2434 = vadd.f32 %v1982, %v2433
    %v2435 = vpop.f32.mrf.mxu0
    %v2436 = vadd.f32 %v1986, %v2435
    %v2437 = vpop.f32.mrf.mxu0
    %v2438 = vadd.f32 %v1982, %v2437
    %v2439 = vpop.f32.mrf.mxu0
    %v2440 = vadd.f32 %v1986, %v2439
    %2441 = vmatprep.mubr.bf16.mxu0 %v1900
    %2442 = vmatmul.mubr.bf16.gmra.mxu0 %v1899
    %v2443 = vpop.f32.mrf.mxu0
    %v2444 = vadd.f32 %v1982, %v2443
    %v2445 = vpop.f32.mrf.mxu0
    %v2446 = vadd.f32 %v1986, %v2445
    %v2447 = vpop.f32.mrf.mxu0
    %v2448 = vadd.f32 %v1982, %v2447
    %v2449 = vpop.f32.mrf.mxu0
    %v2450 = vadd.f32 %v1986, %v2449
    %2451 = vmatprep.mubr.bf16.mxu0 %v1902
    %2452 = vmatmul.mubr.bf16.gmra.mxu0 %v1901
    %v2453 = vpop.f32.mrf.mxu0
    %v2454 = vadd.f32 %v1982, %v2453
    %v2455 = vpop.f32.mrf.mxu0
    %v2456 = vadd.f32 %v1986, %v2455
    %v2457 = vpop.f32.mrf.mxu0
    %v2458 = vadd.f32 %v1982, %v2457
    %v2459 = vpop.f32.mrf.mxu0
    %v2460 = vadd.f32 %v1986, %v2459
    %2461 = vmatprep.mubr.bf16.mxu0 %v1904
    %2462 = vmatmul.mubr.bf16.gmra.mxu0 %v1903
    %v2463 = vpop.f32.mrf.mxu0
    %v2464 = vadd.f32 %v1982, %v2463
    %v2465 = vpop.f32.mrf.mxu0
    %v2466 = vadd.f32 %v1986, %v2465
    %v2467 = vpop.f32.mrf.mxu0
    %v2468 = vadd.f32 %v1982, %v2467
    %v2469 = vpop.f32.mrf.mxu0
    %v2470 = vadd.f32 %v1986, %v2469
    %2471 = vmatprep.mubr.bf16.mxu0 %v1906
    %2472 = vmatmul.mubr.bf16.gmra.mxu0 %v1905
    %v2473 = vpop.f32.mrf.mxu0
    %v2474 = vadd.f32 %v1982, %v2473
    %v2475 = vpop.f32.mrf.mxu0
    %v2476 = vadd.f32 %v1986, %v2475
    %v2477 = vpop.f32.mrf.mxu0
    %v2478 = vadd.f32 %v1982, %v2477
    %v2479 = vpop.f32.mrf.mxu0
    %v2480 = vadd.f32 %v1986, %v2479
    %2481 = vmatprep.mubr.bf16.mxu0 %v1908
    %2482 = vmatmul.mubr.bf16.gmra.mxu0 %v1907
    %v2483 = vpop.f32.mrf.mxu0
    %v2484 = vadd.f32 %v1982, %v2483
    %v2485 = vpop.f32.mrf.mxu0
    %v2486 = vadd.f32 %v1986, %v2485
    %v2487 = vpop.f32.mrf.mxu0
    %v2488 = vadd.f32 %v1982, %v2487
    %v2489 = vpop.f32.mrf.mxu0
    %v2490 = vadd.f32 %v1986, %v2489
    %2491 = vmatprep.mubr.bf16.mxu0 %v1910
    %2492 = vmatmul.mubr.bf16.gmra.mxu0 %v1909
    %v2493 = vpop.f32.mrf.mxu0
    %v2494 = vadd.f32 %v1982, %v2493
    %v2495 = vpop.f32.mrf.mxu0
    %v2496 = vadd.f32 %v1986, %v2495
    %v2497 = vpop.f32.mrf.mxu0
    %v2498 = vadd.f32 %v1982, %v2497
    %v2499 = vpop.f32.mrf.mxu0
    %v2500 = vadd.f32 %v1986, %v2499
    %2501 = vmatprep.mubr.bf16.mxu0 %v1912
    %2502 = vmatmul.mubr.bf16.gmra.mxu0 %v1911
    %v2503 = vpop.f32.mrf.mxu0
    %v2504 = vadd.f32 %v1982, %v2503
    %v2505 = vpop.f32.mrf.mxu0
    %v2506 = vadd.f32 %v1986, %v2505
    %v2507 = vpop.f32.mrf.mxu0
    %v2508 = vadd.f32 %v1982, %v2507
    %v2509 = vpop.f32.mrf.mxu0
    %v2510 = vadd.f32 %v1986, %v2509
    %2511 = vdwg.mxu0
    %2512 = vmatprep.subr.bf16.mxu0 %v2222
    %2513 = vmatpush1.bf16.msra.mxu0 %v2221
    %2514 = vmatprep.subr.bf16.mxu0 %v2218
    %2515 = vmatpush1.bf16.msra.mxu0 %v2217
    %2516 = vmatprep.subr.bf16.mxu0 %v2214
    %2517 = vmatpush1.bf16.msra.mxu0 %v2213
    %2518 = vmatprep.subr.bf16.mxu0 %v2210
    %2519 = vmatpush1.bf16.msra.mxu0 %v2209
    %2520 = vmatprep.subr.bf16.mxu0 %v2206
    %2521 = vmatpush1.bf16.msra.mxu0 %v2205
    %2522 = vmatprep.subr.bf16.mxu0 %v2202
    %2523 = vmatpush1.bf16.msra.mxu0 %v2201
    %2524 = vmatprep.subr.bf16.mxu0 %v2198
    %2525 = vmatpush1.bf16.msra.mxu0 %v2197
    %2526 = vmatprep.subr.bf16.mxu0 %v2194
    %2527 = vmatpush1.bf16.msra.mxu0 %v2193
    %2528 = vmatprep.subr.bf16.mxu0 %v2254
    %2529 = vmatpush2.bf16.msra.mxu0 %v2253
    %2530 = vmatprep.subr.bf16.mxu0 %v2250
    %2531 = vmatpush2.bf16.msra.mxu0 %v2249
    %2532 = vmatprep.subr.bf16.mxu0 %v2246
    %2533 = vmatpush2.bf16.msra.mxu0 %v2245
    %2534 = vmatprep.subr.bf16.mxu0 %v2242
    %2535 = vmatpush2.bf16.msra.mxu0 %v2241
    %2536 = vmatprep.subr.bf16.mxu0 %v2238
    %2537 = vmatpush2.bf16.msra.mxu0 %v2237
    %2538 = vmatprep.subr.bf16.mxu0 %v2234
    %2539 = vmatpush2.bf16.msra.mxu0 %v2233
    %2540 = vmatprep.subr.bf16.mxu0 %v2230
    %2541 = vmatpush2.bf16.msra.mxu0 %v2229
    %2542 = vmatprep.subr.bf16.mxu0 %v2226
    %2543 = vmatpush2.bf16.msra.mxu0 %v2225
    %2544 = vmatprep.mubr.bf16.mxu0 %v1882
    %2545 = vmatmul.mubr.bf16.gmra.mxu0 %v1881
    %v2546 = vpop.f32.mrf.mxu0
    %v2547 = vadd.f32 %v1990, %v2546
    %v2548 = vpop.f32.mrf.mxu0
    %v2549 = vadd.f32 %v1994, %v2548
    %v2550 = vpop.f32.mrf.mxu0
    %v2551 = vadd.f32 %v1990, %v2550
    %v2552 = vpop.f32.mrf.mxu0
    %v2553 = vadd.f32 %v1994, %v2552
    %2554 = vmatprep.mubr.bf16.mxu0 %v1884
    %2555 = vmatmul.mubr.bf16.gmra.mxu0 %v1883
    %v2556 = vpop.f32.mrf.mxu0
    %v2557 = vadd.f32 %v1990, %v2556
    %v2558 = vpop.f32.mrf.mxu0
    %v2559 = vadd.f32 %v1994, %v2558
    %v2560 = vpop.f32.mrf.mxu0
    %v2561 = vadd.f32 %v1990, %v2560
    %v2562 = vpop.f32.mrf.mxu0
    %v2563 = vadd.f32 %v1994, %v2562
    %2564 = vmatprep.mubr.bf16.mxu0 %v1886
    %2565 = vmatmul.mubr.bf16.gmra.mxu0 %v1885
    %v2566 = vpop.f32.mrf.mxu0
    %v2567 = vadd.f32 %v1990, %v2566
    %v2568 = vpop.f32.mrf.mxu0
    %v2569 = vadd.f32 %v1994, %v2568
    %v2570 = vpop.f32.mrf.mxu0
    %v2571 = vadd.f32 %v1990, %v2570
    %v2572 = vpop.f32.mrf.mxu0
    %v2573 = vadd.f32 %v1994, %v2572
    %2574 = vmatprep.mubr.bf16.mxu0 %v1888
    %2575 = vmatmul.mubr.bf16.gmra.mxu0 %v1887
    %v2576 = vpop.f32.mrf.mxu0
    %v2577 = vadd.f32 %v1990, %v2576
    %v2578 = vpop.f32.mrf.mxu0
    %v2579 = vadd.f32 %v1994, %v2578
    %v2580 = vpop.f32.mrf.mxu0
    %v2581 = vadd.f32 %v1990, %v2580
    %v2582 = vpop.f32.mrf.mxu0
    %v2583 = vadd.f32 %v1994, %v2582
    %2584 = vmatprep.mubr.bf16.mxu0 %v1890
    %2585 = vmatmul.mubr.bf16.gmra.mxu0 %v1889
    %v2586 = vpop.f32.mrf.mxu0
    %v2587 = vadd.f32 %v1990, %v2586
    %v2588 = vpop.f32.mrf.mxu0
    %v2589 = vadd.f32 %v1994, %v2588
    %v2590 = vpop.f32.mrf.mxu0
    %v2591 = vadd.f32 %v1990, %v2590
    %v2592 = vpop.f32.mrf.mxu0
    %v2593 = vadd.f32 %v1994, %v2592
    %2594 = vmatprep.mubr.bf16.mxu0 %v1892
    %2595 = vmatmul.mubr.bf16.gmra.mxu0 %v1891
    %v2596 = vpop.f32.mrf.mxu0
    %v2597 = vadd.f32 %v1990, %v2596
    %v2598 = vpop.f32.mrf.mxu0
    %v2599 = vadd.f32 %v1994, %v2598
    %v2600 = vpop.f32.mrf.mxu0
    %v2601 = vadd.f32 %v1990, %v2600
    %v2602 = vpop.f32.mrf.mxu0
    %v2603 = vadd.f32 %v1994, %v2602
    %2604 = vmatprep.mubr.bf16.mxu0 %v1894
    %2605 = vmatmul.mubr.bf16.gmra.mxu0 %v1893
    %v2606 = vpop.f32.mrf.mxu0
    %v2607 = vadd.f32 %v1990, %v2606
    %v2608 = vpop.f32.mrf.mxu0
    %v2609 = vadd.f32 %v1994, %v2608
    %v2610 = vpop.f32.mrf.mxu0
    %v2611 = vadd.f32 %v1990, %v2610
    %v2612 = vpop.f32.mrf.mxu0
    %v2613 = vadd.f32 %v1994, %v2612
    %2614 = vmatprep.mubr.bf16.mxu0 %v1896
    %2615 = vmatmul.mubr.bf16.gmra.mxu0 %v1895
    %v2616 = vpop.f32.mrf.mxu0
    %v2617 = vadd.f32 %v1990, %v2616
    %v2618 = vpop.f32.mrf.mxu0
    %v2619 = vadd.f32 %v1994, %v2618
    %v2620 = vpop.f32.mrf.mxu0
    %v2621 = vadd.f32 %v1990, %v2620
    %v2622 = vpop.f32.mrf.mxu0
    %v2623 = vadd.f32 %v1994, %v2622
    %2624 = vmatprep.mubr.bf16.mxu0 %v1898
    %2625 = vmatmul.mubr.bf16.gmra.mxu0 %v1897
    %v2626 = vpop.f32.mrf.mxu0
    %v2627 = vadd.f32 %v1990, %v2626
    %v2628 = vpop.f32.mrf.mxu0
    %v2629 = vadd.f32 %v1994, %v2628
    %v2630 = vpop.f32.mrf.mxu0
    %v2631 = vadd.f32 %v1990, %v2630
    %v2632 = vpop.f32.mrf.mxu0
    %v2633 = vadd.f32 %v1994, %v2632
    %2634 = vmatprep.mubr.bf16.mxu0 %v1900
    %2635 = vmatmul.mubr.bf16.gmra.mxu0 %v1899
    %v2636 = vpop.f32.mrf.mxu0
    %v2637 = vadd.f32 %v1990, %v2636
    %v2638 = vpop.f32.mrf.mxu0
    %v2639 = vadd.f32 %v1994, %v2638
    %v2640 = vpop.f32.mrf.mxu0
    %v2641 = vadd.f32 %v1990, %v2640
    %v2642 = vpop.f32.mrf.mxu0
    %v2643 = vadd.f32 %v1994, %v2642
    %2644 = vmatprep.mubr.bf16.mxu0 %v1902
    %2645 = vmatmul.mubr.bf16.gmra.mxu0 %v1901
    %v2646 = vpop.f32.mrf.mxu0
    %v2647 = vadd.f32 %v1990, %v2646
    %v2648 = vpop.f32.mrf.mxu0
    %v2649 = vadd.f32 %v1994, %v2648
    %v2650 = vpop.f32.mrf.mxu0
    %v2651 = vadd.f32 %v1990, %v2650
    %v2652 = vpop.f32.mrf.mxu0
    %v2653 = vadd.f32 %v1994, %v2652
    %2654 = vmatprep.mubr.bf16.mxu0 %v1904
    %2655 = vmatmul.mubr.bf16.gmra.mxu0 %v1903
    %v2656 = vpop.f32.mrf.mxu0
    %v2657 = vadd.f32 %v1990, %v2656
    %v2658 = vpop.f32.mrf.mxu0
    %v2659 = vadd.f32 %v1994, %v2658
    %v2660 = vpop.f32.mrf.mxu0
    %v2661 = vadd.f32 %v1990, %v2660
    %v2662 = vpop.f32.mrf.mxu0
    %v2663 = vadd.f32 %v1994, %v2662
    %2664 = vmatprep.mubr.bf16.mxu0 %v1906
    %2665 = vmatmul.mubr.bf16.gmra.mxu0 %v1905
    %v2666 = vpop.f32.mrf.mxu0
    %v2667 = vadd.f32 %v1990, %v2666
    %v2668 = vpop.f32.mrf.mxu0
    %v2669 = vadd.f32 %v1994, %v2668
    %v2670 = vpop.f32.mrf.mxu0
    %v2671 = vadd.f32 %v1990, %v2670
    %v2672 = vpop.f32.mrf.mxu0
    %v2673 = vadd.f32 %v1994, %v2672
    %2674 = vmatprep.mubr.bf16.mxu0 %v1908
    %2675 = vmatmul.mubr.bf16.gmra.mxu0 %v1907
    %v2676 = vpop.f32.mrf.mxu0
    %v2677 = vadd.f32 %v1990, %v2676
    %v2678 = vpop.f32.mrf.mxu0
    %v2679 = vadd.f32 %v1994, %v2678
    %v2680 = vpop.f32.mrf.mxu0
    %v2681 = vadd.f32 %v1990, %v2680
    %v2682 = vpop.f32.mrf.mxu0
    %v2683 = vadd.f32 %v1994, %v2682
    %2684 = vmatprep.mubr.bf16.mxu0 %v1910
    %2685 = vmatmul.mubr.bf16.gmra.mxu0 %v1909
    %v2686 = vpop.f32.mrf.mxu0
    %v2687 = vadd.f32 %v1990, %v2686
    %v2688 = vpop.f32.mrf.mxu0
    %v2689 = vadd.f32 %v1994, %v2688
    %v2690 = vpop.f32.mrf.mxu0
    %v2691 = vadd.f32 %v1990, %v2690
    %v2692 = vpop.f32.mrf.mxu0
    %v2693 = vadd.f32 %v1994, %v2692
    %2694 = vmatprep.mubr.bf16.mxu0 %v1912
    %2695 = vmatmul.mubr.bf16.gmra.mxu0 %v1911
    %v2696 = vpop.f32.mrf.mxu0
    %v2697 = vadd.f32 %v1990, %v2696
    %v2698 = vpop.f32.mrf.mxu0
    %v2699 = vadd.f32 %v1994, %v2698
    %v2700 = vpop.f32.mrf.mxu0
    %v2701 = vadd.f32 %v1990, %v2700
    %v2702 = vpop.f32.mrf.mxu0
    %v2703 = vadd.f32 %v1994, %v2702
    %2704 = vdwg.mxu0
    %v2705 = vmax.f32 %v2354, 0.0
    %v2706 = vmax.f32 %v2356, 0.0
    %v2707 = vmax.f32 %v2547, 0.0
    %v2708 = vmax.f32 %v2549, 0.0
    %v2709 = vmax.f32 %v2358, 0.0
    %v2710 = vmax.f32 %v2360, 0.0
    %v2711 = vmax.f32 %v2551, 0.0
    %v2712 = vmax.f32 %v2553, 0.0
    %v2713 = vmax.f32 %v2364, 0.0
    %v2714 = vmax.f32 %v2366, 0.0
    %v2715 = vmax.f32 %v2557, 0.0
    %v2716 = vmax.f32 %v2559, 0.0
    %v2717 = vmax.f32 %v2368, 0.0
    %v2718 = vmax.f32 %v2370, 0.0
    %v2719 = vmax.f32 %v2561, 0.0
    %v2720 = vmax.f32 %v2563, 0.0
    %v2721 = vmax.f32 %v2374, 0.0
    %v2722 = vmax.f32 %v2376, 0.0
    %v2723 = vmax.f32 %v2567, 0.0
    %v2724 = vmax.f32 %v2569, 0.0
    %v2725 = vmax.f32 %v2378, 0.0
    %v2726 = vmax.f32 %v2380, 0.0
    %v2727 = vmax.f32 %v2571, 0.0
    %v2728 = vmax.f32 %v2573, 0.0
    %v2729 = vmax.f32 %v2384, 0.0
    %v2730 = vmax.f32 %v2386, 0.0
    %v2731 = vmax.f32 %v2577, 0.0
    %v2732 = vmax.f32 %v2579, 0.0
    %v2733 = vmax.f32 %v2388, 0.0
    %v2734 = vmax.f32 %v2390, 0.0
    %v2735 = vmax.f32 %v2581, 0.0
    %v2736 = vmax.f32 %v2583, 0.0
    %v2737 = vmax.f32 %v2394, 0.0
    %v2738 = vmax.f32 %v2396, 0.0
    %v2739 = vmax.f32 %v2587, 0.0
    %v2740 = vmax.f32 %v2589, 0.0
    %v2741 = vmax.f32 %v2398, 0.0
    %v2742 = vmax.f32 %v2400, 0.0
    %v2743 = vmax.f32 %v2591, 0.0
    %v2744 = vmax.f32 %v2593, 0.0
    %v2745 = vmax.f32 %v2404, 0.0
    %v2746 = vmax.f32 %v2406, 0.0
    %v2747 = vmax.f32 %v2597, 0.0
    %v2748 = vmax.f32 %v2599, 0.0
    %v2749 = vmax.f32 %v2408, 0.0
    %v2750 = vmax.f32 %v2410, 0.0
    %v2751 = vmax.f32 %v2601, 0.0
    %v2752 = vmax.f32 %v2603, 0.0
    %v2753 = vmax.f32 %v2414, 0.0
    %v2754 = vmax.f32 %v2416, 0.0
    %v2755 = vmax.f32 %v2607, 0.0
    %v2756 = vmax.f32 %v2609, 0.0
    %v2757 = vmax.f32 %v2418, 0.0
    %v2758 = vmax.f32 %v2420, 0.0
    %v2759 = vmax.f32 %v2611, 0.0
    %v2760 = vmax.f32 %v2613, 0.0
    %v2761 = vmax.f32 %v2424, 0.0
    %v2762 = vmax.f32 %v2426, 0.0
    %v2763 = vmax.f32 %v2617, 0.0
    %v2764 = vmax.f32 %v2619, 0.0
    %v2765 = vmax.f32 %v2428, 0.0
    %v2766 = vmax.f32 %v2430, 0.0
    %v2767 = vmax.f32 %v2621, 0.0
    %v2768 = vmax.f32 %v2623, 0.0
    %v2769 = vmax.f32 %v2434, 0.0
    %v2770 = vmax.f32 %v2436, 0.0
    %v2771 = vmax.f32 %v2627, 0.0
    %v2772 = vmax.f32 %v2629, 0.0
    %v2773 = vmax.f32 %v2438, 0.0
    %v2774 = vmax.f32 %v2440, 0.0
    %v2775 = vmax.f32 %v2631, 0.0
    %v2776 = vmax.f32 %v2633, 0.0
    %v2777 = vmax.f32 %v2444, 0.0
    %v2778 = vmax.f32 %v2446, 0.0
    %v2779 = vmax.f32 %v2637, 0.0
    %v2780 = vmax.f32 %v2639, 0.0
    %v2781 = vmax.f32 %v2448, 0.0
    %v2782 = vmax.f32 %v2450, 0.0
    %v2783 = vmax.f32 %v2641, 0.0
    %v2784 = vmax.f32 %v2643, 0.0
    %v2785 = vmax.f32 %v2454, 0.0
    %v2786 = vmax.f32 %v2456, 0.0
    %v2787 = vmax.f32 %v2647, 0.0
    %v2788 = vmax.f32 %v2649, 0.0
    %v2789 = vmax.f32 %v2458, 0.0
    %v2790 = vmax.f32 %v2460, 0.0
    %v2791 = vmax.f32 %v2651, 0.0
    %v2792 = vmax.f32 %v2653, 0.0
    %v2793 = vmax.f32 %v2464, 0.0
    %v2794 = vmax.f32 %v2466, 0.0
    %v2795 = vmax.f32 %v2657, 0.0
    %v2796 = vmax.f32 %v2659, 0.0
    %v2797 = vmax.f32 %v2468, 0.0
    %v2798 = vmax.f32 %v2470, 0.0
    %v2799 = vmax.f32 %v2661, 0.0
    %v2800 = vmax.f32 %v2663, 0.0
    %v2801 = vmax.f32 %v2474, 0.0
    %v2802 = vmax.f32 %v2476, 0.0
    %v2803 = vmax.f32 %v2667, 0.0
    %v2804 = vmax.f32 %v2669, 0.0
    %v2805 = vmax.f32 %v2478, 0.0
    %v2806 = vmax.f32 %v2480, 0.0
    %v2807 = vmax.f32 %v2671, 0.0
    %v2808 = vmax.f32 %v2673, 0.0
    %v2809 = vmax.f32 %v2484, 0.0
    %v2810 = vmax.f32 %v2486, 0.0
    %v2811 = vmax.f32 %v2677, 0.0
    %v2812 = vmax.f32 %v2679, 0.0
    %v2813 = vmax.f32 %v2488, 0.0
    %v2814 = vmax.f32 %v2490, 0.0
    %v2815 = vmax.f32 %v2681, 0.0
    %v2816 = vmax.f32 %v2683, 0.0
    %v2817 = vmax.f32 %v2494, 0.0
    %v2818 = vmax.f32 %v2496, 0.0
    %v2819 = vmax.f32 %v2687, 0.0
    %v2820 = vmax.f32 %v2689, 0.0
    %v2821 = vmax.f32 %v2498, 0.0
    %v2822 = vmax.f32 %v2500, 0.0
    %v2823 = vmax.f32 %v2691, 0.0
    %v2824 = vmax.f32 %v2693, 0.0
    %v2825 = vmax.f32 %v2504, 0.0
    %v2826 = vmax.f32 %v2506, 0.0
    %v2827 = vmax.f32 %v2697, 0.0
    %v2828 = vmax.f32 %v2699, 0.0
    %v2829 = vmax.f32 %v2508, 0.0
    %v2830 = vmax.f32 %v2510, 0.0
    %v2831 = vmax.f32 %v2701, 0.0
    %v2832 = vmax.f32 %v2703, 0.0
    %v2833 = vpack.c.bf16 %v2709, %v2705
    %v2834 = vpack.c.bf16 %v2710, %v2706
    %v2835 = vpack.c.bf16 %v2711, %v2707
    %v2836 = vpack.c.bf16 %v2712, %v2708
    %v2837 = vpack.c.bf16 %v2717, %v2713
    %v2838 = vpack.c.bf16 %v2718, %v2714
    %v2839 = vpack.c.bf16 %v2719, %v2715
    %v2840 = vpack.c.bf16 %v2720, %v2716
    %v2841 = vpack.c.bf16 %v2725, %v2721
    %v2842 = vpack.c.bf16 %v2726, %v2722
    %v2843 = vpack.c.bf16 %v2727, %v2723
    %v2844 = vpack.c.bf16 %v2728, %v2724
    %v2845 = vpack.c.bf16 %v2733, %v2729
    %v2846 = vpack.c.bf16 %v2734, %v2730
    %v2847 = vpack.c.bf16 %v2735, %v2731
    %v2848 = vpack.c.bf16 %v2736, %v2732
    %v2849 = vpack.c.bf16 %v2741, %v2737
    %v2850 = vpack.c.bf16 %v2742, %v2738
    %v2851 = vpack.c.bf16 %v2743, %v2739
    %v2852 = vpack.c.bf16 %v2744, %v2740
    %v2853 = vpack.c.bf16 %v2749, %v2745
    %v2854 = vpack.c.bf16 %v2750, %v2746
    %v2855 = vpack.c.bf16 %v2751, %v2747
    %v2856 = vpack.c.bf16 %v2752, %v2748
    %v2857 = vpack.c.bf16 %v2757, %v2753
    %v2858 = vpack.c.bf16 %v2758, %v2754
    %v2859 = vpack.c.bf16 %v2759, %v2755
    %v2860 = vpack.c.bf16 %v2760, %v2756
    %v2861 = vpack.c.bf16 %v2765, %v2761
    %v2862 = vpack.c.bf16 %v2766, %v2762
    %v2863 = vpack.c.bf16 %v2767, %v2763
    %v2864 = vpack.c.bf16 %v2768, %v2764
    %v2865 = vpack.c.bf16 %v2773, %v2769
    %v2866 = vpack.c.bf16 %v2774, %v2770
    %v2867 = vpack.c.bf16 %v2775, %v2771
    %v2868 = vpack.c.bf16 %v2776, %v2772
    %v2869 = vpack.c.bf16 %v2781, %v2777
    %v2870 = vpack.c.bf16 %v2782, %v2778
    %v2871 = vpack.c.bf16 %v2783, %v2779
    %v2872 = vpack.c.bf16 %v2784, %v2780
    %v2873 = vpack.c.bf16 %v2789, %v2785
    %v2874 = vpack.c.bf16 %v2790, %v2786
    %v2875 = vpack.c.bf16 %v2791, %v2787
    %v2876 = vpack.c.bf16 %v2792, %v2788
    %v2877 = vpack.c.bf16 %v2797, %v2793
    %v2878 = vpack.c.bf16 %v2798, %v2794
    %v2879 = vpack.c.bf16 %v2799, %v2795
    %v2880 = vpack.c.bf16 %v2800, %v2796
    %v2881 = vpack.c.bf16 %v2805, %v2801
    %v2882 = vpack.c.bf16 %v2806, %v2802
    %v2883 = vpack.c.bf16 %v2807, %v2803
    %v2884 = vpack.c.bf16 %v2808, %v2804
    %v2885 = vpack.c.bf16 %v2813, %v2809
    %v2886 = vpack.c.bf16 %v2814, %v2810
    %v2887 = vpack.c.bf16 %v2815, %v2811
    %v2888 = vpack.c.bf16 %v2816, %v2812
    %v2889 = vpack.c.bf16 %v2821, %v2817
    %v2890 = vpack.c.bf16 %v2822, %v2818
    %v2891 = vpack.c.bf16 %v2823, %v2819
    %v2892 = vpack.c.bf16 %v2824, %v2820
    %v2893 = vpack.c.bf16 %v2829, %v2825
    %v2894 = vpack.c.bf16 %v2830, %v2826
    %v2895 = vpack.c.bf16 %v2831, %v2827
    %v2896 = vpack.c.bf16 %v2832, %v2828
    %v2897 = vld [vmem:[%s7] sm:$0xff]
    %v2898 = vld [vmem:[%s7 + $0x8] sm:$0xff]
    %v2899 = vld [vmem:[%s7 + $0x10] sm:$0xff]
    %v2900 = vld [vmem:[%s7 + $0x18] sm:$0xff]
    %v2901 = vld [vmem:[%s7 + $0x20] sm:$0xff]
    %v2902 = vld [vmem:[%s7 + $0x28] sm:$0xff]
    %v2903 = vld [vmem:[%s7 + $0x30] sm:$0xff]
    %v2904 = vld [vmem:[%s7 + $0x38] sm:$0xff]
    %v2905 = vld [vmem:[%s7 + $0x40] sm:$0xff]
    %v2906 = vld [vmem:[%s7 + $0x48] sm:$0xff]
    %v2907 = vld [vmem:[%s7 + $0x50] sm:$0xff]
    %v2908 = vld [vmem:[%s7 + $0x58] sm:$0xff]
    %v2909 = vld [vmem:[%s7 + $0x60] sm:$0xff]
    %v2910 = vld [vmem:[%s7 + $0x68] sm:$0xff]
    %v2911 = vld [vmem:[%s7 + $0x70] sm:$0xff]
    %v2912 = vld [vmem:[%s7 + $0x78] sm:$0xff]
    %v2913 = vld [vmem:[%s7 + $0x80] sm:$0xff]
    %v2914 = vld [vmem:[%s7 + $0x88] sm:$0xff]
    %v2915 = vld [vmem:[%s7 + $0x90] sm:$0xff]
    %v2916 = vld [vmem:[%s7 + $0x98] sm:$0xff]
    %v2917 = vld [vmem:[%s7 + $0xa0] sm:$0xff]
    %v2918 = vld [vmem:[%s7 + $0xa8] sm:$0xff]
    %v2919 = vld [vmem:[%s7 + $0xb0] sm:$0xff]
    %v2920 = vld [vmem:[%s7 + $0xb8] sm:$0xff]
    %v2921 = vld [vmem:[%s7 + $0xc0] sm:$0xff]
    %v2922 = vld [vmem:[%s7 + $0xc8] sm:$0xff]
    %v2923 = vld [vmem:[%s7 + $0xd0] sm:$0xff]
    %v2924 = vld [vmem:[%s7 + $0xd8] sm:$0xff]
    %v2925 = vld [vmem:[%s7 + $0xe0] sm:$0xff]
    %v2926 = vld [vmem:[%s7 + $0xe8] sm:$0xff]
    %v2927 = vld [vmem:[%s7 + $0xf0] sm:$0xff]
    %v2928 = vld [vmem:[%s7 + $0xf8] sm:$0xff]
    %v2929 = vld [vmem:[%s7 + $0x100] sm:$0xff]
    %v2930 = vld [vmem:[%s7 + $0x108] sm:$0xff]
    %v2931 = vld [vmem:[%s7 + $0x110] sm:$0xff]
    %v2932 = vld [vmem:[%s7 + $0x118] sm:$0xff]
    %v2933 = vld [vmem:[%s7 + $0x120] sm:$0xff]
    %v2934 = vld [vmem:[%s7 + $0x128] sm:$0xff]
    %v2935 = vld [vmem:[%s7 + $0x130] sm:$0xff]
    %v2936 = vld [vmem:[%s7 + $0x138] sm:$0xff]
    %v2937 = vld [vmem:[%s7 + $0x140] sm:$0xff]
    %v2938 = vld [vmem:[%s7 + $0x148] sm:$0xff]
    %v2939 = vld [vmem:[%s7 + $0x150] sm:$0xff]
    %v2940 = vld [vmem:[%s7 + $0x158] sm:$0xff]
    %v2941 = vld [vmem:[%s7 + $0x160] sm:$0xff]
    %v2942 = vld [vmem:[%s7 + $0x168] sm:$0xff]
    %v2943 = vld [vmem:[%s7 + $0x170] sm:$0xff]
    %v2944 = vld [vmem:[%s7 + $0x178] sm:$0xff]
    %v2945 = vld [vmem:[%s7 + $0x180] sm:$0xff]
    %v2946 = vld [vmem:[%s7 + $0x188] sm:$0xff]
    %v2947 = vld [vmem:[%s7 + $0x190] sm:$0xff]
    %v2948 = vld [vmem:[%s7 + $0x198] sm:$0xff]
    %v2949 = vld [vmem:[%s7 + $0x1a0] sm:$0xff]
    %v2950 = vld [vmem:[%s7 + $0x1a8] sm:$0xff]
    %v2951 = vld [vmem:[%s7 + $0x1b0] sm:$0xff]
    %v2952 = vld [vmem:[%s7 + $0x1b8] sm:$0xff]
    %v2953 = vld [vmem:[%s7 + $0x1c0] sm:$0xff]
    %v2954 = vld [vmem:[%s7 + $0x1c8] sm:$0xff]
    %v2955 = vld [vmem:[%s7 + $0x1d0] sm:$0xff]
    %v2956 = vld [vmem:[%s7 + $0x1d8] sm:$0xff]
    %v2957 = vld [vmem:[%s7 + $0x1e0] sm:$0xff]
    %v2958 = vld [vmem:[%s7 + $0x1e8] sm:$0xff]
    %v2959 = vld [vmem:[%s7 + $0x1f0] sm:$0xff]
    %v2960 = vld [vmem:[%s7 + $0x1f8] sm:$0xff]
    %v2961 = vld [vmem:[%s7 + $0x200] sm:$0xff]
    %v2962 = vld [vmem:[%s7 + $0x208] sm:$0xff]
    %v2963 = vld [vmem:[%s7 + $0x210] sm:$0xff]
    %v2964 = vld [vmem:[%s7 + $0x218] sm:$0xff]
    %v2965 = vld [vmem:[%s7 + $0x220] sm:$0xff]
    %v2966 = vld [vmem:[%s7 + $0x228] sm:$0xff]
    %v2967 = vld [vmem:[%s7 + $0x230] sm:$0xff]
    %v2968 = vld [vmem:[%s7 + $0x238] sm:$0xff]
    %v2969 = vld [vmem:[%s7 + $0x240] sm:$0xff]
    %v2970 = vld [vmem:[%s7 + $0x248] sm:$0xff]
    %v2971 = vld [vmem:[%s7 + $0x250] sm:$0xff]
    %v2972 = vld [vmem:[%s7 + $0x258] sm:$0xff]
    %v2973 = vld [vmem:[%s7 + $0x260] sm:$0xff]
    %v2974 = vld [vmem:[%s7 + $0x268] sm:$0xff]
    %v2975 = vld [vmem:[%s7 + $0x270] sm:$0xff]
    %v2976 = vld [vmem:[%s7 + $0x278] sm:$0xff]
    %v2977 = vld [vmem:[%s7 + $0x280] sm:$0xff]
    %v2978 = vld [vmem:[%s7 + $0x288] sm:$0xff]
    %v2979 = vld [vmem:[%s7 + $0x290] sm:$0xff]
    %v2980 = vld [vmem:[%s7 + $0x298] sm:$0xff]
    %v2981 = vld [vmem:[%s7 + $0x2a0] sm:$0xff]
    %v2982 = vld [vmem:[%s7 + $0x2a8] sm:$0xff]
    %v2983 = vld [vmem:[%s7 + $0x2b0] sm:$0xff]
    %v2984 = vld [vmem:[%s7 + $0x2b8] sm:$0xff]
    %v2985 = vld [vmem:[%s7 + $0x2c0] sm:$0xff]
    %v2986 = vld [vmem:[%s7 + $0x2c8] sm:$0xff]
    %v2987 = vld [vmem:[%s7 + $0x2d0] sm:$0xff]
    %v2988 = vld [vmem:[%s7 + $0x2d8] sm:$0xff]
    %v2989 = vld [vmem:[%s7 + $0x2e0] sm:$0xff]
    %v2990 = vld [vmem:[%s7 + $0x2e8] sm:$0xff]
    %v2991 = vld [vmem:[%s7 + $0x2f0] sm:$0xff]
    %v2992 = vld [vmem:[%s7 + $0x2f8] sm:$0xff]
    %v2993 = vld [vmem:[%s7 + $0x300] sm:$0xff]
    %v2994 = vld [vmem:[%s7 + $0x308] sm:$0xff]
    %v2995 = vld [vmem:[%s7 + $0x310] sm:$0xff]
    %v2996 = vld [vmem:[%s7 + $0x318] sm:$0xff]
    %v2997 = vld [vmem:[%s7 + $0x320] sm:$0xff]
    %v2998 = vld [vmem:[%s7 + $0x328] sm:$0xff]
    %v2999 = vld [vmem:[%s7 + $0x330] sm:$0xff]
    %v3000 = vld [vmem:[%s7 + $0x338] sm:$0xff]
    %v3001 = vld [vmem:[%s7 + $0x340] sm:$0xff]
    %v3002 = vld [vmem:[%s7 + $0x348] sm:$0xff]
    %v3003 = vld [vmem:[%s7 + $0x350] sm:$0xff]
    %v3004 = vld [vmem:[%s7 + $0x358] sm:$0xff]
    %v3005 = vld [vmem:[%s7 + $0x360] sm:$0xff]
    %v3006 = vld [vmem:[%s7 + $0x368] sm:$0xff]
    %v3007 = vld [vmem:[%s7 + $0x370] sm:$0xff]
    %v3008 = vld [vmem:[%s7 + $0x378] sm:$0xff]
    %v3009 = vld [vmem:[%s7 + $0x380] sm:$0xff]
    %v3010 = vld [vmem:[%s7 + $0x388] sm:$0xff]
    %v3011 = vld [vmem:[%s7 + $0x390] sm:$0xff]
    %v3012 = vld [vmem:[%s7 + $0x398] sm:$0xff]
    %v3013 = vld [vmem:[%s7 + $0x3a0] sm:$0xff]
    %v3014 = vld [vmem:[%s7 + $0x3a8] sm:$0xff]
    %v3015 = vld [vmem:[%s7 + $0x3b0] sm:$0xff]
    %v3016 = vld [vmem:[%s7 + $0x3b8] sm:$0xff]
    %v3017 = vld [vmem:[%s7 + $0x3c0] sm:$0xff]
    %v3018 = vld [vmem:[%s7 + $0x3c8] sm:$0xff]
    %v3019 = vld [vmem:[%s7 + $0x3d0] sm:$0xff]
    %v3020 = vld [vmem:[%s7 + $0x3d8] sm:$0xff]
    %v3021 = vld [vmem:[%s7 + $0x3e0] sm:$0xff]
    %v3022 = vld [vmem:[%s7 + $0x3e8] sm:$0xff]
    %v3023 = vld [vmem:[%s7 + $0x3f0] sm:$0xff]
    %v3024 = vld [vmem:[%s7 + $0x3f8] sm:$0xff]
    %v3025 = vld [vmem:[%s8] sm:$0xf]
    %v3027 = vlaneseq
    %v3028 = vshrl.u32 %v3027, 7
    %v3029 = vsub.s32 0, %v3028
    %v3030 = vrot.slane %v3025, %v3029
    %v3031 = vlaneseq
    %v3032 = vshrl.u32 %v3031, 7
    %v3033 = vsub.s32 1, %v3032
    %v3034 = vrot.slane %v3025, %v3033
    %v3035 = vlaneseq
    %v3036 = vshrl.u32 %v3035, 7
    %v3037 = vsub.s32 2, %v3036
    %v3038 = vrot.slane %v3025, %v3037
    %v3039 = vlaneseq
    %v3040 = vshrl.u32 %v3039, 7
    %v3041 = vsub.s32 3, %v3040
    %v3042 = vrot.slane %v3025, %v3041
    %v3175 = vunpack.c.l.b16 %v2897
    %v3176 = vunpack.c.h.b16 %v2897
    %v3177 = vunpack.c.l.b16 %v2898
    %v3178 = vunpack.c.h.b16 %v2898
    %v3179 = vunpack.c.l.b16 %v2899
    %v3180 = vunpack.c.h.b16 %v2899
    %v3181 = vunpack.c.l.b16 %v2900
    %v3182 = vunpack.c.h.b16 %v2900
    %v3183 = vunpack.c.l.b16 %v2901
    %v3184 = vunpack.c.h.b16 %v2901
    %v3185 = vunpack.c.l.b16 %v2902
    %v3186 = vunpack.c.h.b16 %v2902
    %v3187 = vunpack.c.l.b16 %v2903
    %v3188 = vunpack.c.h.b16 %v2903
    %v3189 = vunpack.c.l.b16 %v2904
    %v3190 = vunpack.c.h.b16 %v2904
    %v3191 = vunpack.c.l.b16 %v2905
    %v3192 = vunpack.c.h.b16 %v2905
    %v3193 = vunpack.c.l.b16 %v2906
    %v3194 = vunpack.c.h.b16 %v2906
    %v3195 = vunpack.c.l.b16 %v2907
    %v3196 = vunpack.c.h.b16 %v2907
    %v3197 = vunpack.c.l.b16 %v2908
    %v3198 = vunpack.c.h.b16 %v2908
    %v3199 = vunpack.c.l.b16 %v2909
    %v3200 = vunpack.c.h.b16 %v2909
    %v3201 = vunpack.c.l.b16 %v2910
    %v3202 = vunpack.c.h.b16 %v2910
    %v3203 = vunpack.c.l.b16 %v2911
    %v3204 = vunpack.c.h.b16 %v2911
    %v3205 = vunpack.c.l.b16 %v2912
    %v3206 = vunpack.c.h.b16 %v2912
    %v3207 = vunpack.c.l.b16 %v2913
    %v3208 = vunpack.c.h.b16 %v2913
    %v3209 = vunpack.c.l.b16 %v2914
    %v3210 = vunpack.c.h.b16 %v2914
    %v3211 = vunpack.c.l.b16 %v2915
    %v3212 = vunpack.c.h.b16 %v2915
    %v3213 = vunpack.c.l.b16 %v2916
    %v3214 = vunpack.c.h.b16 %v2916
    %v3215 = vunpack.c.l.b16 %v2917
    %v3216 = vunpack.c.h.b16 %v2917
    %v3217 = vunpack.c.l.b16 %v2918
    %v3218 = vunpack.c.h.b16 %v2918
    %v3219 = vunpack.c.l.b16 %v2919
    %v3220 = vunpack.c.h.b16 %v2919
    %v3221 = vunpack.c.l.b16 %v2920
    %v3222 = vunpack.c.h.b16 %v2920
    %v3223 = vunpack.c.l.b16 %v2921
    %v3224 = vunpack.c.h.b16 %v2921
    %v3225 = vunpack.c.l.b16 %v2922
    %v3226 = vunpack.c.h.b16 %v2922
    %v3227 = vunpack.c.l.b16 %v2923
    %v3228 = vunpack.c.h.b16 %v2923
    %v3229 = vunpack.c.l.b16 %v2924
    %v3230 = vunpack.c.h.b16 %v2924
    %v3231 = vunpack.c.l.b16 %v2925
    %v3232 = vunpack.c.h.b16 %v2925
    %v3233 = vunpack.c.l.b16 %v2926
    %v3234 = vunpack.c.h.b16 %v2926
    %v3235 = vunpack.c.l.b16 %v2927
    %v3236 = vunpack.c.h.b16 %v2927
    %v3237 = vunpack.c.l.b16 %v2928
    %v3238 = vunpack.c.h.b16 %v2928
    %v3239 = vunpack.c.l.b16 %v2929
    %v3240 = vunpack.c.h.b16 %v2929
    %v3241 = vunpack.c.l.b16 %v2930
    %v3242 = vunpack.c.h.b16 %v2930
    %v3243 = vunpack.c.l.b16 %v2931
    %v3244 = vunpack.c.h.b16 %v2931
    %v3245 = vunpack.c.l.b16 %v2932
    %v3246 = vunpack.c.h.b16 %v2932
    %v3247 = vunpack.c.l.b16 %v2933
    %v3248 = vunpack.c.h.b16 %v2933
    %v3249 = vunpack.c.l.b16 %v2934
    %v3250 = vunpack.c.h.b16 %v2934
    %v3251 = vunpack.c.l.b16 %v2935
    %v3252 = vunpack.c.h.b16 %v2935
    %v3253 = vunpack.c.l.b16 %v2936
    %v3254 = vunpack.c.h.b16 %v2936
    %v3255 = vunpack.c.l.b16 %v2937
    %v3256 = vunpack.c.h.b16 %v2937
    %v3257 = vunpack.c.l.b16 %v2938
    %v3258 = vunpack.c.h.b16 %v2938
    %v3259 = vunpack.c.l.b16 %v2939
    %v3260 = vunpack.c.h.b16 %v2939
    %v3261 = vunpack.c.l.b16 %v2940
    %v3262 = vunpack.c.h.b16 %v2940
    %v3263 = vunpack.c.l.b16 %v2941
    %v3264 = vunpack.c.h.b16 %v2941
    %v3265 = vunpack.c.l.b16 %v2942
    %v3266 = vunpack.c.h.b16 %v2942
    %v3267 = vunpack.c.l.b16 %v2943
    %v3268 = vunpack.c.h.b16 %v2943
    %v3269 = vunpack.c.l.b16 %v2944
    %v3270 = vunpack.c.h.b16 %v2944
    %v3271 = vunpack.c.l.b16 %v2945
    %v3272 = vunpack.c.h.b16 %v2945
    %v3273 = vunpack.c.l.b16 %v2946
    %v3274 = vunpack.c.h.b16 %v2946
    %v3275 = vunpack.c.l.b16 %v2947
    %v3276 = vunpack.c.h.b16 %v2947
    %v3277 = vunpack.c.l.b16 %v2948
    %v3278 = vunpack.c.h.b16 %v2948
    %v3279 = vunpack.c.l.b16 %v2949
    %v3280 = vunpack.c.h.b16 %v2949
    %v3281 = vunpack.c.l.b16 %v2950
    %v3282 = vunpack.c.h.b16 %v2950
    %v3283 = vunpack.c.l.b16 %v2951
    %v3284 = vunpack.c.h.b16 %v2951
    %v3285 = vunpack.c.l.b16 %v2952
    %v3286 = vunpack.c.h.b16 %v2952
    %v3287 = vunpack.c.l.b16 %v2953
    %v3288 = vunpack.c.h.b16 %v2953
    %v3289 = vunpack.c.l.b16 %v2954
    %v3290 = vunpack.c.h.b16 %v2954
    %v3291 = vunpack.c.l.b16 %v2955
    %v3292 = vunpack.c.h.b16 %v2955
    %v3293 = vunpack.c.l.b16 %v2956
    %v3294 = vunpack.c.h.b16 %v2956
    %v3295 = vunpack.c.l.b16 %v2957
    %v3296 = vunpack.c.h.b16 %v2957
    %v3297 = vunpack.c.l.b16 %v2958
    %v3298 = vunpack.c.h.b16 %v2958
    %v3299 = vunpack.c.l.b16 %v2959
    %v3300 = vunpack.c.h.b16 %v2959
    %v3301 = vunpack.c.l.b16 %v2960
    %v3302 = vunpack.c.h.b16 %v2960
    %v3303 = vunpack.c.l.b16 %v2961
    %v3304 = vunpack.c.h.b16 %v2961
    %v3305 = vunpack.c.l.b16 %v2962
    %v3306 = vunpack.c.h.b16 %v2962
    %v3307 = vunpack.c.l.b16 %v2963
    %v3308 = vunpack.c.h.b16 %v2963
    %v3309 = vunpack.c.l.b16 %v2964
    %v3310 = vunpack.c.h.b16 %v2964
    %v3311 = vunpack.c.l.b16 %v2965
    %v3312 = vunpack.c.h.b16 %v2965
    %v3313 = vunpack.c.l.b16 %v2966
    %v3314 = vunpack.c.h.b16 %v2966
    %v3315 = vunpack.c.l.b16 %v2967
    %v3316 = vunpack.c.h.b16 %v2967
    %v3317 = vunpack.c.l.b16 %v2968
    %v3318 = vunpack.c.h.b16 %v2968
    %v3319 = vunpack.c.l.b16 %v2969
    %v3320 = vunpack.c.h.b16 %v2969
    %v3321 = vunpack.c.l.b16 %v2970
    %v3322 = vunpack.c.h.b16 %v2970
    %v3323 = vunpack.c.l.b16 %v2971
    %v3324 = vunpack.c.h.b16 %v2971
    %v3325 = vunpack.c.l.b16 %v2972
    %v3326 = vunpack.c.h.b16 %v2972
    %v3327 = vunpack.c.l.b16 %v2973
    %v3328 = vunpack.c.h.b16 %v2973
    %v3329 = vunpack.c.l.b16 %v2974
    %v3330 = vunpack.c.h.b16 %v2974
    %v3331 = vunpack.c.l.b16 %v2975
    %v3332 = vunpack.c.h.b16 %v2975
    %v3333 = vunpack.c.l.b16 %v2976
    %v3334 = vunpack.c.h.b16 %v2976
    %v3335 = vunpack.c.l.b16 %v2977
    %v3336 = vunpack.c.h.b16 %v2977
    %v3337 = vunpack.c.l.b16 %v2978
    %v3338 = vunpack.c.h.b16 %v2978
    %v3339 = vunpack.c.l.b16 %v2979
    %v3340 = vunpack.c.h.b16 %v2979
    %v3341 = vunpack.c.l.b16 %v2980
    %v3342 = vunpack.c.h.b16 %v2980
    %v3343 = vunpack.c.l.b16 %v2981
    %v3344 = vunpack.c.h.b16 %v2981
    %v3345 = vunpack.c.l.b16 %v2982
    %v3346 = vunpack.c.h.b16 %v2982
    %v3347 = vunpack.c.l.b16 %v2983
    %v3348 = vunpack.c.h.b16 %v2983
    %v3349 = vunpack.c.l.b16 %v2984
    %v3350 = vunpack.c.h.b16 %v2984
    %v3351 = vunpack.c.l.b16 %v2985
    %v3352 = vunpack.c.h.b16 %v2985
    %v3353 = vunpack.c.l.b16 %v2986
    %v3354 = vunpack.c.h.b16 %v2986
    %v3355 = vunpack.c.l.b16 %v2987
    %v3356 = vunpack.c.h.b16 %v2987
    %v3357 = vunpack.c.l.b16 %v2988
    %v3358 = vunpack.c.h.b16 %v2988
    %v3359 = vunpack.c.l.b16 %v2989
    %v3360 = vunpack.c.h.b16 %v2989
    %v3361 = vunpack.c.l.b16 %v2990
    %v3362 = vunpack.c.h.b16 %v2990
    %v3363 = vunpack.c.l.b16 %v2991
    %v3364 = vunpack.c.h.b16 %v2991
    %v3365 = vunpack.c.l.b16 %v2992
    %v3366 = vunpack.c.h.b16 %v2992
    %v3367 = vunpack.c.l.b16 %v2993
    %v3368 = vunpack.c.h.b16 %v2993
    %v3369 = vunpack.c.l.b16 %v2994
    %v3370 = vunpack.c.h.b16 %v2994
    %v3371 = vunpack.c.l.b16 %v2995
    %v3372 = vunpack.c.h.b16 %v2995
    %v3373 = vunpack.c.l.b16 %v2996
    %v3374 = vunpack.c.h.b16 %v2996
    %v3375 = vunpack.c.l.b16 %v2997
    %v3376 = vunpack.c.h.b16 %v2997
    %v3377 = vunpack.c.l.b16 %v2998
    %v3378 = vunpack.c.h.b16 %v2998
    %v3379 = vunpack.c.l.b16 %v2999
    %v3380 = vunpack.c.h.b16 %v2999
    %v3381 = vunpack.c.l.b16 %v3000
    %v3382 = vunpack.c.h.b16 %v3000
    %v3383 = vunpack.c.l.b16 %v3001
    %v3384 = vunpack.c.h.b16 %v3001
    %v3385 = vunpack.c.l.b16 %v3002
    %v3386 = vunpack.c.h.b16 %v3002
    %v3387 = vunpack.c.l.b16 %v3003
    %v3388 = vunpack.c.h.b16 %v3003
    %v3389 = vunpack.c.l.b16 %v3004
    %v3390 = vunpack.c.h.b16 %v3004
    %v3391 = vunpack.c.l.b16 %v3005
    %v3392 = vunpack.c.h.b16 %v3005
    %v3393 = vunpack.c.l.b16 %v3006
    %v3394 = vunpack.c.h.b16 %v3006
    %v3395 = vunpack.c.l.b16 %v3007
    %v3396 = vunpack.c.h.b16 %v3007
    %v3397 = vunpack.c.l.b16 %v3008
    %v3398 = vunpack.c.h.b16 %v3008
    %v3399 = vunpack.c.l.b16 %v3009
    %v3400 = vunpack.c.h.b16 %v3009
    %v3401 = vunpack.c.l.b16 %v3010
    %v3402 = vunpack.c.h.b16 %v3010
    %v3403 = vunpack.c.l.b16 %v3011
    %v3404 = vunpack.c.h.b16 %v3011
    %v3405 = vunpack.c.l.b16 %v3012
    %v3406 = vunpack.c.h.b16 %v3012
    %v3407 = vunpack.c.l.b16 %v3013
    %v3408 = vunpack.c.h.b16 %v3013
    %v3409 = vunpack.c.l.b16 %v3014
    %v3410 = vunpack.c.h.b16 %v3014
    %v3411 = vunpack.c.l.b16 %v3015
    %v3412 = vunpack.c.h.b16 %v3015
    %v3413 = vunpack.c.l.b16 %v3016
    %v3414 = vunpack.c.h.b16 %v3016
    %v3415 = vunpack.c.l.b16 %v3017
    %v3416 = vunpack.c.h.b16 %v3017
    %v3417 = vunpack.c.l.b16 %v3018
    %v3418 = vunpack.c.h.b16 %v3018
    %v3419 = vunpack.c.l.b16 %v3019
    %v3420 = vunpack.c.h.b16 %v3019
    %v3421 = vunpack.c.l.b16 %v3020
    %v3422 = vunpack.c.h.b16 %v3020
    %v3423 = vunpack.c.l.b16 %v3021
    %v3424 = vunpack.c.h.b16 %v3021
    %v3425 = vunpack.c.l.b16 %v3022
    %v3426 = vunpack.c.h.b16 %v3022
    %v3427 = vunpack.c.l.b16 %v3023
    %v3428 = vunpack.c.h.b16 %v3023
    %v3429 = vunpack.c.l.b16 %v3024
    %v3430 = vunpack.c.h.b16 %v3024
    %v3431 = vpack.c.b16 %v3179, %v3175
    %v3432 = vpack.c.b16 %v3180, %v3176
    %v3433 = vpack.c.b16 %v3181, %v3177
    %v3434 = vpack.c.b16 %v3182, %v3178
    %v3435 = vpack.c.b16 %v3187, %v3183
    %v3436 = vpack.c.b16 %v3188, %v3184
    %v3437 = vpack.c.b16 %v3189, %v3185
    %v3438 = vpack.c.b16 %v3190, %v3186
    %v3439 = vpack.c.b16 %v3195, %v3191
    %v3440 = vpack.c.b16 %v3196, %v3192
    %v3441 = vpack.c.b16 %v3197, %v3193
    %v3442 = vpack.c.b16 %v3198, %v3194
    %v3443 = vpack.c.b16 %v3203, %v3199
    %v3444 = vpack.c.b16 %v3204, %v3200
    %v3445 = vpack.c.b16 %v3205, %v3201
    %v3446 = vpack.c.b16 %v3206, %v3202
    %v3447 = vpack.c.b16 %v3211, %v3207
    %v3448 = vpack.c.b16 %v3212, %v3208
    %v3449 = vpack.c.b16 %v3213, %v3209
    %v3450 = vpack.c.b16 %v3214, %v3210
    %v3451 = vpack.c.b16 %v3219, %v3215
    %v3452 = vpack.c.b16 %v3220, %v3216
    %v3453 = vpack.c.b16 %v3221, %v3217
    %v3454 = vpack.c.b16 %v3222, %v3218
    %v3455 = vpack.c.b16 %v3227, %v3223
    %v3456 = vpack.c.b16 %v3228, %v3224
    %v3457 = vpack.c.b16 %v3229, %v3225
    %v3458 = vpack.c.b16 %v3230, %v3226
    %v3459 = vpack.c.b16 %v3235, %v3231
    %v3460 = vpack.c.b16 %v3236, %v3232
    %v3461 = vpack.c.b16 %v3237, %v3233
    %v3462 = vpack.c.b16 %v3238, %v3234
    %v3463 = vpack.c.b16 %v3243, %v3239
    %v3464 = vpack.c.b16 %v3244, %v3240
    %v3465 = vpack.c.b16 %v3245, %v3241
    %v3466 = vpack.c.b16 %v3246, %v3242
    %v3467 = vpack.c.b16 %v3251, %v3247
    %v3468 = vpack.c.b16 %v3252, %v3248
    %v3469 = vpack.c.b16 %v3253, %v3249
    %v3470 = vpack.c.b16 %v3254, %v3250
    %v3471 = vpack.c.b16 %v3259, %v3255
    %v3472 = vpack.c.b16 %v3260, %v3256
    %v3473 = vpack.c.b16 %v3261, %v3257
    %v3474 = vpack.c.b16 %v3262, %v3258
    %v3475 = vpack.c.b16 %v3267, %v3263
    %v3476 = vpack.c.b16 %v3268, %v3264
    %v3477 = vpack.c.b16 %v3269, %v3265
    %v3478 = vpack.c.b16 %v3270, %v3266
    %v3479 = vpack.c.b16 %v3275, %v3271
    %v3480 = vpack.c.b16 %v3276, %v3272
    %v3481 = vpack.c.b16 %v3277, %v3273
    %v3482 = vpack.c.b16 %v3278, %v3274
    %v3483 = vpack.c.b16 %v3283, %v3279
    %v3484 = vpack.c.b16 %v3284, %v3280
    %v3485 = vpack.c.b16 %v3285, %v3281
    %v3486 = vpack.c.b16 %v3286, %v3282
    %v3487 = vpack.c.b16 %v3291, %v3287
    %v3488 = vpack.c.b16 %v3292, %v3288
    %v3489 = vpack.c.b16 %v3293, %v3289
    %v3490 = vpack.c.b16 %v3294, %v3290
    %v3491 = vpack.c.b16 %v3299, %v3295
    %v3492 = vpack.c.b16 %v3300, %v3296
    %v3493 = vpack.c.b16 %v3301, %v3297
    %v3494 = vpack.c.b16 %v3302, %v3298
    %v3495 = vpack.c.b16 %v3307, %v3303
    %v3496 = vpack.c.b16 %v3308, %v3304
    %v3497 = vpack.c.b16 %v3309, %v3305
    %v3498 = vpack.c.b16 %v3310, %v3306
    %v3499 = vpack.c.b16 %v3315, %v3311
    %v3500 = vpack.c.b16 %v3316, %v3312
    %v3501 = vpack.c.b16 %v3317, %v3313
    %v3502 = vpack.c.b16 %v3318, %v3314
    %v3503 = vpack.c.b16 %v3323, %v3319
    %v3504 = vpack.c.b16 %v3324, %v3320
    %v3505 = vpack.c.b16 %v3325, %v3321
    %v3506 = vpack.c.b16 %v3326, %v3322
    %v3507 = vpack.c.b16 %v3331, %v3327
    %v3508 = vpack.c.b16 %v3332, %v3328
    %v3509 = vpack.c.b16 %v3333, %v3329
    %v3510 = vpack.c.b16 %v3334, %v3330
    %v3511 = vpack.c.b16 %v3339, %v3335
    %v3512 = vpack.c.b16 %v3340, %v3336
    %v3513 = vpack.c.b16 %v3341, %v3337
    %v3514 = vpack.c.b16 %v3342, %v3338
    %v3515 = vpack.c.b16 %v3347, %v3343
    %v3516 = vpack.c.b16 %v3348, %v3344
    %v3517 = vpack.c.b16 %v3349, %v3345
    %v3518 = vpack.c.b16 %v3350, %v3346
    %v3519 = vpack.c.b16 %v3355, %v3351
    %v3520 = vpack.c.b16 %v3356, %v3352
    %v3521 = vpack.c.b16 %v3357, %v3353
    %v3522 = vpack.c.b16 %v3358, %v3354
    %v3523 = vpack.c.b16 %v3363, %v3359
    %v3524 = vpack.c.b16 %v3364, %v3360
    %v3525 = vpack.c.b16 %v3365, %v3361
    %v3526 = vpack.c.b16 %v3366, %v3362
    %v3527 = vpack.c.b16 %v3371, %v3367
    %v3528 = vpack.c.b16 %v3372, %v3368
    %v3529 = vpack.c.b16 %v3373, %v3369
    %v3530 = vpack.c.b16 %v3374, %v3370
    %v3531 = vpack.c.b16 %v3379, %v3375
    %v3532 = vpack.c.b16 %v3380, %v3376
    %v3533 = vpack.c.b16 %v3381, %v3377
    %v3534 = vpack.c.b16 %v3382, %v3378
    %v3535 = vpack.c.b16 %v3387, %v3383
    %v3536 = vpack.c.b16 %v3388, %v3384
    %v3537 = vpack.c.b16 %v3389, %v3385
    %v3538 = vpack.c.b16 %v3390, %v3386
    %v3539 = vpack.c.b16 %v3395, %v3391
    %v3540 = vpack.c.b16 %v3396, %v3392
    %v3541 = vpack.c.b16 %v3397, %v3393
    %v3542 = vpack.c.b16 %v3398, %v3394
    %v3543 = vpack.c.b16 %v3403, %v3399
    %v3544 = vpack.c.b16 %v3404, %v3400
    %v3545 = vpack.c.b16 %v3405, %v3401
    %v3546 = vpack.c.b16 %v3406, %v3402
    %v3547 = vpack.c.b16 %v3411, %v3407
    %v3548 = vpack.c.b16 %v3412, %v3408
    %v3549 = vpack.c.b16 %v3413, %v3409
    %v3550 = vpack.c.b16 %v3414, %v3410
    %v3551 = vpack.c.b16 %v3419, %v3415
    %v3552 = vpack.c.b16 %v3420, %v3416
    %v3553 = vpack.c.b16 %v3421, %v3417
    %v3554 = vpack.c.b16 %v3422, %v3418
    %v3555 = vpack.c.b16 %v3427, %v3423
    %v3556 = vpack.c.b16 %v3428, %v3424
    %v3557 = vpack.c.b16 %v3429, %v3425
    %v3558 = vpack.c.b16 %v3430, %v3426
    %3687 = vmatprep.subr.bf16.mxu0 %v3460
    %3688 = vmatpush1.bf16.msra.mxu0 %v3459
    %3689 = vmatprep.subr.bf16.mxu0 %v3456
    %3690 = vmatpush1.bf16.msra.mxu0 %v3455
    %3691 = vmatprep.subr.bf16.mxu0 %v3452
    %3692 = vmatpush1.bf16.msra.mxu0 %v3451
    %3693 = vmatprep.subr.bf16.mxu0 %v3448
    %3694 = vmatpush1.bf16.msra.mxu0 %v3447
    %3695 = vmatprep.subr.bf16.mxu0 %v3444
    %3696 = vmatpush1.bf16.msra.mxu0 %v3443
    %3697 = vmatprep.subr.bf16.mxu0 %v3440
    %3698 = vmatpush1.bf16.msra.mxu0 %v3439
    %3699 = vmatprep.subr.bf16.mxu0 %v3436
    %3700 = vmatpush1.bf16.msra.mxu0 %v3435
    %3701 = vmatprep.subr.bf16.mxu0 %v3432
    %3702 = vmatpush1.bf16.msra.mxu0 %v3431
    %3703 = vmatprep.subr.bf16.mxu0 %v3492
    %3704 = vmatpush2.bf16.msra.mxu0 %v3491
    %3705 = vmatprep.subr.bf16.mxu0 %v3488
    %3706 = vmatpush2.bf16.msra.mxu0 %v3487
    %3707 = vmatprep.subr.bf16.mxu0 %v3484
    %3708 = vmatpush2.bf16.msra.mxu0 %v3483
    %3709 = vmatprep.subr.bf16.mxu0 %v3480
    %3710 = vmatpush2.bf16.msra.mxu0 %v3479
    %3711 = vmatprep.subr.bf16.mxu0 %v3476
    %3712 = vmatpush2.bf16.msra.mxu0 %v3475
    %3713 = vmatprep.subr.bf16.mxu0 %v3472
    %3714 = vmatpush2.bf16.msra.mxu0 %v3471
    %3715 = vmatprep.subr.bf16.mxu0 %v3468
    %3716 = vmatpush2.bf16.msra.mxu0 %v3467
    %3717 = vmatprep.subr.bf16.mxu0 %v3464
    %3718 = vmatpush2.bf16.msra.mxu0 %v3463
    %3719 = vmatprep.mubr.bf16.mxu0 %v2834
    %3720 = vmatmul.mubr.bf16.gmra.mxu0 %v2833
    %v3721 = vpop.f32.mrf.mxu0
    %v3722 = vadd.f32 %v3030, %v3721
    %v3723 = vpop.f32.mrf.mxu0
    %v3724 = vadd.f32 %v3034, %v3723
    %v3725 = vpop.f32.mrf.mxu0
    %v3726 = vadd.f32 %v3030, %v3725
    %v3727 = vpop.f32.mrf.mxu0
    %v3728 = vadd.f32 %v3034, %v3727
    %3729 = vmatprep.mubr.bf16.mxu0 %v2838
    %3730 = vmatmul.mubr.bf16.gmra.mxu0 %v2837
    %v3731 = vpop.f32.mrf.mxu0
    %v3732 = vadd.f32 %v3030, %v3731
    %v3733 = vpop.f32.mrf.mxu0
    %v3734 = vadd.f32 %v3034, %v3733
    %v3735 = vpop.f32.mrf.mxu0
    %v3736 = vadd.f32 %v3030, %v3735
    %v3737 = vpop.f32.mrf.mxu0
    %v3738 = vadd.f32 %v3034, %v3737
    %3739 = vmatprep.mubr.bf16.mxu0 %v2842
    %3740 = vmatmul.mubr.bf16.gmra.mxu0 %v2841
    %v3741 = vpop.f32.mrf.mxu0
    %v3742 = vadd.f32 %v3030, %v3741
    %v3743 = vpop.f32.mrf.mxu0
    %v3744 = vadd.f32 %v3034, %v3743
    %v3745 = vpop.f32.mrf.mxu0
    %v3746 = vadd.f32 %v3030, %v3745
    %v3747 = vpop.f32.mrf.mxu0
    %v3748 = vadd.f32 %v3034, %v3747
    %3749 = vmatprep.mubr.bf16.mxu0 %v2846
    %3750 = vmatmul.mubr.bf16.gmra.mxu0 %v2845
    %v3751 = vpop.f32.mrf.mxu0
    %v3752 = vadd.f32 %v3030, %v3751
    %v3753 = vpop.f32.mrf.mxu0
    %v3754 = vadd.f32 %v3034, %v3753
    %v3755 = vpop.f32.mrf.mxu0
    %v3756 = vadd.f32 %v3030, %v3755
    %v3757 = vpop.f32.mrf.mxu0
    %v3758 = vadd.f32 %v3034, %v3757
    %3759 = vmatprep.mubr.bf16.mxu0 %v2850
    %3760 = vmatmul.mubr.bf16.gmra.mxu0 %v2849
    %v3761 = vpop.f32.mrf.mxu0
    %v3762 = vadd.f32 %v3030, %v3761
    %v3763 = vpop.f32.mrf.mxu0
    %v3764 = vadd.f32 %v3034, %v3763
    %v3765 = vpop.f32.mrf.mxu0
    %v3766 = vadd.f32 %v3030, %v3765
    %v3767 = vpop.f32.mrf.mxu0
    %v3768 = vadd.f32 %v3034, %v3767
    %3769 = vmatprep.mubr.bf16.mxu0 %v2854
    %3770 = vmatmul.mubr.bf16.gmra.mxu0 %v2853
    %v3771 = vpop.f32.mrf.mxu0
    %v3772 = vadd.f32 %v3030, %v3771
    %v3773 = vpop.f32.mrf.mxu0
    %v3774 = vadd.f32 %v3034, %v3773
    %v3775 = vpop.f32.mrf.mxu0
    %v3776 = vadd.f32 %v3030, %v3775
    %v3777 = vpop.f32.mrf.mxu0
    %v3778 = vadd.f32 %v3034, %v3777
    %3779 = vmatprep.mubr.bf16.mxu0 %v2858
    %3780 = vmatmul.mubr.bf16.gmra.mxu0 %v2857
    %v3781 = vpop.f32.mrf.mxu0
    %v3782 = vadd.f32 %v3030, %v3781
    %v3783 = vpop.f32.mrf.mxu0
    %v3784 = vadd.f32 %v3034, %v3783
    %v3785 = vpop.f32.mrf.mxu0
    %v3786 = vadd.f32 %v3030, %v3785
    %v3787 = vpop.f32.mrf.mxu0
    %v3788 = vadd.f32 %v3034, %v3787
    %3789 = vmatprep.mubr.bf16.mxu0 %v2862
    %3790 = vmatmul.mubr.bf16.gmra.mxu0 %v2861
    %v3791 = vpop.f32.mrf.mxu0
    %v3792 = vadd.f32 %v3030, %v3791
    %v3793 = vpop.f32.mrf.mxu0
    %v3794 = vadd.f32 %v3034, %v3793
    %v3795 = vpop.f32.mrf.mxu0
    %v3796 = vadd.f32 %v3030, %v3795
    %v3797 = vpop.f32.mrf.mxu0
    %v3798 = vadd.f32 %v3034, %v3797
    %3799 = vmatprep.mubr.bf16.mxu0 %v2866
    %3800 = vmatmul.mubr.bf16.gmra.mxu0 %v2865
    %v3801 = vpop.f32.mrf.mxu0
    %v3802 = vadd.f32 %v3030, %v3801
    %v3803 = vpop.f32.mrf.mxu0
    %v3804 = vadd.f32 %v3034, %v3803
    %v3805 = vpop.f32.mrf.mxu0
    %v3806 = vadd.f32 %v3030, %v3805
    %v3807 = vpop.f32.mrf.mxu0
    %v3808 = vadd.f32 %v3034, %v3807
    %3809 = vmatprep.mubr.bf16.mxu0 %v2870
    %3810 = vmatmul.mubr.bf16.gmra.mxu0 %v2869
    %v3811 = vpop.f32.mrf.mxu0
    %v3812 = vadd.f32 %v3030, %v3811
    %v3813 = vpop.f32.mrf.mxu0
    %v3814 = vadd.f32 %v3034, %v3813
    %v3815 = vpop.f32.mrf.mxu0
    %v3816 = vadd.f32 %v3030, %v3815
    %v3817 = vpop.f32.mrf.mxu0
    %v3818 = vadd.f32 %v3034, %v3817
    %3819 = vmatprep.mubr.bf16.mxu0 %v2874
    %3820 = vmatmul.mubr.bf16.gmra.mxu0 %v2873
    %v3821 = vpop.f32.mrf.mxu0
    %v3822 = vadd.f32 %v3030, %v3821
    %v3823 = vpop.f32.mrf.mxu0
    %v3824 = vadd.f32 %v3034, %v3823
    %v3825 = vpop.f32.mrf.mxu0
    %v3826 = vadd.f32 %v3030, %v3825
    %v3827 = vpop.f32.mrf.mxu0
    %v3828 = vadd.f32 %v3034, %v3827
    %3829 = vmatprep.mubr.bf16.mxu0 %v2878
    %3830 = vmatmul.mubr.bf16.gmra.mxu0 %v2877
    %v3831 = vpop.f32.mrf.mxu0
    %v3832 = vadd.f32 %v3030, %v3831
    %v3833 = vpop.f32.mrf.mxu0
    %v3834 = vadd.f32 %v3034, %v3833
    %v3835 = vpop.f32.mrf.mxu0
    %v3836 = vadd.f32 %v3030, %v3835
    %v3837 = vpop.f32.mrf.mxu0
    %v3838 = vadd.f32 %v3034, %v3837
    %3839 = vmatprep.mubr.bf16.mxu0 %v2882
    %3840 = vmatmul.mubr.bf16.gmra.mxu0 %v2881
    %v3841 = vpop.f32.mrf.mxu0
    %v3842 = vadd.f32 %v3030, %v3841
    %v3843 = vpop.f32.mrf.mxu0
    %v3844 = vadd.f32 %v3034, %v3843
    %v3845 = vpop.f32.mrf.mxu0
    %v3846 = vadd.f32 %v3030, %v3845
    %v3847 = vpop.f32.mrf.mxu0
    %v3848 = vadd.f32 %v3034, %v3847
    %3849 = vmatprep.mubr.bf16.mxu0 %v2886
    %3850 = vmatmul.mubr.bf16.gmra.mxu0 %v2885
    %v3851 = vpop.f32.mrf.mxu0
    %v3852 = vadd.f32 %v3030, %v3851
    %v3853 = vpop.f32.mrf.mxu0
    %v3854 = vadd.f32 %v3034, %v3853
    %v3855 = vpop.f32.mrf.mxu0
    %v3856 = vadd.f32 %v3030, %v3855
    %v3857 = vpop.f32.mrf.mxu0
    %v3858 = vadd.f32 %v3034, %v3857
    %3859 = vmatprep.mubr.bf16.mxu0 %v2890
    %3860 = vmatmul.mubr.bf16.gmra.mxu0 %v2889
    %v3861 = vpop.f32.mrf.mxu0
    %v3862 = vadd.f32 %v3030, %v3861
    %v3863 = vpop.f32.mrf.mxu0
    %v3864 = vadd.f32 %v3034, %v3863
    %v3865 = vpop.f32.mrf.mxu0
    %v3866 = vadd.f32 %v3030, %v3865
    %v3867 = vpop.f32.mrf.mxu0
    %v3868 = vadd.f32 %v3034, %v3867
    %3869 = vmatprep.mubr.bf16.mxu0 %v2894
    %3870 = vmatmul.mubr.bf16.gmra.mxu0 %v2893
    %v3871 = vpop.f32.mrf.mxu0
    %v3872 = vadd.f32 %v3030, %v3871
    %v3873 = vpop.f32.mrf.mxu0
    %v3874 = vadd.f32 %v3034, %v3873
    %v3875 = vpop.f32.mrf.mxu0
    %v3876 = vadd.f32 %v3030, %v3875
    %v3877 = vpop.f32.mrf.mxu0
    %v3878 = vadd.f32 %v3034, %v3877
    %3879 = vdwg.mxu0
    %3880 = vmatprep.subr.bf16.mxu0 %v3524
    %3881 = vmatpush1.bf16.msra.mxu0 %v3523
    %3882 = vmatprep.subr.bf16.mxu0 %v3520
    %3883 = vmatpush1.bf16.msra.mxu0 %v3519
    %3884 = vmatprep.subr.bf16.mxu0 %v3516
    %3885 = vmatpush1.bf16.msra.mxu0 %v3515
    %3886 = vmatprep.subr.bf16.mxu0 %v3512
    %3887 = vmatpush1.bf16.msra.mxu0 %v3511
    %3888 = vmatprep.subr.bf16.mxu0 %v3508
    %3889 = vmatpush1.bf16.msra.mxu0 %v3507
    %3890 = vmatprep.subr.bf16.mxu0 %v3504
    %3891 = vmatpush1.bf16.msra.mxu0 %v3503
    %3892 = vmatprep.subr.bf16.mxu0 %v3500
    %3893 = vmatpush1.bf16.msra.mxu0 %v3499
    %3894 = vmatprep.subr.bf16.mxu0 %v3496
    %3895 = vmatpush1.bf16.msra.mxu0 %v3495
    %3896 = vmatprep.subr.bf16.mxu0 %v3556
    %3897 = vmatpush2.bf16.msra.mxu0 %v3555
    %3898 = vmatprep.subr.bf16.mxu0 %v3552
    %3899 = vmatpush2.bf16.msra.mxu0 %v3551
    %3900 = vmatprep.subr.bf16.mxu0 %v3548
    %3901 = vmatpush2.bf16.msra.mxu0 %v3547
    %3902 = vmatprep.subr.bf16.mxu0 %v3544
    %3903 = vmatpush2.bf16.msra.mxu0 %v3543
    %3904 = vmatprep.subr.bf16.mxu0 %v3540
    %3905 = vmatpush2.bf16.msra.mxu0 %v3539
    %3906 = vmatprep.subr.bf16.mxu0 %v3536
    %3907 = vmatpush2.bf16.msra.mxu0 %v3535
    %3908 = vmatprep.subr.bf16.mxu0 %v3532
    %3909 = vmatpush2.bf16.msra.mxu0 %v3531
    %3910 = vmatprep.subr.bf16.mxu0 %v3528
    %3911 = vmatpush2.bf16.msra.mxu0 %v3527
    %3912 = vmatprep.mubr.bf16.mxu0 %v2836
    %3913 = vmatmul.mubr.bf16.gmra.mxu0 %v2835
    %v3914 = vpop.f32.mrf.mxu0
    %v3915 = vadd.f32 %v3722, %v3914
    %v3916 = vpop.f32.mrf.mxu0
    %v3917 = vadd.f32 %v3724, %v3916
    %v3918 = vpop.f32.mrf.mxu0
    %v3919 = vadd.f32 %v3726, %v3918
    %v3920 = vpop.f32.mrf.mxu0
    %v3921 = vadd.f32 %v3728, %v3920
    %3922 = vmatprep.mubr.bf16.mxu0 %v2840
    %3923 = vmatmul.mubr.bf16.gmra.mxu0 %v2839
    %v3924 = vpop.f32.mrf.mxu0
    %v3925 = vadd.f32 %v3732, %v3924
    %v3926 = vpop.f32.mrf.mxu0
    %v3927 = vadd.f32 %v3734, %v3926
    %v3928 = vpop.f32.mrf.mxu0
    %v3929 = vadd.f32 %v3736, %v3928
    %v3930 = vpop.f32.mrf.mxu0
    %v3931 = vadd.f32 %v3738, %v3930
    %3932 = vmatprep.mubr.bf16.mxu0 %v2844
    %3933 = vmatmul.mubr.bf16.gmra.mxu0 %v2843
    %v3934 = vpop.f32.mrf.mxu0
    %v3935 = vadd.f32 %v3742, %v3934
    %v3936 = vpop.f32.mrf.mxu0
    %v3937 = vadd.f32 %v3744, %v3936
    %v3938 = vpop.f32.mrf.mxu0
    %v3939 = vadd.f32 %v3746, %v3938
    %v3940 = vpop.f32.mrf.mxu0
    %v3941 = vadd.f32 %v3748, %v3940
    %3942 = vmatprep.mubr.bf16.mxu0 %v2848
    %3943 = vmatmul.mubr.bf16.gmra.mxu0 %v2847
    %v3944 = vpop.f32.mrf.mxu0
    %v3945 = vadd.f32 %v3752, %v3944
    %v3946 = vpop.f32.mrf.mxu0
    %v3947 = vadd.f32 %v3754, %v3946
    %v3948 = vpop.f32.mrf.mxu0
    %v3949 = vadd.f32 %v3756, %v3948
    %v3950 = vpop.f32.mrf.mxu0
    %v3951 = vadd.f32 %v3758, %v3950
    %3952 = vmatprep.mubr.bf16.mxu0 %v2852
    %3953 = vmatmul.mubr.bf16.gmra.mxu0 %v2851
    %v3954 = vpop.f32.mrf.mxu0
    %v3955 = vadd.f32 %v3762, %v3954
    %v3956 = vpop.f32.mrf.mxu0
    %v3957 = vadd.f32 %v3764, %v3956
    %v3958 = vpop.f32.mrf.mxu0
    %v3959 = vadd.f32 %v3766, %v3958
    %v3960 = vpop.f32.mrf.mxu0
    %v3961 = vadd.f32 %v3768, %v3960
    %3962 = vmatprep.mubr.bf16.mxu0 %v2856
    %3963 = vmatmul.mubr.bf16.gmra.mxu0 %v2855
    %v3964 = vpop.f32.mrf.mxu0
    %v3965 = vadd.f32 %v3772, %v3964
    %v3966 = vpop.f32.mrf.mxu0
    %v3967 = vadd.f32 %v3774, %v3966
    %v3968 = vpop.f32.mrf.mxu0
    %v3969 = vadd.f32 %v3776, %v3968
    %v3970 = vpop.f32.mrf.mxu0
    %v3971 = vadd.f32 %v3778, %v3970
    %3972 = vmatprep.mubr.bf16.mxu0 %v2860
    %3973 = vmatmul.mubr.bf16.gmra.mxu0 %v2859
    %v3974 = vpop.f32.mrf.mxu0
    %v3975 = vadd.f32 %v3782, %v3974
    %v3976 = vpop.f32.mrf.mxu0
    %v3977 = vadd.f32 %v3784, %v3976
    %v3978 = vpop.f32.mrf.mxu0
    %v3979 = vadd.f32 %v3786, %v3978
    %v3980 = vpop.f32.mrf.mxu0
    %v3981 = vadd.f32 %v3788, %v3980
    %3982 = vmatprep.mubr.bf16.mxu0 %v2864
    %3983 = vmatmul.mubr.bf16.gmra.mxu0 %v2863
    %v3984 = vpop.f32.mrf.mxu0
    %v3985 = vadd.f32 %v3792, %v3984
    %v3986 = vpop.f32.mrf.mxu0
    %v3987 = vadd.f32 %v3794, %v3986
    %v3988 = vpop.f32.mrf.mxu0
    %v3989 = vadd.f32 %v3796, %v3988
    %v3990 = vpop.f32.mrf.mxu0
    %v3991 = vadd.f32 %v3798, %v3990
    %3992 = vmatprep.mubr.bf16.mxu0 %v2868
    %3993 = vmatmul.mubr.bf16.gmra.mxu0 %v2867
    %v3994 = vpop.f32.mrf.mxu0
    %v3995 = vadd.f32 %v3802, %v3994
    %v3996 = vpop.f32.mrf.mxu0
    %v3997 = vadd.f32 %v3804, %v3996
    %v3998 = vpop.f32.mrf.mxu0
    %v3999 = vadd.f32 %v3806, %v3998
    %v4000 = vpop.f32.mrf.mxu0
    %v4001 = vadd.f32 %v3808, %v4000
    %4002 = vmatprep.mubr.bf16.mxu0 %v2872
    %4003 = vmatmul.mubr.bf16.gmra.mxu0 %v2871
    %v4004 = vpop.f32.mrf.mxu0
    %v4005 = vadd.f32 %v3812, %v4004
    %v4006 = vpop.f32.mrf.mxu0
    %v4007 = vadd.f32 %v3814, %v4006
    %v4008 = vpop.f32.mrf.mxu0
    %v4009 = vadd.f32 %v3816, %v4008
    %v4010 = vpop.f32.mrf.mxu0
    %v4011 = vadd.f32 %v3818, %v4010
    %4012 = vmatprep.mubr.bf16.mxu0 %v2876
    %4013 = vmatmul.mubr.bf16.gmra.mxu0 %v2875
    %v4014 = vpop.f32.mrf.mxu0
    %v4015 = vadd.f32 %v3822, %v4014
    %v4016 = vpop.f32.mrf.mxu0
    %v4017 = vadd.f32 %v3824, %v4016
    %v4018 = vpop.f32.mrf.mxu0
    %v4019 = vadd.f32 %v3826, %v4018
    %v4020 = vpop.f32.mrf.mxu0
    %v4021 = vadd.f32 %v3828, %v4020
    %4022 = vmatprep.mubr.bf16.mxu0 %v2880
    %4023 = vmatmul.mubr.bf16.gmra.mxu0 %v2879
    %v4024 = vpop.f32.mrf.mxu0
    %v4025 = vadd.f32 %v3832, %v4024
    %v4026 = vpop.f32.mrf.mxu0
    %v4027 = vadd.f32 %v3834, %v4026
    %v4028 = vpop.f32.mrf.mxu0
    %v4029 = vadd.f32 %v3836, %v4028
    %v4030 = vpop.f32.mrf.mxu0
    %v4031 = vadd.f32 %v3838, %v4030
    %4032 = vmatprep.mubr.bf16.mxu0 %v2884
    %4033 = vmatmul.mubr.bf16.gmra.mxu0 %v2883
    %v4034 = vpop.f32.mrf.mxu0
    %v4035 = vadd.f32 %v3842, %v4034
    %v4036 = vpop.f32.mrf.mxu0
    %v4037 = vadd.f32 %v3844, %v4036
    %v4038 = vpop.f32.mrf.mxu0
    %v4039 = vadd.f32 %v3846, %v4038
    %v4040 = vpop.f32.mrf.mxu0
    %v4041 = vadd.f32 %v3848, %v4040
    %4042 = vmatprep.mubr.bf16.mxu0 %v2888
    %4043 = vmatmul.mubr.bf16.gmra.mxu0 %v2887
    %v4044 = vpop.f32.mrf.mxu0
    %v4045 = vadd.f32 %v3852, %v4044
    %v4046 = vpop.f32.mrf.mxu0
    %v4047 = vadd.f32 %v3854, %v4046
    %v4048 = vpop.f32.mrf.mxu0
    %v4049 = vadd.f32 %v3856, %v4048
    %v4050 = vpop.f32.mrf.mxu0
    %v4051 = vadd.f32 %v3858, %v4050
    %4052 = vmatprep.mubr.bf16.mxu0 %v2892
    %4053 = vmatmul.mubr.bf16.gmra.mxu0 %v2891
    %v4054 = vpop.f32.mrf.mxu0
    %v4055 = vadd.f32 %v3862, %v4054
    %v4056 = vpop.f32.mrf.mxu0
    %v4057 = vadd.f32 %v3864, %v4056
    %v4058 = vpop.f32.mrf.mxu0
    %v4059 = vadd.f32 %v3866, %v4058
    %v4060 = vpop.f32.mrf.mxu0
    %v4061 = vadd.f32 %v3868, %v4060
    %4062 = vmatprep.mubr.bf16.mxu0 %v2896
    %4063 = vmatmul.mubr.bf16.gmra.mxu0 %v2895
    %v4064 = vpop.f32.mrf.mxu0
    %v4065 = vadd.f32 %v3872, %v4064
    %v4066 = vpop.f32.mrf.mxu0
    %v4067 = vadd.f32 %v3874, %v4066
    %v4068 = vpop.f32.mrf.mxu0
    %v4069 = vadd.f32 %v3876, %v4068
    %v4070 = vpop.f32.mrf.mxu0
    %v4071 = vadd.f32 %v3878, %v4070
    %4072 = vdwg.mxu0
    %4073 = vmatprep.subr.bf16.mxu0 %v3462
    %4074 = vmatpush1.bf16.msra.mxu0 %v3461
    %4075 = vmatprep.subr.bf16.mxu0 %v3458
    %4076 = vmatpush1.bf16.msra.mxu0 %v3457
    %4077 = vmatprep.subr.bf16.mxu0 %v3454
    %4078 = vmatpush1.bf16.msra.mxu0 %v3453
    %4079 = vmatprep.subr.bf16.mxu0 %v3450
    %4080 = vmatpush1.bf16.msra.mxu0 %v3449
    %4081 = vmatprep.subr.bf16.mxu0 %v3446
    %4082 = vmatpush1.bf16.msra.mxu0 %v3445
    %4083 = vmatprep.subr.bf16.mxu0 %v3442
    %4084 = vmatpush1.bf16.msra.mxu0 %v3441
    %4085 = vmatprep.subr.bf16.mxu0 %v3438
    %4086 = vmatpush1.bf16.msra.mxu0 %v3437
    %4087 = vmatprep.subr.bf16.mxu0 %v3434
    %4088 = vmatpush1.bf16.msra.mxu0 %v3433
    %4089 = vmatprep.subr.bf16.mxu0 %v3494
    %4090 = vmatpush2.bf16.msra.mxu0 %v3493
    %4091 = vmatprep.subr.bf16.mxu0 %v3490
    %4092 = vmatpush2.bf16.msra.mxu0 %v3489
    %4093 = vmatprep.subr.bf16.mxu0 %v3486
    %4094 = vmatpush2.bf16.msra.mxu0 %v3485
    %4095 = vmatprep.subr.bf16.mxu0 %v3482
    %4096 = vmatpush2.bf16.msra.mxu0 %v3481
    %4097 = vmatprep.subr.bf16.mxu0 %v3478
    %4098 = vmatpush2.bf16.msra.mxu0 %v3477
    %4099 = vmatprep.subr.bf16.mxu0 %v3474
    %4100 = vmatpush2.bf16.msra.mxu0 %v3473
    %4101 = vmatprep.subr.bf16.mxu0 %v3470
    %4102 = vmatpush2.bf16.msra.mxu0 %v3469
    %4103 = vmatprep.subr.bf16.mxu0 %v3466
    %4104 = vmatpush2.bf16.msra.mxu0 %v3465
    %4105 = vmatprep.mubr.bf16.mxu0 %v2834
    %4106 = vmatmul.mubr.bf16.gmra.mxu0 %v2833
    %v4107 = vpop.f32.mrf.mxu0
    %v4108 = vadd.f32 %v3038, %v4107
    %v4109 = vpop.f32.mrf.mxu0
    %v4110 = vadd.f32 %v3042, %v4109
    %v4111 = vpop.f32.mrf.mxu0
    %v4112 = vadd.f32 %v3038, %v4111
    %v4113 = vpop.f32.mrf.mxu0
    %v4114 = vadd.f32 %v3042, %v4113
    %4115 = vmatprep.mubr.bf16.mxu0 %v2838
    %4116 = vmatmul.mubr.bf16.gmra.mxu0 %v2837
    %v4117 = vpop.f32.mrf.mxu0
    %v4118 = vadd.f32 %v3038, %v4117
    %v4119 = vpop.f32.mrf.mxu0
    %v4120 = vadd.f32 %v3042, %v4119
    %v4121 = vpop.f32.mrf.mxu0
    %v4122 = vadd.f32 %v3038, %v4121
    %v4123 = vpop.f32.mrf.mxu0
    %v4124 = vadd.f32 %v3042, %v4123
    %4125 = vmatprep.mubr.bf16.mxu0 %v2842
    %4126 = vmatmul.mubr.bf16.gmra.mxu0 %v2841
    %v4127 = vpop.f32.mrf.mxu0
    %v4128 = vadd.f32 %v3038, %v4127
    %v4129 = vpop.f32.mrf.mxu0
    %v4130 = vadd.f32 %v3042, %v4129
    %v4131 = vpop.f32.mrf.mxu0
    %v4132 = vadd.f32 %v3038, %v4131
    %v4133 = vpop.f32.mrf.mxu0
    %v4134 = vadd.f32 %v3042, %v4133
    %4135 = vmatprep.mubr.bf16.mxu0 %v2846
    %4136 = vmatmul.mubr.bf16.gmra.mxu0 %v2845
    %v4137 = vpop.f32.mrf.mxu0
    %v4138 = vadd.f32 %v3038, %v4137
    %v4139 = vpop.f32.mrf.mxu0
    %v4140 = vadd.f32 %v3042, %v4139
    %v4141 = vpop.f32.mrf.mxu0
    %v4142 = vadd.f32 %v3038, %v4141
    %v4143 = vpop.f32.mrf.mxu0
    %v4144 = vadd.f32 %v3042, %v4143
    %4145 = vmatprep.mubr.bf16.mxu0 %v2850
    %4146 = vmatmul.mubr.bf16.gmra.mxu0 %v2849
    %v4147 = vpop.f32.mrf.mxu0
    %v4148 = vadd.f32 %v3038, %v4147
    %v4149 = vpop.f32.mrf.mxu0
    %v4150 = vadd.f32 %v3042, %v4149
    %v4151 = vpop.f32.mrf.mxu0
    %v4152 = vadd.f32 %v3038, %v4151
    %v4153 = vpop.f32.mrf.mxu0
    %v4154 = vadd.f32 %v3042, %v4153
    %4155 = vmatprep.mubr.bf16.mxu0 %v2854
    %4156 = vmatmul.mubr.bf16.gmra.mxu0 %v2853
    %v4157 = vpop.f32.mrf.mxu0
    %v4158 = vadd.f32 %v3038, %v4157
    %v4159 = vpop.f32.mrf.mxu0
    %v4160 = vadd.f32 %v3042, %v4159
    %v4161 = vpop.f32.mrf.mxu0
    %v4162 = vadd.f32 %v3038, %v4161
    %v4163 = vpop.f32.mrf.mxu0
    %v4164 = vadd.f32 %v3042, %v4163
    %4165 = vmatprep.mubr.bf16.mxu0 %v2858
    %4166 = vmatmul.mubr.bf16.gmra.mxu0 %v2857
    %v4167 = vpop.f32.mrf.mxu0
    %v4168 = vadd.f32 %v3038, %v4167
    %v4169 = vpop.f32.mrf.mxu0
    %v4170 = vadd.f32 %v3042, %v4169
    %v4171 = vpop.f32.mrf.mxu0
    %v4172 = vadd.f32 %v3038, %v4171
    %v4173 = vpop.f32.mrf.mxu0
    %v4174 = vadd.f32 %v3042, %v4173
    %4175 = vmatprep.mubr.bf16.mxu0 %v2862
    %4176 = vmatmul.mubr.bf16.gmra.mxu0 %v2861
    %v4177 = vpop.f32.mrf.mxu0
    %v4178 = vadd.f32 %v3038, %v4177
    %v4179 = vpop.f32.mrf.mxu0
    %v4180 = vadd.f32 %v3042, %v4179
    %v4181 = vpop.f32.mrf.mxu0
    %v4182 = vadd.f32 %v3038, %v4181
    %v4183 = vpop.f32.mrf.mxu0
    %v4184 = vadd.f32 %v3042, %v4183
    %4185 = vmatprep.mubr.bf16.mxu0 %v2866
    %4186 = vmatmul.mubr.bf16.gmra.mxu0 %v2865
    %v4187 = vpop.f32.mrf.mxu0
    %v4188 = vadd.f32 %v3038, %v4187
    %v4189 = vpop.f32.mrf.mxu0
    %v4190 = vadd.f32 %v3042, %v4189
    %v4191 = vpop.f32.mrf.mxu0
    %v4192 = vadd.f32 %v3038, %v4191
    %v4193 = vpop.f32.mrf.mxu0
    %v4194 = vadd.f32 %v3042, %v4193
    %4195 = vmatprep.mubr.bf16.mxu0 %v2870
    %4196 = vmatmul.mubr.bf16.gmra.mxu0 %v2869
    %v4197 = vpop.f32.mrf.mxu0
    %v4198 = vadd.f32 %v3038, %v4197
    %v4199 = vpop.f32.mrf.mxu0
    %v4200 = vadd.f32 %v3042, %v4199
    %v4201 = vpop.f32.mrf.mxu0
    %v4202 = vadd.f32 %v3038, %v4201
    %v4203 = vpop.f32.mrf.mxu0
    %v4204 = vadd.f32 %v3042, %v4203
    %4205 = vmatprep.mubr.bf16.mxu0 %v2874
    %4206 = vmatmul.mubr.bf16.gmra.mxu0 %v2873
    %v4207 = vpop.f32.mrf.mxu0
    %v4208 = vadd.f32 %v3038, %v4207
    %v4209 = vpop.f32.mrf.mxu0
    %v4210 = vadd.f32 %v3042, %v4209
    %v4211 = vpop.f32.mrf.mxu0
    %v4212 = vadd.f32 %v3038, %v4211
    %v4213 = vpop.f32.mrf.mxu0
    %v4214 = vadd.f32 %v3042, %v4213
    %4215 = vmatprep.mubr.bf16.mxu0 %v2878
    %4216 = vmatmul.mubr.bf16.gmra.mxu0 %v2877
    %v4217 = vpop.f32.mrf.mxu0
    %v4218 = vadd.f32 %v3038, %v4217
    %v4219 = vpop.f32.mrf.mxu0
    %v4220 = vadd.f32 %v3042, %v4219
    %v4221 = vpop.f32.mrf.mxu0
    %v4222 = vadd.f32 %v3038, %v4221
    %v4223 = vpop.f32.mrf.mxu0
    %v4224 = vadd.f32 %v3042, %v4223
    %4225 = vmatprep.mubr.bf16.mxu0 %v2882
    %4226 = vmatmul.mubr.bf16.gmra.mxu0 %v2881
    %v4227 = vpop.f32.mrf.mxu0
    %v4228 = vadd.f32 %v3038, %v4227
    %v4229 = vpop.f32.mrf.mxu0
    %v4230 = vadd.f32 %v3042, %v4229
    %v4231 = vpop.f32.mrf.mxu0
    %v4232 = vadd.f32 %v3038, %v4231
    %v4233 = vpop.f32.mrf.mxu0
    %v4234 = vadd.f32 %v3042, %v4233
    %4235 = vmatprep.mubr.bf16.mxu0 %v2886
    %4236 = vmatmul.mubr.bf16.gmra.mxu0 %v2885
    %v4237 = vpop.f32.mrf.mxu0
    %v4238 = vadd.f32 %v3038, %v4237
    %v4239 = vpop.f32.mrf.mxu0
    %v4240 = vadd.f32 %v3042, %v4239
    %v4241 = vpop.f32.mrf.mxu0
    %v4242 = vadd.f32 %v3038, %v4241
    %v4243 = vpop.f32.mrf.mxu0
    %v4244 = vadd.f32 %v3042, %v4243
    %4245 = vmatprep.mubr.bf16.mxu0 %v2890
    %4246 = vmatmul.mubr.bf16.gmra.mxu0 %v2889
    %v4247 = vpop.f32.mrf.mxu0
    %v4248 = vadd.f32 %v3038, %v4247
    %v4249 = vpop.f32.mrf.mxu0
    %v4250 = vadd.f32 %v3042, %v4249
    %v4251 = vpop.f32.mrf.mxu0
    %v4252 = vadd.f32 %v3038, %v4251
    %v4253 = vpop.f32.mrf.mxu0
    %v4254 = vadd.f32 %v3042, %v4253
    %4255 = vmatprep.mubr.bf16.mxu0 %v2894
    %4256 = vmatmul.mubr.bf16.gmra.mxu0 %v2893
    %v4257 = vpop.f32.mrf.mxu0
    %v4258 = vadd.f32 %v3038, %v4257
    %v4259 = vpop.f32.mrf.mxu0
    %v4260 = vadd.f32 %v3042, %v4259
    %v4261 = vpop.f32.mrf.mxu0
    %v4262 = vadd.f32 %v3038, %v4261
    %v4263 = vpop.f32.mrf.mxu0
    %v4264 = vadd.f32 %v3042, %v4263
    %4265 = vdwg.mxu0
    %4266 = vmatprep.subr.bf16.mxu0 %v3526
    %4267 = vmatpush1.bf16.msra.mxu0 %v3525
    %4268 = vmatprep.subr.bf16.mxu0 %v3522
    %4269 = vmatpush1.bf16.msra.mxu0 %v3521
    %4270 = vmatprep.subr.bf16.mxu0 %v3518
    %4271 = vmatpush1.bf16.msra.mxu0 %v3517
    %4272 = vmatprep.subr.bf16.mxu0 %v3514
    %4273 = vmatpush1.bf16.msra.mxu0 %v3513
    %4274 = vmatprep.subr.bf16.mxu0 %v3510
    %4275 = vmatpush1.bf16.msra.mxu0 %v3509
    %4276 = vmatprep.subr.bf16.mxu0 %v3506
    %4277 = vmatpush1.bf16.msra.mxu0 %v3505
    %4278 = vmatprep.subr.bf16.mxu0 %v3502
    %4279 = vmatpush1.bf16.msra.mxu0 %v3501
    %4280 = vmatprep.subr.bf16.mxu0 %v3498
    %4281 = vmatpush1.bf16.msra.mxu0 %v3497
    %4282 = vmatprep.subr.bf16.mxu0 %v3558
    %4283 = vmatpush2.bf16.msra.mxu0 %v3557
    %4284 = vmatprep.subr.bf16.mxu0 %v3554
    %4285 = vmatpush2.bf16.msra.mxu0 %v3553
    %4286 = vmatprep.subr.bf16.mxu0 %v3550
    %4287 = vmatpush2.bf16.msra.mxu0 %v3549
    %4288 = vmatprep.subr.bf16.mxu0 %v3546
    %4289 = vmatpush2.bf16.msra.mxu0 %v3545
    %4290 = vmatprep.subr.bf16.mxu0 %v3542
    %4291 = vmatpush2.bf16.msra.mxu0 %v3541
    %4292 = vmatprep.subr.bf16.mxu0 %v3538
    %4293 = vmatpush2.bf16.msra.mxu0 %v3537
    %4294 = vmatprep.subr.bf16.mxu0 %v3534
    %4295 = vmatpush2.bf16.msra.mxu0 %v3533
    %4296 = vmatprep.subr.bf16.mxu0 %v3530
    %4297 = vmatpush2.bf16.msra.mxu0 %v3529
    %4298 = vmatprep.mubr.bf16.mxu0 %v2836
    %4299 = vmatmul.mubr.bf16.gmra.mxu0 %v2835
    %v4300 = vpop.f32.mrf.mxu0
    %v4301 = vadd.f32 %v4108, %v4300
    %v4302 = vpop.f32.mrf.mxu0
    %v4303 = vadd.f32 %v4110, %v4302
    %v4304 = vpop.f32.mrf.mxu0
    %v4305 = vadd.f32 %v4112, %v4304
    %v4306 = vpop.f32.mrf.mxu0
    %v4307 = vadd.f32 %v4114, %v4306
    %4308 = vmatprep.mubr.bf16.mxu0 %v2840
    %4309 = vmatmul.mubr.bf16.gmra.mxu0 %v2839
    %v4310 = vpop.f32.mrf.mxu0
    %v4311 = vadd.f32 %v4118, %v4310
    %v4312 = vpop.f32.mrf.mxu0
    %v4313 = vadd.f32 %v4120, %v4312
    %v4314 = vpop.f32.mrf.mxu0
    %v4315 = vadd.f32 %v4122, %v4314
    %v4316 = vpop.f32.mrf.mxu0
    %v4317 = vadd.f32 %v4124, %v4316
    %4318 = vmatprep.mubr.bf16.mxu0 %v2844
    %4319 = vmatmul.mubr.bf16.gmra.mxu0 %v2843
    %v4320 = vpop.f32.mrf.mxu0
    %v4321 = vadd.f32 %v4128, %v4320
    %v4322 = vpop.f32.mrf.mxu0
    %v4323 = vadd.f32 %v4130, %v4322
    %v4324 = vpop.f32.mrf.mxu0
    %v4325 = vadd.f32 %v4132, %v4324
    %v4326 = vpop.f32.mrf.mxu0
    %v4327 = vadd.f32 %v4134, %v4326
    %4328 = vmatprep.mubr.bf16.mxu0 %v2848
    %4329 = vmatmul.mubr.bf16.gmra.mxu0 %v2847
    %v4330 = vpop.f32.mrf.mxu0
    %v4331 = vadd.f32 %v4138, %v4330
    %v4332 = vpop.f32.mrf.mxu0
    %v4333 = vadd.f32 %v4140, %v4332
    %v4334 = vpop.f32.mrf.mxu0
    %v4335 = vadd.f32 %v4142, %v4334
    %v4336 = vpop.f32.mrf.mxu0
    %v4337 = vadd.f32 %v4144, %v4336
    %4338 = vmatprep.mubr.bf16.mxu0 %v2852
    %4339 = vmatmul.mubr.bf16.gmra.mxu0 %v2851
    %v4340 = vpop.f32.mrf.mxu0
    %v4341 = vadd.f32 %v4148, %v4340
    %v4342 = vpop.f32.mrf.mxu0
    %v4343 = vadd.f32 %v4150, %v4342
    %v4344 = vpop.f32.mrf.mxu0
    %v4345 = vadd.f32 %v4152, %v4344
    %v4346 = vpop.f32.mrf.mxu0
    %v4347 = vadd.f32 %v4154, %v4346
    %4348 = vmatprep.mubr.bf16.mxu0 %v2856
    %4349 = vmatmul.mubr.bf16.gmra.mxu0 %v2855
    %v4350 = vpop.f32.mrf.mxu0
    %v4351 = vadd.f32 %v4158, %v4350
    %v4352 = vpop.f32.mrf.mxu0
    %v4353 = vadd.f32 %v4160, %v4352
    %v4354 = vpop.f32.mrf.mxu0
    %v4355 = vadd.f32 %v4162, %v4354
    %v4356 = vpop.f32.mrf.mxu0
    %v4357 = vadd.f32 %v4164, %v4356
    %4358 = vmatprep.mubr.bf16.mxu0 %v2860
    %4359 = vmatmul.mubr.bf16.gmra.mxu0 %v2859
    %v4360 = vpop.f32.mrf.mxu0
    %v4361 = vadd.f32 %v4168, %v4360
    %v4362 = vpop.f32.mrf.mxu0
    %v4363 = vadd.f32 %v4170, %v4362
    %v4364 = vpop.f32.mrf.mxu0
    %v4365 = vadd.f32 %v4172, %v4364
    %v4366 = vpop.f32.mrf.mxu0
    %v4367 = vadd.f32 %v4174, %v4366
    %4368 = vmatprep.mubr.bf16.mxu0 %v2864
    %4369 = vmatmul.mubr.bf16.gmra.mxu0 %v2863
    %v4370 = vpop.f32.mrf.mxu0
    %v4371 = vadd.f32 %v4178, %v4370
    %v4372 = vpop.f32.mrf.mxu0
    %v4373 = vadd.f32 %v4180, %v4372
    %v4374 = vpop.f32.mrf.mxu0
    %v4375 = vadd.f32 %v4182, %v4374
    %v4376 = vpop.f32.mrf.mxu0
    %v4377 = vadd.f32 %v4184, %v4376
    %4378 = vmatprep.mubr.bf16.mxu0 %v2868
    %4379 = vmatmul.mubr.bf16.gmra.mxu0 %v2867
    %v4380 = vpop.f32.mrf.mxu0
    %v4381 = vadd.f32 %v4188, %v4380
    %v4382 = vpop.f32.mrf.mxu0
    %v4383 = vadd.f32 %v4190, %v4382
    %v4384 = vpop.f32.mrf.mxu0
    %v4385 = vadd.f32 %v4192, %v4384
    %v4386 = vpop.f32.mrf.mxu0
    %v4387 = vadd.f32 %v4194, %v4386
    %4388 = vmatprep.mubr.bf16.mxu0 %v2872
    %4389 = vmatmul.mubr.bf16.gmra.mxu0 %v2871
    %v4390 = vpop.f32.mrf.mxu0
    %v4391 = vadd.f32 %v4198, %v4390
    %v4392 = vpop.f32.mrf.mxu0
    %v4393 = vadd.f32 %v4200, %v4392
    %v4394 = vpop.f32.mrf.mxu0
    %v4395 = vadd.f32 %v4202, %v4394
    %v4396 = vpop.f32.mrf.mxu0
    %v4397 = vadd.f32 %v4204, %v4396
    %4398 = vmatprep.mubr.bf16.mxu0 %v2876
    %4399 = vmatmul.mubr.bf16.gmra.mxu0 %v2875
    %v4400 = vpop.f32.mrf.mxu0
    %v4401 = vadd.f32 %v4208, %v4400
    %v4402 = vpop.f32.mrf.mxu0
    %v4403 = vadd.f32 %v4210, %v4402
    %v4404 = vpop.f32.mrf.mxu0
    %v4405 = vadd.f32 %v4212, %v4404
    %v4406 = vpop.f32.mrf.mxu0
    %v4407 = vadd.f32 %v4214, %v4406
    %4408 = vmatprep.mubr.bf16.mxu0 %v2880
    %4409 = vmatmul.mubr.bf16.gmra.mxu0 %v2879
    %v4410 = vpop.f32.mrf.mxu0
    %v4411 = vadd.f32 %v4218, %v4410
    %v4412 = vpop.f32.mrf.mxu0
    %v4413 = vadd.f32 %v4220, %v4412
    %v4414 = vpop.f32.mrf.mxu0
    %v4415 = vadd.f32 %v4222, %v4414
    %v4416 = vpop.f32.mrf.mxu0
    %v4417 = vadd.f32 %v4224, %v4416
    %4418 = vmatprep.mubr.bf16.mxu0 %v2884
    %4419 = vmatmul.mubr.bf16.gmra.mxu0 %v2883
    %v4420 = vpop.f32.mrf.mxu0
    %v4421 = vadd.f32 %v4228, %v4420
    %v4422 = vpop.f32.mrf.mxu0
    %v4423 = vadd.f32 %v4230, %v4422
    %v4424 = vpop.f32.mrf.mxu0
    %v4425 = vadd.f32 %v4232, %v4424
    %v4426 = vpop.f32.mrf.mxu0
    %v4427 = vadd.f32 %v4234, %v4426
    %4428 = vmatprep.mubr.bf16.mxu0 %v2888
    %4429 = vmatmul.mubr.bf16.gmra.mxu0 %v2887
    %v4430 = vpop.f32.mrf.mxu0
    %v4431 = vadd.f32 %v4238, %v4430
    %v4432 = vpop.f32.mrf.mxu0
    %v4433 = vadd.f32 %v4240, %v4432
    %v4434 = vpop.f32.mrf.mxu0
    %v4435 = vadd.f32 %v4242, %v4434
    %v4436 = vpop.f32.mrf.mxu0
    %v4437 = vadd.f32 %v4244, %v4436
    %4438 = vmatprep.mubr.bf16.mxu0 %v2892
    %4439 = vmatmul.mubr.bf16.gmra.mxu0 %v2891
    %v4440 = vpop.f32.mrf.mxu0
    %v4441 = vadd.f32 %v4248, %v4440
    %v4442 = vpop.f32.mrf.mxu0
    %v4443 = vadd.f32 %v4250, %v4442
    %v4444 = vpop.f32.mrf.mxu0
    %v4445 = vadd.f32 %v4252, %v4444
    %v4446 = vpop.f32.mrf.mxu0
    %v4447 = vadd.f32 %v4254, %v4446
    %4448 = vmatprep.mubr.bf16.mxu0 %v2896
    %4449 = vmatmul.mubr.bf16.gmra.mxu0 %v2895
    %v4450 = vpop.f32.mrf.mxu0
    %v4451 = vadd.f32 %v4258, %v4450
    %v4452 = vpop.f32.mrf.mxu0
    %v4453 = vadd.f32 %v4260, %v4452
    %v4454 = vpop.f32.mrf.mxu0
    %v4455 = vadd.f32 %v4262, %v4454
    %v4456 = vpop.f32.mrf.mxu0
    %v4457 = vadd.f32 %v4264, %v4456
    %4458 = vdwg.mxu0
    %v4459 = vmax.f32 %v3915, 0.0
    %v4460 = vmax.f32 %v3917, 0.0
    %v4461 = vmax.f32 %v4301, 0.0
    %v4462 = vmax.f32 %v4303, 0.0
    %v4463 = vmax.f32 %v3919, 0.0
    %v4464 = vmax.f32 %v3921, 0.0
    %v4465 = vmax.f32 %v4305, 0.0
    %v4466 = vmax.f32 %v4307, 0.0
    %v4467 = vmax.f32 %v3925, 0.0
    %v4468 = vmax.f32 %v3927, 0.0
    %v4469 = vmax.f32 %v4311, 0.0
    %v4470 = vmax.f32 %v4313, 0.0
    %v4471 = vmax.f32 %v3929, 0.0
    %v4472 = vmax.f32 %v3931, 0.0
    %v4473 = vmax.f32 %v4315, 0.0
    %v4474 = vmax.f32 %v4317, 0.0
    %v4475 = vmax.f32 %v3935, 0.0
    %v4476 = vmax.f32 %v3937, 0.0
    %v4477 = vmax.f32 %v4321, 0.0
    %v4478 = vmax.f32 %v4323, 0.0
    %v4479 = vmax.f32 %v3939, 0.0
    %v4480 = vmax.f32 %v3941, 0.0
    %v4481 = vmax.f32 %v4325, 0.0
    %v4482 = vmax.f32 %v4327, 0.0
    %v4483 = vmax.f32 %v3945, 0.0
    %v4484 = vmax.f32 %v3947, 0.0
    %v4485 = vmax.f32 %v4331, 0.0
    %v4486 = vmax.f32 %v4333, 0.0
    %v4487 = vmax.f32 %v3949, 0.0
    %v4488 = vmax.f32 %v3951, 0.0
    %v4489 = vmax.f32 %v4335, 0.0
    %v4490 = vmax.f32 %v4337, 0.0
    %v4491 = vmax.f32 %v3955, 0.0
    %v4492 = vmax.f32 %v3957, 0.0
    %v4493 = vmax.f32 %v4341, 0.0
    %v4494 = vmax.f32 %v4343, 0.0
    %v4495 = vmax.f32 %v3959, 0.0
    %v4496 = vmax.f32 %v3961, 0.0
    %v4497 = vmax.f32 %v4345, 0.0
    %v4498 = vmax.f32 %v4347, 0.0
    %v4499 = vmax.f32 %v3965, 0.0
    %v4500 = vmax.f32 %v3967, 0.0
    %v4501 = vmax.f32 %v4351, 0.0
    %v4502 = vmax.f32 %v4353, 0.0
    %v4503 = vmax.f32 %v3969, 0.0
    %v4504 = vmax.f32 %v3971, 0.0
    %v4505 = vmax.f32 %v4355, 0.0
    %v4506 = vmax.f32 %v4357, 0.0
    %v4507 = vmax.f32 %v3975, 0.0
    %v4508 = vmax.f32 %v3977, 0.0
    %v4509 = vmax.f32 %v4361, 0.0
    %v4510 = vmax.f32 %v4363, 0.0
    %v4511 = vmax.f32 %v3979, 0.0
    %v4512 = vmax.f32 %v3981, 0.0
    %v4513 = vmax.f32 %v4365, 0.0
    %v4514 = vmax.f32 %v4367, 0.0
    %v4515 = vmax.f32 %v3985, 0.0
    %v4516 = vmax.f32 %v3987, 0.0
    %v4517 = vmax.f32 %v4371, 0.0
    %v4518 = vmax.f32 %v4373, 0.0
    %v4519 = vmax.f32 %v3989, 0.0
    %v4520 = vmax.f32 %v3991, 0.0
    %v4521 = vmax.f32 %v4375, 0.0
    %v4522 = vmax.f32 %v4377, 0.0
    %v4523 = vmax.f32 %v3995, 0.0
    %v4524 = vmax.f32 %v3997, 0.0
    %v4525 = vmax.f32 %v4381, 0.0
    %v4526 = vmax.f32 %v4383, 0.0
    %v4527 = vmax.f32 %v3999, 0.0
    %v4528 = vmax.f32 %v4001, 0.0
    %v4529 = vmax.f32 %v4385, 0.0
    %v4530 = vmax.f32 %v4387, 0.0
    %v4531 = vmax.f32 %v4005, 0.0
    %v4532 = vmax.f32 %v4007, 0.0
    %v4533 = vmax.f32 %v4391, 0.0
    %v4534 = vmax.f32 %v4393, 0.0
    %v4535 = vmax.f32 %v4009, 0.0
    %v4536 = vmax.f32 %v4011, 0.0
    %v4537 = vmax.f32 %v4395, 0.0
    %v4538 = vmax.f32 %v4397, 0.0
    %v4539 = vmax.f32 %v4015, 0.0
    %v4540 = vmax.f32 %v4017, 0.0
    %v4541 = vmax.f32 %v4401, 0.0
    %v4542 = vmax.f32 %v4403, 0.0
    %v4543 = vmax.f32 %v4019, 0.0
    %v4544 = vmax.f32 %v4021, 0.0
    %v4545 = vmax.f32 %v4405, 0.0
    %v4546 = vmax.f32 %v4407, 0.0
    %v4547 = vmax.f32 %v4025, 0.0
    %v4548 = vmax.f32 %v4027, 0.0
    %v4549 = vmax.f32 %v4411, 0.0
    %v4550 = vmax.f32 %v4413, 0.0
    %v4551 = vmax.f32 %v4029, 0.0
    %v4552 = vmax.f32 %v4031, 0.0
    %v4553 = vmax.f32 %v4415, 0.0
    %v4554 = vmax.f32 %v4417, 0.0
    %v4555 = vmax.f32 %v4035, 0.0
    %v4556 = vmax.f32 %v4037, 0.0
    %v4557 = vmax.f32 %v4421, 0.0
    %v4558 = vmax.f32 %v4423, 0.0
    %v4559 = vmax.f32 %v4039, 0.0
    %v4560 = vmax.f32 %v4041, 0.0
    %v4561 = vmax.f32 %v4425, 0.0
    %v4562 = vmax.f32 %v4427, 0.0
    %v4563 = vmax.f32 %v4045, 0.0
    %v4564 = vmax.f32 %v4047, 0.0
    %v4565 = vmax.f32 %v4431, 0.0
    %v4566 = vmax.f32 %v4433, 0.0
    %v4567 = vmax.f32 %v4049, 0.0
    %v4568 = vmax.f32 %v4051, 0.0
    %v4569 = vmax.f32 %v4435, 0.0
    %v4570 = vmax.f32 %v4437, 0.0
    %v4571 = vmax.f32 %v4055, 0.0
    %v4572 = vmax.f32 %v4057, 0.0
    %v4573 = vmax.f32 %v4441, 0.0
    %v4574 = vmax.f32 %v4443, 0.0
    %v4575 = vmax.f32 %v4059, 0.0
    %v4576 = vmax.f32 %v4061, 0.0
    %v4577 = vmax.f32 %v4445, 0.0
    %v4578 = vmax.f32 %v4447, 0.0
    %v4579 = vmax.f32 %v4065, 0.0
    %v4580 = vmax.f32 %v4067, 0.0
    %v4581 = vmax.f32 %v4451, 0.0
    %v4582 = vmax.f32 %v4453, 0.0
    %v4583 = vmax.f32 %v4069, 0.0
    %v4584 = vmax.f32 %v4071, 0.0
    %v4585 = vmax.f32 %v4455, 0.0
    %v4586 = vmax.f32 %v4457, 0.0
    %v4587 = vpack.c.bf16 %v4463, %v4459
    %v4588 = vpack.c.bf16 %v4464, %v4460
    %v4589 = vpack.c.bf16 %v4465, %v4461
    %v4590 = vpack.c.bf16 %v4466, %v4462
    %v4591 = vpack.c.bf16 %v4471, %v4467
    %v4592 = vpack.c.bf16 %v4472, %v4468
    %v4593 = vpack.c.bf16 %v4473, %v4469
    %v4594 = vpack.c.bf16 %v4474, %v4470
    %v4595 = vpack.c.bf16 %v4479, %v4475
    %v4596 = vpack.c.bf16 %v4480, %v4476
    %v4597 = vpack.c.bf16 %v4481, %v4477
    %v4598 = vpack.c.bf16 %v4482, %v4478
    %v4599 = vpack.c.bf16 %v4487, %v4483
    %v4600 = vpack.c.bf16 %v4488, %v4484
    %v4601 = vpack.c.bf16 %v4489, %v4485
    %v4602 = vpack.c.bf16 %v4490, %v4486
    %v4603 = vpack.c.bf16 %v4495, %v4491
    %v4604 = vpack.c.bf16 %v4496, %v4492
    %v4605 = vpack.c.bf16 %v4497, %v4493
    %v4606 = vpack.c.bf16 %v4498, %v4494
    %v4607 = vpack.c.bf16 %v4503, %v4499
    %v4608 = vpack.c.bf16 %v4504, %v4500
    %v4609 = vpack.c.bf16 %v4505, %v4501
    %v4610 = vpack.c.bf16 %v4506, %v4502
    %v4611 = vpack.c.bf16 %v4511, %v4507
    %v4612 = vpack.c.bf16 %v4512, %v4508
    %v4613 = vpack.c.bf16 %v4513, %v4509
    %v4614 = vpack.c.bf16 %v4514, %v4510
    %v4615 = vpack.c.bf16 %v4519, %v4515
    %v4616 = vpack.c.bf16 %v4520, %v4516
    %v4617 = vpack.c.bf16 %v4521, %v4517
    %v4618 = vpack.c.bf16 %v4522, %v4518
    %v4619 = vpack.c.bf16 %v4527, %v4523
    %v4620 = vpack.c.bf16 %v4528, %v4524
    %v4621 = vpack.c.bf16 %v4529, %v4525
    %v4622 = vpack.c.bf16 %v4530, %v4526
    %v4623 = vpack.c.bf16 %v4535, %v4531
    %v4624 = vpack.c.bf16 %v4536, %v4532
    %v4625 = vpack.c.bf16 %v4537, %v4533
    %v4626 = vpack.c.bf16 %v4538, %v4534
    %v4627 = vpack.c.bf16 %v4543, %v4539
    %v4628 = vpack.c.bf16 %v4544, %v4540
    %v4629 = vpack.c.bf16 %v4545, %v4541
    %v4630 = vpack.c.bf16 %v4546, %v4542
    %v4631 = vpack.c.bf16 %v4551, %v4547
    %v4632 = vpack.c.bf16 %v4552, %v4548
    %v4633 = vpack.c.bf16 %v4553, %v4549
    %v4634 = vpack.c.bf16 %v4554, %v4550
    %v4635 = vpack.c.bf16 %v4559, %v4555
    %v4636 = vpack.c.bf16 %v4560, %v4556
    %v4637 = vpack.c.bf16 %v4561, %v4557
    %v4638 = vpack.c.bf16 %v4562, %v4558
    %v4639 = vpack.c.bf16 %v4567, %v4563
    %v4640 = vpack.c.bf16 %v4568, %v4564
    %v4641 = vpack.c.bf16 %v4569, %v4565
    %v4642 = vpack.c.bf16 %v4570, %v4566
    %v4643 = vpack.c.bf16 %v4575, %v4571
    %v4644 = vpack.c.bf16 %v4576, %v4572
    %v4645 = vpack.c.bf16 %v4577, %v4573
    %v4646 = vpack.c.bf16 %v4578, %v4574
    %v4647 = vpack.c.bf16 %v4583, %v4579
    %v4648 = vpack.c.bf16 %v4584, %v4580
    %v4649 = vpack.c.bf16 %v4585, %v4581
    %v4650 = vpack.c.bf16 %v4586, %v4582
    %v4651 = vld [vmem:[%s9] sm:$0xf]
    %v4652 = vld [vmem:[%s9 + $0x4] sm:$0xf]
    %v4653 = vld [vmem:[%s9 + $0x8] sm:$0xf]
    %v4654 = vld [vmem:[%s9 + $0xc] sm:$0xf]
    %v4655 = vld [vmem:[%s9 + $0x10] sm:$0xf]
    %v4656 = vld [vmem:[%s9 + $0x14] sm:$0xf]
    %v4657 = vld [vmem:[%s9 + $0x18] sm:$0xf]
    %v4658 = vld [vmem:[%s9 + $0x1c] sm:$0xf]
    %v4659 = vld [vmem:[%s9 + $0x20] sm:$0xf]
    %v4660 = vld [vmem:[%s9 + $0x24] sm:$0xf]
    %v4661 = vld [vmem:[%s9 + $0x28] sm:$0xf]
    %v4662 = vld [vmem:[%s9 + $0x2c] sm:$0xf]
    %v4663 = vld [vmem:[%s9 + $0x30] sm:$0xf]
    %v4664 = vld [vmem:[%s9 + $0x34] sm:$0xf]
    %v4665 = vld [vmem:[%s9 + $0x38] sm:$0xf]
    %v4666 = vld [vmem:[%s9 + $0x3c] sm:$0xf]
    %v4667 = vld [vmem:[%s9 + $0x40] sm:$0xf]
    %v4668 = vld [vmem:[%s9 + $0x44] sm:$0xf]
    %v4669 = vld [vmem:[%s9 + $0x48] sm:$0xf]
    %v4670 = vld [vmem:[%s9 + $0x4c] sm:$0xf]
    %v4671 = vld [vmem:[%s9 + $0x50] sm:$0xf]
    %v4672 = vld [vmem:[%s9 + $0x54] sm:$0xf]
    %v4673 = vld [vmem:[%s9 + $0x58] sm:$0xf]
    %v4674 = vld [vmem:[%s9 + $0x5c] sm:$0xf]
    %v4675 = vld [vmem:[%s9 + $0x60] sm:$0xf]
    %v4676 = vld [vmem:[%s9 + $0x64] sm:$0xf]
    %v4677 = vld [vmem:[%s9 + $0x68] sm:$0xf]
    %v4678 = vld [vmem:[%s9 + $0x6c] sm:$0xf]
    %v4679 = vld [vmem:[%s9 + $0x70] sm:$0xf]
    %v4680 = vld [vmem:[%s9 + $0x74] sm:$0xf]
    %v4681 = vld [vmem:[%s9 + $0x78] sm:$0xf]
    %v4682 = vld [vmem:[%s9 + $0x7c] sm:$0xf]
    %v4683 = vld [vmem:[%s9 + $0x80] sm:$0xf]
    %v4684 = vld [vmem:[%s9 + $0x84] sm:$0xf]
    %v4685 = vld [vmem:[%s9 + $0x88] sm:$0xf]
    %v4686 = vld [vmem:[%s9 + $0x8c] sm:$0xf]
    %v4687 = vld [vmem:[%s9 + $0x90] sm:$0xf]
    %v4688 = vld [vmem:[%s9 + $0x94] sm:$0xf]
    %v4689 = vld [vmem:[%s9 + $0x98] sm:$0xf]
    %v4690 = vld [vmem:[%s9 + $0x9c] sm:$0xf]
    %v4691 = vld [vmem:[%s9 + $0xa0] sm:$0xf]
    %v4692 = vld [vmem:[%s9 + $0xa4] sm:$0xf]
    %v4693 = vld [vmem:[%s9 + $0xa8] sm:$0xf]
    %v4694 = vld [vmem:[%s9 + $0xac] sm:$0xf]
    %v4695 = vld [vmem:[%s9 + $0xb0] sm:$0xf]
    %v4696 = vld [vmem:[%s9 + $0xb4] sm:$0xf]
    %v4697 = vld [vmem:[%s9 + $0xb8] sm:$0xf]
    %v4698 = vld [vmem:[%s9 + $0xbc] sm:$0xf]
    %v4699 = vld [vmem:[%s9 + $0xc0] sm:$0xf]
    %v4700 = vld [vmem:[%s9 + $0xc4] sm:$0xf]
    %v4701 = vld [vmem:[%s9 + $0xc8] sm:$0xf]
    %v4702 = vld [vmem:[%s9 + $0xcc] sm:$0xf]
    %v4703 = vld [vmem:[%s9 + $0xd0] sm:$0xf]
    %v4704 = vld [vmem:[%s9 + $0xd4] sm:$0xf]
    %v4705 = vld [vmem:[%s9 + $0xd8] sm:$0xf]
    %v4706 = vld [vmem:[%s9 + $0xdc] sm:$0xf]
    %v4707 = vld [vmem:[%s9 + $0xe0] sm:$0xf]
    %v4708 = vld [vmem:[%s9 + $0xe4] sm:$0xf]
    %v4709 = vld [vmem:[%s9 + $0xe8] sm:$0xf]
    %v4710 = vld [vmem:[%s9 + $0xec] sm:$0xf]
    %v4711 = vld [vmem:[%s9 + $0xf0] sm:$0xf]
    %v4712 = vld [vmem:[%s9 + $0xf4] sm:$0xf]
    %v4713 = vld [vmem:[%s9 + $0xf8] sm:$0xf]
    %v4714 = vld [vmem:[%s9 + $0xfc] sm:$0xf]
    %v4715 = vld [vmem:[%s10] sm:$0x1]
    %v4717 = vlaneseq
    %v4718 = vshrl.u32 %v4717, 7
    %v4719 = vsub.s32 0, %v4718
    %v4720 = vrot.slane %v4715, %v4719
    %v4786 = vunpack.c.l.b16 %v4651
    %v4787 = vunpack.c.l.b16 %v4652
    %v4788 = vunpack.c.l.b16 %v4653
    %v4789 = vunpack.c.l.b16 %v4654
    %v4790 = vunpack.c.l.b16 %v4655
    %v4791 = vunpack.c.l.b16 %v4656
    %v4792 = vunpack.c.l.b16 %v4657
    %v4793 = vunpack.c.l.b16 %v4658
    %v4794 = vunpack.c.l.b16 %v4659
    %v4795 = vunpack.c.l.b16 %v4660
    %v4796 = vunpack.c.l.b16 %v4661
    %v4797 = vunpack.c.l.b16 %v4662
    %v4798 = vunpack.c.l.b16 %v4663
    %v4799 = vunpack.c.l.b16 %v4664
    %v4800 = vunpack.c.l.b16 %v4665
    %v4801 = vunpack.c.l.b16 %v4666
    %v4802 = vunpack.c.l.b16 %v4667
    %v4803 = vunpack.c.l.b16 %v4668
    %v4804 = vunpack.c.l.b16 %v4669
    %v4805 = vunpack.c.l.b16 %v4670
    %v4806 = vunpack.c.l.b16 %v4671
    %v4807 = vunpack.c.l.b16 %v4672
    %v4808 = vunpack.c.l.b16 %v4673
    %v4809 = vunpack.c.l.b16 %v4674
    %v4810 = vunpack.c.l.b16 %v4675
    %v4811 = vunpack.c.l.b16 %v4676
    %v4812 = vunpack.c.l.b16 %v4677
    %v4813 = vunpack.c.l.b16 %v4678
    %v4814 = vunpack.c.l.b16 %v4679
    %v4815 = vunpack.c.l.b16 %v4680
    %v4816 = vunpack.c.l.b16 %v4681
    %v4817 = vunpack.c.l.b16 %v4682
    %v4818 = vunpack.c.l.b16 %v4683
    %v4819 = vunpack.c.l.b16 %v4684
    %v4820 = vunpack.c.l.b16 %v4685
    %v4821 = vunpack.c.l.b16 %v4686
    %v4822 = vunpack.c.l.b16 %v4687
    %v4823 = vunpack.c.l.b16 %v4688
    %v4824 = vunpack.c.l.b16 %v4689
    %v4825 = vunpack.c.l.b16 %v4690
    %v4826 = vunpack.c.l.b16 %v4691
    %v4827 = vunpack.c.l.b16 %v4692
    %v4828 = vunpack.c.l.b16 %v4693
    %v4829 = vunpack.c.l.b16 %v4694
    %v4830 = vunpack.c.l.b16 %v4695
    %v4831 = vunpack.c.l.b16 %v4696
    %v4832 = vunpack.c.l.b16 %v4697
    %v4833 = vunpack.c.l.b16 %v4698
    %v4834 = vunpack.c.l.b16 %v4699
    %v4835 = vunpack.c.l.b16 %v4700
    %v4836 = vunpack.c.l.b16 %v4701
    %v4837 = vunpack.c.l.b16 %v4702
    %v4838 = vunpack.c.l.b16 %v4703
    %v4839 = vunpack.c.l.b16 %v4704
    %v4840 = vunpack.c.l.b16 %v4705
    %v4841 = vunpack.c.l.b16 %v4706
    %v4842 = vunpack.c.l.b16 %v4707
    %v4843 = vunpack.c.l.b16 %v4708
    %v4844 = vunpack.c.l.b16 %v4709
    %v4845 = vunpack.c.l.b16 %v4710
    %v4846 = vunpack.c.l.b16 %v4711
    %v4847 = vunpack.c.l.b16 %v4712
    %v4848 = vunpack.c.l.b16 %v4713
    %v4849 = vunpack.c.l.b16 %v4714
    %v4850 = vpack.c.b16 %v4787, %v4786
    %v4851 = vpack.c.b16 %v4789, %v4788
    %v4852 = vpack.c.b16 %v4791, %v4790
    %v4853 = vpack.c.b16 %v4793, %v4792
    %v4854 = vpack.c.b16 %v4795, %v4794
    %v4855 = vpack.c.b16 %v4797, %v4796
    %v4856 = vpack.c.b16 %v4799, %v4798
    %v4857 = vpack.c.b16 %v4801, %v4800
    %v4858 = vpack.c.b16 %v4803, %v4802
    %v4859 = vpack.c.b16 %v4805, %v4804
    %v4860 = vpack.c.b16 %v4807, %v4806
    %v4861 = vpack.c.b16 %v4809, %v4808
    %v4862 = vpack.c.b16 %v4811, %v4810
    %v4863 = vpack.c.b16 %v4813, %v4812
    %v4864 = vpack.c.b16 %v4815, %v4814
    %v4865 = vpack.c.b16 %v4817, %v4816
    %v4866 = vpack.c.b16 %v4819, %v4818
    %v4867 = vpack.c.b16 %v4821, %v4820
    %v4868 = vpack.c.b16 %v4823, %v4822
    %v4869 = vpack.c.b16 %v4825, %v4824
    %v4870 = vpack.c.b16 %v4827, %v4826
    %v4871 = vpack.c.b16 %v4829, %v4828
    %v4872 = vpack.c.b16 %v4831, %v4830
    %v4873 = vpack.c.b16 %v4833, %v4832
    %v4874 = vpack.c.b16 %v4835, %v4834
    %v4875 = vpack.c.b16 %v4837, %v4836
    %v4876 = vpack.c.b16 %v4839, %v4838
    %v4877 = vpack.c.b16 %v4841, %v4840
    %v4878 = vpack.c.b16 %v4843, %v4842
    %v4879 = vpack.c.b16 %v4845, %v4844
    %v4880 = vpack.c.b16 %v4847, %v4846
    %v4881 = vpack.c.b16 %v4849, %v4848
    %4914 = vmatprep.subr.bf16.mxu0 0
    %4915 = vmatpush1.bf16.msra.mxu0 %v4857
    %4916 = vmatprep.subr.bf16.mxu0 0
    %4917 = vmatpush1.bf16.msra.mxu0 %v4856
    %4918 = vmatprep.subr.bf16.mxu0 0
    %4919 = vmatpush1.bf16.msra.mxu0 %v4855
    %4920 = vmatprep.subr.bf16.mxu0 0
    %4921 = vmatpush1.bf16.msra.mxu0 %v4854
    %4922 = vmatprep.subr.bf16.mxu0 0
    %4923 = vmatpush1.bf16.msra.mxu0 %v4853
    %4924 = vmatprep.subr.bf16.mxu0 0
    %4925 = vmatpush1.bf16.msra.mxu0 %v4852
    %4926 = vmatprep.subr.bf16.mxu0 0
    %4927 = vmatpush1.bf16.msra.mxu0 %v4851
    %4928 = vmatprep.subr.bf16.mxu0 0
    %4929 = vmatpush1.bf16.msra.mxu0 %v4850
    %4930 = vmatprep.subr.bf16.mxu0 0
    %4931 = vmatpush2.bf16.msra.mxu0 %v4865
    %4932 = vmatprep.subr.bf16.mxu0 0
    %4933 = vmatpush2.bf16.msra.mxu0 %v4864
    %4934 = vmatprep.subr.bf16.mxu0 0
    %4935 = vmatpush2.bf16.msra.mxu0 %v4863
    %4936 = vmatprep.subr.bf16.mxu0 0
    %4937 = vmatpush2.bf16.msra.mxu0 %v4862
    %4938 = vmatprep.subr.bf16.mxu0 0
    %4939 = vmatpush2.bf16.msra.mxu0 %v4861
    %4940 = vmatprep.subr.bf16.mxu0 0
    %4941 = vmatpush2.bf16.msra.mxu0 %v4860
    %4942 = vmatprep.subr.bf16.mxu0 0
    %4943 = vmatpush2.bf16.msra.mxu0 %v4859
    %4944 = vmatprep.subr.bf16.mxu0 0
    %4945 = vmatpush2.bf16.msra.mxu0 %v4858
    %4946 = vmatprep.mubr.bf16.mxu0 %v4588
    %4947 = vmatmul.mubr.bf16.gmra.mxu0 %v4587
    %v4948 = vpop.f32.mrf.mxu0
    %v4949 = vadd.f32 %v4720, %v4948
    %v4950 = vpop.f32.mrf.mxu0
    %v4951 = vpop.f32.mrf.mxu0
    %v4952 = vadd.f32 %v4720, %v4951
    %v4953 = vpop.f32.mrf.mxu0
    %4954 = vmatprep.mubr.bf16.mxu0 %v4592
    %4955 = vmatmul.mubr.bf16.gmra.mxu0 %v4591
    %v4956 = vpop.f32.mrf.mxu0
    %v4957 = vadd.f32 %v4720, %v4956
    %v4958 = vpop.f32.mrf.mxu0
    %v4959 = vpop.f32.mrf.mxu0
    %v4960 = vadd.f32 %v4720, %v4959
    %v4961 = vpop.f32.mrf.mxu0
    %4962 = vmatprep.mubr.bf16.mxu0 %v4596
    %4963 = vmatmul.mubr.bf16.gmra.mxu0 %v4595
    %v4964 = vpop.f32.mrf.mxu0
    %v4965 = vadd.f32 %v4720, %v4964
    %v4966 = vpop.f32.mrf.mxu0
    %v4967 = vpop.f32.mrf.mxu0
    %v4968 = vadd.f32 %v4720, %v4967
    %v4969 = vpop.f32.mrf.mxu0
    %4970 = vmatprep.mubr.bf16.mxu0 %v4600
    %4971 = vmatmul.mubr.bf16.gmra.mxu0 %v4599
    %v4972 = vpop.f32.mrf.mxu0
    %v4973 = vadd.f32 %v4720, %v4972
    %v4974 = vpop.f32.mrf.mxu0
    %v4975 = vpop.f32.mrf.mxu0
    %v4976 = vadd.f32 %v4720, %v4975
    %v4977 = vpop.f32.mrf.mxu0
    %4978 = vmatprep.mubr.bf16.mxu0 %v4604
    %4979 = vmatmul.mubr.bf16.gmra.mxu0 %v4603
    %v4980 = vpop.f32.mrf.mxu0
    %v4981 = vadd.f32 %v4720, %v4980
    %v4982 = vpop.f32.mrf.mxu0
    %v4983 = vpop.f32.mrf.mxu0
    %v4984 = vadd.f32 %v4720, %v4983
    %v4985 = vpop.f32.mrf.mxu0
    %4986 = vmatprep.mubr.bf16.mxu0 %v4608
    %4987 = vmatmul.mubr.bf16.gmra.mxu0 %v4607
    %v4988 = vpop.f32.mrf.mxu0
    %v4989 = vadd.f32 %v4720, %v4988
    %v4990 = vpop.f32.mrf.mxu0
    %v4991 = vpop.f32.mrf.mxu0
    %v4992 = vadd.f32 %v4720, %v4991
    %v4993 = vpop.f32.mrf.mxu0
    %4994 = vmatprep.mubr.bf16.mxu0 %v4612
    %4995 = vmatmul.mubr.bf16.gmra.mxu0 %v4611
    %v4996 = vpop.f32.mrf.mxu0
    %v4997 = vadd.f32 %v4720, %v4996
    %v4998 = vpop.f32.mrf.mxu0
    %v4999 = vpop.f32.mrf.mxu0
    %v5000 = vadd.f32 %v4720, %v4999
    %v5001 = vpop.f32.mrf.mxu0
    %5002 = vmatprep.mubr.bf16.mxu0 %v4616
    %5003 = vmatmul.mubr.bf16.gmra.mxu0 %v4615
    %v5004 = vpop.f32.mrf.mxu0
    %v5005 = vadd.f32 %v4720, %v5004
    %v5006 = vpop.f32.mrf.mxu0
    %v5007 = vpop.f32.mrf.mxu0
    %v5008 = vadd.f32 %v4720, %v5007
    %v5009 = vpop.f32.mrf.mxu0
    %5010 = vmatprep.mubr.bf16.mxu0 %v4620
    %5011 = vmatmul.mubr.bf16.gmra.mxu0 %v4619
    %v5012 = vpop.f32.mrf.mxu0
    %v5013 = vadd.f32 %v4720, %v5012
    %v5014 = vpop.f32.mrf.mxu0
    %v5015 = vpop.f32.mrf.mxu0
    %v5016 = vadd.f32 %v4720, %v5015
    %v5017 = vpop.f32.mrf.mxu0
    %5018 = vmatprep.mubr.bf16.mxu0 %v4624
    %5019 = vmatmul.mubr.bf16.gmra.mxu0 %v4623
    %v5020 = vpop.f32.mrf.mxu0
    %v5021 = vadd.f32 %v4720, %v5020
    %v5022 = vpop.f32.mrf.mxu0
    %v5023 = vpop.f32.mrf.mxu0
    %v5024 = vadd.f32 %v4720, %v5023
    %v5025 = vpop.f32.mrf.mxu0
    %5026 = vmatprep.mubr.bf16.mxu0 %v4628
    %5027 = vmatmul.mubr.bf16.gmra.mxu0 %v4627
    %v5028 = vpop.f32.mrf.mxu0
    %v5029 = vadd.f32 %v4720, %v5028
    %v5030 = vpop.f32.mrf.mxu0
    %v5031 = vpop.f32.mrf.mxu0
    %v5032 = vadd.f32 %v4720, %v5031
    %v5033 = vpop.f32.mrf.mxu0
    %5034 = vmatprep.mubr.bf16.mxu0 %v4632
    %5035 = vmatmul.mubr.bf16.gmra.mxu0 %v4631
    %v5036 = vpop.f32.mrf.mxu0
    %v5037 = vadd.f32 %v4720, %v5036
    %v5038 = vpop.f32.mrf.mxu0
    %v5039 = vpop.f32.mrf.mxu0
    %v5040 = vadd.f32 %v4720, %v5039
    %v5041 = vpop.f32.mrf.mxu0
    %5042 = vmatprep.mubr.bf16.mxu0 %v4636
    %5043 = vmatmul.mubr.bf16.gmra.mxu0 %v4635
    %v5044 = vpop.f32.mrf.mxu0
    %v5045 = vadd.f32 %v4720, %v5044
    %v5046 = vpop.f32.mrf.mxu0
    %v5047 = vpop.f32.mrf.mxu0
    %v5048 = vadd.f32 %v4720, %v5047
    %v5049 = vpop.f32.mrf.mxu0
    %5050 = vmatprep.mubr.bf16.mxu0 %v4640
    %5051 = vmatmul.mubr.bf16.gmra.mxu0 %v4639
    %v5052 = vpop.f32.mrf.mxu0
    %v5053 = vadd.f32 %v4720, %v5052
    %v5054 = vpop.f32.mrf.mxu0
    %v5055 = vpop.f32.mrf.mxu0
    %v5056 = vadd.f32 %v4720, %v5055
    %v5057 = vpop.f32.mrf.mxu0
    %5058 = vmatprep.mubr.bf16.mxu0 %v4644
    %5059 = vmatmul.mubr.bf16.gmra.mxu0 %v4643
    %v5060 = vpop.f32.mrf.mxu0
    %v5061 = vadd.f32 %v4720, %v5060
    %v5062 = vpop.f32.mrf.mxu0
    %v5063 = vpop.f32.mrf.mxu0
    %v5064 = vadd.f32 %v4720, %v5063
    %v5065 = vpop.f32.mrf.mxu0
    %5066 = vmatprep.mubr.bf16.mxu0 %v4648
    %5067 = vmatmul.mubr.bf16.gmra.mxu0 %v4647
    %v5068 = vpop.f32.mrf.mxu0
    %v5069 = vadd.f32 %v4720, %v5068
    %v5070 = vpop.f32.mrf.mxu0
    %v5071 = vpop.f32.mrf.mxu0
    %v5072 = vadd.f32 %v4720, %v5071
    %v5073 = vpop.f32.mrf.mxu0
    %5074 = vdwg.mxu0
    %5075 = vmatprep.subr.bf16.mxu0 0
    %5076 = vmatpush1.bf16.msra.mxu0 %v4873
    %5077 = vmatprep.subr.bf16.mxu0 0
    %5078 = vmatpush1.bf16.msra.mxu0 %v4872
    %5079 = vmatprep.subr.bf16.mxu0 0
    %5080 = vmatpush1.bf16.msra.mxu0 %v4871
    %5081 = vmatprep.subr.bf16.mxu0 0
    %5082 = vmatpush1.bf16.msra.mxu0 %v4870
    %5083 = vmatprep.subr.bf16.mxu0 0
    %5084 = vmatpush1.bf16.msra.mxu0 %v4869
    %5085 = vmatprep.subr.bf16.mxu0 0
    %5086 = vmatpush1.bf16.msra.mxu0 %v4868
    %5087 = vmatprep.subr.bf16.mxu0 0
    %5088 = vmatpush1.bf16.msra.mxu0 %v4867
    %5089 = vmatprep.subr.bf16.mxu0 0
    %5090 = vmatpush1.bf16.msra.mxu0 %v4866
    %5091 = vmatprep.subr.bf16.mxu0 0
    %5092 = vmatpush2.bf16.msra.mxu0 %v4881
    %5093 = vmatprep.subr.bf16.mxu0 0
    %5094 = vmatpush2.bf16.msra.mxu0 %v4880
    %5095 = vmatprep.subr.bf16.mxu0 0
    %5096 = vmatpush2.bf16.msra.mxu0 %v4879
    %5097 = vmatprep.subr.bf16.mxu0 0
    %5098 = vmatpush2.bf16.msra.mxu0 %v4878
    %5099 = vmatprep.subr.bf16.mxu0 0
    %5100 = vmatpush2.bf16.msra.mxu0 %v4877
    %5101 = vmatprep.subr.bf16.mxu0 0
    %5102 = vmatpush2.bf16.msra.mxu0 %v4876
    %5103 = vmatprep.subr.bf16.mxu0 0
    %5104 = vmatpush2.bf16.msra.mxu0 %v4875
    %5105 = vmatprep.subr.bf16.mxu0 0
    %5106 = vmatpush2.bf16.msra.mxu0 %v4874
    %5107 = vmatprep.mubr.bf16.mxu0 %v4590
    %5108 = vmatmul.mubr.bf16.gmra.mxu0 %v4589
    %v5109 = vpop.f32.mrf.mxu0
    %v5110 = vadd.f32 %v4949, %v5109
    %v5111 = vpop.f32.mrf.mxu0
    %v5112 = vpop.f32.mrf.mxu0
    %v5113 = vadd.f32 %v4952, %v5112
    %v5114 = vpop.f32.mrf.mxu0
    %5115 = vmatprep.mubr.bf16.mxu0 %v4594
    %5116 = vmatmul.mubr.bf16.gmra.mxu0 %v4593
    %v5117 = vpop.f32.mrf.mxu0
    %v5118 = vadd.f32 %v4957, %v5117
    %v5119 = vpop.f32.mrf.mxu0
    %v5120 = vpop.f32.mrf.mxu0
    %v5121 = vadd.f32 %v4960, %v5120
    %v5122 = vpop.f32.mrf.mxu0
    %5123 = vmatprep.mubr.bf16.mxu0 %v4598
    %5124 = vmatmul.mubr.bf16.gmra.mxu0 %v4597
    %v5125 = vpop.f32.mrf.mxu0
    %v5126 = vadd.f32 %v4965, %v5125
    %v5127 = vpop.f32.mrf.mxu0
    %v5128 = vpop.f32.mrf.mxu0
    %v5129 = vadd.f32 %v4968, %v5128
    %v5130 = vpop.f32.mrf.mxu0
    %5131 = vmatprep.mubr.bf16.mxu0 %v4602
    %5132 = vmatmul.mubr.bf16.gmra.mxu0 %v4601
    %v5133 = vpop.f32.mrf.mxu0
    %v5134 = vadd.f32 %v4973, %v5133
    %v5135 = vpop.f32.mrf.mxu0
    %v5136 = vpop.f32.mrf.mxu0
    %v5137 = vadd.f32 %v4976, %v5136
    %v5138 = vpop.f32.mrf.mxu0
    %5139 = vmatprep.mubr.bf16.mxu0 %v4606
    %5140 = vmatmul.mubr.bf16.gmra.mxu0 %v4605
    %v5141 = vpop.f32.mrf.mxu0
    %v5142 = vadd.f32 %v4981, %v5141
    %v5143 = vpop.f32.mrf.mxu0
    %v5144 = vpop.f32.mrf.mxu0
    %v5145 = vadd.f32 %v4984, %v5144
    %v5146 = vpop.f32.mrf.mxu0
    %5147 = vmatprep.mubr.bf16.mxu0 %v4610
    %5148 = vmatmul.mubr.bf16.gmra.mxu0 %v4609
    %v5149 = vpop.f32.mrf.mxu0
    %v5150 = vadd.f32 %v4989, %v5149
    %v5151 = vpop.f32.mrf.mxu0
    %v5152 = vpop.f32.mrf.mxu0
    %v5153 = vadd.f32 %v4992, %v5152
    %v5154 = vpop.f32.mrf.mxu0
    %5155 = vmatprep.mubr.bf16.mxu0 %v4614
    %5156 = vmatmul.mubr.bf16.gmra.mxu0 %v4613
    %v5157 = vpop.f32.mrf.mxu0
    %v5158 = vadd.f32 %v4997, %v5157
    %v5159 = vpop.f32.mrf.mxu0
    %v5160 = vpop.f32.mrf.mxu0
    %v5161 = vadd.f32 %v5000, %v5160
    %v5162 = vpop.f32.mrf.mxu0
    %5163 = vmatprep.mubr.bf16.mxu0 %v4618
    %5164 = vmatmul.mubr.bf16.gmra.mxu0 %v4617
    %v5165 = vpop.f32.mrf.mxu0
    %v5166 = vadd.f32 %v5005, %v5165
    %v5167 = vpop.f32.mrf.mxu0
    %v5168 = vpop.f32.mrf.mxu0
    %v5169 = vadd.f32 %v5008, %v5168
    %v5170 = vpop.f32.mrf.mxu0
    %5171 = vmatprep.mubr.bf16.mxu0 %v4622
    %5172 = vmatmul.mubr.bf16.gmra.mxu0 %v4621
    %v5173 = vpop.f32.mrf.mxu0
    %v5174 = vadd.f32 %v5013, %v5173
    %v5175 = vpop.f32.mrf.mxu0
    %v5176 = vpop.f32.mrf.mxu0
    %v5177 = vadd.f32 %v5016, %v5176
    %v5178 = vpop.f32.mrf.mxu0
    %5179 = vmatprep.mubr.bf16.mxu0 %v4626
    %5180 = vmatmul.mubr.bf16.gmra.mxu0 %v4625
    %v5181 = vpop.f32.mrf.mxu0
    %v5182 = vadd.f32 %v5021, %v5181
    %v5183 = vpop.f32.mrf.mxu0
    %v5184 = vpop.f32.mrf.mxu0
    %v5185 = vadd.f32 %v5024, %v5184
    %v5186 = vpop.f32.mrf.mxu0
    %5187 = vmatprep.mubr.bf16.mxu0 %v4630
    %5188 = vmatmul.mubr.bf16.gmra.mxu0 %v4629
    %v5189 = vpop.f32.mrf.mxu0
    %v5190 = vadd.f32 %v5029, %v5189
    %v5191 = vpop.f32.mrf.mxu0
    %v5192 = vpop.f32.mrf.mxu0
    %v5193 = vadd.f32 %v5032, %v5192
    %v5194 = vpop.f32.mrf.mxu0
    %5195 = vmatprep.mubr.bf16.mxu0 %v4634
    %5196 = vmatmul.mubr.bf16.gmra.mxu0 %v4633
    %v5197 = vpop.f32.mrf.mxu0
    %v5198 = vadd.f32 %v5037, %v5197
    %v5199 = vpop.f32.mrf.mxu0
    %v5200 = vpop.f32.mrf.mxu0
    %v5201 = vadd.f32 %v5040, %v5200
    %v5202 = vpop.f32.mrf.mxu0
    %5203 = vmatprep.mubr.bf16.mxu0 %v4638
    %5204 = vmatmul.mubr.bf16.gmra.mxu0 %v4637
    %v5205 = vpop.f32.mrf.mxu0
    %v5206 = vadd.f32 %v5045, %v5205
    %v5207 = vpop.f32.mrf.mxu0
    %v5208 = vpop.f32.mrf.mxu0
    %v5209 = vadd.f32 %v5048, %v5208
    %v5210 = vpop.f32.mrf.mxu0
    %5211 = vmatprep.mubr.bf16.mxu0 %v4642
    %5212 = vmatmul.mubr.bf16.gmra.mxu0 %v4641
    %v5213 = vpop.f32.mrf.mxu0
    %v5214 = vadd.f32 %v5053, %v5213
    %v5215 = vpop.f32.mrf.mxu0
    %v5216 = vpop.f32.mrf.mxu0
    %v5217 = vadd.f32 %v5056, %v5216
    %v5218 = vpop.f32.mrf.mxu0
    %5219 = vmatprep.mubr.bf16.mxu0 %v4646
    %5220 = vmatmul.mubr.bf16.gmra.mxu0 %v4645
    %v5221 = vpop.f32.mrf.mxu0
    %v5222 = vadd.f32 %v5061, %v5221
    %v5223 = vpop.f32.mrf.mxu0
    %v5224 = vpop.f32.mrf.mxu0
    %v5225 = vadd.f32 %v5064, %v5224
    %v5226 = vpop.f32.mrf.mxu0
    %5227 = vmatprep.mubr.bf16.mxu0 %v4650
    %5228 = vmatmul.mubr.bf16.gmra.mxu0 %v4649
    %v5229 = vpop.f32.mrf.mxu0
    %v5230 = vadd.f32 %v5069, %v5229
    %v5231 = vpop.f32.mrf.mxu0
    %v5232 = vpop.f32.mrf.mxu0
    %v5233 = vadd.f32 %v5072, %v5232
    %v5234 = vpop.f32.mrf.mxu0
    %5235 = vdwg.mxu0
    %v5236 = vpack.c.bf16 %v5113, %v5110
    %v5237 = vpack.c.bf16 %v5121, %v5118
    %v5238 = vpack.c.bf16 %v5129, %v5126
    %v5239 = vpack.c.bf16 %v5137, %v5134
    %v5240 = vpack.c.bf16 %v5145, %v5142
    %v5241 = vpack.c.bf16 %v5153, %v5150
    %v5242 = vpack.c.bf16 %v5161, %v5158
    %v5243 = vpack.c.bf16 %v5169, %v5166
    %v5244 = vpack.c.bf16 %v5177, %v5174
    %v5245 = vpack.c.bf16 %v5185, %v5182
    %v5246 = vpack.c.bf16 %v5193, %v5190
    %v5247 = vpack.c.bf16 %v5201, %v5198
    %v5248 = vpack.c.bf16 %v5209, %v5206
    %v5249 = vpack.c.bf16 %v5217, %v5214
    %v5250 = vpack.c.bf16 %v5225, %v5222
    %v5251 = vpack.c.bf16 %v5233, %v5230
    %v5268 = vunpack.c.l.b16 %v5236
    %v5269 = vunpack.c.h.b16 %v5236
    %v5270 = vunpack.c.l.b16 %v5237
    %v5271 = vunpack.c.h.b16 %v5237
    %v5272 = vunpack.c.l.b16 %v5238
    %v5273 = vunpack.c.h.b16 %v5238
    %v5274 = vunpack.c.l.b16 %v5239
    %v5275 = vunpack.c.h.b16 %v5239
    %v5276 = vunpack.c.l.b16 %v5240
    %v5277 = vunpack.c.h.b16 %v5240
    %v5278 = vunpack.c.l.b16 %v5241
    %v5279 = vunpack.c.h.b16 %v5241
    %v5280 = vunpack.c.l.b16 %v5242
    %v5281 = vunpack.c.h.b16 %v5242
    %v5282 = vunpack.c.l.b16 %v5243
    %v5283 = vunpack.c.h.b16 %v5243
    %v5284 = vunpack.c.l.b16 %v5244
    %v5285 = vunpack.c.h.b16 %v5244
    %v5286 = vunpack.c.l.b16 %v5245
    %v5287 = vunpack.c.h.b16 %v5245
    %v5288 = vunpack.c.l.b16 %v5246
    %v5289 = vunpack.c.h.b16 %v5246
    %v5290 = vunpack.c.l.b16 %v5247
    %v5291 = vunpack.c.h.b16 %v5247
    %v5292 = vunpack.c.l.b16 %v5248
    %v5293 = vunpack.c.h.b16 %v5248
    %v5294 = vunpack.c.l.b16 %v5249
    %v5295 = vunpack.c.h.b16 %v5249
    %v5296 = vunpack.c.l.b16 %v5250
    %v5297 = vunpack.c.h.b16 %v5250
    %v5298 = vunpack.c.l.b16 %v5251
    %v5299 = vunpack.c.h.b16 %v5251
    %v5300 = vpack.c.b16 %v5268, %v5268
    %v5301 = vpack.c.b16 %v5269, %v5269
    %v5302 = vpack.c.b16 %v5270, %v5270
    %v5303 = vpack.c.b16 %v5271, %v5271
    %v5304 = vpack.c.b16 %v5272, %v5272
    %v5305 = vpack.c.b16 %v5273, %v5273
    %v5306 = vpack.c.b16 %v5274, %v5274
    %v5307 = vpack.c.b16 %v5275, %v5275
    %v5308 = vpack.c.b16 %v5276, %v5276
    %v5309 = vpack.c.b16 %v5277, %v5277
    %v5310 = vpack.c.b16 %v5278, %v5278
    %v5311 = vpack.c.b16 %v5279, %v5279
    %v5312 = vpack.c.b16 %v5280, %v5280
    %v5313 = vpack.c.b16 %v5281, %v5281
    %v5314 = vpack.c.b16 %v5282, %v5282
    %v5315 = vpack.c.b16 %v5283, %v5283
    %v5316 = vpack.c.b16 %v5284, %v5284
    %v5317 = vpack.c.b16 %v5285, %v5285
    %v5318 = vpack.c.b16 %v5286, %v5286
    %v5319 = vpack.c.b16 %v5287, %v5287
    %v5320 = vpack.c.b16 %v5288, %v5288
    %v5321 = vpack.c.b16 %v5289, %v5289
    %v5322 = vpack.c.b16 %v5290, %v5290
    %v5323 = vpack.c.b16 %v5291, %v5291
    %v5324 = vpack.c.b16 %v5292, %v5292
    %v5325 = vpack.c.b16 %v5293, %v5293
    %v5326 = vpack.c.b16 %v5294, %v5294
    %v5327 = vpack.c.b16 %v5295, %v5295
    %v5328 = vpack.c.b16 %v5296, %v5296
    %v5329 = vpack.c.b16 %v5297, %v5297
    %v5330 = vpack.c.b16 %v5298, %v5298
    %v5331 = vpack.c.b16 %v5299, %v5299
    %5364 = vst [vmem:[#allocation2] sm:$0xf] %v5300
    %5365 = vst [vmem:[#allocation2 + $0x4] sm:$0xf] %v5301
    %5366 = vst [vmem:[#allocation2 + $0x8] sm:$0xf] %v5302
    %5367 = vst [vmem:[#allocation2 + $0xc] sm:$0xf] %v5303
    %5368 = vst [vmem:[#allocation2 + $0x10] sm:$0xf] %v5304
    %5369 = vst [vmem:[#allocation2 + $0x14] sm:$0xf] %v5305
    %5370 = vst [vmem:[#allocation2 + $0x18] sm:$0xf] %v5306
    %5371 = vst [vmem:[#allocation2 + $0x1c] sm:$0xf] %v5307
    %5372 = vst [vmem:[#allocation2 + $0x20] sm:$0xf] %v5308
    %5373 = vst [vmem:[#allocation2 + $0x24] sm:$0xf] %v5309
    %5374 = vst [vmem:[#allocation2 + $0x28] sm:$0xf] %v5310
    %5375 = vst [vmem:[#allocation2 + $0x2c] sm:$0xf] %v5311
    %5376 = vst [vmem:[#allocation2 + $0x30] sm:$0xf] %v5312
    %5377 = vst [vmem:[#allocation2 + $0x34] sm:$0xf] %v5313
    %5378 = vst [vmem:[#allocation2 + $0x38] sm:$0xf] %v5314
    %5379 = vst [vmem:[#allocation2 + $0x3c] sm:$0xf] %v5315
    %5380 = vst [vmem:[#allocation2 + $0x40] sm:$0xf] %v5316
    %5381 = vst [vmem:[#allocation2 + $0x44] sm:$0xf] %v5317
    %5382 = vst [vmem:[#allocation2 + $0x48] sm:$0xf] %v5318
    %5383 = vst [vmem:[#allocation2 + $0x4c] sm:$0xf] %v5319
    %5384 = vst [vmem:[#allocation2 + $0x50] sm:$0xf] %v5320
    %5385 = vst [vmem:[#allocation2 + $0x54] sm:$0xf] %v5321
    %5386 = vst [vmem:[#allocation2 + $0x58] sm:$0xf] %v5322
    %5387 = vst [vmem:[#allocation2 + $0x5c] sm:$0xf] %v5323
    %5388 = vst [vmem:[#allocation2 + $0x60] sm:$0xf] %v5324
    %5389 = vst [vmem:[#allocation2 + $0x64] sm:$0xf] %v5325
    %5390 = vst [vmem:[#allocation2 + $0x68] sm:$0xf] %v5326
    %5391 = vst [vmem:[#allocation2 + $0x6c] sm:$0xf] %v5327
    %5392 = vst [vmem:[#allocation2 + $0x70] sm:$0xf] %v5328
    %5393 = vst [vmem:[#allocation2 + $0x74] sm:$0xf] %v5329
    %5394 = vst [vmem:[#allocation2 + $0x78] sm:$0xf] %v5330
    %5395 = vst [vmem:[#allocation2 + $0x7c] sm:$0xf] %v5331
    // Predicated region
    $region46: #{tpu_custom_call.1} parent=1 // pred_check
      _
    $region47: #{tpu_custom_call.1} parent=1 // pred_check_branch
      %5397 = sbr.rel (0) target = $region49
    $region48: #{tpu_custom_call.1} parent=1 // pred_region
      %s5399 = ssub.s32 2048, 2048
      %5400 = vsyncadd [#allocation3], %s5399
      %s5401 = sshll.u32 [#allocation2], 4
      %s5402 = int_to_ptr.vmem [resolvable:$true] %s5401
      %5407 = dma.vmem_to_hbm [thread:$0]  %s5402, 2048, %s11, [#allocation3], 64, 64, 4
    $region49: #{tpu_custom_call.1} parent=1 // pred_fallthru
      _
    // Predicated region
    $region50: #{tpu_custom_call.1} parent=1 // pred_check
      _
    $region51: #{tpu_custom_call.1} parent=1 // pred_check_branch
      %5409 = sbr.rel (0) target = $region53
    $region52: #{tpu_custom_call.1} parent=1 // pred_region
      %5410 = dma.done [#allocation3], 2048
    $region53: #{tpu_custom_call.1} parent=1 // pred_fallthru
      _
    %5411 = vsyncpa [#allocation3], 1

</llo_original>
